<compile_context>
chip_gen: v7x
topology: tpu7x:2x2x1
jax: 0.10.0
libtpu: 0.0.40
codegen_flags: <defaults>
</compile_context>

<pallas_src>
from functools import partial

import jax
import jax.numpy as jnp
from jax import lax
from jax.experimental import pallas as pl
from jax.experimental.pallas import tpu as pltpu


# --------------------------------------------------------------------------
# Fused kernel: one (batch, row-stripe) tile per grid step.
# --------------------------------------------------------------------------
def _basic_block_kernel(x_ref, w1_ref, s1_ref, b1_ref, w2_ref, s2_ref, b2_ref,
                        o_ref, col_ref, h1_ref):
    """One TILE_H-row output stripe of BasicBlock.forward.

    x_ref  : (1, 1, TILE_H+4, MW+2, Cin) bf16  overlapping padded-input stripe
    w1_ref : (9*Cin,  Cout) bf16   conv1 weights, tap-major im2col layout
    w2_ref : (9*Cout, Cout) bf16   conv2 weights
    s*_ref / b*_ref : (1, Cout) f32  folded BatchNorm scale / bias
    o_ref  : (1, TILE_H, W, Cout) bf16
    col_ref: ((TILE_H+2)*MW, 9*Cin) bf16  VMEM im2col staging buffer (reused)
    h1_ref : (TILE_H+2, MW, Cout)   bf16  conv1 output incl. conv2's 1-px halo
    """
    t = pl.program_id(1)
    last_t = pl.num_programs(1) - 1

    _, th, out_w, cout = o_ref.shape
    cin = x_ref.shape[-1]
    wp = x_ref.shape[-2]
    mid_w = wp - 2          # conv1 output cols (16-aligned, >= out_w + 2)
    mid_h = th + 2          # conv1 output rows = conv2 input rows (1-row halo)
    p1 = mid_h * mid_w
    p2 = th * out_w

    # ---- conv1: im2col (K = 9*Cin) + single MXU matmul + BN1 + ReLU --------
    for kh in range(3):
        for kw in range(3):
            k = kh * 3 + kw
            tap = x_ref[0, 0, kh:kh + mid_h, kw:kw + mid_w, :].reshape(p1, cin)
            col_ref[:, k * cin:(k + 1) * cin] = tap
    acc1 = jnp.dot(col_ref[...], w1_ref[...], preferred_element_type=jnp.float32)
    h1 = jnp.maximum(acc1 * s1_ref[...] + b1_ref[...], 0.0)
    h1_ref[...] = h1.reshape(mid_h, mid_w, cout).astype(h1_ref.dtype)

    # ---- conv2 'SAME' zero padding: zero only the 1-px borders of h1 -------
    # (conv1 at border positions is BN-bias+ReLU leakage, not zero padding.)
    zcol = jnp.zeros((mid_h, 1, cout), h1_ref.dtype)
    h1_ref[:, 0:1, :] = zcol                           # left pad column
    h1_ref[:, out_w + 1:out_w + 2, :] = zcol           # right pad column
    zrow = jnp.zeros((1, mid_w, cout), h1_ref.dtype)

    @pl.when(t == 0)
    def _():
        h1_ref[0:1, :, :] = zrow                       # top pad row (first stripe)

    @pl.when(t == last_t)
    def _():
        h1_ref[mid_h - 1:mid_h, :, :] = zrow           # bottom pad row (last stripe)

    # ---- conv2: im2col + matmul, then BN2 + residual add + ReLU ------------
    for kh in range(3):
        for kw in range(3):
            k = kh * 3 + kw
            tap = h1_ref[kh:kh + th, kw:kw + out_w, :].reshape(p2, cout)
            col_ref[0:p2, k * cout:(k + 1) * cout] = tap
    acc2 = jnp.dot(col_ref[0:p2, :], w2_ref[...],
                   preferred_element_type=jnp.float32)
    res = x_ref[0, 0, 2:2 + th, 2:2 + out_w, :].reshape(p2, cin).astype(jnp.float32)
    out = jnp.maximum(acc2 * s2_ref[...] + b2_ref[...] + res, 0.0)
    o_ref[...] = out.reshape(1, th, out_w, cout).astype(o_ref.dtype)


# --------------------------------------------------------------------------
# Wrapper
# --------------------------------------------------------------------------
def _fold_bn(gamma, beta, running_mean, running_var, eps=1e-5):
    scale = gamma / jnp.sqrt(running_var + eps)
    bias = beta - running_mean * scale
    return scale.reshape(1, -1), bias.reshape(1, -1)


def _round_up(v, m):
    return (v + m - 1) // m * m


def _pick_tile_h(h, n, vmem_bytes_fn, budget):
    """Largest divisor of H whose per-step VMEM estimate fits the budget."""
    divs = [d for d in range(h, 0, -1) if h % d == 0]
    fitting = [d for d in divs if vmem_bytes_fn(d) <= budget] or [1]
    th = fitting[0]
    # v7x has 2 TensorCores: keep >= 2 parallel grid steps when batch == 1.
    if n == 1 and th == h and len(fitting) > 1:
        th = fitting[1]
    return th


@partial(jax.jit, static_argnames=("tile_h",))
def basic_block_forward(x_nchw, params, tile_h=None):
    """BasicBlock forward (stride=1, downsample=None). NCHW in / NCHW out (bf16)."""
    w1, bn1, w2, bn2 = params["w1"], params["bn1"], params["w2"], params["bn2"]
    n, c_in, hgt, wdt = x_nchw.shape
    c_out = w1.shape[0]
    assert c_in == c_out, "identity residual requires inplanes == planes"
    # TODO(synk): stride > 1 and a non-None downsample branch.

    mid_w = _round_up(wdt + 2, 16)   # conv1 output cols, 16-aligned for reshapes
    wp = mid_w + 2                   # padded input cols

    def vmem_bytes(th):
        mh = th + 2
        in_blk = (th + 4) * wp * c_in * 2
        out_blk = th * wdt * c_out * 2
        wts = (9 * c_in * c_out + 9 * c_out * c_out) * 2 + 4 * c_out * 4
        col = mh * mid_w * 9 * c_in * 2
        h1b = mh * mid_w * c_out * 2
        f32_tmp = mh * mid_w * c_out * 4 * 2   # matmul acc + elementwise temps
        return 2 * (in_blk + out_blk + wts) + col + h1b + f32_tmp

    if tile_h is None:
        th = _pick_tile_h(hgt, n, vmem_bytes, budget=20 * 1024 * 1024)
    else:
        assert hgt % tile_h == 0, "tile_h must divide H"
        th = tile_h
    num_t = hgt // th

    # NCHW -> NHWC once; bf16 activations (MXU operands + half the HBM bytes).
    x = jnp.transpose(x_nchw, (0, 2, 3, 1)).astype(jnp.bfloat16)

    # Single zero-pad of x supplies the halos of BOTH convs (h1 never hits HBM).
    xp = jnp.pad(x, ((0, 0), (2, 2), (2, mid_w - wdt), (0, 0)))

    # Overlapping (TILE_H+4)-row stripes built in the wrapper: one input block
    # per grid step, no in-kernel concat, no separate halo BlockSpec.  When
    # num_t == 1 this is just an expand_dims (free).
    xs = jnp.stack([xp[:, t * th: t * th + th + 4] for t in range(num_t)], axis=1)

    # conv weights -> tap-major im2col layout (9*Cin, Cout), bf16.
    w1k = jnp.transpose(w1, (2, 3, 1, 0)).reshape(9 * c_in, c_out).astype(jnp.bfloat16)
    w2k = jnp.transpose(w2, (2, 3, 1, 0)).reshape(9 * c_out, c_out).astype(jnp.bfloat16)
    s1, b1 = _fold_bn(*bn1)
    s2, b2 = _fold_bn(*bn2)

    def _full(a):   # tiny arrays (weights / BN affine): whole thing resident
        nd = a.ndim
        return pl.BlockSpec(a.shape, lambda i, j, _nd=nd: (0,) * _nd)
    # TODO(synk): pl.Buffered(1) on these resident blocks for C >= 128 (v7x VMEM).

    est = vmem_bytes(th)
    vmem_limit = int(min(32 * 1024 * 1024, max(16 * 1024 * 1024, est + 8 * 1024 * 1024)))

    flops = 2 * 2 * 9 * c_in * c_out * hgt * wdt * n       # two 3x3 convs
    bytes_acc = int(xs.size) * 2 + n * hgt * wdt * c_out * 2 \
        + (int(w1k.size) + int(w2k.size)) * 2 + 4 * c_out * 4

    out = pl.pallas_call(
        _basic_block_kernel,
        out_shape=jax.ShapeDtypeStruct((n, hgt, wdt, c_out), jnp.bfloat16),
        grid=(n, num_t),
        in_specs=[
            pl.BlockSpec((1, 1, th + 4, wp, c_in), lambda i, j: (i, j, 0, 0, 0)),
            _full(w1k), _full(s1), _full(b1),
            _full(w2k), _full(s2), _full(b2),
        ],
        out_specs=pl.BlockSpec((1, th, wdt, c_out), lambda i, j: (i, j, 0, 0)),
        scratch_shapes=[
            pltpu.VMEM(((th + 2) * mid_w, 9 * c_in), jnp.bfloat16),  # im2col buffer
            pltpu.VMEM((th + 2, mid_w, c_out), jnp.bfloat16),        # h1 (conv2 input)
        ],
        compiler_params=pltpu.CompilerParams(
            dimension_semantics=("parallel", "parallel"),   # megacore-shardable
            vmem_limit_bytes=vmem_limit,                    # v7x: 64 MiB / TC total
        ),
        cost_estimate=pl.CostEstimate(flops=flops, transcendentals=0,
                                      bytes_accessed=bytes_acc),
    )(xs, w1k, s1, b1, w2k, s2, b2)

    # TODO(synk): lane-dense flattened out_spec when c_out < 128.
    return jnp.transpose(out, (0, 3, 1, 2))   # NCHW, bf16


# --------------------------------------------------------------------------
# Pure-JAX reference (bf16 conv operands, f32 accumulation, f32 output).
# --------------------------------------------------------------------------
def _reference_forward(x_nchw, params):
    w1, bn1, w2, bn2 = params["w1"], params["bn1"], params["w2"], params["bn2"]
    x = jnp.transpose(x_nchw, (0, 2, 3, 1)).astype(jnp.bfloat16)

    def conv(inp, w_oihw):
        w_hwio = jnp.transpose(w_oihw, (2, 3, 1, 0)).astype(jnp.bfloat16)
        return lax.conv_general_dilated(
            inp, w_hwio, window_strides=(1, 1), padding="SAME",
            dimension_numbers=("NHWC", "HWIO", "NHWC"),
            preferred_element_type=jnp.float32)

    s1, b1 = _fold_bn(*bn1)
    s2, b2 = _fold_bn(*bn2)
    h1 = jnp.maximum(conv(x, w1) * s1 + b1, 0.0)
    out = jnp.maximum(conv(h1.astype(jnp.bfloat16), w2) * s2 + b2
                      + x.astype(jnp.float32), 0.0)
    return jnp.transpose(out, (0, 3, 1, 2))


def init_params(key, inplanes, planes):
    """Deterministic synthetic parameters matching BasicBlock.__init__ shapes."""
    k1, k2, k3, k4, k5, k6 = jax.random.split(key, 6)
    w1 = 0.1 * jax.random.normal(k1, (planes, inplanes, 3, 3), jnp.float32)
    w2 = 0.1 * jax.random.normal(k2, (planes, planes, 3, 3), jnp.float32)
    bn1 = (1.0 + 0.1 * jax.random.normal(k3, (planes,), jnp.float32),   # gamma
           0.1 * jax.random.normal(k4, (planes,), jnp.float32),         # beta
           jnp.zeros((planes,), jnp.float32),                           # running_mean
           jnp.ones((planes,), jnp.float32))                            # running_var
    bn2 = (1.0 + 0.1 * jax.random.normal(k5, (planes,), jnp.float32),
           0.1 * jax.random.normal(k6, (planes,), jnp.float32),
           jnp.zeros((planes,), jnp.float32),
           jnp.ones((planes,), jnp.float32))
    return {"w1": w1, "bn1": bn1, "w2": w2, "bn2": bn2}


if __name__ == "__main__":
    key = jax.random.PRNGKey(0)
    kx, kp = jax.random.split(key)

    inplanes = planes = 4
    x = jax.random.normal(kx, (2, inplanes, 16, 16), jnp.float32)  # NCHW
    params = init_params(kp, inplanes, planes)

    ref = jax.block_until_ready(_reference_forward(x, params))

    # Default path: full-image row tile per grid step (grid = (batch, 1)).
    out = jax.block_until_ready(basic_block_forward(x, params))
    assert out.shape == (2, planes, 16, 16)
    out_f32 = out.astype(jnp.float32)
    err = jnp.max(jnp.abs(out_f32 - ref))
    assert jnp.allclose(out_f32, ref, atol=5e-2, rtol=2e-2), (
        f"full-tile mismatch vs reference, max|diff|={err}")

    # Striped path: forces TILE_H=4 (4 row stripes) to exercise the overlapping
    # stripe windows and the pl.when top/bottom border zeroing.
    out_s = jax.block_until_ready(basic_block_forward(x, params, tile_h=4))
    out_s_f32 = out_s.astype(jnp.float32)
    err_s = jnp.max(jnp.abs(out_s_f32 - ref))
    assert jnp.allclose(out_s_f32, ref, atol=5e-2, rtol=2e-2), (
        f"striped mismatch vs reference, max|diff|={err_s}")

    print("KERNEL_OK")
</pallas_src>

<mosaic_0001>
module attributes {stable_mosaic.version = 11 : i64} {
  func.func @_basic_block_kernel(%arg0: i32, %arg1: i32, %arg2: memref<1x1x20x34x4xbf16, #tpu.memory_space<vmem>>, %arg3: memref<36x4xbf16, #tpu.memory_space<vmem>>, %arg4: memref<1x4xf32, #tpu.memory_space<vmem>>, %arg5: memref<1x4xf32, #tpu.memory_space<vmem>>, %arg6: memref<36x4xbf16, #tpu.memory_space<vmem>>, %arg7: memref<1x4xf32, #tpu.memory_space<vmem>>, %arg8: memref<1x4xf32, #tpu.memory_space<vmem>>, %arg9: memref<1x16x16x4xbf16, #tpu.memory_space<vmem>>, %arg10: memref<576x36xbf16, #tpu.memory_space<vmem>>, %arg11: memref<18x32x4xbf16, #tpu.memory_space<vmem>>) attributes {dimension_semantics = [#tpu.dimension_semantics<parallel>, #tpu.dimension_semantics<parallel>], iteration_bounds = array<i64: 2, 1>, scalar_prefetch = 0 : i64, scratch_operands = 2 : i64, tpu.core_type = #tpu.core_type<tc>, window_params = [{transform_indices = @transform_0, window_bounds = array<i64: 1, 1, 20, 34, 4>}, {pipeline_mode = #tpu.pipeline_mode<synchronous>, transform_indices = @transform_1, window_bounds = array<i64: 36, 4>}, {pipeline_mode = #tpu.pipeline_mode<synchronous>, transform_indices = @transform_2, window_bounds = array<i64: 1, 4>}, {pipeline_mode = #tpu.pipeline_mode<synchronous>, transform_indices = @transform_3, window_bounds = array<i64: 1, 4>}, {pipeline_mode = #tpu.pipeline_mode<synchronous>, transform_indices = @transform_4, window_bounds = array<i64: 36, 4>}, {pipeline_mode = #tpu.pipeline_mode<synchronous>, transform_indices = @transform_5, window_bounds = array<i64: 1, 4>}, {pipeline_mode = #tpu.pipeline_mode<synchronous>, transform_indices = @transform_6, window_bounds = array<i64: 1, 4>}, {transform_indices = @transform_7, window_bounds = array<i64: 1, 16, 16, 4>}]} {
    %c0 = arith.constant 0 : index
    %c0_0 = arith.constant 0 : index
    %c0_1 = arith.constant 0 : index
    %c0_2 = arith.constant 0 : index
    %c0_3 = arith.constant 0 : index
    %0 = vector.load %arg2[%c0, %c0_0, %c0_1, %c0_2, %c0_3] : memref<1x1x20x34x4xbf16, #tpu.memory_space<vmem>>, vector<1x1x18x32x4xbf16>
    %1 = vector.shape_cast %0 : vector<1x1x18x32x4xbf16> to vector<18x32x4xbf16>
    %2 = vector.shape_cast %1 : vector<18x32x4xbf16> to vector<576x4xbf16>
    %c0_4 = arith.constant 0 : index
    %c0_5 = arith.constant 0 : index
    %3 = vector.load %arg10[%c0_4, %c0_5] : memref<576x36xbf16, #tpu.memory_space<vmem>>, vector<576x4xbf16>
    tpu.vector_store %arg10[%c0_4, %c0_5], %2 {strides = array<i32>} : memref<576x36xbf16, #tpu.memory_space<vmem>>, vector<576x4xbf16>,
    %c0_6 = arith.constant 0 : index
    %c0_7 = arith.constant 0 : index
    %c0_8 = arith.constant 0 : index
    %c1 = arith.constant 1 : index
    %c0_9 = arith.constant 0 : index
    %4 = vector.load %arg2[%c0_6, %c0_7, %c0_8, %c1, %c0_9] : memref<1x1x20x34x4xbf16, #tpu.memory_space<vmem>>, vector<1x1x18x32x4xbf16>
    %5 = vector.shape_cast %4 : vector<1x1x18x32x4xbf16> to vector<18x32x4xbf16>
    %6 = vector.shape_cast %5 : vector<18x32x4xbf16> to vector<576x4xbf16>
    %c0_10 = arith.constant 0 : index
    %c4 = arith.constant 4 : index
    %7 = vector.load %arg10[%c0_10, %c4] : memref<576x36xbf16, #tpu.memory_space<vmem>>, vector<576x4xbf16>
    tpu.vector_store %arg10[%c0_10, %c4], %6 {strides = array<i32>} : memref<576x36xbf16, #tpu.memory_space<vmem>>, vector<576x4xbf16>,
    %c0_11 = arith.constant 0 : index
    %c0_12 = arith.constant 0 : index
    %c0_13 = arith.constant 0 : index
    %c2 = arith.constant 2 : index
    %c0_14 = arith.constant 0 : index
    %8 = vector.load %arg2[%c0_11, %c0_12, %c0_13, %c2, %c0_14] : memref<1x1x20x34x4xbf16, #tpu.memory_space<vmem>>, vector<1x1x18x32x4xbf16>
    %9 = vector.shape_cast %8 : vector<1x1x18x32x4xbf16> to vector<18x32x4xbf16>
    %10 = vector.shape_cast %9 : vector<18x32x4xbf16> to vector<576x4xbf16>
    %c0_15 = arith.constant 0 : index
    %c8 = arith.constant 8 : index
    %11 = vector.load %arg10[%c0_15, %c8] : memref<576x36xbf16, #tpu.memory_space<vmem>>, vector<576x4xbf16>
    tpu.vector_store %arg10[%c0_15, %c8], %10 {strides = array<i32>} : memref<576x36xbf16, #tpu.memory_space<vmem>>, vector<576x4xbf16>,
    %c0_16 = arith.constant 0 : index
    %c0_17 = arith.constant 0 : index
    %c1_18 = arith.constant 1 : index
    %c0_19 = arith.constant 0 : index
    %c0_20 = arith.constant 0 : index
    %12 = vector.load %arg2[%c0_16, %c0_17, %c1_18, %c0_19, %c0_20] : memref<1x1x20x34x4xbf16, #tpu.memory_space<vmem>>, vector<1x1x18x32x4xbf16>
    %13 = vector.shape_cast %12 : vector<1x1x18x32x4xbf16> to vector<18x32x4xbf16>
    %14 = vector.shape_cast %13 : vector<18x32x4xbf16> to vector<576x4xbf16>
    %c0_21 = arith.constant 0 : index
    %c12 = arith.constant 12 : index
    %15 = vector.load %arg10[%c0_21, %c12] : memref<576x36xbf16, #tpu.memory_space<vmem>>, vector<576x4xbf16>
    tpu.vector_store %arg10[%c0_21, %c12], %14 {strides = array<i32>} : memref<576x36xbf16, #tpu.memory_space<vmem>>, vector<576x4xbf16>,
    %c0_22 = arith.constant 0 : index
    %c0_23 = arith.constant 0 : index
    %c1_24 = arith.constant 1 : index
    %c1_25 = arith.constant 1 : index
    %c0_26 = arith.constant 0 : index
    %16 = vector.load %arg2[%c0_22, %c0_23, %c1_24, %c1_25, %c0_26] : memref<1x1x20x34x4xbf16, #tpu.memory_space<vmem>>, vector<1x1x18x32x4xbf16>
    %17 = vector.shape_cast %16 : vector<1x1x18x32x4xbf16> to vector<18x32x4xbf16>
    %18 = vector.shape_cast %17 : vector<18x32x4xbf16> to vector<576x4xbf16>
    %c0_27 = arith.constant 0 : index
    %c16 = arith.constant 16 : index
    %19 = vector.load %arg10[%c0_27, %c16] : memref<576x36xbf16, #tpu.memory_space<vmem>>, vector<576x4xbf16>
    tpu.vector_store %arg10[%c0_27, %c16], %18 {strides = array<i32>} : memref<576x36xbf16, #tpu.memory_space<vmem>>, vector<576x4xbf16>,
    %c0_28 = arith.constant 0 : index
    %c0_29 = arith.constant 0 : index
    %c1_30 = arith.constant 1 : index
    %c2_31 = arith.constant 2 : index
    %c0_32 = arith.constant 0 : index
    %20 = vector.load %arg2[%c0_28, %c0_29, %c1_30, %c2_31, %c0_32] : memref<1x1x20x34x4xbf16, #tpu.memory_space<vmem>>, vector<1x1x18x32x4xbf16>
    %21 = vector.shape_cast %20 : vector<1x1x18x32x4xbf16> to vector<18x32x4xbf16>
    %22 = vector.shape_cast %21 : vector<18x32x4xbf16> to vector<576x4xbf16>
    %c0_33 = arith.constant 0 : index
    %c20 = arith.constant 20 : index
    %23 = vector.load %arg10[%c0_33, %c20] : memref<576x36xbf16, #tpu.memory_space<vmem>>, vector<576x4xbf16>
    tpu.vector_store %arg10[%c0_33, %c20], %22 {strides = array<i32>} : memref<576x36xbf16, #tpu.memory_space<vmem>>, vector<576x4xbf16>,
    %c0_34 = arith.constant 0 : index
    %c0_35 = arith.constant 0 : index
    %c2_36 = arith.constant 2 : index
    %c0_37 = arith.constant 0 : index
    %c0_38 = arith.constant 0 : index
    %24 = vector.load %arg2[%c0_34, %c0_35, %c2_36, %c0_37, %c0_38] : memref<1x1x20x34x4xbf16, #tpu.memory_space<vmem>>, vector<1x1x18x32x4xbf16>
    %25 = vector.shape_cast %24 : vector<1x1x18x32x4xbf16> to vector<18x32x4xbf16>
    %26 = vector.shape_cast %25 : vector<18x32x4xbf16> to vector<576x4xbf16>
    %c0_39 = arith.constant 0 : index
    %c24 = arith.constant 24 : index
    %27 = vector.load %arg10[%c0_39, %c24] : memref<576x36xbf16, #tpu.memory_space<vmem>>, vector<576x4xbf16>
    tpu.vector_store %arg10[%c0_39, %c24], %26 {strides = array<i32>} : memref<576x36xbf16, #tpu.memory_space<vmem>>, vector<576x4xbf16>,
    %c0_40 = arith.constant 0 : index
    %c0_41 = arith.constant 0 : index
    %c2_42 = arith.constant 2 : index
    %c1_43 = arith.constant 1 : index
    %c0_44 = arith.constant 0 : index
    %28 = vector.load %arg2[%c0_40, %c0_41, %c2_42, %c1_43, %c0_44] : memref<1x1x20x34x4xbf16, #tpu.memory_space<vmem>>, vector<1x1x18x32x4xbf16>
    %29 = vector.shape_cast %28 : vector<1x1x18x32x4xbf16> to vector<18x32x4xbf16>
    %30 = vector.shape_cast %29 : vector<18x32x4xbf16> to vector<576x4xbf16>
    %c0_45 = arith.constant 0 : index
    %c28 = arith.constant 28 : index
    %31 = vector.load %arg10[%c0_45, %c28] : memref<576x36xbf16, #tpu.memory_space<vmem>>, vector<576x4xbf16>
    tpu.vector_store %arg10[%c0_45, %c28], %30 {strides = array<i32>} : memref<576x36xbf16, #tpu.memory_space<vmem>>, vector<576x4xbf16>,
    %c0_46 = arith.constant 0 : index
    %c0_47 = arith.constant 0 : index
    %c2_48 = arith.constant 2 : index
    %c2_49 = arith.constant 2 : index
    %c0_50 = arith.constant 0 : index
    %32 = vector.load %arg2[%c0_46, %c0_47, %c2_48, %c2_49, %c0_50] : memref<1x1x20x34x4xbf16, #tpu.memory_space<vmem>>, vector<1x1x18x32x4xbf16>
    %33 = vector.shape_cast %32 : vector<1x1x18x32x4xbf16> to vector<18x32x4xbf16>
    %34 = vector.shape_cast %33 : vector<18x32x4xbf16> to vector<576x4xbf16>
    %c0_51 = arith.constant 0 : index
    %c32 = arith.constant 32 : index
    %35 = vector.load %arg10[%c0_51, %c32] : memref<576x36xbf16, #tpu.memory_space<vmem>>, vector<576x4xbf16>
    tpu.vector_store %arg10[%c0_51, %c32], %34 {strides = array<i32>} : memref<576x36xbf16, #tpu.memory_space<vmem>>, vector<576x4xbf16>,
    %c0_52 = arith.constant 0 : index
    %c0_53 = arith.constant 0 : index
    %36 = vector.load %arg10[%c0_52, %c0_53] : memref<576x36xbf16, #tpu.memory_space<vmem>>, vector<576x36xbf16>
    %c0_54 = arith.constant 0 : index
    %c0_55 = arith.constant 0 : index
    %37 = vector.load %arg3[%c0_54, %c0_55] : memref<36x4xbf16, #tpu.memory_space<vmem>>, vector<36x4xbf16>
    %cst = arith.constant dense<0.000000e+00> : vector<576x4xf32>
    %38 = tpu.matmul %36, %37, %cst {dimension_numbers = #tpu.dot_dimension_numbers<[1], [0], [0], [1], [0, 0, 1, 1], [], []>} : vector<576x36xbf16>, vector<36x4xbf16>, vector<576x4xf32> -> vector<576x4xf32>
    %c0_56 = arith.constant 0 : index
    %c0_57 = arith.constant 0 : index
    %39 = vector.load %arg4[%c0_56, %c0_57] : memref<1x4xf32, #tpu.memory_space<vmem>>, vector<1x4xf32>
    %40 = vector.broadcast %39 : vector<1x4xf32> to vector<576x4xf32>
    %41 = arith.mulf %38, %40 : vector<576x4xf32>
    %c0_58 = arith.constant 0 : index
    %c0_59 = arith.constant 0 : index
    %42 = vector.load %arg5[%c0_58, %c0_59] : memref<1x4xf32, #tpu.memory_space<vmem>>, vector<1x4xf32>
    %43 = vector.broadcast %42 : vector<1x4xf32> to vector<576x4xf32>
    %44 = arith.addf %41, %43 : vector<576x4xf32>
    %cst_60 = arith.constant 0.000000e+00 : f32
    %45 = vector.broadcast %cst_60 : f32 to vector<576x4xf32>
    %46 = arith.maximumf %44, %45 : vector<576x4xf32>
    %47 = vector.shape_cast %46 : vector<576x4xf32> to vector<18x32x4xf32>
    %48 = arith.truncf %47 : vector<18x32x4xf32> to vector<18x32x4xbf16>
    %c0_61 = arith.constant 0 : index
    %c0_62 = arith.constant 0 : index
    %c0_63 = arith.constant 0 : index
    %49 = vector.load %arg11[%c0_61, %c0_62, %c0_63] : memref<18x32x4xbf16, #tpu.memory_space<vmem>>, vector<18x32x4xbf16>
    tpu.vector_store %arg11[%c0_61, %c0_62, %c0_63], %48 {strides = array<i32>} : memref<18x32x4xbf16, #tpu.memory_space<vmem>>, vector<18x32x4xbf16>,
    %cst_64 = arith.constant 0.000000e+00 : bf16
    %50 = vector.broadcast %cst_64 : bf16 to vector<18x1x4xbf16>
    %c0_65 = arith.constant 0 : index
    %c0_66 = arith.constant 0 : index
    %c0_67 = arith.constant 0 : index
    %51 = vector.load %arg11[%c0_65, %c0_66, %c0_67] : memref<18x32x4xbf16, #tpu.memory_space<vmem>>, vector<18x1x4xbf16>
    tpu.vector_store %arg11[%c0_65, %c0_66, %c0_67], %50 {strides = array<i32>} : memref<18x32x4xbf16, #tpu.memory_space<vmem>>, vector<18x1x4xbf16>,
    %c0_68 = arith.constant 0 : index
    %c17 = arith.constant 17 : index
    %c0_69 = arith.constant 0 : index
    %52 = vector.load %arg11[%c0_68, %c17, %c0_69] : memref<18x32x4xbf16, #tpu.memory_space<vmem>>, vector<18x1x4xbf16>
    tpu.vector_store %arg11[%c0_68, %c17, %c0_69], %50 {strides = array<i32>} : memref<18x32x4xbf16, #tpu.memory_space<vmem>>, vector<18x1x4xbf16>,
    %cst_70 = arith.constant 0.000000e+00 : bf16
    %53 = vector.broadcast %cst_70 : bf16 to vector<1x32x4xbf16>
    %c0_i32 = arith.constant 0 : i32
    %54 = arith.cmpi eq, %arg1, %c0_i32 : i32
    %55 = arith.extui %54 : i1 to i32
    %c0_i32_71 = arith.constant 0 : i32
    %56 = arith.cmpi ne, %55, %c0_i32_71 : i32
    scf.if %56 {
      %c0_138 = arith.constant 0 : index
      %c0_139 = arith.constant 0 : index
      %c0_140 = arith.constant 0 : index
      %106 = vector.load %arg11[%c0_138, %c0_139, %c0_140] : memref<18x32x4xbf16, #tpu.memory_space<vmem>>, vector<1x32x4xbf16>
      tpu.vector_store %arg11[%c0_138, %c0_139, %c0_140], %53 {strides = array<i32>} : memref<18x32x4xbf16, #tpu.memory_space<vmem>>, vector<1x32x4xbf16>,
    } else {
    }
    %c0_i32_72 = arith.constant 0 : i32
    %57 = arith.cmpi eq, %arg1, %c0_i32_72 : i32
    %58 = arith.extui %57 : i1 to i32
    %c0_i32_73 = arith.constant 0 : i32
    %59 = arith.cmpi ne, %58, %c0_i32_73 : i32
    scf.if %59 {
      %c17_138 = arith.constant 17 : index
      %c0_139 = arith.constant 0 : index
      %c0_140 = arith.constant 0 : index
      %106 = vector.load %arg11[%c17_138, %c0_139, %c0_140] : memref<18x32x4xbf16, #tpu.memory_space<vmem>>, vector<1x32x4xbf16>
      tpu.vector_store %arg11[%c17_138, %c0_139, %c0_140], %53 {strides = array<i32>} : memref<18x32x4xbf16, #tpu.memory_space<vmem>>, vector<1x32x4xbf16>,
    } else {
    }
    %c0_74 = arith.constant 0 : index
    %c0_75 = arith.constant 0 : index
    %c0_76 = arith.constant 0 : index
    %60 = vector.load %arg11[%c0_74, %c0_75, %c0_76] : memref<18x32x4xbf16, #tpu.memory_space<vmem>>, vector<16x16x4xbf16>
    %61 = vector.shape_cast %60 : vector<16x16x4xbf16> to vector<256x4xbf16>
    %c0_77 = arith.constant 0 : index
    %c0_78 = arith.constant 0 : index
    %62 = vector.load %arg10[%c0_77, %c0_78] : memref<576x36xbf16, #tpu.memory_space<vmem>>, vector<256x4xbf16>
    tpu.vector_store %arg10[%c0_77, %c0_78], %61 {strides = array<i32>} : memref<576x36xbf16, #tpu.memory_space<vmem>>, vector<256x4xbf16>,
    %c0_79 = arith.constant 0 : index
    %c1_80 = arith.constant 1 : index
    %c0_81 = arith.constant 0 : index
    %63 = vector.load %arg11[%c0_79, %c1_80, %c0_81] : memref<18x32x4xbf16, #tpu.memory_space<vmem>>, vector<16x16x4xbf16>
    %64 = vector.shape_cast %63 : vector<16x16x4xbf16> to vector<256x4xbf16>
    %c0_82 = arith.constant 0 : index
    %c4_83 = arith.constant 4 : index
    %65 = vector.load %arg10[%c0_82, %c4_83] : memref<576x36xbf16, #tpu.memory_space<vmem>>, vector<256x4xbf16>
    tpu.vector_store %arg10[%c0_82, %c4_83], %64 {strides = array<i32>} : memref<576x36xbf16, #tpu.memory_space<vmem>>, vector<256x4xbf16>,
    %c0_84 = arith.constant 0 : index
    %c2_85 = arith.constant 2 : index
    %c0_86 = arith.constant 0 : index
    %66 = vector.load %arg11[%c0_84, %c2_85, %c0_86] : memref<18x32x4xbf16, #tpu.memory_space<vmem>>, vector<16x16x4xbf16>
    %67 = vector.shape_cast %66 : vector<16x16x4xbf16> to vector<256x4xbf16>
    %c0_87 = arith.constant 0 : index
    %c8_88 = arith.constant 8 : index
    %68 = vector.load %arg10[%c0_87, %c8_88] : memref<576x36xbf16, #tpu.memory_space<vmem>>, vector<256x4xbf16>
    tpu.vector_store %arg10[%c0_87, %c8_88], %67 {strides = array<i32>} : memref<576x36xbf16, #tpu.memory_space<vmem>>, vector<256x4xbf16>,
    %c1_89 = arith.constant 1 : index
    %c0_90 = arith.constant 0 : index
    %c0_91 = arith.constant 0 : index
    %69 = vector.load %arg11[%c1_89, %c0_90, %c0_91] : memref<18x32x4xbf16, #tpu.memory_space<vmem>>, vector<16x16x4xbf16>
    %70 = vector.shape_cast %69 : vector<16x16x4xbf16> to vector<256x4xbf16>
    %c0_92 = arith.constant 0 : index
    %c12_93 = arith.constant 12 : index
    %71 = vector.load %arg10[%c0_92, %c12_93] : memref<576x36xbf16, #tpu.memory_space<vmem>>, vector<256x4xbf16>
    tpu.vector_store %arg10[%c0_92, %c12_93], %70 {strides = array<i32>} : memref<576x36xbf16, #tpu.memory_space<vmem>>, vector<256x4xbf16>,
    %c1_94 = arith.constant 1 : index
    %c1_95 = arith.constant 1 : index
    %c0_96 = arith.constant 0 : index
    %72 = vector.load %arg11[%c1_94, %c1_95, %c0_96] : memref<18x32x4xbf16, #tpu.memory_space<vmem>>, vector<16x16x4xbf16>
    %73 = vector.shape_cast %72 : vector<16x16x4xbf16> to vector<256x4xbf16>
    %c0_97 = arith.constant 0 : index
    %c16_98 = arith.constant 16 : index
    %74 = vector.load %arg10[%c0_97, %c16_98] : memref<576x36xbf16, #tpu.memory_space<vmem>>, vector<256x4xbf16>
    tpu.vector_store %arg10[%c0_97, %c16_98], %73 {strides = array<i32>} : memref<576x36xbf16, #tpu.memory_space<vmem>>, vector<256x4xbf16>,
    %c1_99 = arith.constant 1 : index
    %c2_100 = arith.constant 2 : index
    %c0_101 = arith.constant 0 : index
    %75 = vector.load %arg11[%c1_99, %c2_100, %c0_101] : memref<18x32x4xbf16, #tpu.memory_space<vmem>>, vector<16x16x4xbf16>
    %76 = vector.shape_cast %75 : vector<16x16x4xbf16> to vector<256x4xbf16>
    %c0_102 = arith.constant 0 : index
    %c20_103 = arith.constant 20 : index
    %77 = vector.load %arg10[%c0_102, %c20_103] : memref<576x36xbf16, #tpu.memory_space<vmem>>, vector<256x4xbf16>
    tpu.vector_store %arg10[%c0_102, %c20_103], %76 {strides = array<i32>} : memref<576x36xbf16, #tpu.memory_space<vmem>>, vector<256x4xbf16>,
    %c2_104 = arith.constant 2 : index
    %c0_105 = arith.constant 0 : index
    %c0_106 = arith.constant 0 : index
    %78 = vector.load %arg11[%c2_104, %c0_105, %c0_106] : memref<18x32x4xbf16, #tpu.memory_space<vmem>>, vector<16x16x4xbf16>
    %79 = vector.shape_cast %78 : vector<16x16x4xbf16> to vector<256x4xbf16>
    %c0_107 = arith.constant 0 : index
    %c24_108 = arith.constant 24 : index
    %80 = vector.load %arg10[%c0_107, %c24_108] : memref<576x36xbf16, #tpu.memory_space<vmem>>, vector<256x4xbf16>
    tpu.vector_store %arg10[%c0_107, %c24_108], %79 {strides = array<i32>} : memref<576x36xbf16, #tpu.memory_space<vmem>>, vector<256x4xbf16>,
    %c2_109 = arith.constant 2 : index
    %c1_110 = arith.constant 1 : index
    %c0_111 = arith.constant 0 : index
    %81 = vector.load %arg11[%c2_109, %c1_110, %c0_111] : memref<18x32x4xbf16, #tpu.memory_space<vmem>>, vector<16x16x4xbf16>
    %82 = vector.shape_cast %81 : vector<16x16x4xbf16> to vector<256x4xbf16>
    %c0_112 = arith.constant 0 : index
    %c28_113 = arith.constant 28 : index
    %83 = vector.load %arg10[%c0_112, %c28_113] : memref<576x36xbf16, #tpu.memory_space<vmem>>, vector<256x4xbf16>
    tpu.vector_store %arg10[%c0_112, %c28_113], %82 {strides = array<i32>} : memref<576x36xbf16, #tpu.memory_space<vmem>>, vector<256x4xbf16>,
    %c2_114 = arith.constant 2 : index
    %c2_115 = arith.constant 2 : index
    %c0_116 = arith.constant 0 : index
    %84 = vector.load %arg11[%c2_114, %c2_115, %c0_116] : memref<18x32x4xbf16, #tpu.memory_space<vmem>>, vector<16x16x4xbf16>
    %85 = vector.shape_cast %84 : vector<16x16x4xbf16> to vector<256x4xbf16>
    %c0_117 = arith.constant 0 : index
    %c32_118 = arith.constant 32 : index
    %86 = vector.load %arg10[%c0_117, %c32_118] : memref<576x36xbf16, #tpu.memory_space<vmem>>, vector<256x4xbf16>
    tpu.vector_store %arg10[%c0_117, %c32_118], %85 {strides = array<i32>} : memref<576x36xbf16, #tpu.memory_space<vmem>>, vector<256x4xbf16>,
    %c0_119 = arith.constant 0 : index
    %c0_120 = arith.constant 0 : index
    %87 = vector.load %arg10[%c0_119, %c0_120] : memref<576x36xbf16, #tpu.memory_space<vmem>>, vector<256x36xbf16>
    %c0_121 = arith.constant 0 : index
    %c0_122 = arith.constant 0 : index
    %88 = vector.load %arg6[%c0_121, %c0_122] : memref<36x4xbf16, #tpu.memory_space<vmem>>, vector<36x4xbf16>
    %cst_123 = arith.constant dense<0.000000e+00> : vector<256x4xf32>
    %89 = tpu.matmul %87, %88, %cst_123 {dimension_numbers = #tpu.dot_dimension_numbers<[1], [0], [0], [1], [0, 0, 1, 1], [], []>} : vector<256x36xbf16>, vector<36x4xbf16>, vector<256x4xf32> -> vector<256x4xf32>
    %c0_124 = arith.constant 0 : index
    %c0_125 = arith.constant 0 : index
    %c2_126 = arith.constant 2 : index
    %c2_127 = arith.constant 2 : index
    %c0_128 = arith.constant 0 : index
    %90 = vector.load %arg2[%c0_124, %c0_125, %c2_126, %c2_127, %c0_128] : memref<1x1x20x34x4xbf16, #tpu.memory_space<vmem>>, vector<1x1x16x16x4xbf16>
    %91 = vector.shape_cast %90 : vector<1x1x16x16x4xbf16> to vector<16x16x4xbf16>
    %92 = vector.shape_cast %91 : vector<16x16x4xbf16> to vector<256x4xbf16>
    %93 = arith.extf %92 : vector<256x4xbf16> to vector<256x4xf32>
    %c0_129 = arith.constant 0 : index
    %c0_130 = arith.constant 0 : index
    %94 = vector.load %arg7[%c0_129, %c0_130] : memref<1x4xf32, #tpu.memory_space<vmem>>, vector<1x4xf32>
    %95 = vector.broadcast %94 : vector<1x4xf32> to vector<256x4xf32>
    %96 = arith.mulf %89, %95 : vector<256x4xf32>
    %c0_131 = arith.constant 0 : index
    %c0_132 = arith.constant 0 : index
    %97 = vector.load %arg8[%c0_131, %c0_132] : memref<1x4xf32, #tpu.memory_space<vmem>>, vector<1x4xf32>
    %98 = vector.broadcast %97 : vector<1x4xf32> to vector<256x4xf32>
    %99 = arith.addf %96, %98 : vector<256x4xf32>
    %100 = arith.addf %99, %93 : vector<256x4xf32>
    %cst_133 = arith.constant 0.000000e+00 : f32
    %101 = vector.broadcast %cst_133 : f32 to vector<256x4xf32>
    %102 = arith.maximumf %100, %101 : vector<256x4xf32>
    %103 = vector.shape_cast %102 : vector<256x4xf32> to vector<1x16x16x4xf32>
    %104 = arith.truncf %103 : vector<1x16x16x4xf32> to vector<1x16x16x4xbf16>
    %c0_134 = arith.constant 0 : index
    %c0_135 = arith.constant 0 : index
    %c0_136 = arith.constant 0 : index
    %c0_137 = arith.constant 0 : index
    %105 = vector.load %arg9[%c0_134, %c0_135, %c0_136, %c0_137] : memref<1x16x16x4xbf16, #tpu.memory_space<vmem>>, vector<1x16x16x4xbf16>
    tpu.vector_store %arg9[%c0_134, %c0_135, %c0_136, %c0_137], %104 {strides = array<i32>} : memref<1x16x16x4xbf16, #tpu.memory_space<vmem>>, vector<1x16x16x4xbf16>,
    return
  }
  func.func @transform_0(%arg0: i32, %arg1: i32) -> (i32, i32, i32, i32, i32) {
    %c0_i32 = arith.constant 0 : i32
    %c0_i32_0 = arith.constant 0 : i32
    %c0_i32_1 = arith.constant 0 : i32
    %c0_i32_2 = arith.constant 0 : i32
    return %arg0, %arg1, %c0_i32, %c0_i32_0, %c0_i32_1 : i32, i32, i32, i32, i32
  }
  func.func @transform_1(%arg0: i32, %arg1: i32) -> (i32, i32) {
    %c0_i32 = arith.constant 0 : i32
    %c0_i32_0 = arith.constant 0 : i32
    %c0_i32_1 = arith.constant 0 : i32
    return %c0_i32, %c0_i32_0 : i32, i32
  }
  func.func @transform_2(%arg0: i32, %arg1: i32) -> (i32, i32) {
    %c0_i32 = arith.constant 0 : i32
    %c0_i32_0 = arith.constant 0 : i32
    %c0_i32_1 = arith.constant 0 : i32
    return %c0_i32, %c0_i32_0 : i32, i32
  }
  func.func @transform_3(%arg0: i32, %arg1: i32) -> (i32, i32) {
    %c0_i32 = arith.constant 0 : i32
    %c0_i32_0 = arith.constant 0 : i32
    %c0_i32_1 = arith.constant 0 : i32
    return %c0_i32, %c0_i32_0 : i32, i32
  }
  func.func @transform_4(%arg0: i32, %arg1: i32) -> (i32, i32) {
    %c0_i32 = arith.constant 0 : i32
    %c0_i32_0 = arith.constant 0 : i32
    %c0_i32_1 = arith.constant 0 : i32
    return %c0_i32, %c0_i32_0 : i32, i32
  }
  func.func @transform_5(%arg0: i32, %arg1: i32) -> (i32, i32) {
    %c0_i32 = arith.constant 0 : i32
    %c0_i32_0 = arith.constant 0 : i32
    %c0_i32_1 = arith.constant 0 : i32
    return %c0_i32, %c0_i32_0 : i32, i32
  }
  func.func @transform_6(%arg0: i32, %arg1: i32) -> (i32, i32) {
    %c0_i32 = arith.constant 0 : i32
    %c0_i32_0 = arith.constant 0 : i32
    %c0_i32_1 = arith.constant 0 : i32
    return %c0_i32, %c0_i32_0 : i32, i32
  }
  func.func @transform_7(%arg0: i32, %arg1: i32) -> (i32, i32, i32, i32) {
    %c0_i32 = arith.constant 0 : i32
    %c0_i32_0 = arith.constant 0 : i32
    %c0_i32_1 = arith.constant 0 : i32
    return %arg0, %arg1, %c0_i32, %c0_i32_0 : i32, i32, i32, i32
  }
}

</mosaic_0001>

<llo_original>
// kernel: basic_block_forward.1
$region0: #{basic_block_forward.1}
  #allocation0 [shape = 'u32[]', space=smem, size = 0x4, offset = 0x4, fixed_abs, tag = 'smem constant byte address 0x4 - core index']
  #allocation1 [shape = 'u32[144,128]{1,0:T(1,128)}', space=vmem, size = 0x12000, scoped, tag = 'internal scratch']
  #allocation2 [shape = 'bf16[576,36]{1,0:T(16,128)(2,1)}', space=vmem, size = 0x24000, scoped, tag = 'scratch operand']
  #allocation3 [shape = 'bf16[18,32,4]{2,1,0:T(16,128)(2,1)}', space=vmem, size = 0x24000, scoped, tag = 'scratch operand']
  %s0 = inlined_call_operand.vmem [shape: bf16[2,1,20,34,4], index: 0, kind: input, shape index: {}]
  %s1 = inlined_call_operand.vmem [shape: bf16[36,4], index: 1, kind: input, shape index: {}]
  %s2 = inlined_call_operand.vmem [shape: f32[1,4], index: 2, kind: input, shape index: {}]
  %s3 = inlined_call_operand.vmem [shape: f32[1,4], index: 3, kind: input, shape index: {}]
  %s4 = inlined_call_operand.vmem [shape: bf16[36,4], index: 4, kind: input, shape index: {}]
  %s5 = inlined_call_operand.vmem [shape: f32[1,4], index: 5, kind: input, shape index: {}]
  %s6 = inlined_call_operand.vmem [shape: f32[1,4], index: 6, kind: input, shape index: {}]
  %s7 = inlined_call_operand.vmem [shape: bf16[2,16,16,4], index: 7, kind: output, shape index: {}]
  %s8 = sld [smem:[#allocation0]]
  $region65: #{basic_block_forward.1} parent=0
    _
  %s10 = ssub.s32 1, %s8
  %s11 = scalar_select 0, %s10, %s8
  loop: start=0, step=1, limit=4
  $region2: #{basic_block_forward.1} parent=0 // loop_pre_header
    _
  $region3: #{basic_block_forward.1} parent=0 // loop_header
    %s13 = sphi 0, %s17
    %p14 = scmp.ge.s32.totalorder %s13, 4
    %s20 = sphi 0, %s32
    %s21 = sphi 0, %s28
    %s22 = sphi 0, %s20
    %s23 = sphi 0, %s21
    %s24 = sphi 0, %s22
    %s25 = sphi 0, %s23
    %s37 = sphi 0, %s39
    %s40 = sphi 0, %s37
    %s41 = sphi 0, %s40
    %s57 = sphi 0, %s41
    %s61 = sphi 0, %s61
    %s63 = sphi 0, %s61
    %s64 = sphi 0, %s63
    %s78 = sphi 0, %s64
    %s82 = sphi 0, %s82
    %s84 = sphi 0, %s82
    %s85 = sphi 0, %s84
    %s99 = sphi 0, %s85
    %s103 = sphi 0, %s103
    %s105 = sphi 0, %s103
    %s106 = sphi 0, %s105
    %s120 = sphi 0, %s106
    %s124 = sphi 0, %s124
    %s126 = sphi 0, %s124
    %s127 = sphi 0, %s126
    %s141 = sphi 0, %s127
    %s145 = sphi 0, %s145
    %s147 = sphi 0, %s145
    %s148 = sphi 0, %s147
    %s162 = sphi 0, %s148
    %s166 = sphi 0, %s166
    %s168 = sphi 0, %s166
    %s169 = sphi 0, %s168
    %s183 = sphi 0, %s169
    %s191 = sphi 0, %s193
    %s194 = sphi 0, %s191
    %s195 = sphi 0, %s194
    %s211 = sphi 0, %s195
  $region4: #{basic_block_forward.1} parent=0 // loop_header_branch
    %16 = sbr.rel (%p14) target = $region8
  $region5: #{basic_block_forward.1} parent=0 // loop_body
    %s18 = ssub.s32 %s13, 1
    %s19 = ssub.s32 %s13, 2
    %s26 = sadd.s32 1, %s21
    %p27 = scmp.ge.s32.totalorder %s26, 1
    %s28 = scalar_select %p27, 0, %s26
    %s29 = sadd.s32 1, %s20
    %s30 = scalar_select %p27, %s29, %s20
    %p31 = scmp.ge.s32.totalorder %s30, 2
    %s32 = scalar_select %p31, 0, %s30
    %s33 = ssub.s32 %s20, %s32
    %s34 = ssub.s32 %s21, %s28
    %s35 = sor.u32 %s33, %s34
    %p36 = scmp.eq.s32.totalorder %s35, 0
    %s38 = sadd.s32 %s37, 1
    %s39 = scalar_select %p36, %s37, %s38
    %p42 = pneg %p36
    %p43 = scmp.eq.s32.totalorder %s13, 1
    %p44 = por %p42, %p43
    %p45 = scmp.ne.s32.totalorder %s37, %s40
    %p46 = scmp.eq.s32.totalorder %s13, 0
    %p47 = por %p45, %p46
    %p48 = scmp.ne.s32.totalorder %s37, %s40
    %p49 = scmp.eq.s32.totalorder %s18, 1
    %p50 = por %p48, %p49
    %p51 = scmp.ne.s32.totalorder %s40, %s41
    %p52 = scmp.eq.s32.totalorder %s18, 0
    %p53 = por %p51, %p52
    %p54 = scmp.ne.s32.totalorder %s40, %s41
    %p55 = scmp.eq.s32.totalorder %s19, 1
    %p56 = por %p54, %p55
    %p58 = scmp.ne.s32.totalorder %s41, %s57
    %p59 = scmp.eq.s32.totalorder %s19, 0
    %p60 = por %p58, %p59
    %s62 = sadd.s32 %s61, 1
    %p65 = scmp.eq.s32.totalorder %s13, 1
    %p66 = scmp.ne.s32.totalorder %s61, %s63
    %p67 = scmp.eq.s32.totalorder %s13, 0
    %p68 = por %p66, %p67
    %p69 = scmp.ne.s32.totalorder %s61, %s63
    %p70 = scmp.eq.s32.totalorder %s18, 1
    %p71 = por %p69, %p70
    %p72 = scmp.ne.s32.totalorder %s63, %s64
    %p73 = scmp.eq.s32.totalorder %s18, 0
    %p74 = por %p72, %p73
    %p75 = scmp.ne.s32.totalorder %s63, %s64
    %p76 = scmp.eq.s32.totalorder %s19, 1
    %p77 = por %p75, %p76
    %p79 = scmp.ne.s32.totalorder %s64, %s78
    %p80 = scmp.eq.s32.totalorder %s19, 0
    %p81 = por %p79, %p80
    %s83 = sadd.s32 %s82, 1
    %p86 = scmp.eq.s32.totalorder %s13, 1
    %p87 = scmp.ne.s32.totalorder %s82, %s84
    %p88 = scmp.eq.s32.totalorder %s13, 0
    %p89 = por %p87, %p88
    %p90 = scmp.ne.s32.totalorder %s82, %s84
    %p91 = scmp.eq.s32.totalorder %s18, 1
    %p92 = por %p90, %p91
    %p93 = scmp.ne.s32.totalorder %s84, %s85
    %p94 = scmp.eq.s32.totalorder %s18, 0
    %p95 = por %p93, %p94
    %p96 = scmp.ne.s32.totalorder %s84, %s85
    %p97 = scmp.eq.s32.totalorder %s19, 1
    %p98 = por %p96, %p97
    %p100 = scmp.ne.s32.totalorder %s85, %s99
    %p101 = scmp.eq.s32.totalorder %s19, 0
    %p102 = por %p100, %p101
    %s104 = sadd.s32 %s103, 1
    %p107 = scmp.eq.s32.totalorder %s13, 1
    %p108 = scmp.ne.s32.totalorder %s103, %s105
    %p109 = scmp.eq.s32.totalorder %s13, 0
    %p110 = por %p108, %p109
    %p111 = scmp.ne.s32.totalorder %s103, %s105
    %p112 = scmp.eq.s32.totalorder %s18, 1
    %p113 = por %p111, %p112
    %p114 = scmp.ne.s32.totalorder %s105, %s106
    %p115 = scmp.eq.s32.totalorder %s18, 0
    %p116 = por %p114, %p115
    %p117 = scmp.ne.s32.totalorder %s105, %s106
    %p118 = scmp.eq.s32.totalorder %s19, 1
    %p119 = por %p117, %p118
    %p121 = scmp.ne.s32.totalorder %s106, %s120
    %p122 = scmp.eq.s32.totalorder %s19, 0
    %p123 = por %p121, %p122
    %s125 = sadd.s32 %s124, 1
    %p128 = scmp.eq.s32.totalorder %s13, 1
    %p129 = scmp.ne.s32.totalorder %s124, %s126
    %p130 = scmp.eq.s32.totalorder %s13, 0
    %p131 = por %p129, %p130
    %p132 = scmp.ne.s32.totalorder %s124, %s126
    %p133 = scmp.eq.s32.totalorder %s18, 1
    %p134 = por %p132, %p133
    %p135 = scmp.ne.s32.totalorder %s126, %s127
    %p136 = scmp.eq.s32.totalorder %s18, 0
    %p137 = por %p135, %p136
    %p138 = scmp.ne.s32.totalorder %s126, %s127
    %p139 = scmp.eq.s32.totalorder %s19, 1
    %p140 = por %p138, %p139
    %p142 = scmp.ne.s32.totalorder %s127, %s141
    %p143 = scmp.eq.s32.totalorder %s19, 0
    %p144 = por %p142, %p143
    %s146 = sadd.s32 %s145, 1
    %p149 = scmp.eq.s32.totalorder %s13, 1
    %p150 = scmp.ne.s32.totalorder %s145, %s147
    %p151 = scmp.eq.s32.totalorder %s13, 0
    %p152 = por %p150, %p151
    %p153 = scmp.ne.s32.totalorder %s145, %s147
    %p154 = scmp.eq.s32.totalorder %s18, 1
    %p155 = por %p153, %p154
    %p156 = scmp.ne.s32.totalorder %s147, %s148
    %p157 = scmp.eq.s32.totalorder %s18, 0
    %p158 = por %p156, %p157
    %p159 = scmp.ne.s32.totalorder %s147, %s148
    %p160 = scmp.eq.s32.totalorder %s19, 1
    %p161 = por %p159, %p160
    %p163 = scmp.ne.s32.totalorder %s148, %s162
    %p164 = scmp.eq.s32.totalorder %s19, 0
    %p165 = por %p163, %p164
    %s167 = sadd.s32 %s166, 1
    %p170 = scmp.eq.s32.totalorder %s13, 1
    %p171 = scmp.ne.s32.totalorder %s166, %s168
    %p172 = scmp.eq.s32.totalorder %s13, 0
    %p173 = por %p171, %p172
    %p174 = scmp.ne.s32.totalorder %s166, %s168
    %p175 = scmp.eq.s32.totalorder %s18, 1
    %p176 = por %p174, %p175
    %p177 = scmp.ne.s32.totalorder %s168, %s169
    %p178 = scmp.eq.s32.totalorder %s18, 0
    %p179 = por %p177, %p178
    %p180 = scmp.ne.s32.totalorder %s168, %s169
    %p181 = scmp.eq.s32.totalorder %s19, 1
    %p182 = por %p180, %p181
    %p184 = scmp.ne.s32.totalorder %s169, %s183
    %p185 = scmp.eq.s32.totalorder %s19, 0
    %p186 = por %p184, %p185
    %s187 = ssub.s32 %s20, %s32
    %s188 = ssub.s32 %s21, %s28
    %s189 = sor.u32 %s187, %s188
    %p190 = scmp.eq.s32.totalorder %s189, 0
    %s192 = sadd.s32 %s191, 1
    %s193 = scalar_select %p190, %s191, %s192
    %p196 = pneg %p190
    %p197 = scmp.eq.s32.totalorder %s13, 1
    %p198 = por %p196, %p197
    %p199 = scmp.ne.s32.totalorder %s191, %s194
    %p200 = scmp.eq.s32.totalorder %s13, 0
    %p201 = por %p199, %p200
    %p202 = scmp.ne.s32.totalorder %s191, %s194
    %p203 = scmp.eq.s32.totalorder %s18, 1
    %p204 = por %p202, %p203
    %p205 = scmp.ne.s32.totalorder %s194, %s195
    %p206 = scmp.eq.s32.totalorder %s18, 0
    %p207 = por %p205, %p206
    %p208 = scmp.ne.s32.totalorder %s194, %s195
    %p209 = scmp.eq.s32.totalorder %s19, 1
    %p210 = por %p208, %p209
    %p212 = scmp.ne.s32.totalorder %s195, %s211
    %p213 = scmp.eq.s32.totalorder %s19, 0
    %p214 = por %p212, %p213
    %p215 = scmp.le.s32.totalorder 1, %s13
    %p216 = scmp.lt.s32.totalorder %s13, 3
    %p217 = pnand %p215, %p216
    %p218 = pneg %p217
    // Predicated region
    $region9: #{basic_block_forward.1} parent=5 // pred_check
      _
    $region10: #{basic_block_forward.1} parent=5 // pred_check_branch
      %220 = sbr.rel (%p217) target = $region12
    $region11: #{basic_block_forward.1} parent=5 // pred_region
      %s221 = ssub.s32 %s13, 1
      // Predicated region
      $region13: #{basic_block_forward.1} parent=11 // pred_check
        %p222 = pneg %p74
      $region14: #{basic_block_forward.1} parent=11 // pred_check_branch
        %224 = sbr.rel (%p222) target = $region16
      $region15: #{basic_block_forward.1} parent=11 // pred_region
        _
      $region16: #{basic_block_forward.1} parent=11 // pred_fallthru
        _
      // Predicated region
      $region17: #{basic_block_forward.1} parent=11 // pred_check
        %p225 = pneg %p95
      $region18: #{basic_block_forward.1} parent=11 // pred_check_branch
        %227 = sbr.rel (%p225) target = $region20
      $region19: #{basic_block_forward.1} parent=11 // pred_region
        _
      $region20: #{basic_block_forward.1} parent=11 // pred_fallthru
        _
      // Predicated region
      $region21: #{basic_block_forward.1} parent=11 // pred_check
        %p228 = pneg %p116
      $region22: #{basic_block_forward.1} parent=11 // pred_check_branch
        %230 = sbr.rel (%p228) target = $region24
      $region23: #{basic_block_forward.1} parent=11 // pred_region
        _
      $region24: #{basic_block_forward.1} parent=11 // pred_fallthru
        _
      // Predicated region
      $region25: #{basic_block_forward.1} parent=11 // pred_check
        %p231 = pneg %p137
      $region26: #{basic_block_forward.1} parent=11 // pred_check_branch
        %233 = sbr.rel (%p231) target = $region28
      $region27: #{basic_block_forward.1} parent=11 // pred_region
        _
      $region28: #{basic_block_forward.1} parent=11 // pred_fallthru
        _
      // Predicated region
      $region29: #{basic_block_forward.1} parent=11 // pred_check
        %p234 = pneg %p158
      $region30: #{basic_block_forward.1} parent=11 // pred_check_branch
        %236 = sbr.rel (%p234) target = $region32
      $region31: #{basic_block_forward.1} parent=11 // pred_region
        _
      $region32: #{basic_block_forward.1} parent=11 // pred_fallthru
        _
      // Predicated region
      $region33: #{basic_block_forward.1} parent=11 // pred_check
        %p237 = pneg %p179
      $region34: #{basic_block_forward.1} parent=11 // pred_check_branch
        %239 = sbr.rel (%p237) target = $region36
      $region35: #{basic_block_forward.1} parent=11 // pred_region
        _
      $region36: #{basic_block_forward.1} parent=11 // pred_fallthru
        _
    $region12: #{basic_block_forward.1} parent=5 // pred_fallthru
      _
    %p240 = scmp.lt.s32.totalorder %s13, 2
    // Predicated region
    $region37: #{basic_block_forward.1} parent=5 // pred_check
      %p241 = pneg %p240
    $region38: #{basic_block_forward.1} parent=5 // pred_check_branch
      %243 = sbr.rel (%p241) target = $region40
    $region39: #{basic_block_forward.1} parent=5 // pred_region
      // Predicated region
      $region41: #{basic_block_forward.1} parent=39 // pred_check
        %p244 = pneg %p47
      $region42: #{basic_block_forward.1} parent=39 // pred_check_branch
        %246 = sbr.rel (%p244) target = $region44
      $region43: #{basic_block_forward.1} parent=39 // pred_region
        %p247 = scmp.lt.s32.totalorder %s20, 1
        %s248 = scalar_select %p247, %s20, 1
        %p249 = scmp.lt.s32.totalorder %s21, 0
        %s250 = scalar_select %p249, %s21, 0
        %s251 = smul.addr %s250, 100
        %s252 = smul.addr %s248, 100
        %s253 = sadd.s32 %s251, %s252
        %s254 = smul.addr %s253, 4
        %s255 = scalar_lea.vmem %s0, %s254
      $region44: #{basic_block_forward.1} parent=39 // pred_fallthru
        _
    $region40: #{basic_block_forward.1} parent=5 // pred_fallthru
      _
    %p256 = scmp.le.s32.totalorder 1, %s13
    %p257 = scmp.lt.s32.totalorder %s13, 3
    %p258 = pnand %p256, %p257
    %p259 = pneg %p258
    // Predicated region
    $region45: #{basic_block_forward.1} parent=5 // pred_check
      _
    $region46: #{basic_block_forward.1} parent=5 // pred_check_branch
      %261 = sbr.rel (%p258) target = $region48
    $region47: #{basic_block_forward.1} parent=5 // pred_region
      %s262 = ssub.s32 %s13, 1
      %p263 = scmp.lt.s32.totalorder %s22, 1
      %s264 = scalar_select %p263, %s22, 1
      %p265 = scmp.lt.s32.totalorder %s23, 0
      %s266 = scalar_select %p265, %s23, 0
      %s267 = smul.addr %s266, 100
      %s268 = smul.addr %s264, 100
      %s269 = sadd.s32 %s267, %s268
      %s270 = smul.addr %s269, 4
      %s271 = scalar_lea.vmem %s0, %s270
      %p272 = pneg %p53
      %p273 = pneg %p50
      %p274 = pneg %p74
      %p275 = pneg %p71
      %p276 = pneg %p95
      %p277 = pneg %p92
      %p278 = pneg %p116
      %p279 = pneg %p113
      %p280 = pneg %p137
      %p281 = pneg %p134
      %p282 = pneg %p158
      %p283 = pneg %p155
      %p284 = pneg %p179
      %p285 = pneg %p176
      %p286 = pneg %p207
      %p287 = pneg %p204
      %s288 = smul.u32 16, %s23
      %p289 = scmp.lt.s32.totalorder %s22, 1
      %s290 = scalar_select %p289, %s22, 1
      %p291 = scmp.lt.s32.totalorder %s288, 15
      %s292 = scalar_select %p291, %s288, 15
      %s293 = smul.addr %s292, 2
      %s294 = smul.addr %s290, 32
      %s295 = sadd.s32 %s293, %s294
      %s296 = smul.addr %s295, 4
      %s297 = scalar_lea.vmem %s7, %s296
      %p298 = scmp.lt.s32.totalorder %s22, 1
      %s299 = scalar_select %p298, %s22, 1
      %p300 = scmp.lt.s32.totalorder %s23, 0
      %s301 = scalar_select %p300, %s23, 0
      %s302 = smul.addr %s301, 100
      %s303 = smul.addr %s299, 100
      %s304 = sadd.s32 %s302, %s303
      %s305 = smul.addr %s304, 4
      %s306 = scalar_lea.vmem %s0, %s305
      %s307 = smul.u32 16, %s23
      %p308 = scmp.lt.s32.totalorder %s22, 1
      %s309 = scalar_select %p308, %s22, 1
      %p310 = scmp.lt.s32.totalorder %s307, 15
      %s311 = scalar_select %p310, %s307, 15
      %s312 = smul.addr %s311, 2
      %s313 = smul.addr %s309, 32
      %s314 = sadd.s32 %s312, %s313
      %s315 = smul.addr %s314, 4
      %s316 = scalar_lea.vmem %s7, %s315
      %s317 = smul.u32 16, %s23
      %v319 = vld [vmem:[%s306] sm:$0xf]
      %v320 = vld [vmem:[%s306 + $0x4] sm:$0xf]
      %v321 = vld [vmem:[%s306 + $0x8] sm:$0xf]
      %v322 = vld [vmem:[%s306 + $0xc] sm:$0xf]
      %v323 = vld [vmem:[%s306 + $0x14] sm:$0xf]
      %v324 = vld [vmem:[%s306 + $0x18] sm:$0xf]
      %v325 = vld [vmem:[%s306 + $0x1c] sm:$0xf]
      %v326 = vld [vmem:[%s306 + $0x20] sm:$0xf]
      %v327 = vld [vmem:[%s306 + $0x28] sm:$0xf]
      %v328 = vld [vmem:[%s306 + $0x2c] sm:$0xf]
      %v329 = vld [vmem:[%s306 + $0x30] sm:$0xf]
      %v330 = vld [vmem:[%s306 + $0x34] sm:$0xf]
      %v331 = vld [vmem:[%s306 + $0x3c] sm:$0xf]
      %v332 = vld [vmem:[%s306 + $0x40] sm:$0xf]
      %v333 = vld [vmem:[%s306 + $0x44] sm:$0xf]
      %v334 = vld [vmem:[%s306 + $0x48] sm:$0xf]
      %v335 = vld [vmem:[%s306 + $0x50] sm:$0xf]
      %v336 = vld [vmem:[%s306 + $0x54] sm:$0xf]
      %v337 = vld [vmem:[%s306 + $0x58] sm:$0xf]
      %v338 = vld [vmem:[%s306 + $0x5c] sm:$0xf]
      %v339 = vld [vmem:[%s306 + $0x64] sm:$0xf]
      %v340 = vld [vmem:[%s306 + $0x68] sm:$0xf]
      %v341 = vld [vmem:[%s306 + $0x6c] sm:$0xf]
      %v342 = vld [vmem:[%s306 + $0x70] sm:$0xf]
      %v343 = vld [vmem:[%s306 + $0x78] sm:$0xf]
      %v344 = vld [vmem:[%s306 + $0x7c] sm:$0xf]
      %v345 = vld [vmem:[%s306 + $0x80] sm:$0xf]
      %v346 = vld [vmem:[%s306 + $0x84] sm:$0xf]
      %v347 = vld [vmem:[%s306 + $0x8c] sm:$0xf]
      %v348 = vld [vmem:[%s306 + $0x90] sm:$0xf]
      %v349 = vld [vmem:[%s306 + $0x94] sm:$0xf]
      %v350 = vld [vmem:[%s306 + $0x98] sm:$0xf]
      %v351 = vld [vmem:[%s306 + $0xa0] sm:$0xf]
      %v352 = vld [vmem:[%s306 + $0xa4] sm:$0xf]
      %v353 = vld [vmem:[%s306 + $0xa8] sm:$0xf]
      %v354 = vld [vmem:[%s306 + $0xac] sm:$0xf]
      %v355 = vld [vmem:[%s306 + $0xb4] sm:$0xf]
      %v356 = vld [vmem:[%s306 + $0xb8] sm:$0xf]
      %v357 = vld [vmem:[%s306 + $0xbc] sm:$0xf]
      %v358 = vld [vmem:[%s306 + $0xc0] sm:$0xf]
      %v359 = vld [vmem:[%s306 + $0xc8] sm:$0xf]
      %v360 = vld [vmem:[%s306 + $0xcc] sm:$0xf]
      %v361 = vld [vmem:[%s306 + $0xd0] sm:$0xf]
      %v362 = vld [vmem:[%s306 + $0xd4] sm:$0xf]
      %v363 = vld [vmem:[%s306 + $0xdc] sm:$0xf]
      %v364 = vld [vmem:[%s306 + $0xe0] sm:$0xf]
      %v365 = vld [vmem:[%s306 + $0xe4] sm:$0xf]
      %v366 = vld [vmem:[%s306 + $0xe8] sm:$0xf]
      %v367 = vld [vmem:[%s306 + $0xf0] sm:$0xf]
      %v368 = vld [vmem:[%s306 + $0xf4] sm:$0xf]
      %v369 = vld [vmem:[%s306 + $0xf8] sm:$0xf]
      %v370 = vld [vmem:[%s306 + $0xfc] sm:$0xf]
      %v371 = vld [vmem:[%s306 + $0x104] sm:$0xf]
      %v372 = vld [vmem:[%s306 + $0x108] sm:$0xf]
      %v373 = vld [vmem:[%s306 + $0x10c] sm:$0xf]
      %v374 = vld [vmem:[%s306 + $0x110] sm:$0xf]
      %v375 = vld [vmem:[%s306 + $0x118] sm:$0xf]
      %v376 = vld [vmem:[%s306 + $0x11c] sm:$0xf]
      %v377 = vld [vmem:[%s306 + $0x120] sm:$0xf]
      %v378 = vld [vmem:[%s306 + $0x124] sm:$0xf]
      %v379 = vld [vmem:[%s306 + $0x12c] sm:$0xf]
      %v380 = vld [vmem:[%s306 + $0x130] sm:$0xf]
      %v381 = vld [vmem:[%s306 + $0x134] sm:$0xf]
      %v382 = vld [vmem:[%s306 + $0x138] sm:$0xf]
      %v383 = vld [vmem:[%s306 + $0x140] sm:$0xf]
      %v384 = vld [vmem:[%s306 + $0x144] sm:$0xf]
      %v385 = vld [vmem:[%s306 + $0x148] sm:$0xf]
      %v386 = vld [vmem:[%s306 + $0x14c] sm:$0xf]
      %v387 = vld [vmem:[%s306 + $0x154] sm:$0xf]
      %v388 = vld [vmem:[%s306 + $0x158] sm:$0xf]
      %v389 = vld [vmem:[%s306 + $0x15c] sm:$0xf]
      %v390 = vld [vmem:[%s306 + $0x160] sm:$0xf]
      %v463 = vunpack.c.l.b16 %v319
      %v464 = vunpack.c.l.b16 %v320
      %v465 = vunpack.c.l.b16 %v321
      %v466 = vunpack.c.l.b16 %v322
      %v467 = vunpack.c.l.b16 %v323
      %v468 = vunpack.c.l.b16 %v324
      %v469 = vunpack.c.l.b16 %v325
      %v470 = vunpack.c.l.b16 %v326
      %v471 = vunpack.c.l.b16 %v327
      %v472 = vunpack.c.l.b16 %v328
      %v473 = vunpack.c.l.b16 %v329
      %v474 = vunpack.c.l.b16 %v330
      %v475 = vunpack.c.l.b16 %v331
      %v476 = vunpack.c.l.b16 %v332
      %v477 = vunpack.c.l.b16 %v333
      %v478 = vunpack.c.l.b16 %v334
      %v479 = vunpack.c.l.b16 %v335
      %v480 = vunpack.c.l.b16 %v336
      %v481 = vunpack.c.l.b16 %v337
      %v482 = vunpack.c.l.b16 %v338
      %v483 = vunpack.c.l.b16 %v339
      %v484 = vunpack.c.l.b16 %v340
      %v485 = vunpack.c.l.b16 %v341
      %v486 = vunpack.c.l.b16 %v342
      %v487 = vunpack.c.l.b16 %v343
      %v488 = vunpack.c.l.b16 %v344
      %v489 = vunpack.c.l.b16 %v345
      %v490 = vunpack.c.l.b16 %v346
      %v491 = vunpack.c.l.b16 %v347
      %v492 = vunpack.c.l.b16 %v348
      %v493 = vunpack.c.l.b16 %v349
      %v494 = vunpack.c.l.b16 %v350
      %v495 = vunpack.c.l.b16 %v351
      %v496 = vunpack.c.l.b16 %v352
      %v497 = vunpack.c.l.b16 %v353
      %v498 = vunpack.c.l.b16 %v354
      %v499 = vunpack.c.l.b16 %v355
      %v500 = vunpack.c.l.b16 %v356
      %v501 = vunpack.c.l.b16 %v357
      %v502 = vunpack.c.l.b16 %v358
      %v503 = vunpack.c.l.b16 %v359
      %v504 = vunpack.c.l.b16 %v360
      %v505 = vunpack.c.l.b16 %v361
      %v506 = vunpack.c.l.b16 %v362
      %v507 = vunpack.c.l.b16 %v363
      %v508 = vunpack.c.l.b16 %v364
      %v509 = vunpack.c.l.b16 %v365
      %v510 = vunpack.c.l.b16 %v366
      %v511 = vunpack.c.l.b16 %v367
      %v512 = vunpack.c.l.b16 %v368
      %v513 = vunpack.c.l.b16 %v369
      %v514 = vunpack.c.l.b16 %v370
      %v515 = vunpack.c.l.b16 %v371
      %v516 = vunpack.c.l.b16 %v372
      %v517 = vunpack.c.l.b16 %v373
      %v518 = vunpack.c.l.b16 %v374
      %v519 = vunpack.c.l.b16 %v375
      %v520 = vunpack.c.l.b16 %v376
      %v521 = vunpack.c.l.b16 %v377
      %v522 = vunpack.c.l.b16 %v378
      %v523 = vunpack.c.l.b16 %v379
      %v524 = vunpack.c.l.b16 %v380
      %v525 = vunpack.c.l.b16 %v381
      %v526 = vunpack.c.l.b16 %v382
      %v527 = vunpack.c.l.b16 %v383
      %v528 = vunpack.c.l.b16 %v384
      %v529 = vunpack.c.l.b16 %v385
      %v530 = vunpack.c.l.b16 %v386
      %v531 = vunpack.c.l.b16 %v387
      %v532 = vunpack.c.l.b16 %v388
      %v533 = vunpack.c.l.b16 %v389
      %v534 = vunpack.c.l.b16 %v390
      %v535 = vpack.c.b16 %v464, %v463
      %v536 = vpack.c.b16 %v466, %v465
      %v537 = vpack.c.b16 %v468, %v467
      %v538 = vpack.c.b16 %v470, %v469
      %v539 = vpack.c.b16 %v472, %v471
      %v540 = vpack.c.b16 %v474, %v473
      %v541 = vpack.c.b16 %v476, %v475
      %v542 = vpack.c.b16 %v478, %v477
      %v543 = vpack.c.b16 %v480, %v479
      %v544 = vpack.c.b16 %v482, %v481
      %v545 = vpack.c.b16 %v484, %v483
      %v546 = vpack.c.b16 %v486, %v485
      %v547 = vpack.c.b16 %v488, %v487
      %v548 = vpack.c.b16 %v490, %v489
      %v549 = vpack.c.b16 %v492, %v491
      %v550 = vpack.c.b16 %v494, %v493
      %v551 = vpack.c.b16 %v496, %v495
      %v552 = vpack.c.b16 %v498, %v497
      %v553 = vpack.c.b16 %v500, %v499
      %v554 = vpack.c.b16 %v502, %v501
      %v555 = vpack.c.b16 %v504, %v503
      %v556 = vpack.c.b16 %v506, %v505
      %v557 = vpack.c.b16 %v508, %v507
      %v558 = vpack.c.b16 %v510, %v509
      %v559 = vpack.c.b16 %v512, %v511
      %v560 = vpack.c.b16 %v514, %v513
      %v561 = vpack.c.b16 %v516, %v515
      %v562 = vpack.c.b16 %v518, %v517
      %v563 = vpack.c.b16 %v520, %v519
      %v564 = vpack.c.b16 %v522, %v521
      %v565 = vpack.c.b16 %v524, %v523
      %v566 = vpack.c.b16 %v526, %v525
      %v567 = vpack.c.b16 %v528, %v527
      %v568 = vpack.c.b16 %v530, %v529
      %v569 = vpack.c.b16 %v532, %v531
      %v570 = vpack.c.b16 %v534, %v533
      %vm607 = vcmask 31744
      %608 = vst.msk [vmem:[#allocation2] sm:$0xff] %vm607, %v535
      %609 = vst.msk [vmem:[#allocation2 + $0x8] sm:$0xff] %vm607, %v536
      %610 = vst.msk [vmem:[#allocation2 + $0x10] sm:$0xff] %vm607, %v537
      %611 = vst.msk [vmem:[#allocation2 + $0x18] sm:$0xff] %vm607, %v538
      %612 = vst.msk [vmem:[#allocation2 + $0x20] sm:$0xff] %vm607, %v539
      %613 = vst.msk [vmem:[#allocation2 + $0x28] sm:$0xff] %vm607, %v540
      %614 = vst.msk [vmem:[#allocation2 + $0x30] sm:$0xff] %vm607, %v541
      %615 = vst.msk [vmem:[#allocation2 + $0x38] sm:$0xff] %vm607, %v542
      %616 = vst.msk [vmem:[#allocation2 + $0x40] sm:$0xff] %vm607, %v543
      %617 = vst.msk [vmem:[#allocation2 + $0x48] sm:$0xff] %vm607, %v544
      %618 = vst.msk [vmem:[#allocation2 + $0x50] sm:$0xff] %vm607, %v545
      %619 = vst.msk [vmem:[#allocation2 + $0x58] sm:$0xff] %vm607, %v546
      %620 = vst.msk [vmem:[#allocation2 + $0x60] sm:$0xff] %vm607, %v547
      %621 = vst.msk [vmem:[#allocation2 + $0x68] sm:$0xff] %vm607, %v548
      %622 = vst.msk [vmem:[#allocation2 + $0x70] sm:$0xff] %vm607, %v549
      %623 = vst.msk [vmem:[#allocation2 + $0x78] sm:$0xff] %vm607, %v550
      %624 = vst.msk [vmem:[#allocation2 + $0x80] sm:$0xff] %vm607, %v551
      %625 = vst.msk [vmem:[#allocation2 + $0x88] sm:$0xff] %vm607, %v552
      %626 = vst.msk [vmem:[#allocation2 + $0x90] sm:$0xff] %vm607, %v553
      %627 = vst.msk [vmem:[#allocation2 + $0x98] sm:$0xff] %vm607, %v554
      %628 = vst.msk [vmem:[#allocation2 + $0xa0] sm:$0xff] %vm607, %v555
      %629 = vst.msk [vmem:[#allocation2 + $0xa8] sm:$0xff] %vm607, %v556
      %630 = vst.msk [vmem:[#allocation2 + $0xb0] sm:$0xff] %vm607, %v557
      %631 = vst.msk [vmem:[#allocation2 + $0xb8] sm:$0xff] %vm607, %v558
      %632 = vst.msk [vmem:[#allocation2 + $0xc0] sm:$0xff] %vm607, %v559
      %633 = vst.msk [vmem:[#allocation2 + $0xc8] sm:$0xff] %vm607, %v560
      %634 = vst.msk [vmem:[#allocation2 + $0xd0] sm:$0xff] %vm607, %v561
      %635 = vst.msk [vmem:[#allocation2 + $0xd8] sm:$0xff] %vm607, %v562
      %636 = vst.msk [vmem:[#allocation2 + $0xe0] sm:$0xff] %vm607, %v563
      %637 = vst.msk [vmem:[#allocation2 + $0xe8] sm:$0xff] %vm607, %v564
      %638 = vst.msk [vmem:[#allocation2 + $0xf0] sm:$0xff] %vm607, %v565
      %639 = vst.msk [vmem:[#allocation2 + $0xf8] sm:$0xff] %vm607, %v566
      %640 = vst.msk [vmem:[#allocation2 + $0x100] sm:$0xff] %vm607, %v567
      %641 = vst.msk [vmem:[#allocation2 + $0x108] sm:$0xff] %vm607, %v568
      %642 = vst.msk [vmem:[#allocation2 + $0x110] sm:$0xff] %vm607, %v569
      %643 = vst.msk [vmem:[#allocation2 + $0x118] sm:$0xff] %vm607, %v570
      %v644 = vld [vmem:[%s306] sm:$0xf]
      %v645 = vld [vmem:[%s306 + $0x4] sm:$0xf]
      %v646 = vld [vmem:[%s306 + $0x8] sm:$0xf]
      %v647 = vld [vmem:[%s306 + $0xc] sm:$0xf]
      %v648 = vld [vmem:[%s306 + $0x10] sm:$0x1]
      %v649 = vld [vmem:[%s306 + $0x14] sm:$0xf]
      %v650 = vld [vmem:[%s306 + $0x18] sm:$0xf]
      %v651 = vld [vmem:[%s306 + $0x1c] sm:$0xf]
      %v652 = vld [vmem:[%s306 + $0x20] sm:$0xf]
      %v653 = vld [vmem:[%s306 + $0x24] sm:$0x1]
      %v654 = vld [vmem:[%s306 + $0x28] sm:$0xf]
      %v655 = vld [vmem:[%s306 + $0x2c] sm:$0xf]
      %v656 = vld [vmem:[%s306 + $0x30] sm:$0xf]
      %v657 = vld [vmem:[%s306 + $0x34] sm:$0xf]
      %v658 = vld [vmem:[%s306 + $0x38] sm:$0x1]
      %v659 = vld [vmem:[%s306 + $0x3c] sm:$0xf]
      %v660 = vld [vmem:[%s306 + $0x40] sm:$0xf]
      %v661 = vld [vmem:[%s306 + $0x44] sm:$0xf]
      %v662 = vld [vmem:[%s306 + $0x48] sm:$0xf]
      %v663 = vld [vmem:[%s306 + $0x4c] sm:$0x1]
      %v664 = vld [vmem:[%s306 + $0x50] sm:$0xf]
      %v665 = vld [vmem:[%s306 + $0x54] sm:$0xf]
      %v666 = vld [vmem:[%s306 + $0x58] sm:$0xf]
      %v667 = vld [vmem:[%s306 + $0x5c] sm:$0xf]
      %v668 = vld [vmem:[%s306 + $0x60] sm:$0x1]
      %v669 = vld [vmem:[%s306 + $0x64] sm:$0xf]
      %v670 = vld [vmem:[%s306 + $0x68] sm:$0xf]
      %v671 = vld [vmem:[%s306 + $0x6c] sm:$0xf]
      %v672 = vld [vmem:[%s306 + $0x70] sm:$0xf]
      %v673 = vld [vmem:[%s306 + $0x74] sm:$0x1]
      %v674 = vld [vmem:[%s306 + $0x78] sm:$0xf]
      %v675 = vld [vmem:[%s306 + $0x7c] sm:$0xf]
      %v676 = vld [vmem:[%s306 + $0x80] sm:$0xf]
      %v677 = vld [vmem:[%s306 + $0x84] sm:$0xf]
      %v678 = vld [vmem:[%s306 + $0x88] sm:$0x1]
      %v679 = vld [vmem:[%s306 + $0x8c] sm:$0xf]
      %v680 = vld [vmem:[%s306 + $0x90] sm:$0xf]
      %v681 = vld [vmem:[%s306 + $0x94] sm:$0xf]
      %v682 = vld [vmem:[%s306 + $0x98] sm:$0xf]
      %v683 = vld [vmem:[%s306 + $0x9c] sm:$0x1]
      %v684 = vld [vmem:[%s306 + $0xa0] sm:$0xf]
      %v685 = vld [vmem:[%s306 + $0xa4] sm:$0xf]
      %v686 = vld [vmem:[%s306 + $0xa8] sm:$0xf]
      %v687 = vld [vmem:[%s306 + $0xac] sm:$0xf]
      %v688 = vld [vmem:[%s306 + $0xb0] sm:$0x1]
      %v689 = vld [vmem:[%s306 + $0xb4] sm:$0xf]
      %v690 = vld [vmem:[%s306 + $0xb8] sm:$0xf]
      %v691 = vld [vmem:[%s306 + $0xbc] sm:$0xf]
      %v692 = vld [vmem:[%s306 + $0xc0] sm:$0xf]
      %v693 = vld [vmem:[%s306 + $0xc4] sm:$0x1]
      %v694 = vld [vmem:[%s306 + $0xc8] sm:$0xf]
      %v695 = vld [vmem:[%s306 + $0xcc] sm:$0xf]
      %v696 = vld [vmem:[%s306 + $0xd0] sm:$0xf]
      %v697 = vld [vmem:[%s306 + $0xd4] sm:$0xf]
      %v698 = vld [vmem:[%s306 + $0xd8] sm:$0x1]
      %v699 = vld [vmem:[%s306 + $0xdc] sm:$0xf]
      %v700 = vld [vmem:[%s306 + $0xe0] sm:$0xf]
      %v701 = vld [vmem:[%s306 + $0xe4] sm:$0xf]
      %v702 = vld [vmem:[%s306 + $0xe8] sm:$0xf]
      %v703 = vld [vmem:[%s306 + $0xec] sm:$0x1]
      %v704 = vld [vmem:[%s306 + $0xf0] sm:$0xf]
      %v705 = vld [vmem:[%s306 + $0xf4] sm:$0xf]
      %v706 = vld [vmem:[%s306 + $0xf8] sm:$0xf]
      %v707 = vld [vmem:[%s306 + $0xfc] sm:$0xf]
      %v708 = vld [vmem:[%s306 + $0x100] sm:$0x1]
      %v709 = vld [vmem:[%s306 + $0x104] sm:$0xf]
      %v710 = vld [vmem:[%s306 + $0x108] sm:$0xf]
      %v711 = vld [vmem:[%s306 + $0x10c] sm:$0xf]
      %v712 = vld [vmem:[%s306 + $0x110] sm:$0xf]
      %v713 = vld [vmem:[%s306 + $0x114] sm:$0x1]
      %v714 = vld [vmem:[%s306 + $0x118] sm:$0xf]
      %v715 = vld [vmem:[%s306 + $0x11c] sm:$0xf]
      %v716 = vld [vmem:[%s306 + $0x120] sm:$0xf]
      %v717 = vld [vmem:[%s306 + $0x124] sm:$0xf]
      %v718 = vld [vmem:[%s306 + $0x128] sm:$0x1]
      %v719 = vld [vmem:[%s306 + $0x12c] sm:$0xf]
      %v720 = vld [vmem:[%s306 + $0x130] sm:$0xf]
      %v721 = vld [vmem:[%s306 + $0x134] sm:$0xf]
      %v722 = vld [vmem:[%s306 + $0x138] sm:$0xf]
      %v723 = vld [vmem:[%s306 + $0x13c] sm:$0x1]
      %v724 = vld [vmem:[%s306 + $0x140] sm:$0xf]
      %v725 = vld [vmem:[%s306 + $0x144] sm:$0xf]
      %v726 = vld [vmem:[%s306 + $0x148] sm:$0xf]
      %v727 = vld [vmem:[%s306 + $0x14c] sm:$0xf]
      %v728 = vld [vmem:[%s306 + $0x150] sm:$0x1]
      %v729 = vld [vmem:[%s306 + $0x154] sm:$0xf]
      %v730 = vld [vmem:[%s306 + $0x158] sm:$0xf]
      %v731 = vld [vmem:[%s306 + $0x15c] sm:$0xf]
      %v732 = vld [vmem:[%s306 + $0x160] sm:$0xf]
      %v733 = vld [vmem:[%s306 + $0x164] sm:$0x1]
      %vm734 = vsmask.f32 3328
      %vm735 = vsmask.f32 7440
      %vm736 = vmor %vm734, %vm735
      %v738 = vshrl.u32 %v644, 16
      %v740 = vrot.slane %v738, 4
      %v741 = vshll.u32 %v644, 16
      %v743 = vrot.slane %v741, 5
      %v744 = vor.u32 %v740, %v743
      %v745 = vrot.slane %v744, 4
      %v747 = vshll.u32 %v645, 16
      %v749 = vrot.slane %v747, 5
      %v750 = vsel %vm736, %v745, %v749
      %v751 = vshrl.u32 %v645, 16
      %v753 = vrot.slane %v751, 4
      %v754 = vor.u32 %v753, %v749
      %v755 = vrot.slane %v754, 4
      %v757 = vshll.u32 %v646, 16
      %v759 = vrot.slane %v757, 5
      %v760 = vsel %vm736, %v755, %v759
      %v761 = vshrl.u32 %v646, 16
      %v763 = vrot.slane %v761, 4
      %v764 = vor.u32 %v763, %v759
      %v765 = vrot.slane %v764, 4
      %v767 = vshll.u32 %v647, 16
      %v769 = vrot.slane %v767, 5
      %v770 = vsel %vm736, %v765, %v769
      %v771 = vshrl.u32 %v647, 16
      %v773 = vrot.slane %v771, 4
      %v774 = vor.u32 %v773, %v769
      %v775 = vrot.slane %v774, 4
      %v777 = vshll.u32 %v648, 16
      %v779 = vrot.slane %v777, 5
      %v780 = vsel %vm736, %v775, %v779
      %v782 = vshrl.u32 %v649, 16
      %v784 = vrot.slane %v782, 4
      %v785 = vshll.u32 %v649, 16
      %v787 = vrot.slane %v785, 5
      %v788 = vor.u32 %v784, %v787
      %v789 = vrot.slane %v788, 4
      %v791 = vshll.u32 %v650, 16
      %v793 = vrot.slane %v791, 5
      %v794 = vsel %vm736, %v789, %v793
      %v795 = vshrl.u32 %v650, 16
      %v797 = vrot.slane %v795, 4
      %v798 = vor.u32 %v797, %v793
      %v799 = vrot.slane %v798, 4
      %v801 = vshll.u32 %v651, 16
      %v803 = vrot.slane %v801, 5
      %v804 = vsel %vm736, %v799, %v803
      %v805 = vshrl.u32 %v651, 16
      %v807 = vrot.slane %v805, 4
      %v808 = vor.u32 %v807, %v803
      %v809 = vrot.slane %v808, 4
      %v811 = vshll.u32 %v652, 16
      %v813 = vrot.slane %v811, 5
      %v814 = vsel %vm736, %v809, %v813
      %v815 = vshrl.u32 %v652, 16
      %v817 = vrot.slane %v815, 4
      %v818 = vor.u32 %v817, %v813
      %v819 = vrot.slane %v818, 4
      %v821 = vshll.u32 %v653, 16
      %v823 = vrot.slane %v821, 5
      %v824 = vsel %vm736, %v819, %v823
      %v826 = vshrl.u32 %v654, 16
      %v828 = vrot.slane %v826, 4
      %v829 = vshll.u32 %v654, 16
      %v831 = vrot.slane %v829, 5
      %v832 = vor.u32 %v828, %v831
      %v833 = vrot.slane %v832, 4
      %v835 = vshll.u32 %v655, 16
      %v837 = vrot.slane %v835, 5
      %v838 = vsel %vm736, %v833, %v837
      %v839 = vshrl.u32 %v655, 16
      %v841 = vrot.slane %v839, 4
      %v842 = vor.u32 %v841, %v837
      %v843 = vrot.slane %v842, 4
      %v845 = vshll.u32 %v656, 16
      %v847 = vrot.slane %v845, 5
      %v848 = vsel %vm736, %v843, %v847
      %v849 = vshrl.u32 %v656, 16
      %v851 = vrot.slane %v849, 4
      %v852 = vor.u32 %v851, %v847
      %v853 = vrot.slane %v852, 4
      %v855 = vshll.u32 %v657, 16
      %v857 = vrot.slane %v855, 5
      %v858 = vsel %vm736, %v853, %v857
      %v859 = vshrl.u32 %v657, 16
      %v861 = vrot.slane %v859, 4
      %v862 = vor.u32 %v861, %v857
      %v863 = vrot.slane %v862, 4
      %v865 = vshll.u32 %v658, 16
      %v867 = vrot.slane %v865, 5
      %v868 = vsel %vm736, %v863, %v867
      %v870 = vshrl.u32 %v659, 16
      %v872 = vrot.slane %v870, 4
      %v873 = vshll.u32 %v659, 16
      %v875 = vrot.slane %v873, 5
      %v876 = vor.u32 %v872, %v875
      %v877 = vrot.slane %v876, 4
      %v879 = vshll.u32 %v660, 16
      %v881 = vrot.slane %v879, 5
      %v882 = vsel %vm736, %v877, %v881
      %v883 = vshrl.u32 %v660, 16
      %v885 = vrot.slane %v883, 4
      %v886 = vor.u32 %v885, %v881
      %v887 = vrot.slane %v886, 4
      %v889 = vshll.u32 %v661, 16
      %v891 = vrot.slane %v889, 5
      %v892 = vsel %vm736, %v887, %v891
      %v893 = vshrl.u32 %v661, 16
      %v895 = vrot.slane %v893, 4
      %v896 = vor.u32 %v895, %v891
      %v897 = vrot.slane %v896, 4
      %v899 = vshll.u32 %v662, 16
      %v901 = vrot.slane %v899, 5
      %v902 = vsel %vm736, %v897, %v901
      %v903 = vshrl.u32 %v662, 16
      %v905 = vrot.slane %v903, 4
      %v906 = vor.u32 %v905, %v901
      %v907 = vrot.slane %v906, 4
      %v909 = vshll.u32 %v663, 16
      %v911 = vrot.slane %v909, 5
      %v912 = vsel %vm736, %v907, %v911
      %v914 = vshrl.u32 %v664, 16
      %v916 = vrot.slane %v914, 4
      %v917 = vshll.u32 %v664, 16
      %v919 = vrot.slane %v917, 5
      %v920 = vor.u32 %v916, %v919
      %v921 = vrot.slane %v920, 4
      %v923 = vshll.u32 %v665, 16
      %v925 = vrot.slane %v923, 5
      %v926 = vsel %vm736, %v921, %v925
      %v927 = vshrl.u32 %v665, 16
      %v929 = vrot.slane %v927, 4
      %v930 = vor.u32 %v929, %v925
      %v931 = vrot.slane %v930, 4
      %v933 = vshll.u32 %v666, 16
      %v935 = vrot.slane %v933, 5
      %v936 = vsel %vm736, %v931, %v935
      %v937 = vshrl.u32 %v666, 16
      %v939 = vrot.slane %v937, 4
      %v940 = vor.u32 %v939, %v935
      %v941 = vrot.slane %v940, 4
      %v943 = vshll.u32 %v667, 16
      %v945 = vrot.slane %v943, 5
      %v946 = vsel %vm736, %v941, %v945
      %v947 = vshrl.u32 %v667, 16
      %v949 = vrot.slane %v947, 4
      %v950 = vor.u32 %v949, %v945
      %v951 = vrot.slane %v950, 4
      %v953 = vshll.u32 %v668, 16
      %v955 = vrot.slane %v953, 5
      %v956 = vsel %vm736, %v951, %v955
      %v958 = vshrl.u32 %v669, 16
      %v960 = vrot.slane %v958, 4
      %v961 = vshll.u32 %v669, 16
      %v963 = vrot.slane %v961, 5
      %v964 = vor.u32 %v960, %v963
      %v965 = vrot.slane %v964, 4
      %v967 = vshll.u32 %v670, 16
      %v969 = vrot.slane %v967, 5
      %v970 = vsel %vm736, %v965, %v969
      %v971 = vshrl.u32 %v670, 16
      %v973 = vrot.slane %v971, 4
      %v974 = vor.u32 %v973, %v969
      %v975 = vrot.slane %v974, 4
      %v977 = vshll.u32 %v671, 16
      %v979 = vrot.slane %v977, 5
      %v980 = vsel %vm736, %v975, %v979
      %v981 = vshrl.u32 %v671, 16
      %v983 = vrot.slane %v981, 4
      %v984 = vor.u32 %v983, %v979
      %v985 = vrot.slane %v984, 4
      %v987 = vshll.u32 %v672, 16
      %v989 = vrot.slane %v987, 5
      %v990 = vsel %vm736, %v985, %v989
      %v991 = vshrl.u32 %v672, 16
      %v993 = vrot.slane %v991, 4
      %v994 = vor.u32 %v993, %v989
      %v995 = vrot.slane %v994, 4
      %v997 = vshll.u32 %v673, 16
      %v999 = vrot.slane %v997, 5
      %v1000 = vsel %vm736, %v995, %v999
      %v1002 = vshrl.u32 %v674, 16
      %v1004 = vrot.slane %v1002, 4
      %v1005 = vshll.u32 %v674, 16
      %v1007 = vrot.slane %v1005, 5
      %v1008 = vor.u32 %v1004, %v1007
      %v1009 = vrot.slane %v1008, 4
      %v1011 = vshll.u32 %v675, 16
      %v1013 = vrot.slane %v1011, 5
      %v1014 = vsel %vm736, %v1009, %v1013
      %v1015 = vshrl.u32 %v675, 16
      %v1017 = vrot.slane %v1015, 4
      %v1018 = vor.u32 %v1017, %v1013
      %v1019 = vrot.slane %v1018, 4
      %v1021 = vshll.u32 %v676, 16
      %v1023 = vrot.slane %v1021, 5
      %v1024 = vsel %vm736, %v1019, %v1023
      %v1025 = vshrl.u32 %v676, 16
      %v1027 = vrot.slane %v1025, 4
      %v1028 = vor.u32 %v1027, %v1023
      %v1029 = vrot.slane %v1028, 4
      %v1031 = vshll.u32 %v677, 16
      %v1033 = vrot.slane %v1031, 5
      %v1034 = vsel %vm736, %v1029, %v1033
      %v1035 = vshrl.u32 %v677, 16
      %v1037 = vrot.slane %v1035, 4
      %v1038 = vor.u32 %v1037, %v1033
      %v1039 = vrot.slane %v1038, 4
      %v1041 = vshll.u32 %v678, 16
      %v1043 = vrot.slane %v1041, 5
      %v1044 = vsel %vm736, %v1039, %v1043
      %v1046 = vshrl.u32 %v679, 16
      %v1048 = vrot.slane %v1046, 4
      %v1049 = vshll.u32 %v679, 16
      %v1051 = vrot.slane %v1049, 5
      %v1052 = vor.u32 %v1048, %v1051
      %v1053 = vrot.slane %v1052, 4
      %v1055 = vshll.u32 %v680, 16
      %v1057 = vrot.slane %v1055, 5
      %v1058 = vsel %vm736, %v1053, %v1057
      %v1059 = vshrl.u32 %v680, 16
      %v1061 = vrot.slane %v1059, 4
      %v1062 = vor.u32 %v1061, %v1057
      %v1063 = vrot.slane %v1062, 4
      %v1065 = vshll.u32 %v681, 16
      %v1067 = vrot.slane %v1065, 5
      %v1068 = vsel %vm736, %v1063, %v1067
      %v1069 = vshrl.u32 %v681, 16
      %v1071 = vrot.slane %v1069, 4
      %v1072 = vor.u32 %v1071, %v1067
      %v1073 = vrot.slane %v1072, 4
      %v1075 = vshll.u32 %v682, 16
      %v1077 = vrot.slane %v1075, 5
      %v1078 = vsel %vm736, %v1073, %v1077
      %v1079 = vshrl.u32 %v682, 16
      %v1081 = vrot.slane %v1079, 4
      %v1082 = vor.u32 %v1081, %v1077
      %v1083 = vrot.slane %v1082, 4
      %v1085 = vshll.u32 %v683, 16
      %v1087 = vrot.slane %v1085, 5
      %v1088 = vsel %vm736, %v1083, %v1087
      %v1090 = vshrl.u32 %v684, 16
      %v1092 = vrot.slane %v1090, 4
      %v1093 = vshll.u32 %v684, 16
      %v1095 = vrot.slane %v1093, 5
      %v1096 = vor.u32 %v1092, %v1095
      %v1097 = vrot.slane %v1096, 4
      %v1099 = vshll.u32 %v685, 16
      %v1101 = vrot.slane %v1099, 5
      %v1102 = vsel %vm736, %v1097, %v1101
      %v1103 = vshrl.u32 %v685, 16
      %v1105 = vrot.slane %v1103, 4
      %v1106 = vor.u32 %v1105, %v1101
      %v1107 = vrot.slane %v1106, 4
      %v1109 = vshll.u32 %v686, 16
      %v1111 = vrot.slane %v1109, 5
      %v1112 = vsel %vm736, %v1107, %v1111
      %v1113 = vshrl.u32 %v686, 16
      %v1115 = vrot.slane %v1113, 4
      %v1116 = vor.u32 %v1115, %v1111
      %v1117 = vrot.slane %v1116, 4
      %v1119 = vshll.u32 %v687, 16
      %v1121 = vrot.slane %v1119, 5
      %v1122 = vsel %vm736, %v1117, %v1121
      %v1123 = vshrl.u32 %v687, 16
      %v1125 = vrot.slane %v1123, 4
      %v1126 = vor.u32 %v1125, %v1121
      %v1127 = vrot.slane %v1126, 4
      %v1129 = vshll.u32 %v688, 16
      %v1131 = vrot.slane %v1129, 5
      %v1132 = vsel %vm736, %v1127, %v1131
      %v1134 = vshrl.u32 %v689, 16
      %v1136 = vrot.slane %v1134, 4
      %v1137 = vshll.u32 %v689, 16
      %v1139 = vrot.slane %v1137, 5
      %v1140 = vor.u32 %v1136, %v1139
      %v1141 = vrot.slane %v1140, 4
      %v1143 = vshll.u32 %v690, 16
      %v1145 = vrot.slane %v1143, 5
      %v1146 = vsel %vm736, %v1141, %v1145
      %v1147 = vshrl.u32 %v690, 16
      %v1149 = vrot.slane %v1147, 4
      %v1150 = vor.u32 %v1149, %v1145
      %v1151 = vrot.slane %v1150, 4
      %v1153 = vshll.u32 %v691, 16
      %v1155 = vrot.slane %v1153, 5
      %v1156 = vsel %vm736, %v1151, %v1155
      %v1157 = vshrl.u32 %v691, 16
      %v1159 = vrot.slane %v1157, 4
      %v1160 = vor.u32 %v1159, %v1155
      %v1161 = vrot.slane %v1160, 4
      %v1163 = vshll.u32 %v692, 16
      %v1165 = vrot.slane %v1163, 5
      %v1166 = vsel %vm736, %v1161, %v1165
      %v1167 = vshrl.u32 %v692, 16
      %v1169 = vrot.slane %v1167, 4
      %v1170 = vor.u32 %v1169, %v1165
      %v1171 = vrot.slane %v1170, 4
      %v1173 = vshll.u32 %v693, 16
      %v1175 = vrot.slane %v1173, 5
      %v1176 = vsel %vm736, %v1171, %v1175
      %v1178 = vshrl.u32 %v694, 16
      %v1180 = vrot.slane %v1178, 4
      %v1181 = vshll.u32 %v694, 16
      %v1183 = vrot.slane %v1181, 5
      %v1184 = vor.u32 %v1180, %v1183
      %v1185 = vrot.slane %v1184, 4
      %v1187 = vshll.u32 %v695, 16
      %v1189 = vrot.slane %v1187, 5
      %v1190 = vsel %vm736, %v1185, %v1189
      %v1191 = vshrl.u32 %v695, 16
      %v1193 = vrot.slane %v1191, 4
      %v1194 = vor.u32 %v1193, %v1189
      %v1195 = vrot.slane %v1194, 4
      %v1197 = vshll.u32 %v696, 16
      %v1199 = vrot.slane %v1197, 5
      %v1200 = vsel %vm736, %v1195, %v1199
      %v1201 = vshrl.u32 %v696, 16
      %v1203 = vrot.slane %v1201, 4
      %v1204 = vor.u32 %v1203, %v1199
      %v1205 = vrot.slane %v1204, 4
      %v1207 = vshll.u32 %v697, 16
      %v1209 = vrot.slane %v1207, 5
      %v1210 = vsel %vm736, %v1205, %v1209
      %v1211 = vshrl.u32 %v697, 16
      %v1213 = vrot.slane %v1211, 4
      %v1214 = vor.u32 %v1213, %v1209
      %v1215 = vrot.slane %v1214, 4
      %v1217 = vshll.u32 %v698, 16
      %v1219 = vrot.slane %v1217, 5
      %v1220 = vsel %vm736, %v1215, %v1219
      %v1222 = vshrl.u32 %v699, 16
      %v1224 = vrot.slane %v1222, 4
      %v1225 = vshll.u32 %v699, 16
      %v1227 = vrot.slane %v1225, 5
      %v1228 = vor.u32 %v1224, %v1227
      %v1229 = vrot.slane %v1228, 4
      %v1231 = vshll.u32 %v700, 16
      %v1233 = vrot.slane %v1231, 5
      %v1234 = vsel %vm736, %v1229, %v1233
      %v1235 = vshrl.u32 %v700, 16
      %v1237 = vrot.slane %v1235, 4
      %v1238 = vor.u32 %v1237, %v1233
      %v1239 = vrot.slane %v1238, 4
      %v1241 = vshll.u32 %v701, 16
      %v1243 = vrot.slane %v1241, 5
      %v1244 = vsel %vm736, %v1239, %v1243
      %v1245 = vshrl.u32 %v701, 16
      %v1247 = vrot.slane %v1245, 4
      %v1248 = vor.u32 %v1247, %v1243
      %v1249 = vrot.slane %v1248, 4
      %v1251 = vshll.u32 %v702, 16
      %v1253 = vrot.slane %v1251, 5
      %v1254 = vsel %vm736, %v1249, %v1253
      %v1255 = vshrl.u32 %v702, 16
      %v1257 = vrot.slane %v1255, 4
      %v1258 = vor.u32 %v1257, %v1253
      %v1259 = vrot.slane %v1258, 4
      %v1261 = vshll.u32 %v703, 16
      %v1263 = vrot.slane %v1261, 5
      %v1264 = vsel %vm736, %v1259, %v1263
      %v1266 = vshrl.u32 %v704, 16
      %v1268 = vrot.slane %v1266, 4
      %v1269 = vshll.u32 %v704, 16
      %v1271 = vrot.slane %v1269, 5
      %v1272 = vor.u32 %v1268, %v1271
      %v1273 = vrot.slane %v1272, 4
      %v1275 = vshll.u32 %v705, 16
      %v1277 = vrot.slane %v1275, 5
      %v1278 = vsel %vm736, %v1273, %v1277
      %v1279 = vshrl.u32 %v705, 16
      %v1281 = vrot.slane %v1279, 4
      %v1282 = vor.u32 %v1281, %v1277
      %v1283 = vrot.slane %v1282, 4
      %v1285 = vshll.u32 %v706, 16
      %v1287 = vrot.slane %v1285, 5
      %v1288 = vsel %vm736, %v1283, %v1287
      %v1289 = vshrl.u32 %v706, 16
      %v1291 = vrot.slane %v1289, 4
      %v1292 = vor.u32 %v1291, %v1287
      %v1293 = vrot.slane %v1292, 4
      %v1295 = vshll.u32 %v707, 16
      %v1297 = vrot.slane %v1295, 5
      %v1298 = vsel %vm736, %v1293, %v1297
      %v1299 = vshrl.u32 %v707, 16
      %v1301 = vrot.slane %v1299, 4
      %v1302 = vor.u32 %v1301, %v1297
      %v1303 = vrot.slane %v1302, 4
      %v1305 = vshll.u32 %v708, 16
      %v1307 = vrot.slane %v1305, 5
      %v1308 = vsel %vm736, %v1303, %v1307
      %v1310 = vshrl.u32 %v709, 16
      %v1312 = vrot.slane %v1310, 4
      %v1313 = vshll.u32 %v709, 16
      %v1315 = vrot.slane %v1313, 5
      %v1316 = vor.u32 %v1312, %v1315
      %v1317 = vrot.slane %v1316, 4
      %v1319 = vshll.u32 %v710, 16
      %v1321 = vrot.slane %v1319, 5
      %v1322 = vsel %vm736, %v1317, %v1321
      %v1323 = vshrl.u32 %v710, 16
      %v1325 = vrot.slane %v1323, 4
      %v1326 = vor.u32 %v1325, %v1321
      %v1327 = vrot.slane %v1326, 4
      %v1329 = vshll.u32 %v711, 16
      %v1331 = vrot.slane %v1329, 5
      %v1332 = vsel %vm736, %v1327, %v1331
      %v1333 = vshrl.u32 %v711, 16
      %v1335 = vrot.slane %v1333, 4
      %v1336 = vor.u32 %v1335, %v1331
      %v1337 = vrot.slane %v1336, 4
      %v1339 = vshll.u32 %v712, 16
      %v1341 = vrot.slane %v1339, 5
      %v1342 = vsel %vm736, %v1337, %v1341
      %v1343 = vshrl.u32 %v712, 16
      %v1345 = vrot.slane %v1343, 4
      %v1346 = vor.u32 %v1345, %v1341
      %v1347 = vrot.slane %v1346, 4
      %v1349 = vshll.u32 %v713, 16
      %v1351 = vrot.slane %v1349, 5
      %v1352 = vsel %vm736, %v1347, %v1351
      %v1354 = vshrl.u32 %v714, 16
      %v1356 = vrot.slane %v1354, 4
      %v1357 = vshll.u32 %v714, 16
      %v1359 = vrot.slane %v1357, 5
      %v1360 = vor.u32 %v1356, %v1359
      %v1361 = vrot.slane %v1360, 4
      %v1363 = vshll.u32 %v715, 16
      %v1365 = vrot.slane %v1363, 5
      %v1366 = vsel %vm736, %v1361, %v1365
      %v1367 = vshrl.u32 %v715, 16
      %v1369 = vrot.slane %v1367, 4
      %v1370 = vor.u32 %v1369, %v1365
      %v1371 = vrot.slane %v1370, 4
      %v1373 = vshll.u32 %v716, 16
      %v1375 = vrot.slane %v1373, 5
      %v1376 = vsel %vm736, %v1371, %v1375
      %v1377 = vshrl.u32 %v716, 16
      %v1379 = vrot.slane %v1377, 4
      %v1380 = vor.u32 %v1379, %v1375
      %v1381 = vrot.slane %v1380, 4
      %v1383 = vshll.u32 %v717, 16
      %v1385 = vrot.slane %v1383, 5
      %v1386 = vsel %vm736, %v1381, %v1385
      %v1387 = vshrl.u32 %v717, 16
      %v1389 = vrot.slane %v1387, 4
      %v1390 = vor.u32 %v1389, %v1385
      %v1391 = vrot.slane %v1390, 4
      %v1393 = vshll.u32 %v718, 16
      %v1395 = vrot.slane %v1393, 5
      %v1396 = vsel %vm736, %v1391, %v1395
      %v1398 = vshrl.u32 %v719, 16
      %v1400 = vrot.slane %v1398, 4
      %v1401 = vshll.u32 %v719, 16
      %v1403 = vrot.slane %v1401, 5
      %v1404 = vor.u32 %v1400, %v1403
      %v1405 = vrot.slane %v1404, 4
      %v1407 = vshll.u32 %v720, 16
      %v1409 = vrot.slane %v1407, 5
      %v1410 = vsel %vm736, %v1405, %v1409
      %v1411 = vshrl.u32 %v720, 16
      %v1413 = vrot.slane %v1411, 4
      %v1414 = vor.u32 %v1413, %v1409
      %v1415 = vrot.slane %v1414, 4
      %v1417 = vshll.u32 %v721, 16
      %v1419 = vrot.slane %v1417, 5
      %v1420 = vsel %vm736, %v1415, %v1419
      %v1421 = vshrl.u32 %v721, 16
      %v1423 = vrot.slane %v1421, 4
      %v1424 = vor.u32 %v1423, %v1419
      %v1425 = vrot.slane %v1424, 4
      %v1427 = vshll.u32 %v722, 16
      %v1429 = vrot.slane %v1427, 5
      %v1430 = vsel %vm736, %v1425, %v1429
      %v1431 = vshrl.u32 %v722, 16
      %v1433 = vrot.slane %v1431, 4
      %v1434 = vor.u32 %v1433, %v1429
      %v1435 = vrot.slane %v1434, 4
      %v1437 = vshll.u32 %v723, 16
      %v1439 = vrot.slane %v1437, 5
      %v1440 = vsel %vm736, %v1435, %v1439
      %v1442 = vshrl.u32 %v724, 16
      %v1444 = vrot.slane %v1442, 4
      %v1445 = vshll.u32 %v724, 16
      %v1447 = vrot.slane %v1445, 5
      %v1448 = vor.u32 %v1444, %v1447
      %v1449 = vrot.slane %v1448, 4
      %v1451 = vshll.u32 %v725, 16
      %v1453 = vrot.slane %v1451, 5
      %v1454 = vsel %vm736, %v1449, %v1453
      %v1455 = vshrl.u32 %v725, 16
      %v1457 = vrot.slane %v1455, 4
      %v1458 = vor.u32 %v1457, %v1453
      %v1459 = vrot.slane %v1458, 4
      %v1461 = vshll.u32 %v726, 16
      %v1463 = vrot.slane %v1461, 5
      %v1464 = vsel %vm736, %v1459, %v1463
      %v1465 = vshrl.u32 %v726, 16
      %v1467 = vrot.slane %v1465, 4
      %v1468 = vor.u32 %v1467, %v1463
      %v1469 = vrot.slane %v1468, 4
      %v1471 = vshll.u32 %v727, 16
      %v1473 = vrot.slane %v1471, 5
      %v1474 = vsel %vm736, %v1469, %v1473
      %v1475 = vshrl.u32 %v727, 16
      %v1477 = vrot.slane %v1475, 4
      %v1478 = vor.u32 %v1477, %v1473
      %v1479 = vrot.slane %v1478, 4
      %v1481 = vshll.u32 %v728, 16
      %v1483 = vrot.slane %v1481, 5
      %v1484 = vsel %vm736, %v1479, %v1483
      %v1486 = vshrl.u32 %v729, 16
      %v1488 = vrot.slane %v1486, 4
      %v1489 = vshll.u32 %v729, 16
      %v1491 = vrot.slane %v1489, 5
      %v1492 = vor.u32 %v1488, %v1491
      %v1493 = vrot.slane %v1492, 4
      %v1495 = vshll.u32 %v730, 16
      %v1497 = vrot.slane %v1495, 5
      %v1498 = vsel %vm736, %v1493, %v1497
      %v1499 = vshrl.u32 %v730, 16
      %v1501 = vrot.slane %v1499, 4
      %v1502 = vor.u32 %v1501, %v1497
      %v1503 = vrot.slane %v1502, 4
      %v1505 = vshll.u32 %v731, 16
      %v1507 = vrot.slane %v1505, 5
      %v1508 = vsel %vm736, %v1503, %v1507
      %v1509 = vshrl.u32 %v731, 16
      %v1511 = vrot.slane %v1509, 4
      %v1512 = vor.u32 %v1511, %v1507
      %v1513 = vrot.slane %v1512, 4
      %v1515 = vshll.u32 %v732, 16
      %v1517 = vrot.slane %v1515, 5
      %v1518 = vsel %vm736, %v1513, %v1517
      %v1519 = vshrl.u32 %v732, 16
      %v1521 = vrot.slane %v1519, 4
      %v1522 = vor.u32 %v1521, %v1517
      %v1523 = vrot.slane %v1522, 4
      %v1525 = vshll.u32 %v733, 16
      %v1527 = vrot.slane %v1525, 5
      %v1528 = vsel %vm736, %v1523, %v1527
      %v1529 = vunpack.c.l.b16 %v750
      %v1530 = vunpack.c.l.b16 %v760
      %v1531 = vunpack.c.l.b16 %v770
      %v1532 = vunpack.c.l.b16 %v780
      %v1533 = vunpack.c.l.b16 %v794
      %v1534 = vunpack.c.l.b16 %v804
      %v1535 = vunpack.c.l.b16 %v814
      %v1536 = vunpack.c.l.b16 %v824
      %v1537 = vunpack.c.l.b16 %v838
      %v1538 = vunpack.c.l.b16 %v848
      %v1539 = vunpack.c.l.b16 %v858
      %v1540 = vunpack.c.l.b16 %v868
      %v1541 = vunpack.c.l.b16 %v882
      %v1542 = vunpack.c.l.b16 %v892
      %v1543 = vunpack.c.l.b16 %v902
      %v1544 = vunpack.c.l.b16 %v912
      %v1545 = vunpack.c.l.b16 %v926
      %v1546 = vunpack.c.l.b16 %v936
      %v1547 = vunpack.c.l.b16 %v946
      %v1548 = vunpack.c.l.b16 %v956
      %v1549 = vunpack.c.l.b16 %v970
      %v1550 = vunpack.c.l.b16 %v980
      %v1551 = vunpack.c.l.b16 %v990
      %v1552 = vunpack.c.l.b16 %v1000
      %v1553 = vunpack.c.l.b16 %v1014
      %v1554 = vunpack.c.l.b16 %v1024
      %v1555 = vunpack.c.l.b16 %v1034
      %v1556 = vunpack.c.l.b16 %v1044
      %v1557 = vunpack.c.l.b16 %v1058
      %v1558 = vunpack.c.l.b16 %v1068
      %v1559 = vunpack.c.l.b16 %v1078
      %v1560 = vunpack.c.l.b16 %v1088
      %v1561 = vunpack.c.l.b16 %v1102
      %v1562 = vunpack.c.l.b16 %v1112
      %v1563 = vunpack.c.l.b16 %v1122
      %v1564 = vunpack.c.l.b16 %v1132
      %v1565 = vunpack.c.l.b16 %v1146
      %v1566 = vunpack.c.l.b16 %v1156
      %v1567 = vunpack.c.l.b16 %v1166
      %v1568 = vunpack.c.l.b16 %v1176
      %v1569 = vunpack.c.l.b16 %v1190
      %v1570 = vunpack.c.l.b16 %v1200
      %v1571 = vunpack.c.l.b16 %v1210
      %v1572 = vunpack.c.l.b16 %v1220
      %v1573 = vunpack.c.l.b16 %v1234
      %v1574 = vunpack.c.l.b16 %v1244
      %v1575 = vunpack.c.l.b16 %v1254
      %v1576 = vunpack.c.l.b16 %v1264
      %v1577 = vunpack.c.l.b16 %v1278
      %v1578 = vunpack.c.l.b16 %v1288
      %v1579 = vunpack.c.l.b16 %v1298
      %v1580 = vunpack.c.l.b16 %v1308
      %v1581 = vunpack.c.l.b16 %v1322
      %v1582 = vunpack.c.l.b16 %v1332
      %v1583 = vunpack.c.l.b16 %v1342
      %v1584 = vunpack.c.l.b16 %v1352
      %v1585 = vunpack.c.l.b16 %v1366
      %v1586 = vunpack.c.l.b16 %v1376
      %v1587 = vunpack.c.l.b16 %v1386
      %v1588 = vunpack.c.l.b16 %v1396
      %v1589 = vunpack.c.l.b16 %v1410
      %v1590 = vunpack.c.l.b16 %v1420
      %v1591 = vunpack.c.l.b16 %v1430
      %v1592 = vunpack.c.l.b16 %v1440
      %v1593 = vunpack.c.l.b16 %v1454
      %v1594 = vunpack.c.l.b16 %v1464
      %v1595 = vunpack.c.l.b16 %v1474
      %v1596 = vunpack.c.l.b16 %v1484
      %v1597 = vunpack.c.l.b16 %v1498
      %v1598 = vunpack.c.l.b16 %v1508
      %v1599 = vunpack.c.l.b16 %v1518
      %v1600 = vunpack.c.l.b16 %v1528
      %v1601 = vpack.c.b16 %v1530, %v1529
      %v1602 = vpack.c.b16 %v1532, %v1531
      %v1603 = vpack.c.b16 %v1534, %v1533
      %v1604 = vpack.c.b16 %v1536, %v1535
      %v1605 = vpack.c.b16 %v1538, %v1537
      %v1606 = vpack.c.b16 %v1540, %v1539
      %v1607 = vpack.c.b16 %v1542, %v1541
      %v1608 = vpack.c.b16 %v1544, %v1543
      %v1609 = vpack.c.b16 %v1546, %v1545
      %v1610 = vpack.c.b16 %v1548, %v1547
      %v1611 = vpack.c.b16 %v1550, %v1549
      %v1612 = vpack.c.b16 %v1552, %v1551
      %v1613 = vpack.c.b16 %v1554, %v1553
      %v1614 = vpack.c.b16 %v1556, %v1555
      %v1615 = vpack.c.b16 %v1558, %v1557
      %v1616 = vpack.c.b16 %v1560, %v1559
      %v1617 = vpack.c.b16 %v1562, %v1561
      %v1618 = vpack.c.b16 %v1564, %v1563
      %v1619 = vpack.c.b16 %v1566, %v1565
      %v1620 = vpack.c.b16 %v1568, %v1567
      %v1621 = vpack.c.b16 %v1570, %v1569
      %v1622 = vpack.c.b16 %v1572, %v1571
      %v1623 = vpack.c.b16 %v1574, %v1573
      %v1624 = vpack.c.b16 %v1576, %v1575
      %v1625 = vpack.c.b16 %v1578, %v1577
      %v1626 = vpack.c.b16 %v1580, %v1579
      %v1627 = vpack.c.b16 %v1582, %v1581
      %v1628 = vpack.c.b16 %v1584, %v1583
      %v1629 = vpack.c.b16 %v1586, %v1585
      %v1630 = vpack.c.b16 %v1588, %v1587
      %v1631 = vpack.c.b16 %v1590, %v1589
      %v1632 = vpack.c.b16 %v1592, %v1591
      %v1633 = vpack.c.b16 %v1594, %v1593
      %v1634 = vpack.c.b16 %v1596, %v1595
      %v1635 = vpack.c.b16 %v1598, %v1597
      %v1636 = vpack.c.b16 %v1600, %v1599
      %1637 = vrot.lane.b32.xlu0 %v1601, 4
      %v1638 = vpop.permute.xlu0 %1637
      %1639 = vrot.lane.b32.xlu0 %v1602, 4
      %v1640 = vpop.permute.xlu0 %1639
      %1641 = vrot.lane.b32.xlu0 %v1603, 4
      %v1642 = vpop.permute.xlu0 %1641
      %1643 = vrot.lane.b32.xlu0 %v1604, 4
      %v1644 = vpop.permute.xlu0 %1643
      %1645 = vrot.lane.b32.xlu0 %v1605, 4
      %v1646 = vpop.permute.xlu0 %1645
      %1647 = vrot.lane.b32.xlu0 %v1606, 4
      %v1648 = vpop.permute.xlu0 %1647
      %1649 = vrot.lane.b32.xlu0 %v1607, 4
      %v1650 = vpop.permute.xlu0 %1649
      %1651 = vrot.lane.b32.xlu0 %v1608, 4
      %v1652 = vpop.permute.xlu0 %1651
      %1653 = vrot.lane.b32.xlu0 %v1609, 4
      %v1654 = vpop.permute.xlu0 %1653
      %1655 = vrot.lane.b32.xlu0 %v1610, 4
      %v1656 = vpop.permute.xlu0 %1655
      %1657 = vrot.lane.b32.xlu0 %v1611, 4
      %v1658 = vpop.permute.xlu0 %1657
      %1659 = vrot.lane.b32.xlu0 %v1612, 4
      %v1660 = vpop.permute.xlu0 %1659
      %1661 = vrot.lane.b32.xlu0 %v1613, 4
      %v1662 = vpop.permute.xlu0 %1661
      %1663 = vrot.lane.b32.xlu0 %v1614, 4
      %v1664 = vpop.permute.xlu0 %1663
      %1665 = vrot.lane.b32.xlu0 %v1615, 4
      %v1666 = vpop.permute.xlu0 %1665
      %1667 = vrot.lane.b32.xlu0 %v1616, 4
      %v1668 = vpop.permute.xlu0 %1667
      %1669 = vrot.lane.b32.xlu0 %v1617, 4
      %v1670 = vpop.permute.xlu0 %1669
      %1671 = vrot.lane.b32.xlu0 %v1618, 4
      %v1672 = vpop.permute.xlu0 %1671
      %1673 = vrot.lane.b32.xlu0 %v1619, 4
      %v1674 = vpop.permute.xlu0 %1673
      %1675 = vrot.lane.b32.xlu0 %v1620, 4
      %v1676 = vpop.permute.xlu0 %1675
      %1677 = vrot.lane.b32.xlu0 %v1621, 4
      %v1678 = vpop.permute.xlu0 %1677
      %1679 = vrot.lane.b32.xlu0 %v1622, 4
      %v1680 = vpop.permute.xlu0 %1679
      %1681 = vrot.lane.b32.xlu0 %v1623, 4
      %v1682 = vpop.permute.xlu0 %1681
      %1683 = vrot.lane.b32.xlu0 %v1624, 4
      %v1684 = vpop.permute.xlu0 %1683
      %1685 = vrot.lane.b32.xlu0 %v1625, 4
      %v1686 = vpop.permute.xlu0 %1685
      %1687 = vrot.lane.b32.xlu0 %v1626, 4
      %v1688 = vpop.permute.xlu0 %1687
      %1689 = vrot.lane.b32.xlu0 %v1627, 4
      %v1690 = vpop.permute.xlu0 %1689
      %1691 = vrot.lane.b32.xlu0 %v1628, 4
      %v1692 = vpop.permute.xlu0 %1691
      %1693 = vrot.lane.b32.xlu0 %v1629, 4
      %v1694 = vpop.permute.xlu0 %1693
      %1695 = vrot.lane.b32.xlu0 %v1630, 4
      %v1696 = vpop.permute.xlu0 %1695
      %1697 = vrot.lane.b32.xlu0 %v1631, 4
      %v1698 = vpop.permute.xlu0 %1697
      %1699 = vrot.lane.b32.xlu0 %v1632, 4
      %v1700 = vpop.permute.xlu0 %1699
      %1701 = vrot.lane.b32.xlu0 %v1633, 4
      %v1702 = vpop.permute.xlu0 %1701
      %1703 = vrot.lane.b32.xlu0 %v1634, 4
      %v1704 = vpop.permute.xlu0 %1703
      %1705 = vrot.lane.b32.xlu0 %v1635, 4
      %v1706 = vpop.permute.xlu0 %1705
      %1707 = vrot.lane.b32.xlu0 %v1636, 4
      %v1708 = vpop.permute.xlu0 %1707
      %vm1745 = vcmask 64544
      %1746 = vst.msk [vmem:[#allocation2] sm:$0xff] %vm1745, %v1638
      %1747 = vst.msk [vmem:[#allocation2 + $0x8] sm:$0xff] %vm1745, %v1640
      %1748 = vst.msk [vmem:[#allocation2 + $0x10] sm:$0xff] %vm1745, %v1642
      %1749 = vst.msk [vmem:[#allocation2 + $0x18] sm:$0xff] %vm1745, %v1644
      %1750 = vst.msk [vmem:[#allocation2 + $0x20] sm:$0xff] %vm1745, %v1646
      %1751 = vst.msk [vmem:[#allocation2 + $0x28] sm:$0xff] %vm1745, %v1648
      %1752 = vst.msk [vmem:[#allocation2 + $0x30] sm:$0xff] %vm1745, %v1650
      %1753 = vst.msk [vmem:[#allocation2 + $0x38] sm:$0xff] %vm1745, %v1652
      %1754 = vst.msk [vmem:[#allocation2 + $0x40] sm:$0xff] %vm1745, %v1654
      %1755 = vst.msk [vmem:[#allocation2 + $0x48] sm:$0xff] %vm1745, %v1656
      %1756 = vst.msk [vmem:[#allocation2 + $0x50] sm:$0xff] %vm1745, %v1658
      %1757 = vst.msk [vmem:[#allocation2 + $0x58] sm:$0xff] %vm1745, %v1660
      %1758 = vst.msk [vmem:[#allocation2 + $0x60] sm:$0xff] %vm1745, %v1662
      %1759 = vst.msk [vmem:[#allocation2 + $0x68] sm:$0xff] %vm1745, %v1664
      %1760 = vst.msk [vmem:[#allocation2 + $0x70] sm:$0xff] %vm1745, %v1666
      %1761 = vst.msk [vmem:[#allocation2 + $0x78] sm:$0xff] %vm1745, %v1668
      %1762 = vst.msk [vmem:[#allocation2 + $0x80] sm:$0xff] %vm1745, %v1670
      %1763 = vst.msk [vmem:[#allocation2 + $0x88] sm:$0xff] %vm1745, %v1672
      %1764 = vst.msk [vmem:[#allocation2 + $0x90] sm:$0xff] %vm1745, %v1674
      %1765 = vst.msk [vmem:[#allocation2 + $0x98] sm:$0xff] %vm1745, %v1676
      %1766 = vst.msk [vmem:[#allocation2 + $0xa0] sm:$0xff] %vm1745, %v1678
      %1767 = vst.msk [vmem:[#allocation2 + $0xa8] sm:$0xff] %vm1745, %v1680
      %1768 = vst.msk [vmem:[#allocation2 + $0xb0] sm:$0xff] %vm1745, %v1682
      %1769 = vst.msk [vmem:[#allocation2 + $0xb8] sm:$0xff] %vm1745, %v1684
      %1770 = vst.msk [vmem:[#allocation2 + $0xc0] sm:$0xff] %vm1745, %v1686
      %1771 = vst.msk [vmem:[#allocation2 + $0xc8] sm:$0xff] %vm1745, %v1688
      %1772 = vst.msk [vmem:[#allocation2 + $0xd0] sm:$0xff] %vm1745, %v1690
      %1773 = vst.msk [vmem:[#allocation2 + $0xd8] sm:$0xff] %vm1745, %v1692
      %1774 = vst.msk [vmem:[#allocation2 + $0xe0] sm:$0xff] %vm1745, %v1694
      %1775 = vst.msk [vmem:[#allocation2 + $0xe8] sm:$0xff] %vm1745, %v1696
      %1776 = vst.msk [vmem:[#allocation2 + $0xf0] sm:$0xff] %vm1745, %v1698
      %1777 = vst.msk [vmem:[#allocation2 + $0xf8] sm:$0xff] %vm1745, %v1700
      %1778 = vst.msk [vmem:[#allocation2 + $0x100] sm:$0xff] %vm1745, %v1702
      %1779 = vst.msk [vmem:[#allocation2 + $0x108] sm:$0xff] %vm1745, %v1704
      %1780 = vst.msk [vmem:[#allocation2 + $0x110] sm:$0xff] %vm1745, %v1706
      %1781 = vst.msk [vmem:[#allocation2 + $0x118] sm:$0xff] %vm1745, %v1708
      %v1782 = vld [vmem:[%s306] sm:$0xe]
      %v1783 = vld [vmem:[%s306 + $0x4] sm:$0xf]
      %v1784 = vld [vmem:[%s306 + $0x8] sm:$0xf]
      %v1785 = vld [vmem:[%s306 + $0xc] sm:$0xf]
      %v1786 = vld [vmem:[%s306 + $0x10] sm:$0x1]
      %v1787 = vld [vmem:[%s306 + $0x14] sm:$0xe]
      %v1788 = vld [vmem:[%s306 + $0x18] sm:$0xf]
      %v1789 = vld [vmem:[%s306 + $0x1c] sm:$0xf]
      %v1790 = vld [vmem:[%s306 + $0x20] sm:$0xf]
      %v1791 = vld [vmem:[%s306 + $0x24] sm:$0x1]
      %v1792 = vld [vmem:[%s306 + $0x28] sm:$0xe]
      %v1793 = vld [vmem:[%s306 + $0x2c] sm:$0xf]
      %v1794 = vld [vmem:[%s306 + $0x30] sm:$0xf]
      %v1795 = vld [vmem:[%s306 + $0x34] sm:$0xf]
      %v1796 = vld [vmem:[%s306 + $0x38] sm:$0x1]
      %v1797 = vld [vmem:[%s306 + $0x3c] sm:$0xe]
      %v1798 = vld [vmem:[%s306 + $0x40] sm:$0xf]
      %v1799 = vld [vmem:[%s306 + $0x44] sm:$0xf]
      %v1800 = vld [vmem:[%s306 + $0x48] sm:$0xf]
      %v1801 = vld [vmem:[%s306 + $0x4c] sm:$0x1]
      %v1802 = vld [vmem:[%s306 + $0x50] sm:$0xe]
      %v1803 = vld [vmem:[%s306 + $0x54] sm:$0xf]
      %v1804 = vld [vmem:[%s306 + $0x58] sm:$0xf]
      %v1805 = vld [vmem:[%s306 + $0x5c] sm:$0xf]
      %v1806 = vld [vmem:[%s306 + $0x60] sm:$0x1]
      %v1807 = vld [vmem:[%s306 + $0x64] sm:$0xe]
      %v1808 = vld [vmem:[%s306 + $0x68] sm:$0xf]
      %v1809 = vld [vmem:[%s306 + $0x6c] sm:$0xf]
      %v1810 = vld [vmem:[%s306 + $0x70] sm:$0xf]
      %v1811 = vld [vmem:[%s306 + $0x74] sm:$0x1]
      %v1812 = vld [vmem:[%s306 + $0x78] sm:$0xe]
      %v1813 = vld [vmem:[%s306 + $0x7c] sm:$0xf]
      %v1814 = vld [vmem:[%s306 + $0x80] sm:$0xf]
      %v1815 = vld [vmem:[%s306 + $0x84] sm:$0xf]
      %v1816 = vld [vmem:[%s306 + $0x88] sm:$0x1]
      %v1817 = vld [vmem:[%s306 + $0x8c] sm:$0xe]
      %v1818 = vld [vmem:[%s306 + $0x90] sm:$0xf]
      %v1819 = vld [vmem:[%s306 + $0x94] sm:$0xf]
      %v1820 = vld [vmem:[%s306 + $0x98] sm:$0xf]
      %v1821 = vld [vmem:[%s306 + $0x9c] sm:$0x1]
      %v1822 = vld [vmem:[%s306 + $0xa0] sm:$0xe]
      %v1823 = vld [vmem:[%s306 + $0xa4] sm:$0xf]
      %v1824 = vld [vmem:[%s306 + $0xa8] sm:$0xf]
      %v1825 = vld [vmem:[%s306 + $0xac] sm:$0xf]
      %v1826 = vld [vmem:[%s306 + $0xb0] sm:$0x1]
      %v1827 = vld [vmem:[%s306 + $0xb4] sm:$0xe]
      %v1828 = vld [vmem:[%s306 + $0xb8] sm:$0xf]
      %v1829 = vld [vmem:[%s306 + $0xbc] sm:$0xf]
      %v1830 = vld [vmem:[%s306 + $0xc0] sm:$0xf]
      %v1831 = vld [vmem:[%s306 + $0xc4] sm:$0x1]
      %v1832 = vld [vmem:[%s306 + $0xc8] sm:$0xe]
      %v1833 = vld [vmem:[%s306 + $0xcc] sm:$0xf]
      %v1834 = vld [vmem:[%s306 + $0xd0] sm:$0xf]
      %v1835 = vld [vmem:[%s306 + $0xd4] sm:$0xf]
      %v1836 = vld [vmem:[%s306 + $0xd8] sm:$0x1]
      %v1837 = vld [vmem:[%s306 + $0xdc] sm:$0xe]
      %v1838 = vld [vmem:[%s306 + $0xe0] sm:$0xf]
      %v1839 = vld [vmem:[%s306 + $0xe4] sm:$0xf]
      %v1840 = vld [vmem:[%s306 + $0xe8] sm:$0xf]
      %v1841 = vld [vmem:[%s306 + $0xec] sm:$0x1]
      %v1842 = vld [vmem:[%s306 + $0xf0] sm:$0xe]
      %v1843 = vld [vmem:[%s306 + $0xf4] sm:$0xf]
      %v1844 = vld [vmem:[%s306 + $0xf8] sm:$0xf]
      %v1845 = vld [vmem:[%s306 + $0xfc] sm:$0xf]
      %v1846 = vld [vmem:[%s306 + $0x100] sm:$0x1]
      %v1847 = vld [vmem:[%s306 + $0x104] sm:$0xe]
      %v1848 = vld [vmem:[%s306 + $0x108] sm:$0xf]
      %v1849 = vld [vmem:[%s306 + $0x10c] sm:$0xf]
      %v1850 = vld [vmem:[%s306 + $0x110] sm:$0xf]
      %v1851 = vld [vmem:[%s306 + $0x114] sm:$0x1]
      %v1852 = vld [vmem:[%s306 + $0x118] sm:$0xe]
      %v1853 = vld [vmem:[%s306 + $0x11c] sm:$0xf]
      %v1854 = vld [vmem:[%s306 + $0x120] sm:$0xf]
      %v1855 = vld [vmem:[%s306 + $0x124] sm:$0xf]
      %v1856 = vld [vmem:[%s306 + $0x128] sm:$0x1]
      %v1857 = vld [vmem:[%s306 + $0x12c] sm:$0xe]
      %v1858 = vld [vmem:[%s306 + $0x130] sm:$0xf]
      %v1859 = vld [vmem:[%s306 + $0x134] sm:$0xf]
      %v1860 = vld [vmem:[%s306 + $0x138] sm:$0xf]
      %v1861 = vld [vmem:[%s306 + $0x13c] sm:$0x1]
      %v1862 = vld [vmem:[%s306 + $0x140] sm:$0xe]
      %v1863 = vld [vmem:[%s306 + $0x144] sm:$0xf]
      %v1864 = vld [vmem:[%s306 + $0x148] sm:$0xf]
      %v1865 = vld [vmem:[%s306 + $0x14c] sm:$0xf]
      %v1866 = vld [vmem:[%s306 + $0x150] sm:$0x1]
      %v1867 = vld [vmem:[%s306 + $0x154] sm:$0xe]
      %v1868 = vld [vmem:[%s306 + $0x158] sm:$0xf]
      %v1869 = vld [vmem:[%s306 + $0x15c] sm:$0xf]
      %v1870 = vld [vmem:[%s306 + $0x160] sm:$0xf]
      %v1871 = vld [vmem:[%s306 + $0x164] sm:$0x1]
      %vm1962 = vcmask 1042432
      %vm1963 = vcmask 1046532
      %vm1964 = vmor %vm1962, %vm1963
      %v1965 = vrot.slane %v1782, 5
      %v1966 = vrot.slane %v1965, 4
      %v1967 = vrot.slane %v1783, 5
      %v1968 = vsel %vm1964, %v1966, %v1967
      %v1969 = vrot.slane %v1967, 4
      %v1970 = vrot.slane %v1784, 5
      %v1971 = vsel %vm1964, %v1969, %v1970
      %v1972 = vrot.slane %v1970, 4
      %v1973 = vrot.slane %v1785, 5
      %v1974 = vsel %vm1964, %v1972, %v1973
      %v1975 = vrot.slane %v1973, 4
      %v1976 = vrot.slane %v1786, 5
      %v1977 = vsel %vm1964, %v1975, %v1976
      %v1978 = vrot.slane %v1787, 5
      %v1979 = vrot.slane %v1978, 4
      %v1980 = vrot.slane %v1788, 5
      %v1981 = vsel %vm1964, %v1979, %v1980
      %v1982 = vrot.slane %v1980, 4
      %v1983 = vrot.slane %v1789, 5
      %v1984 = vsel %vm1964, %v1982, %v1983
      %v1985 = vrot.slane %v1983, 4
      %v1986 = vrot.slane %v1790, 5
      %v1987 = vsel %vm1964, %v1985, %v1986
      %v1988 = vrot.slane %v1986, 4
      %v1989 = vrot.slane %v1791, 5
      %v1990 = vsel %vm1964, %v1988, %v1989
      %v1991 = vrot.slane %v1792, 5
      %v1992 = vrot.slane %v1991, 4
      %v1993 = vrot.slane %v1793, 5
      %v1994 = vsel %vm1964, %v1992, %v1993
      %v1995 = vrot.slane %v1993, 4
      %v1996 = vrot.slane %v1794, 5
      %v1997 = vsel %vm1964, %v1995, %v1996
      %v1998 = vrot.slane %v1996, 4
      %v1999 = vrot.slane %v1795, 5
      %v2000 = vsel %vm1964, %v1998, %v1999
      %v2001 = vrot.slane %v1999, 4
      %v2002 = vrot.slane %v1796, 5
      %v2003 = vsel %vm1964, %v2001, %v2002
      %v2004 = vrot.slane %v1797, 5
      %v2005 = vrot.slane %v2004, 4
      %v2006 = vrot.slane %v1798, 5
      %v2007 = vsel %vm1964, %v2005, %v2006
      %v2008 = vrot.slane %v2006, 4
      %v2009 = vrot.slane %v1799, 5
      %v2010 = vsel %vm1964, %v2008, %v2009
      %v2011 = vrot.slane %v2009, 4
      %v2012 = vrot.slane %v1800, 5
      %v2013 = vsel %vm1964, %v2011, %v2012
      %v2014 = vrot.slane %v2012, 4
      %v2015 = vrot.slane %v1801, 5
      %v2016 = vsel %vm1964, %v2014, %v2015
      %v2017 = vrot.slane %v1802, 5
      %v2018 = vrot.slane %v2017, 4
      %v2019 = vrot.slane %v1803, 5
      %v2020 = vsel %vm1964, %v2018, %v2019
      %v2021 = vrot.slane %v2019, 4
      %v2022 = vrot.slane %v1804, 5
      %v2023 = vsel %vm1964, %v2021, %v2022
      %v2024 = vrot.slane %v2022, 4
      %v2025 = vrot.slane %v1805, 5
      %v2026 = vsel %vm1964, %v2024, %v2025
      %v2027 = vrot.slane %v2025, 4
      %v2028 = vrot.slane %v1806, 5
      %v2029 = vsel %vm1964, %v2027, %v2028
      %v2030 = vrot.slane %v1807, 5
      %v2031 = vrot.slane %v2030, 4
      %v2032 = vrot.slane %v1808, 5
      %v2033 = vsel %vm1964, %v2031, %v2032
      %v2034 = vrot.slane %v2032, 4
      %v2035 = vrot.slane %v1809, 5
      %v2036 = vsel %vm1964, %v2034, %v2035
      %v2037 = vrot.slane %v2035, 4
      %v2038 = vrot.slane %v1810, 5
      %v2039 = vsel %vm1964, %v2037, %v2038
      %v2040 = vrot.slane %v2038, 4
      %v2041 = vrot.slane %v1811, 5
      %v2042 = vsel %vm1964, %v2040, %v2041
      %v2043 = vrot.slane %v1812, 5
      %v2044 = vrot.slane %v2043, 4
      %v2045 = vrot.slane %v1813, 5
      %v2046 = vsel %vm1964, %v2044, %v2045
      %v2047 = vrot.slane %v2045, 4
      %v2048 = vrot.slane %v1814, 5
      %v2049 = vsel %vm1964, %v2047, %v2048
      %v2050 = vrot.slane %v2048, 4
      %v2051 = vrot.slane %v1815, 5
      %v2052 = vsel %vm1964, %v2050, %v2051
      %v2053 = vrot.slane %v2051, 4
      %v2054 = vrot.slane %v1816, 5
      %v2055 = vsel %vm1964, %v2053, %v2054
      %v2056 = vrot.slane %v1817, 5
      %v2057 = vrot.slane %v2056, 4
      %v2058 = vrot.slane %v1818, 5
      %v2059 = vsel %vm1964, %v2057, %v2058
      %v2060 = vrot.slane %v2058, 4
      %v2061 = vrot.slane %v1819, 5
      %v2062 = vsel %vm1964, %v2060, %v2061
      %v2063 = vrot.slane %v2061, 4
      %v2064 = vrot.slane %v1820, 5
      %v2065 = vsel %vm1964, %v2063, %v2064
      %v2066 = vrot.slane %v2064, 4
      %v2067 = vrot.slane %v1821, 5
      %v2068 = vsel %vm1964, %v2066, %v2067
      %v2069 = vrot.slane %v1822, 5
      %v2070 = vrot.slane %v2069, 4
      %v2071 = vrot.slane %v1823, 5
      %v2072 = vsel %vm1964, %v2070, %v2071
      %v2073 = vrot.slane %v2071, 4
      %v2074 = vrot.slane %v1824, 5
      %v2075 = vsel %vm1964, %v2073, %v2074
      %v2076 = vrot.slane %v2074, 4
      %v2077 = vrot.slane %v1825, 5
      %v2078 = vsel %vm1964, %v2076, %v2077
      %v2079 = vrot.slane %v2077, 4
      %v2080 = vrot.slane %v1826, 5
      %v2081 = vsel %vm1964, %v2079, %v2080
      %v2082 = vrot.slane %v1827, 5
      %v2083 = vrot.slane %v2082, 4
      %v2084 = vrot.slane %v1828, 5
      %v2085 = vsel %vm1964, %v2083, %v2084
      %v2086 = vrot.slane %v2084, 4
      %v2087 = vrot.slane %v1829, 5
      %v2088 = vsel %vm1964, %v2086, %v2087
      %v2089 = vrot.slane %v2087, 4
      %v2090 = vrot.slane %v1830, 5
      %v2091 = vsel %vm1964, %v2089, %v2090
      %v2092 = vrot.slane %v2090, 4
      %v2093 = vrot.slane %v1831, 5
      %v2094 = vsel %vm1964, %v2092, %v2093
      %v2095 = vrot.slane %v1832, 5
      %v2096 = vrot.slane %v2095, 4
      %v2097 = vrot.slane %v1833, 5
      %v2098 = vsel %vm1964, %v2096, %v2097
      %v2099 = vrot.slane %v2097, 4
      %v2100 = vrot.slane %v1834, 5
      %v2101 = vsel %vm1964, %v2099, %v2100
      %v2102 = vrot.slane %v2100, 4
      %v2103 = vrot.slane %v1835, 5
      %v2104 = vsel %vm1964, %v2102, %v2103
      %v2105 = vrot.slane %v2103, 4
      %v2106 = vrot.slane %v1836, 5
      %v2107 = vsel %vm1964, %v2105, %v2106
      %v2108 = vrot.slane %v1837, 5
      %v2109 = vrot.slane %v2108, 4
      %v2110 = vrot.slane %v1838, 5
      %v2111 = vsel %vm1964, %v2109, %v2110
      %v2112 = vrot.slane %v2110, 4
      %v2113 = vrot.slane %v1839, 5
      %v2114 = vsel %vm1964, %v2112, %v2113
      %v2115 = vrot.slane %v2113, 4
      %v2116 = vrot.slane %v1840, 5
      %v2117 = vsel %vm1964, %v2115, %v2116
      %v2118 = vrot.slane %v2116, 4
      %v2119 = vrot.slane %v1841, 5
      %v2120 = vsel %vm1964, %v2118, %v2119
      %v2121 = vrot.slane %v1842, 5
      %v2122 = vrot.slane %v2121, 4
      %v2123 = vrot.slane %v1843, 5
      %v2124 = vsel %vm1964, %v2122, %v2123
      %v2125 = vrot.slane %v2123, 4
      %v2126 = vrot.slane %v1844, 5
      %v2127 = vsel %vm1964, %v2125, %v2126
      %v2128 = vrot.slane %v2126, 4
      %v2129 = vrot.slane %v1845, 5
      %v2130 = vsel %vm1964, %v2128, %v2129
      %v2131 = vrot.slane %v2129, 4
      %v2132 = vrot.slane %v1846, 5
      %v2133 = vsel %vm1964, %v2131, %v2132
      %v2134 = vrot.slane %v1847, 5
      %v2135 = vrot.slane %v2134, 4
      %v2136 = vrot.slane %v1848, 5
      %v2137 = vsel %vm1964, %v2135, %v2136
      %v2138 = vrot.slane %v2136, 4
      %v2139 = vrot.slane %v1849, 5
      %v2140 = vsel %vm1964, %v2138, %v2139
      %v2141 = vrot.slane %v2139, 4
      %v2142 = vrot.slane %v1850, 5
      %v2143 = vsel %vm1964, %v2141, %v2142
      %v2144 = vrot.slane %v2142, 4
      %v2145 = vrot.slane %v1851, 5
      %v2146 = vsel %vm1964, %v2144, %v2145
      %v2147 = vrot.slane %v1852, 5
      %v2148 = vrot.slane %v2147, 4
      %v2149 = vrot.slane %v1853, 5
      %v2150 = vsel %vm1964, %v2148, %v2149
      %v2151 = vrot.slane %v2149, 4
      %v2152 = vrot.slane %v1854, 5
      %v2153 = vsel %vm1964, %v2151, %v2152
      %v2154 = vrot.slane %v2152, 4
      %v2155 = vrot.slane %v1855, 5
      %v2156 = vsel %vm1964, %v2154, %v2155
      %v2157 = vrot.slane %v2155, 4
      %v2158 = vrot.slane %v1856, 5
      %v2159 = vsel %vm1964, %v2157, %v2158
      %v2160 = vrot.slane %v1857, 5
      %v2161 = vrot.slane %v2160, 4
      %v2162 = vrot.slane %v1858, 5
      %v2163 = vsel %vm1964, %v2161, %v2162
      %v2164 = vrot.slane %v2162, 4
      %v2165 = vrot.slane %v1859, 5
      %v2166 = vsel %vm1964, %v2164, %v2165
      %v2167 = vrot.slane %v2165, 4
      %v2168 = vrot.slane %v1860, 5
      %v2169 = vsel %vm1964, %v2167, %v2168
      %v2170 = vrot.slane %v2168, 4
      %v2171 = vrot.slane %v1861, 5
      %v2172 = vsel %vm1964, %v2170, %v2171
      %v2173 = vrot.slane %v1862, 5
      %v2174 = vrot.slane %v2173, 4
      %v2175 = vrot.slane %v1863, 5
      %v2176 = vsel %vm1964, %v2174, %v2175
      %v2177 = vrot.slane %v2175, 4
      %v2178 = vrot.slane %v1864, 5
      %v2179 = vsel %vm1964, %v2177, %v2178
      %v2180 = vrot.slane %v2178, 4
      %v2181 = vrot.slane %v1865, 5
      %v2182 = vsel %vm1964, %v2180, %v2181
      %v2183 = vrot.slane %v2181, 4
      %v2184 = vrot.slane %v1866, 5
      %v2185 = vsel %vm1964, %v2183, %v2184
      %v2186 = vrot.slane %v1867, 5
      %v2187 = vrot.slane %v2186, 4
      %v2188 = vrot.slane %v1868, 5
      %v2189 = vsel %vm1964, %v2187, %v2188
      %v2190 = vrot.slane %v2188, 4
      %v2191 = vrot.slane %v1869, 5
      %v2192 = vsel %vm1964, %v2190, %v2191
      %v2193 = vrot.slane %v2191, 4
      %v2194 = vrot.slane %v1870, 5
      %v2195 = vsel %vm1964, %v2193, %v2194
      %v2196 = vrot.slane %v2194, 4
      %v2197 = vrot.slane %v1871, 5
      %v2198 = vsel %vm1964, %v2196, %v2197
      %v2199 = vunpack.c.l.b16 %v1968
      %v2200 = vunpack.c.l.b16 %v1971
      %v2201 = vunpack.c.l.b16 %v1974
      %v2202 = vunpack.c.l.b16 %v1977
      %v2203 = vunpack.c.l.b16 %v1981
      %v2204 = vunpack.c.l.b16 %v1984
      %v2205 = vunpack.c.l.b16 %v1987
      %v2206 = vunpack.c.l.b16 %v1990
      %v2207 = vunpack.c.l.b16 %v1994
      %v2208 = vunpack.c.l.b16 %v1997
      %v2209 = vunpack.c.l.b16 %v2000
      %v2210 = vunpack.c.l.b16 %v2003
      %v2211 = vunpack.c.l.b16 %v2007
      %v2212 = vunpack.c.l.b16 %v2010
      %v2213 = vunpack.c.l.b16 %v2013
      %v2214 = vunpack.c.l.b16 %v2016
      %v2215 = vunpack.c.l.b16 %v2020
      %v2216 = vunpack.c.l.b16 %v2023
      %v2217 = vunpack.c.l.b16 %v2026
      %v2218 = vunpack.c.l.b16 %v2029
      %v2219 = vunpack.c.l.b16 %v2033
      %v2220 = vunpack.c.l.b16 %v2036
      %v2221 = vunpack.c.l.b16 %v2039
      %v2222 = vunpack.c.l.b16 %v2042
      %v2223 = vunpack.c.l.b16 %v2046
      %v2224 = vunpack.c.l.b16 %v2049
      %v2225 = vunpack.c.l.b16 %v2052
      %v2226 = vunpack.c.l.b16 %v2055
      %v2227 = vunpack.c.l.b16 %v2059
      %v2228 = vunpack.c.l.b16 %v2062
      %v2229 = vunpack.c.l.b16 %v2065
      %v2230 = vunpack.c.l.b16 %v2068
      %v2231 = vunpack.c.l.b16 %v2072
      %v2232 = vunpack.c.l.b16 %v2075
      %v2233 = vunpack.c.l.b16 %v2078
      %v2234 = vunpack.c.l.b16 %v2081
      %v2235 = vunpack.c.l.b16 %v2085
      %v2236 = vunpack.c.l.b16 %v2088
      %v2237 = vunpack.c.l.b16 %v2091
      %v2238 = vunpack.c.l.b16 %v2094
      %v2239 = vunpack.c.l.b16 %v2098
      %v2240 = vunpack.c.l.b16 %v2101
      %v2241 = vunpack.c.l.b16 %v2104
      %v2242 = vunpack.c.l.b16 %v2107
      %v2243 = vunpack.c.l.b16 %v2111
      %v2244 = vunpack.c.l.b16 %v2114
      %v2245 = vunpack.c.l.b16 %v2117
      %v2246 = vunpack.c.l.b16 %v2120
      %v2247 = vunpack.c.l.b16 %v2124
      %v2248 = vunpack.c.l.b16 %v2127
      %v2249 = vunpack.c.l.b16 %v2130
      %v2250 = vunpack.c.l.b16 %v2133
      %v2251 = vunpack.c.l.b16 %v2137
      %v2252 = vunpack.c.l.b16 %v2140
      %v2253 = vunpack.c.l.b16 %v2143
      %v2254 = vunpack.c.l.b16 %v2146
      %v2255 = vunpack.c.l.b16 %v2150
      %v2256 = vunpack.c.l.b16 %v2153
      %v2257 = vunpack.c.l.b16 %v2156
      %v2258 = vunpack.c.l.b16 %v2159
      %v2259 = vunpack.c.l.b16 %v2163
      %v2260 = vunpack.c.l.b16 %v2166
      %v2261 = vunpack.c.l.b16 %v2169
      %v2262 = vunpack.c.l.b16 %v2172
      %v2263 = vunpack.c.l.b16 %v2176
      %v2264 = vunpack.c.l.b16 %v2179
      %v2265 = vunpack.c.l.b16 %v2182
      %v2266 = vunpack.c.l.b16 %v2185
      %v2267 = vunpack.c.l.b16 %v2189
      %v2268 = vunpack.c.l.b16 %v2192
      %v2269 = vunpack.c.l.b16 %v2195
      %v2270 = vunpack.c.l.b16 %v2198
      %v2271 = vpack.c.b16 %v2200, %v2199
      %v2272 = vpack.c.b16 %v2202, %v2201
      %v2273 = vpack.c.b16 %v2204, %v2203
      %v2274 = vpack.c.b16 %v2206, %v2205
      %v2275 = vpack.c.b16 %v2208, %v2207
      %v2276 = vpack.c.b16 %v2210, %v2209
      %v2277 = vpack.c.b16 %v2212, %v2211
      %v2278 = vpack.c.b16 %v2214, %v2213
      %v2279 = vpack.c.b16 %v2216, %v2215
      %v2280 = vpack.c.b16 %v2218, %v2217
      %v2281 = vpack.c.b16 %v2220, %v2219
      %v2282 = vpack.c.b16 %v2222, %v2221
      %v2283 = vpack.c.b16 %v2224, %v2223
      %v2284 = vpack.c.b16 %v2226, %v2225
      %v2285 = vpack.c.b16 %v2228, %v2227
      %v2286 = vpack.c.b16 %v2230, %v2229
      %v2287 = vpack.c.b16 %v2232, %v2231
      %v2288 = vpack.c.b16 %v2234, %v2233
      %v2289 = vpack.c.b16 %v2236, %v2235
      %v2290 = vpack.c.b16 %v2238, %v2237
      %v2291 = vpack.c.b16 %v2240, %v2239
      %v2292 = vpack.c.b16 %v2242, %v2241
      %v2293 = vpack.c.b16 %v2244, %v2243
      %v2294 = vpack.c.b16 %v2246, %v2245
      %v2295 = vpack.c.b16 %v2248, %v2247
      %v2296 = vpack.c.b16 %v2250, %v2249
      %v2297 = vpack.c.b16 %v2252, %v2251
      %v2298 = vpack.c.b16 %v2254, %v2253
      %v2299 = vpack.c.b16 %v2256, %v2255
      %v2300 = vpack.c.b16 %v2258, %v2257
      %v2301 = vpack.c.b16 %v2260, %v2259
      %v2302 = vpack.c.b16 %v2262, %v2261
      %v2303 = vpack.c.b16 %v2264, %v2263
      %v2304 = vpack.c.b16 %v2266, %v2265
      %v2305 = vpack.c.b16 %v2268, %v2267
      %v2306 = vpack.c.b16 %v2270, %v2269
      %2307 = vrot.lane.b32.xlu0 %v2271, 8
      %v2308 = vpop.permute.xlu0 %2307
      %2309 = vrot.lane.b32.xlu0 %v2272, 8
      %v2310 = vpop.permute.xlu0 %2309
      %2311 = vrot.lane.b32.xlu0 %v2273, 8
      %v2312 = vpop.permute.xlu0 %2311
      %2313 = vrot.lane.b32.xlu0 %v2274, 8
      %v2314 = vpop.permute.xlu0 %2313
      %2315 = vrot.lane.b32.xlu0 %v2275, 8
      %v2316 = vpop.permute.xlu0 %2315
      %2317 = vrot.lane.b32.xlu0 %v2276, 8
      %v2318 = vpop.permute.xlu0 %2317
      %2319 = vrot.lane.b32.xlu0 %v2277, 8
      %v2320 = vpop.permute.xlu0 %2319
      %2321 = vrot.lane.b32.xlu0 %v2278, 8
      %v2322 = vpop.permute.xlu0 %2321
      %2323 = vrot.lane.b32.xlu0 %v2279, 8
      %v2324 = vpop.permute.xlu0 %2323
      %2325 = vrot.lane.b32.xlu0 %v2280, 8
      %v2326 = vpop.permute.xlu0 %2325
      %2327 = vrot.lane.b32.xlu0 %v2281, 8
      %v2328 = vpop.permute.xlu0 %2327
      %2329 = vrot.lane.b32.xlu0 %v2282, 8
      %v2330 = vpop.permute.xlu0 %2329
      %2331 = vrot.lane.b32.xlu0 %v2283, 8
      %v2332 = vpop.permute.xlu0 %2331
      %2333 = vrot.lane.b32.xlu0 %v2284, 8
      %v2334 = vpop.permute.xlu0 %2333
      %2335 = vrot.lane.b32.xlu0 %v2285, 8
      %v2336 = vpop.permute.xlu0 %2335
      %2337 = vrot.lane.b32.xlu0 %v2286, 8
      %v2338 = vpop.permute.xlu0 %2337
      %2339 = vrot.lane.b32.xlu0 %v2287, 8
      %v2340 = vpop.permute.xlu0 %2339
      %2341 = vrot.lane.b32.xlu0 %v2288, 8
      %v2342 = vpop.permute.xlu0 %2341
      %2343 = vrot.lane.b32.xlu0 %v2289, 8
      %v2344 = vpop.permute.xlu0 %2343
      %2345 = vrot.lane.b32.xlu0 %v2290, 8
      %v2346 = vpop.permute.xlu0 %2345
      %2347 = vrot.lane.b32.xlu0 %v2291, 8
      %v2348 = vpop.permute.xlu0 %2347
      %2349 = vrot.lane.b32.xlu0 %v2292, 8
      %v2350 = vpop.permute.xlu0 %2349
      %2351 = vrot.lane.b32.xlu0 %v2293, 8
      %v2352 = vpop.permute.xlu0 %2351
      %2353 = vrot.lane.b32.xlu0 %v2294, 8
      %v2354 = vpop.permute.xlu0 %2353
      %2355 = vrot.lane.b32.xlu0 %v2295, 8
      %v2356 = vpop.permute.xlu0 %2355
      %2357 = vrot.lane.b32.xlu0 %v2296, 8
      %v2358 = vpop.permute.xlu0 %2357
      %2359 = vrot.lane.b32.xlu0 %v2297, 8
      %v2360 = vpop.permute.xlu0 %2359
      %2361 = vrot.lane.b32.xlu0 %v2298, 8
      %v2362 = vpop.permute.xlu0 %2361
      %2363 = vrot.lane.b32.xlu0 %v2299, 8
      %v2364 = vpop.permute.xlu0 %2363
      %2365 = vrot.lane.b32.xlu0 %v2300, 8
      %v2366 = vpop.permute.xlu0 %2365
      %2367 = vrot.lane.b32.xlu0 %v2301, 8
      %v2368 = vpop.permute.xlu0 %2367
      %2369 = vrot.lane.b32.xlu0 %v2302, 8
      %v2370 = vpop.permute.xlu0 %2369
      %2371 = vrot.lane.b32.xlu0 %v2303, 8
      %v2372 = vpop.permute.xlu0 %2371
      %2373 = vrot.lane.b32.xlu0 %v2304, 8
      %v2374 = vpop.permute.xlu0 %2373
      %2375 = vrot.lane.b32.xlu0 %v2305, 8
      %v2376 = vpop.permute.xlu0 %2375
      %2377 = vrot.lane.b32.xlu0 %v2306, 8
      %v2378 = vpop.permute.xlu0 %2377
      %vm2415 = vcmask 97344
      %2416 = vst.msk [vmem:[#allocation2] sm:$0xff] %vm2415, %v2308
      %2417 = vst.msk [vmem:[#allocation2 + $0x8] sm:$0xff] %vm2415, %v2310
      %2418 = vst.msk [vmem:[#allocation2 + $0x10] sm:$0xff] %vm2415, %v2312
      %2419 = vst.msk [vmem:[#allocation2 + $0x18] sm:$0xff] %vm2415, %v2314
      %2420 = vst.msk [vmem:[#allocation2 + $0x20] sm:$0xff] %vm2415, %v2316
      %2421 = vst.msk [vmem:[#allocation2 + $0x28] sm:$0xff] %vm2415, %v2318
      %2422 = vst.msk [vmem:[#allocation2 + $0x30] sm:$0xff] %vm2415, %v2320
      %2423 = vst.msk [vmem:[#allocation2 + $0x38] sm:$0xff] %vm2415, %v2322
      %2424 = vst.msk [vmem:[#allocation2 + $0x40] sm:$0xff] %vm2415, %v2324
      %2425 = vst.msk [vmem:[#allocation2 + $0x48] sm:$0xff] %vm2415, %v2326
      %2426 = vst.msk [vmem:[#allocation2 + $0x50] sm:$0xff] %vm2415, %v2328
      %2427 = vst.msk [vmem:[#allocation2 + $0x58] sm:$0xff] %vm2415, %v2330
      %2428 = vst.msk [vmem:[#allocation2 + $0x60] sm:$0xff] %vm2415, %v2332
      %2429 = vst.msk [vmem:[#allocation2 + $0x68] sm:$0xff] %vm2415, %v2334
      %2430 = vst.msk [vmem:[#allocation2 + $0x70] sm:$0xff] %vm2415, %v2336
      %2431 = vst.msk [vmem:[#allocation2 + $0x78] sm:$0xff] %vm2415, %v2338
      %2432 = vst.msk [vmem:[#allocation2 + $0x80] sm:$0xff] %vm2415, %v2340
      %2433 = vst.msk [vmem:[#allocation2 + $0x88] sm:$0xff] %vm2415, %v2342
      %2434 = vst.msk [vmem:[#allocation2 + $0x90] sm:$0xff] %vm2415, %v2344
      %2435 = vst.msk [vmem:[#allocation2 + $0x98] sm:$0xff] %vm2415, %v2346
      %2436 = vst.msk [vmem:[#allocation2 + $0xa0] sm:$0xff] %vm2415, %v2348
      %2437 = vst.msk [vmem:[#allocation2 + $0xa8] sm:$0xff] %vm2415, %v2350
      %2438 = vst.msk [vmem:[#allocation2 + $0xb0] sm:$0xff] %vm2415, %v2352
      %2439 = vst.msk [vmem:[#allocation2 + $0xb8] sm:$0xff] %vm2415, %v2354
      %2440 = vst.msk [vmem:[#allocation2 + $0xc0] sm:$0xff] %vm2415, %v2356
      %2441 = vst.msk [vmem:[#allocation2 + $0xc8] sm:$0xff] %vm2415, %v2358
      %2442 = vst.msk [vmem:[#allocation2 + $0xd0] sm:$0xff] %vm2415, %v2360
      %2443 = vst.msk [vmem:[#allocation2 + $0xd8] sm:$0xff] %vm2415, %v2362
      %2444 = vst.msk [vmem:[#allocation2 + $0xe0] sm:$0xff] %vm2415, %v2364
      %2445 = vst.msk [vmem:[#allocation2 + $0xe8] sm:$0xff] %vm2415, %v2366
      %2446 = vst.msk [vmem:[#allocation2 + $0xf0] sm:$0xff] %vm2415, %v2368
      %2447 = vst.msk [vmem:[#allocation2 + $0xf8] sm:$0xff] %vm2415, %v2370
      %2448 = vst.msk [vmem:[#allocation2 + $0x100] sm:$0xff] %vm2415, %v2372
      %2449 = vst.msk [vmem:[#allocation2 + $0x108] sm:$0xff] %vm2415, %v2374
      %2450 = vst.msk [vmem:[#allocation2 + $0x110] sm:$0xff] %vm2415, %v2376
      %2451 = vst.msk [vmem:[#allocation2 + $0x118] sm:$0xff] %vm2415, %v2378
      %s2452 = scalar_lea.vmem %s306, 20
      %v2453 = vld [vmem:[%s2452] sm:$0xf]
      %v2454 = vld [vmem:[%s2452 + $0x4] sm:$0xf]
      %v2455 = vld [vmem:[%s2452 + $0x8] sm:$0xf]
      %v2456 = vld [vmem:[%s2452 + $0xc] sm:$0xf]
      %v2457 = vld [vmem:[%s2452 + $0x14] sm:$0xf]
      %v2458 = vld [vmem:[%s2452 + $0x18] sm:$0xf]
      %v2459 = vld [vmem:[%s2452 + $0x1c] sm:$0xf]
      %v2460 = vld [vmem:[%s2452 + $0x20] sm:$0xf]
      %v2461 = vld [vmem:[%s2452 + $0x28] sm:$0xf]
      %v2462 = vld [vmem:[%s2452 + $0x2c] sm:$0xf]
      %v2463 = vld [vmem:[%s2452 + $0x30] sm:$0xf]
      %v2464 = vld [vmem:[%s2452 + $0x34] sm:$0xf]
      %v2465 = vld [vmem:[%s2452 + $0x3c] sm:$0xf]
      %v2466 = vld [vmem:[%s2452 + $0x40] sm:$0xf]
      %v2467 = vld [vmem:[%s2452 + $0x44] sm:$0xf]
      %v2468 = vld [vmem:[%s2452 + $0x48] sm:$0xf]
      %v2469 = vld [vmem:[%s2452 + $0x50] sm:$0xf]
      %v2470 = vld [vmem:[%s2452 + $0x54] sm:$0xf]
      %v2471 = vld [vmem:[%s2452 + $0x58] sm:$0xf]
      %v2472 = vld [vmem:[%s2452 + $0x5c] sm:$0xf]
      %v2473 = vld [vmem:[%s2452 + $0x64] sm:$0xf]
      %v2474 = vld [vmem:[%s2452 + $0x68] sm:$0xf]
      %v2475 = vld [vmem:[%s2452 + $0x6c] sm:$0xf]
      %v2476 = vld [vmem:[%s2452 + $0x70] sm:$0xf]
      %v2477 = vld [vmem:[%s2452 + $0x78] sm:$0xf]
      %v2478 = vld [vmem:[%s2452 + $0x7c] sm:$0xf]
      %v2479 = vld [vmem:[%s2452 + $0x80] sm:$0xf]
      %v2480 = vld [vmem:[%s2452 + $0x84] sm:$0xf]
      %v2481 = vld [vmem:[%s2452 + $0x8c] sm:$0xf]
      %v2482 = vld [vmem:[%s2452 + $0x90] sm:$0xf]
      %v2483 = vld [vmem:[%s2452 + $0x94] sm:$0xf]
      %v2484 = vld [vmem:[%s2452 + $0x98] sm:$0xf]
      %v2485 = vld [vmem:[%s2452 + $0xa0] sm:$0xf]
      %v2486 = vld [vmem:[%s2452 + $0xa4] sm:$0xf]
      %v2487 = vld [vmem:[%s2452 + $0xa8] sm:$0xf]
      %v2488 = vld [vmem:[%s2452 + $0xac] sm:$0xf]
      %v2489 = vld [vmem:[%s2452 + $0xb4] sm:$0xf]
      %v2490 = vld [vmem:[%s2452 + $0xb8] sm:$0xf]
      %v2491 = vld [vmem:[%s2452 + $0xbc] sm:$0xf]
      %v2492 = vld [vmem:[%s2452 + $0xc0] sm:$0xf]
      %v2493 = vld [vmem:[%s2452 + $0xc8] sm:$0xf]
      %v2494 = vld [vmem:[%s2452 + $0xcc] sm:$0xf]
      %v2495 = vld [vmem:[%s2452 + $0xd0] sm:$0xf]
      %v2496 = vld [vmem:[%s2452 + $0xd4] sm:$0xf]
      %v2497 = vld [vmem:[%s2452 + $0xdc] sm:$0xf]
      %v2498 = vld [vmem:[%s2452 + $0xe0] sm:$0xf]
      %v2499 = vld [vmem:[%s2452 + $0xe4] sm:$0xf]
      %v2500 = vld [vmem:[%s2452 + $0xe8] sm:$0xf]
      %v2501 = vld [vmem:[%s2452 + $0xf0] sm:$0xf]
      %v2502 = vld [vmem:[%s2452 + $0xf4] sm:$0xf]
      %v2503 = vld [vmem:[%s2452 + $0xf8] sm:$0xf]
      %v2504 = vld [vmem:[%s2452 + $0xfc] sm:$0xf]
      %v2505 = vld [vmem:[%s2452 + $0x104] sm:$0xf]
      %v2506 = vld [vmem:[%s2452 + $0x108] sm:$0xf]
      %v2507 = vld [vmem:[%s2452 + $0x10c] sm:$0xf]
      %v2508 = vld [vmem:[%s2452 + $0x110] sm:$0xf]
      %v2509 = vld [vmem:[%s2452 + $0x118] sm:$0xf]
      %v2510 = vld [vmem:[%s2452 + $0x11c] sm:$0xf]
      %v2511 = vld [vmem:[%s2452 + $0x120] sm:$0xf]
      %v2512 = vld [vmem:[%s2452 + $0x124] sm:$0xf]
      %v2513 = vld [vmem:[%s2452 + $0x12c] sm:$0xf]
      %v2514 = vld [vmem:[%s2452 + $0x130] sm:$0xf]
      %v2515 = vld [vmem:[%s2452 + $0x134] sm:$0xf]
      %v2516 = vld [vmem:[%s2452 + $0x138] sm:$0xf]
      %v2517 = vld [vmem:[%s2452 + $0x140] sm:$0xf]
      %v2518 = vld [vmem:[%s2452 + $0x144] sm:$0xf]
      %v2519 = vld [vmem:[%s2452 + $0x148] sm:$0xf]
      %v2520 = vld [vmem:[%s2452 + $0x14c] sm:$0xf]
      %v2521 = vld [vmem:[%s2452 + $0x154] sm:$0xf]
      %v2522 = vld [vmem:[%s2452 + $0x158] sm:$0xf]
      %v2523 = vld [vmem:[%s2452 + $0x15c] sm:$0xf]
      %v2524 = vld [vmem:[%s2452 + $0x160] sm:$0xf]
      %v2597 = vunpack.c.l.b16 %v2453
      %v2598 = vunpack.c.l.b16 %v2454
      %v2599 = vunpack.c.l.b16 %v2455
      %v2600 = vunpack.c.l.b16 %v2456
      %v2601 = vunpack.c.l.b16 %v2457
      %v2602 = vunpack.c.l.b16 %v2458
      %v2603 = vunpack.c.l.b16 %v2459
      %v2604 = vunpack.c.l.b16 %v2460
      %v2605 = vunpack.c.l.b16 %v2461
      %v2606 = vunpack.c.l.b16 %v2462
      %v2607 = vunpack.c.l.b16 %v2463
      %v2608 = vunpack.c.l.b16 %v2464
      %v2609 = vunpack.c.l.b16 %v2465
      %v2610 = vunpack.c.l.b16 %v2466
      %v2611 = vunpack.c.l.b16 %v2467
      %v2612 = vunpack.c.l.b16 %v2468
      %v2613 = vunpack.c.l.b16 %v2469
      %v2614 = vunpack.c.l.b16 %v2470
      %v2615 = vunpack.c.l.b16 %v2471
      %v2616 = vunpack.c.l.b16 %v2472
      %v2617 = vunpack.c.l.b16 %v2473
      %v2618 = vunpack.c.l.b16 %v2474
      %v2619 = vunpack.c.l.b16 %v2475
      %v2620 = vunpack.c.l.b16 %v2476
      %v2621 = vunpack.c.l.b16 %v2477
      %v2622 = vunpack.c.l.b16 %v2478
      %v2623 = vunpack.c.l.b16 %v2479
      %v2624 = vunpack.c.l.b16 %v2480
      %v2625 = vunpack.c.l.b16 %v2481
      %v2626 = vunpack.c.l.b16 %v2482
      %v2627 = vunpack.c.l.b16 %v2483
      %v2628 = vunpack.c.l.b16 %v2484
      %v2629 = vunpack.c.l.b16 %v2485
      %v2630 = vunpack.c.l.b16 %v2486
      %v2631 = vunpack.c.l.b16 %v2487
      %v2632 = vunpack.c.l.b16 %v2488
      %v2633 = vunpack.c.l.b16 %v2489
      %v2634 = vunpack.c.l.b16 %v2490
      %v2635 = vunpack.c.l.b16 %v2491
      %v2636 = vunpack.c.l.b16 %v2492
      %v2637 = vunpack.c.l.b16 %v2493
      %v2638 = vunpack.c.l.b16 %v2494
      %v2639 = vunpack.c.l.b16 %v2495
      %v2640 = vunpack.c.l.b16 %v2496
      %v2641 = vunpack.c.l.b16 %v2497
      %v2642 = vunpack.c.l.b16 %v2498
      %v2643 = vunpack.c.l.b16 %v2499
      %v2644 = vunpack.c.l.b16 %v2500
      %v2645 = vunpack.c.l.b16 %v2501
      %v2646 = vunpack.c.l.b16 %v2502
      %v2647 = vunpack.c.l.b16 %v2503
      %v2648 = vunpack.c.l.b16 %v2504
      %v2649 = vunpack.c.l.b16 %v2505
      %v2650 = vunpack.c.l.b16 %v2506
      %v2651 = vunpack.c.l.b16 %v2507
      %v2652 = vunpack.c.l.b16 %v2508
      %v2653 = vunpack.c.l.b16 %v2509
      %v2654 = vunpack.c.l.b16 %v2510
      %v2655 = vunpack.c.l.b16 %v2511
      %v2656 = vunpack.c.l.b16 %v2512
      %v2657 = vunpack.c.l.b16 %v2513
      %v2658 = vunpack.c.l.b16 %v2514
      %v2659 = vunpack.c.l.b16 %v2515
      %v2660 = vunpack.c.l.b16 %v2516
      %v2661 = vunpack.c.l.b16 %v2517
      %v2662 = vunpack.c.l.b16 %v2518
      %v2663 = vunpack.c.l.b16 %v2519
      %v2664 = vunpack.c.l.b16 %v2520
      %v2665 = vunpack.c.l.b16 %v2521
      %v2666 = vunpack.c.l.b16 %v2522
      %v2667 = vunpack.c.l.b16 %v2523
      %v2668 = vunpack.c.l.b16 %v2524
      %v2669 = vpack.c.b16 %v2598, %v2597
      %v2670 = vpack.c.b16 %v2600, %v2599
      %v2671 = vpack.c.b16 %v2602, %v2601
      %v2672 = vpack.c.b16 %v2604, %v2603
      %v2673 = vpack.c.b16 %v2606, %v2605
      %v2674 = vpack.c.b16 %v2608, %v2607
      %v2675 = vpack.c.b16 %v2610, %v2609
      %v2676 = vpack.c.b16 %v2612, %v2611
      %v2677 = vpack.c.b16 %v2614, %v2613
      %v2678 = vpack.c.b16 %v2616, %v2615
      %v2679 = vpack.c.b16 %v2618, %v2617
      %v2680 = vpack.c.b16 %v2620, %v2619
      %v2681 = vpack.c.b16 %v2622, %v2621
      %v2682 = vpack.c.b16 %v2624, %v2623
      %v2683 = vpack.c.b16 %v2626, %v2625
      %v2684 = vpack.c.b16 %v2628, %v2627
      %v2685 = vpack.c.b16 %v2630, %v2629
      %v2686 = vpack.c.b16 %v2632, %v2631
      %v2687 = vpack.c.b16 %v2634, %v2633
      %v2688 = vpack.c.b16 %v2636, %v2635
      %v2689 = vpack.c.b16 %v2638, %v2637
      %v2690 = vpack.c.b16 %v2640, %v2639
      %v2691 = vpack.c.b16 %v2642, %v2641
      %v2692 = vpack.c.b16 %v2644, %v2643
      %v2693 = vpack.c.b16 %v2646, %v2645
      %v2694 = vpack.c.b16 %v2648, %v2647
      %v2695 = vpack.c.b16 %v2650, %v2649
      %v2696 = vpack.c.b16 %v2652, %v2651
      %v2697 = vpack.c.b16 %v2654, %v2653
      %v2698 = vpack.c.b16 %v2656, %v2655
      %v2699 = vpack.c.b16 %v2658, %v2657
      %v2700 = vpack.c.b16 %v2660, %v2659
      %v2701 = vpack.c.b16 %v2662, %v2661
      %v2702 = vpack.c.b16 %v2664, %v2663
      %v2703 = vpack.c.b16 %v2666, %v2665
      %v2704 = vpack.c.b16 %v2668, %v2667
      %2705 = vrot.lane.b32.xlu0 %v2669, 12
      %v2706 = vpop.permute.xlu0 %2705
      %2707 = vrot.lane.b32.xlu0 %v2670, 12
      %v2708 = vpop.permute.xlu0 %2707
      %2709 = vrot.lane.b32.xlu0 %v2671, 12
      %v2710 = vpop.permute.xlu0 %2709
      %2711 = vrot.lane.b32.xlu0 %v2672, 12
      %v2712 = vpop.permute.xlu0 %2711
      %2713 = vrot.lane.b32.xlu0 %v2673, 12
      %v2714 = vpop.permute.xlu0 %2713
      %2715 = vrot.lane.b32.xlu0 %v2674, 12
      %v2716 = vpop.permute.xlu0 %2715
      %2717 = vrot.lane.b32.xlu0 %v2675, 12
      %v2718 = vpop.permute.xlu0 %2717
      %2719 = vrot.lane.b32.xlu0 %v2676, 12
      %v2720 = vpop.permute.xlu0 %2719
      %2721 = vrot.lane.b32.xlu0 %v2677, 12
      %v2722 = vpop.permute.xlu0 %2721
      %2723 = vrot.lane.b32.xlu0 %v2678, 12
      %v2724 = vpop.permute.xlu0 %2723
      %2725 = vrot.lane.b32.xlu0 %v2679, 12
      %v2726 = vpop.permute.xlu0 %2725
      %2727 = vrot.lane.b32.xlu0 %v2680, 12
      %v2728 = vpop.permute.xlu0 %2727
      %2729 = vrot.lane.b32.xlu0 %v2681, 12
      %v2730 = vpop.permute.xlu0 %2729
      %2731 = vrot.lane.b32.xlu0 %v2682, 12
      %v2732 = vpop.permute.xlu0 %2731
      %2733 = vrot.lane.b32.xlu0 %v2683, 12
      %v2734 = vpop.permute.xlu0 %2733
      %2735 = vrot.lane.b32.xlu0 %v2684, 12
      %v2736 = vpop.permute.xlu0 %2735
      %2737 = vrot.lane.b32.xlu0 %v2685, 12
      %v2738 = vpop.permute.xlu0 %2737
      %2739 = vrot.lane.b32.xlu0 %v2686, 12
      %v2740 = vpop.permute.xlu0 %2739
      %2741 = vrot.lane.b32.xlu0 %v2687, 12
      %v2742 = vpop.permute.xlu0 %2741
      %2743 = vrot.lane.b32.xlu0 %v2688, 12
      %v2744 = vpop.permute.xlu0 %2743
      %2745 = vrot.lane.b32.xlu0 %v2689, 12
      %v2746 = vpop.permute.xlu0 %2745
      %2747 = vrot.lane.b32.xlu0 %v2690, 12
      %v2748 = vpop.permute.xlu0 %2747
      %2749 = vrot.lane.b32.xlu0 %v2691, 12
      %v2750 = vpop.permute.xlu0 %2749
      %2751 = vrot.lane.b32.xlu0 %v2692, 12
      %v2752 = vpop.permute.xlu0 %2751
      %2753 = vrot.lane.b32.xlu0 %v2693, 12
      %v2754 = vpop.permute.xlu0 %2753
      %2755 = vrot.lane.b32.xlu0 %v2694, 12
      %v2756 = vpop.permute.xlu0 %2755
      %2757 = vrot.lane.b32.xlu0 %v2695, 12
      %v2758 = vpop.permute.xlu0 %2757
      %2759 = vrot.lane.b32.xlu0 %v2696, 12
      %v2760 = vpop.permute.xlu0 %2759
      %2761 = vrot.lane.b32.xlu0 %v2697, 12
      %v2762 = vpop.permute.xlu0 %2761
      %2763 = vrot.lane.b32.xlu0 %v2698, 12
      %v2764 = vpop.permute.xlu0 %2763
      %2765 = vrot.lane.b32.xlu0 %v2699, 12
      %v2766 = vpop.permute.xlu0 %2765
      %2767 = vrot.lane.b32.xlu0 %v2700, 12
      %v2768 = vpop.permute.xlu0 %2767
      %2769 = vrot.lane.b32.xlu0 %v2701, 12
      %v2770 = vpop.permute.xlu0 %2769
      %2771 = vrot.lane.b32.xlu0 %v2702, 12
      %v2772 = vpop.permute.xlu0 %2771
      %2773 = vrot.lane.b32.xlu0 %v2703, 12
      %v2774 = vpop.permute.xlu0 %2773
      %2775 = vrot.lane.b32.xlu0 %v2704, 12
      %v2776 = vpop.permute.xlu0 %2775
      %vm2813 = vcmask 130144
      %2814 = vst.msk [vmem:[#allocation2] sm:$0xff] %vm2813, %v2706
      %2815 = vst.msk [vmem:[#allocation2 + $0x8] sm:$0xff] %vm2813, %v2708
      %2816 = vst.msk [vmem:[#allocation2 + $0x10] sm:$0xff] %vm2813, %v2710
      %2817 = vst.msk [vmem:[#allocation2 + $0x18] sm:$0xff] %vm2813, %v2712
      %2818 = vst.msk [vmem:[#allocation2 + $0x20] sm:$0xff] %vm2813, %v2714
      %2819 = vst.msk [vmem:[#allocation2 + $0x28] sm:$0xff] %vm2813, %v2716
      %2820 = vst.msk [vmem:[#allocation2 + $0x30] sm:$0xff] %vm2813, %v2718
      %2821 = vst.msk [vmem:[#allocation2 + $0x38] sm:$0xff] %vm2813, %v2720
      %2822 = vst.msk [vmem:[#allocation2 + $0x40] sm:$0xff] %vm2813, %v2722
      %2823 = vst.msk [vmem:[#allocation2 + $0x48] sm:$0xff] %vm2813, %v2724
      %2824 = vst.msk [vmem:[#allocation2 + $0x50] sm:$0xff] %vm2813, %v2726
      %2825 = vst.msk [vmem:[#allocation2 + $0x58] sm:$0xff] %vm2813, %v2728
      %2826 = vst.msk [vmem:[#allocation2 + $0x60] sm:$0xff] %vm2813, %v2730
      %2827 = vst.msk [vmem:[#allocation2 + $0x68] sm:$0xff] %vm2813, %v2732
      %2828 = vst.msk [vmem:[#allocation2 + $0x70] sm:$0xff] %vm2813, %v2734
      %2829 = vst.msk [vmem:[#allocation2 + $0x78] sm:$0xff] %vm2813, %v2736
      %2830 = vst.msk [vmem:[#allocation2 + $0x80] sm:$0xff] %vm2813, %v2738
      %2831 = vst.msk [vmem:[#allocation2 + $0x88] sm:$0xff] %vm2813, %v2740
      %2832 = vst.msk [vmem:[#allocation2 + $0x90] sm:$0xff] %vm2813, %v2742
      %2833 = vst.msk [vmem:[#allocation2 + $0x98] sm:$0xff] %vm2813, %v2744
      %2834 = vst.msk [vmem:[#allocation2 + $0xa0] sm:$0xff] %vm2813, %v2746
      %2835 = vst.msk [vmem:[#allocation2 + $0xa8] sm:$0xff] %vm2813, %v2748
      %2836 = vst.msk [vmem:[#allocation2 + $0xb0] sm:$0xff] %vm2813, %v2750
      %2837 = vst.msk [vmem:[#allocation2 + $0xb8] sm:$0xff] %vm2813, %v2752
      %2838 = vst.msk [vmem:[#allocation2 + $0xc0] sm:$0xff] %vm2813, %v2754
      %2839 = vst.msk [vmem:[#allocation2 + $0xc8] sm:$0xff] %vm2813, %v2756
      %2840 = vst.msk [vmem:[#allocation2 + $0xd0] sm:$0xff] %vm2813, %v2758
      %2841 = vst.msk [vmem:[#allocation2 + $0xd8] sm:$0xff] %vm2813, %v2760
      %2842 = vst.msk [vmem:[#allocation2 + $0xe0] sm:$0xff] %vm2813, %v2762
      %2843 = vst.msk [vmem:[#allocation2 + $0xe8] sm:$0xff] %vm2813, %v2764
      %2844 = vst.msk [vmem:[#allocation2 + $0xf0] sm:$0xff] %vm2813, %v2766
      %2845 = vst.msk [vmem:[#allocation2 + $0xf8] sm:$0xff] %vm2813, %v2768
      %2846 = vst.msk [vmem:[#allocation2 + $0x100] sm:$0xff] %vm2813, %v2770
      %2847 = vst.msk [vmem:[#allocation2 + $0x108] sm:$0xff] %vm2813, %v2772
      %2848 = vst.msk [vmem:[#allocation2 + $0x110] sm:$0xff] %vm2813, %v2774
      %2849 = vst.msk [vmem:[#allocation2 + $0x118] sm:$0xff] %vm2813, %v2776
      %v2850 = vld [vmem:[%s2452] sm:$0xf]
      %v2851 = vld [vmem:[%s2452 + $0x4] sm:$0xf]
      %v2852 = vld [vmem:[%s2452 + $0x8] sm:$0xf]
      %v2853 = vld [vmem:[%s2452 + $0xc] sm:$0xf]
      %v2854 = vld [vmem:[%s2452 + $0x10] sm:$0x1]
      %v2855 = vld [vmem:[%s2452 + $0x14] sm:$0xf]
      %v2856 = vld [vmem:[%s2452 + $0x18] sm:$0xf]
      %v2857 = vld [vmem:[%s2452 + $0x1c] sm:$0xf]
      %v2858 = vld [vmem:[%s2452 + $0x20] sm:$0xf]
      %v2859 = vld [vmem:[%s2452 + $0x24] sm:$0x1]
      %v2860 = vld [vmem:[%s2452 + $0x28] sm:$0xf]
      %v2861 = vld [vmem:[%s2452 + $0x2c] sm:$0xf]
      %v2862 = vld [vmem:[%s2452 + $0x30] sm:$0xf]
      %v2863 = vld [vmem:[%s2452 + $0x34] sm:$0xf]
      %v2864 = vld [vmem:[%s2452 + $0x38] sm:$0x1]
      %v2865 = vld [vmem:[%s2452 + $0x3c] sm:$0xf]
      %v2866 = vld [vmem:[%s2452 + $0x40] sm:$0xf]
      %v2867 = vld [vmem:[%s2452 + $0x44] sm:$0xf]
      %v2868 = vld [vmem:[%s2452 + $0x48] sm:$0xf]
      %v2869 = vld [vmem:[%s2452 + $0x4c] sm:$0x1]
      %v2870 = vld [vmem:[%s2452 + $0x50] sm:$0xf]
      %v2871 = vld [vmem:[%s2452 + $0x54] sm:$0xf]
      %v2872 = vld [vmem:[%s2452 + $0x58] sm:$0xf]
      %v2873 = vld [vmem:[%s2452 + $0x5c] sm:$0xf]
      %v2874 = vld [vmem:[%s2452 + $0x60] sm:$0x1]
      %v2875 = vld [vmem:[%s2452 + $0x64] sm:$0xf]
      %v2876 = vld [vmem:[%s2452 + $0x68] sm:$0xf]
      %v2877 = vld [vmem:[%s2452 + $0x6c] sm:$0xf]
      %v2878 = vld [vmem:[%s2452 + $0x70] sm:$0xf]
      %v2879 = vld [vmem:[%s2452 + $0x74] sm:$0x1]
      %v2880 = vld [vmem:[%s2452 + $0x78] sm:$0xf]
      %v2881 = vld [vmem:[%s2452 + $0x7c] sm:$0xf]
      %v2882 = vld [vmem:[%s2452 + $0x80] sm:$0xf]
      %v2883 = vld [vmem:[%s2452 + $0x84] sm:$0xf]
      %v2884 = vld [vmem:[%s2452 + $0x88] sm:$0x1]
      %v2885 = vld [vmem:[%s2452 + $0x8c] sm:$0xf]
      %v2886 = vld [vmem:[%s2452 + $0x90] sm:$0xf]
      %v2887 = vld [vmem:[%s2452 + $0x94] sm:$0xf]
      %v2888 = vld [vmem:[%s2452 + $0x98] sm:$0xf]
      %v2889 = vld [vmem:[%s2452 + $0x9c] sm:$0x1]
      %v2890 = vld [vmem:[%s2452 + $0xa0] sm:$0xf]
      %v2891 = vld [vmem:[%s2452 + $0xa4] sm:$0xf]
      %v2892 = vld [vmem:[%s2452 + $0xa8] sm:$0xf]
      %v2893 = vld [vmem:[%s2452 + $0xac] sm:$0xf]
      %v2894 = vld [vmem:[%s2452 + $0xb0] sm:$0x1]
      %v2895 = vld [vmem:[%s2452 + $0xb4] sm:$0xf]
      %v2896 = vld [vmem:[%s2452 + $0xb8] sm:$0xf]
      %v2897 = vld [vmem:[%s2452 + $0xbc] sm:$0xf]
      %v2898 = vld [vmem:[%s2452 + $0xc0] sm:$0xf]
      %v2899 = vld [vmem:[%s2452 + $0xc4] sm:$0x1]
      %v2900 = vld [vmem:[%s2452 + $0xc8] sm:$0xf]
      %v2901 = vld [vmem:[%s2452 + $0xcc] sm:$0xf]
      %v2902 = vld [vmem:[%s2452 + $0xd0] sm:$0xf]
      %v2903 = vld [vmem:[%s2452 + $0xd4] sm:$0xf]
      %v2904 = vld [vmem:[%s2452 + $0xd8] sm:$0x1]
      %v2905 = vld [vmem:[%s2452 + $0xdc] sm:$0xf]
      %v2906 = vld [vmem:[%s2452 + $0xe0] sm:$0xf]
      %v2907 = vld [vmem:[%s2452 + $0xe4] sm:$0xf]
      %v2908 = vld [vmem:[%s2452 + $0xe8] sm:$0xf]
      %v2909 = vld [vmem:[%s2452 + $0xec] sm:$0x1]
      %v2910 = vld [vmem:[%s2452 + $0xf0] sm:$0xf]
      %v2911 = vld [vmem:[%s2452 + $0xf4] sm:$0xf]
      %v2912 = vld [vmem:[%s2452 + $0xf8] sm:$0xf]
      %v2913 = vld [vmem:[%s2452 + $0xfc] sm:$0xf]
      %v2914 = vld [vmem:[%s2452 + $0x100] sm:$0x1]
      %v2915 = vld [vmem:[%s2452 + $0x104] sm:$0xf]
      %v2916 = vld [vmem:[%s2452 + $0x108] sm:$0xf]
      %v2917 = vld [vmem:[%s2452 + $0x10c] sm:$0xf]
      %v2918 = vld [vmem:[%s2452 + $0x110] sm:$0xf]
      %v2919 = vld [vmem:[%s2452 + $0x114] sm:$0x1]
      %v2920 = vld [vmem:[%s2452 + $0x118] sm:$0xf]
      %v2921 = vld [vmem:[%s2452 + $0x11c] sm:$0xf]
      %v2922 = vld [vmem:[%s2452 + $0x120] sm:$0xf]
      %v2923 = vld [vmem:[%s2452 + $0x124] sm:$0xf]
      %v2924 = vld [vmem:[%s2452 + $0x128] sm:$0x1]
      %v2925 = vld [vmem:[%s2452 + $0x12c] sm:$0xf]
      %v2926 = vld [vmem:[%s2452 + $0x130] sm:$0xf]
      %v2927 = vld [vmem:[%s2452 + $0x134] sm:$0xf]
      %v2928 = vld [vmem:[%s2452 + $0x138] sm:$0xf]
      %v2929 = vld [vmem:[%s2452 + $0x13c] sm:$0x1]
      %v2930 = vld [vmem:[%s2452 + $0x140] sm:$0xf]
      %v2931 = vld [vmem:[%s2452 + $0x144] sm:$0xf]
      %v2932 = vld [vmem:[%s2452 + $0x148] sm:$0xf]
      %v2933 = vld [vmem:[%s2452 + $0x14c] sm:$0xf]
      %v2934 = vld [vmem:[%s2452 + $0x150] sm:$0x1]
      %v2935 = vld [vmem:[%s2452 + $0x154] sm:$0xf]
      %v2936 = vld [vmem:[%s2452 + $0x158] sm:$0xf]
      %v2937 = vld [vmem:[%s2452 + $0x15c] sm:$0xf]
      %v2938 = vld [vmem:[%s2452 + $0x160] sm:$0xf]
      %v2939 = vld [vmem:[%s2452 + $0x164] sm:$0x1]
      %v2941 = vshrl.u32 %v2850, 16
      %v2943 = vrot.slane %v2941, 4
      %v2944 = vshll.u32 %v2850, 16
      %v2946 = vrot.slane %v2944, 5
      %v2947 = vor.u32 %v2943, %v2946
      %v2948 = vrot.slane %v2947, 4
      %v2950 = vshll.u32 %v2851, 16
      %v2952 = vrot.slane %v2950, 5
      %v2953 = vsel %vm736, %v2948, %v2952
      %v2954 = vshrl.u32 %v2851, 16
      %v2956 = vrot.slane %v2954, 4
      %v2957 = vor.u32 %v2956, %v2952
      %v2958 = vrot.slane %v2957, 4
      %v2960 = vshll.u32 %v2852, 16
      %v2962 = vrot.slane %v2960, 5
      %v2963 = vsel %vm736, %v2958, %v2962
      %v2964 = vshrl.u32 %v2852, 16
      %v2966 = vrot.slane %v2964, 4
      %v2967 = vor.u32 %v2966, %v2962
      %v2968 = vrot.slane %v2967, 4
      %v2970 = vshll.u32 %v2853, 16
      %v2972 = vrot.slane %v2970, 5
      %v2973 = vsel %vm736, %v2968, %v2972
      %v2974 = vshrl.u32 %v2853, 16
      %v2976 = vrot.slane %v2974, 4
      %v2977 = vor.u32 %v2976, %v2972
      %v2978 = vrot.slane %v2977, 4
      %v2980 = vshll.u32 %v2854, 16
      %v2982 = vrot.slane %v2980, 5
      %v2983 = vsel %vm736, %v2978, %v2982
      %v2985 = vshrl.u32 %v2855, 16
      %v2987 = vrot.slane %v2985, 4
      %v2988 = vshll.u32 %v2855, 16
      %v2990 = vrot.slane %v2988, 5
      %v2991 = vor.u32 %v2987, %v2990
      %v2992 = vrot.slane %v2991, 4
      %v2994 = vshll.u32 %v2856, 16
      %v2996 = vrot.slane %v2994, 5
      %v2997 = vsel %vm736, %v2992, %v2996
      %v2998 = vshrl.u32 %v2856, 16
      %v3000 = vrot.slane %v2998, 4
      %v3001 = vor.u32 %v3000, %v2996
      %v3002 = vrot.slane %v3001, 4
      %v3004 = vshll.u32 %v2857, 16
      %v3006 = vrot.slane %v3004, 5
      %v3007 = vsel %vm736, %v3002, %v3006
      %v3008 = vshrl.u32 %v2857, 16
      %v3010 = vrot.slane %v3008, 4
      %v3011 = vor.u32 %v3010, %v3006
      %v3012 = vrot.slane %v3011, 4
      %v3014 = vshll.u32 %v2858, 16
      %v3016 = vrot.slane %v3014, 5
      %v3017 = vsel %vm736, %v3012, %v3016
      %v3018 = vshrl.u32 %v2858, 16
      %v3020 = vrot.slane %v3018, 4
      %v3021 = vor.u32 %v3020, %v3016
      %v3022 = vrot.slane %v3021, 4
      %v3024 = vshll.u32 %v2859, 16
      %v3026 = vrot.slane %v3024, 5
      %v3027 = vsel %vm736, %v3022, %v3026
      %v3029 = vshrl.u32 %v2860, 16
      %v3031 = vrot.slane %v3029, 4
      %v3032 = vshll.u32 %v2860, 16
      %v3034 = vrot.slane %v3032, 5
      %v3035 = vor.u32 %v3031, %v3034
      %v3036 = vrot.slane %v3035, 4
      %v3038 = vshll.u32 %v2861, 16
      %v3040 = vrot.slane %v3038, 5
      %v3041 = vsel %vm736, %v3036, %v3040
      %v3042 = vshrl.u32 %v2861, 16
      %v3044 = vrot.slane %v3042, 4
      %v3045 = vor.u32 %v3044, %v3040
      %v3046 = vrot.slane %v3045, 4
      %v3048 = vshll.u32 %v2862, 16
      %v3050 = vrot.slane %v3048, 5
      %v3051 = vsel %vm736, %v3046, %v3050
      %v3052 = vshrl.u32 %v2862, 16
      %v3054 = vrot.slane %v3052, 4
      %v3055 = vor.u32 %v3054, %v3050
      %v3056 = vrot.slane %v3055, 4
      %v3058 = vshll.u32 %v2863, 16
      %v3060 = vrot.slane %v3058, 5
      %v3061 = vsel %vm736, %v3056, %v3060
      %v3062 = vshrl.u32 %v2863, 16
      %v3064 = vrot.slane %v3062, 4
      %v3065 = vor.u32 %v3064, %v3060
      %v3066 = vrot.slane %v3065, 4
      %v3068 = vshll.u32 %v2864, 16
      %v3070 = vrot.slane %v3068, 5
      %v3071 = vsel %vm736, %v3066, %v3070
      %v3073 = vshrl.u32 %v2865, 16
      %v3075 = vrot.slane %v3073, 4
      %v3076 = vshll.u32 %v2865, 16
      %v3078 = vrot.slane %v3076, 5
      %v3079 = vor.u32 %v3075, %v3078
      %v3080 = vrot.slane %v3079, 4
      %v3082 = vshll.u32 %v2866, 16
      %v3084 = vrot.slane %v3082, 5
      %v3085 = vsel %vm736, %v3080, %v3084
      %v3086 = vshrl.u32 %v2866, 16
      %v3088 = vrot.slane %v3086, 4
      %v3089 = vor.u32 %v3088, %v3084
      %v3090 = vrot.slane %v3089, 4
      %v3092 = vshll.u32 %v2867, 16
      %v3094 = vrot.slane %v3092, 5
      %v3095 = vsel %vm736, %v3090, %v3094
      %v3096 = vshrl.u32 %v2867, 16
      %v3098 = vrot.slane %v3096, 4
      %v3099 = vor.u32 %v3098, %v3094
      %v3100 = vrot.slane %v3099, 4
      %v3102 = vshll.u32 %v2868, 16
      %v3104 = vrot.slane %v3102, 5
      %v3105 = vsel %vm736, %v3100, %v3104
      %v3106 = vshrl.u32 %v2868, 16
      %v3108 = vrot.slane %v3106, 4
      %v3109 = vor.u32 %v3108, %v3104
      %v3110 = vrot.slane %v3109, 4
      %v3112 = vshll.u32 %v2869, 16
      %v3114 = vrot.slane %v3112, 5
      %v3115 = vsel %vm736, %v3110, %v3114
      %v3117 = vshrl.u32 %v2870, 16
      %v3119 = vrot.slane %v3117, 4
      %v3120 = vshll.u32 %v2870, 16
      %v3122 = vrot.slane %v3120, 5
      %v3123 = vor.u32 %v3119, %v3122
      %v3124 = vrot.slane %v3123, 4
      %v3126 = vshll.u32 %v2871, 16
      %v3128 = vrot.slane %v3126, 5
      %v3129 = vsel %vm736, %v3124, %v3128
      %v3130 = vshrl.u32 %v2871, 16
      %v3132 = vrot.slane %v3130, 4
      %v3133 = vor.u32 %v3132, %v3128
      %v3134 = vrot.slane %v3133, 4
      %v3136 = vshll.u32 %v2872, 16
      %v3138 = vrot.slane %v3136, 5
      %v3139 = vsel %vm736, %v3134, %v3138
      %v3140 = vshrl.u32 %v2872, 16
      %v3142 = vrot.slane %v3140, 4
      %v3143 = vor.u32 %v3142, %v3138
      %v3144 = vrot.slane %v3143, 4
      %v3146 = vshll.u32 %v2873, 16
      %v3148 = vrot.slane %v3146, 5
      %v3149 = vsel %vm736, %v3144, %v3148
      %v3150 = vshrl.u32 %v2873, 16
      %v3152 = vrot.slane %v3150, 4
      %v3153 = vor.u32 %v3152, %v3148
      %v3154 = vrot.slane %v3153, 4
      %v3156 = vshll.u32 %v2874, 16
      %v3158 = vrot.slane %v3156, 5
      %v3159 = vsel %vm736, %v3154, %v3158
      %v3161 = vshrl.u32 %v2875, 16
      %v3163 = vrot.slane %v3161, 4
      %v3164 = vshll.u32 %v2875, 16
      %v3166 = vrot.slane %v3164, 5
      %v3167 = vor.u32 %v3163, %v3166
      %v3168 = vrot.slane %v3167, 4
      %v3170 = vshll.u32 %v2876, 16
      %v3172 = vrot.slane %v3170, 5
      %v3173 = vsel %vm736, %v3168, %v3172
      %v3174 = vshrl.u32 %v2876, 16
      %v3176 = vrot.slane %v3174, 4
      %v3177 = vor.u32 %v3176, %v3172
      %v3178 = vrot.slane %v3177, 4
      %v3180 = vshll.u32 %v2877, 16
      %v3182 = vrot.slane %v3180, 5
      %v3183 = vsel %vm736, %v3178, %v3182
      %v3184 = vshrl.u32 %v2877, 16
      %v3186 = vrot.slane %v3184, 4
      %v3187 = vor.u32 %v3186, %v3182
      %v3188 = vrot.slane %v3187, 4
      %v3190 = vshll.u32 %v2878, 16
      %v3192 = vrot.slane %v3190, 5
      %v3193 = vsel %vm736, %v3188, %v3192
      %v3194 = vshrl.u32 %v2878, 16
      %v3196 = vrot.slane %v3194, 4
      %v3197 = vor.u32 %v3196, %v3192
      %v3198 = vrot.slane %v3197, 4
      %v3200 = vshll.u32 %v2879, 16
      %v3202 = vrot.slane %v3200, 5
      %v3203 = vsel %vm736, %v3198, %v3202
      %v3205 = vshrl.u32 %v2880, 16
      %v3207 = vrot.slane %v3205, 4
      %v3208 = vshll.u32 %v2880, 16
      %v3210 = vrot.slane %v3208, 5
      %v3211 = vor.u32 %v3207, %v3210
      %v3212 = vrot.slane %v3211, 4
      %v3214 = vshll.u32 %v2881, 16
      %v3216 = vrot.slane %v3214, 5
      %v3217 = vsel %vm736, %v3212, %v3216
      %v3218 = vshrl.u32 %v2881, 16
      %v3220 = vrot.slane %v3218, 4
      %v3221 = vor.u32 %v3220, %v3216
      %v3222 = vrot.slane %v3221, 4
      %v3224 = vshll.u32 %v2882, 16
      %v3226 = vrot.slane %v3224, 5
      %v3227 = vsel %vm736, %v3222, %v3226
      %v3228 = vshrl.u32 %v2882, 16
      %v3230 = vrot.slane %v3228, 4
      %v3231 = vor.u32 %v3230, %v3226
      %v3232 = vrot.slane %v3231, 4
      %v3234 = vshll.u32 %v2883, 16
      %v3236 = vrot.slane %v3234, 5
      %v3237 = vsel %vm736, %v3232, %v3236
      %v3238 = vshrl.u32 %v2883, 16
      %v3240 = vrot.slane %v3238, 4
      %v3241 = vor.u32 %v3240, %v3236
      %v3242 = vrot.slane %v3241, 4
      %v3244 = vshll.u32 %v2884, 16
      %v3246 = vrot.slane %v3244, 5
      %v3247 = vsel %vm736, %v3242, %v3246
      %v3249 = vshrl.u32 %v2885, 16
      %v3251 = vrot.slane %v3249, 4
      %v3252 = vshll.u32 %v2885, 16
      %v3254 = vrot.slane %v3252, 5
      %v3255 = vor.u32 %v3251, %v3254
      %v3256 = vrot.slane %v3255, 4
      %v3258 = vshll.u32 %v2886, 16
      %v3260 = vrot.slane %v3258, 5
      %v3261 = vsel %vm736, %v3256, %v3260
      %v3262 = vshrl.u32 %v2886, 16
      %v3264 = vrot.slane %v3262, 4
      %v3265 = vor.u32 %v3264, %v3260
      %v3266 = vrot.slane %v3265, 4
      %v3268 = vshll.u32 %v2887, 16
      %v3270 = vrot.slane %v3268, 5
      %v3271 = vsel %vm736, %v3266, %v3270
      %v3272 = vshrl.u32 %v2887, 16
      %v3274 = vrot.slane %v3272, 4
      %v3275 = vor.u32 %v3274, %v3270
      %v3276 = vrot.slane %v3275, 4
      %v3278 = vshll.u32 %v2888, 16
      %v3280 = vrot.slane %v3278, 5
      %v3281 = vsel %vm736, %v3276, %v3280
      %v3282 = vshrl.u32 %v2888, 16
      %v3284 = vrot.slane %v3282, 4
      %v3285 = vor.u32 %v3284, %v3280
      %v3286 = vrot.slane %v3285, 4
      %v3288 = vshll.u32 %v2889, 16
      %v3290 = vrot.slane %v3288, 5
      %v3291 = vsel %vm736, %v3286, %v3290
      %v3293 = vshrl.u32 %v2890, 16
      %v3295 = vrot.slane %v3293, 4
      %v3296 = vshll.u32 %v2890, 16
      %v3298 = vrot.slane %v3296, 5
      %v3299 = vor.u32 %v3295, %v3298
      %v3300 = vrot.slane %v3299, 4
      %v3302 = vshll.u32 %v2891, 16
      %v3304 = vrot.slane %v3302, 5
      %v3305 = vsel %vm736, %v3300, %v3304
      %v3306 = vshrl.u32 %v2891, 16
      %v3308 = vrot.slane %v3306, 4
      %v3309 = vor.u32 %v3308, %v3304
      %v3310 = vrot.slane %v3309, 4
      %v3312 = vshll.u32 %v2892, 16
      %v3314 = vrot.slane %v3312, 5
      %v3315 = vsel %vm736, %v3310, %v3314
      %v3316 = vshrl.u32 %v2892, 16
      %v3318 = vrot.slane %v3316, 4
      %v3319 = vor.u32 %v3318, %v3314
      %v3320 = vrot.slane %v3319, 4
      %v3322 = vshll.u32 %v2893, 16
      %v3324 = vrot.slane %v3322, 5
      %v3325 = vsel %vm736, %v3320, %v3324
      %v3326 = vshrl.u32 %v2893, 16
      %v3328 = vrot.slane %v3326, 4
      %v3329 = vor.u32 %v3328, %v3324
      %v3330 = vrot.slane %v3329, 4
      %v3332 = vshll.u32 %v2894, 16
      %v3334 = vrot.slane %v3332, 5
      %v3335 = vsel %vm736, %v3330, %v3334
      %v3337 = vshrl.u32 %v2895, 16
      %v3339 = vrot.slane %v3337, 4
      %v3340 = vshll.u32 %v2895, 16
      %v3342 = vrot.slane %v3340, 5
      %v3343 = vor.u32 %v3339, %v3342
      %v3344 = vrot.slane %v3343, 4
      %v3346 = vshll.u32 %v2896, 16
      %v3348 = vrot.slane %v3346, 5
      %v3349 = vsel %vm736, %v3344, %v3348
      %v3350 = vshrl.u32 %v2896, 16
      %v3352 = vrot.slane %v3350, 4
      %v3353 = vor.u32 %v3352, %v3348
      %v3354 = vrot.slane %v3353, 4
      %v3356 = vshll.u32 %v2897, 16
      %v3358 = vrot.slane %v3356, 5
      %v3359 = vsel %vm736, %v3354, %v3358
      %v3360 = vshrl.u32 %v2897, 16
      %v3362 = vrot.slane %v3360, 4
      %v3363 = vor.u32 %v3362, %v3358
      %v3364 = vrot.slane %v3363, 4
      %v3366 = vshll.u32 %v2898, 16
      %v3368 = vrot.slane %v3366, 5
      %v3369 = vsel %vm736, %v3364, %v3368
      %v3370 = vshrl.u32 %v2898, 16
      %v3372 = vrot.slane %v3370, 4
      %v3373 = vor.u32 %v3372, %v3368
      %v3374 = vrot.slane %v3373, 4
      %v3376 = vshll.u32 %v2899, 16
      %v3378 = vrot.slane %v3376, 5
      %v3379 = vsel %vm736, %v3374, %v3378
      %v3381 = vshrl.u32 %v2900, 16
      %v3383 = vrot.slane %v3381, 4
      %v3384 = vshll.u32 %v2900, 16
      %v3386 = vrot.slane %v3384, 5
      %v3387 = vor.u32 %v3383, %v3386
      %v3388 = vrot.slane %v3387, 4
      %v3390 = vshll.u32 %v2901, 16
      %v3392 = vrot.slane %v3390, 5
      %v3393 = vsel %vm736, %v3388, %v3392
      %v3394 = vshrl.u32 %v2901, 16
      %v3396 = vrot.slane %v3394, 4
      %v3397 = vor.u32 %v3396, %v3392
      %v3398 = vrot.slane %v3397, 4
      %v3400 = vshll.u32 %v2902, 16
      %v3402 = vrot.slane %v3400, 5
      %v3403 = vsel %vm736, %v3398, %v3402
      %v3404 = vshrl.u32 %v2902, 16
      %v3406 = vrot.slane %v3404, 4
      %v3407 = vor.u32 %v3406, %v3402
      %v3408 = vrot.slane %v3407, 4
      %v3410 = vshll.u32 %v2903, 16
      %v3412 = vrot.slane %v3410, 5
      %v3413 = vsel %vm736, %v3408, %v3412
      %v3414 = vshrl.u32 %v2903, 16
      %v3416 = vrot.slane %v3414, 4
      %v3417 = vor.u32 %v3416, %v3412
      %v3418 = vrot.slane %v3417, 4
      %v3420 = vshll.u32 %v2904, 16
      %v3422 = vrot.slane %v3420, 5
      %v3423 = vsel %vm736, %v3418, %v3422
      %v3425 = vshrl.u32 %v2905, 16
      %v3427 = vrot.slane %v3425, 4
      %v3428 = vshll.u32 %v2905, 16
      %v3430 = vrot.slane %v3428, 5
      %v3431 = vor.u32 %v3427, %v3430
      %v3432 = vrot.slane %v3431, 4
      %v3434 = vshll.u32 %v2906, 16
      %v3436 = vrot.slane %v3434, 5
      %v3437 = vsel %vm736, %v3432, %v3436
      %v3438 = vshrl.u32 %v2906, 16
      %v3440 = vrot.slane %v3438, 4
      %v3441 = vor.u32 %v3440, %v3436
      %v3442 = vrot.slane %v3441, 4
      %v3444 = vshll.u32 %v2907, 16
      %v3446 = vrot.slane %v3444, 5
      %v3447 = vsel %vm736, %v3442, %v3446
      %v3448 = vshrl.u32 %v2907, 16
      %v3450 = vrot.slane %v3448, 4
      %v3451 = vor.u32 %v3450, %v3446
      %v3452 = vrot.slane %v3451, 4
      %v3454 = vshll.u32 %v2908, 16
      %v3456 = vrot.slane %v3454, 5
      %v3457 = vsel %vm736, %v3452, %v3456
      %v3458 = vshrl.u32 %v2908, 16
      %v3460 = vrot.slane %v3458, 4
      %v3461 = vor.u32 %v3460, %v3456
      %v3462 = vrot.slane %v3461, 4
      %v3464 = vshll.u32 %v2909, 16
      %v3466 = vrot.slane %v3464, 5
      %v3467 = vsel %vm736, %v3462, %v3466
      %v3469 = vshrl.u32 %v2910, 16
      %v3471 = vrot.slane %v3469, 4
      %v3472 = vshll.u32 %v2910, 16
      %v3474 = vrot.slane %v3472, 5
      %v3475 = vor.u32 %v3471, %v3474
      %v3476 = vrot.slane %v3475, 4
      %v3478 = vshll.u32 %v2911, 16
      %v3480 = vrot.slane %v3478, 5
      %v3481 = vsel %vm736, %v3476, %v3480
      %v3482 = vshrl.u32 %v2911, 16
      %v3484 = vrot.slane %v3482, 4
      %v3485 = vor.u32 %v3484, %v3480
      %v3486 = vrot.slane %v3485, 4
      %v3488 = vshll.u32 %v2912, 16
      %v3490 = vrot.slane %v3488, 5
      %v3491 = vsel %vm736, %v3486, %v3490
      %v3492 = vshrl.u32 %v2912, 16
      %v3494 = vrot.slane %v3492, 4
      %v3495 = vor.u32 %v3494, %v3490
      %v3496 = vrot.slane %v3495, 4
      %v3498 = vshll.u32 %v2913, 16
      %v3500 = vrot.slane %v3498, 5
      %v3501 = vsel %vm736, %v3496, %v3500
      %v3502 = vshrl.u32 %v2913, 16
      %v3504 = vrot.slane %v3502, 4
      %v3505 = vor.u32 %v3504, %v3500
      %v3506 = vrot.slane %v3505, 4
      %v3508 = vshll.u32 %v2914, 16
      %v3510 = vrot.slane %v3508, 5
      %v3511 = vsel %vm736, %v3506, %v3510
      %v3513 = vshrl.u32 %v2915, 16
      %v3515 = vrot.slane %v3513, 4
      %v3516 = vshll.u32 %v2915, 16
      %v3518 = vrot.slane %v3516, 5
      %v3519 = vor.u32 %v3515, %v3518
      %v3520 = vrot.slane %v3519, 4
      %v3522 = vshll.u32 %v2916, 16
      %v3524 = vrot.slane %v3522, 5
      %v3525 = vsel %vm736, %v3520, %v3524
      %v3526 = vshrl.u32 %v2916, 16
      %v3528 = vrot.slane %v3526, 4
      %v3529 = vor.u32 %v3528, %v3524
      %v3530 = vrot.slane %v3529, 4
      %v3532 = vshll.u32 %v2917, 16
      %v3534 = vrot.slane %v3532, 5
      %v3535 = vsel %vm736, %v3530, %v3534
      %v3536 = vshrl.u32 %v2917, 16
      %v3538 = vrot.slane %v3536, 4
      %v3539 = vor.u32 %v3538, %v3534
      %v3540 = vrot.slane %v3539, 4
      %v3542 = vshll.u32 %v2918, 16
      %v3544 = vrot.slane %v3542, 5
      %v3545 = vsel %vm736, %v3540, %v3544
      %v3546 = vshrl.u32 %v2918, 16
      %v3548 = vrot.slane %v3546, 4
      %v3549 = vor.u32 %v3548, %v3544
      %v3550 = vrot.slane %v3549, 4
      %v3552 = vshll.u32 %v2919, 16
      %v3554 = vrot.slane %v3552, 5
      %v3555 = vsel %vm736, %v3550, %v3554
      %v3557 = vshrl.u32 %v2920, 16
      %v3559 = vrot.slane %v3557, 4
      %v3560 = vshll.u32 %v2920, 16
      %v3562 = vrot.slane %v3560, 5
      %v3563 = vor.u32 %v3559, %v3562
      %v3564 = vrot.slane %v3563, 4
      %v3566 = vshll.u32 %v2921, 16
      %v3568 = vrot.slane %v3566, 5
      %v3569 = vsel %vm736, %v3564, %v3568
      %v3570 = vshrl.u32 %v2921, 16
      %v3572 = vrot.slane %v3570, 4
      %v3573 = vor.u32 %v3572, %v3568
      %v3574 = vrot.slane %v3573, 4
      %v3576 = vshll.u32 %v2922, 16
      %v3578 = vrot.slane %v3576, 5
      %v3579 = vsel %vm736, %v3574, %v3578
      %v3580 = vshrl.u32 %v2922, 16
      %v3582 = vrot.slane %v3580, 4
      %v3583 = vor.u32 %v3582, %v3578
      %v3584 = vrot.slane %v3583, 4
      %v3586 = vshll.u32 %v2923, 16
      %v3588 = vrot.slane %v3586, 5
      %v3589 = vsel %vm736, %v3584, %v3588
      %v3590 = vshrl.u32 %v2923, 16
      %v3592 = vrot.slane %v3590, 4
      %v3593 = vor.u32 %v3592, %v3588
      %v3594 = vrot.slane %v3593, 4
      %v3596 = vshll.u32 %v2924, 16
      %v3598 = vrot.slane %v3596, 5
      %v3599 = vsel %vm736, %v3594, %v3598
      %v3601 = vshrl.u32 %v2925, 16
      %v3603 = vrot.slane %v3601, 4
      %v3604 = vshll.u32 %v2925, 16
      %v3606 = vrot.slane %v3604, 5
      %v3607 = vor.u32 %v3603, %v3606
      %v3608 = vrot.slane %v3607, 4
      %v3610 = vshll.u32 %v2926, 16
      %v3612 = vrot.slane %v3610, 5
      %v3613 = vsel %vm736, %v3608, %v3612
      %v3614 = vshrl.u32 %v2926, 16
      %v3616 = vrot.slane %v3614, 4
      %v3617 = vor.u32 %v3616, %v3612
      %v3618 = vrot.slane %v3617, 4
      %v3620 = vshll.u32 %v2927, 16
      %v3622 = vrot.slane %v3620, 5
      %v3623 = vsel %vm736, %v3618, %v3622
      %v3624 = vshrl.u32 %v2927, 16
      %v3626 = vrot.slane %v3624, 4
      %v3627 = vor.u32 %v3626, %v3622
      %v3628 = vrot.slane %v3627, 4
      %v3630 = vshll.u32 %v2928, 16
      %v3632 = vrot.slane %v3630, 5
      %v3633 = vsel %vm736, %v3628, %v3632
      %v3634 = vshrl.u32 %v2928, 16
      %v3636 = vrot.slane %v3634, 4
      %v3637 = vor.u32 %v3636, %v3632
      %v3638 = vrot.slane %v3637, 4
      %v3640 = vshll.u32 %v2929, 16
      %v3642 = vrot.slane %v3640, 5
      %v3643 = vsel %vm736, %v3638, %v3642
      %v3645 = vshrl.u32 %v2930, 16
      %v3647 = vrot.slane %v3645, 4
      %v3648 = vshll.u32 %v2930, 16
      %v3650 = vrot.slane %v3648, 5
      %v3651 = vor.u32 %v3647, %v3650
      %v3652 = vrot.slane %v3651, 4
      %v3654 = vshll.u32 %v2931, 16
      %v3656 = vrot.slane %v3654, 5
      %v3657 = vsel %vm736, %v3652, %v3656
      %v3658 = vshrl.u32 %v2931, 16
      %v3660 = vrot.slane %v3658, 4
      %v3661 = vor.u32 %v3660, %v3656
      %v3662 = vrot.slane %v3661, 4
      %v3664 = vshll.u32 %v2932, 16
      %v3666 = vrot.slane %v3664, 5
      %v3667 = vsel %vm736, %v3662, %v3666
      %v3668 = vshrl.u32 %v2932, 16
      %v3670 = vrot.slane %v3668, 4
      %v3671 = vor.u32 %v3670, %v3666
      %v3672 = vrot.slane %v3671, 4
      %v3674 = vshll.u32 %v2933, 16
      %v3676 = vrot.slane %v3674, 5
      %v3677 = vsel %vm736, %v3672, %v3676
      %v3678 = vshrl.u32 %v2933, 16
      %v3680 = vrot.slane %v3678, 4
      %v3681 = vor.u32 %v3680, %v3676
      %v3682 = vrot.slane %v3681, 4
      %v3684 = vshll.u32 %v2934, 16
      %v3686 = vrot.slane %v3684, 5
      %v3687 = vsel %vm736, %v3682, %v3686
      %v3689 = vshrl.u32 %v2935, 16
      %v3691 = vrot.slane %v3689, 4
      %v3692 = vshll.u32 %v2935, 16
      %v3694 = vrot.slane %v3692, 5
      %v3695 = vor.u32 %v3691, %v3694
      %v3696 = vrot.slane %v3695, 4
      %v3698 = vshll.u32 %v2936, 16
      %v3700 = vrot.slane %v3698, 5
      %v3701 = vsel %vm736, %v3696, %v3700
      %v3702 = vshrl.u32 %v2936, 16
      %v3704 = vrot.slane %v3702, 4
      %v3705 = vor.u32 %v3704, %v3700
      %v3706 = vrot.slane %v3705, 4
      %v3708 = vshll.u32 %v2937, 16
      %v3710 = vrot.slane %v3708, 5
      %v3711 = vsel %vm736, %v3706, %v3710
      %v3712 = vshrl.u32 %v2937, 16
      %v3714 = vrot.slane %v3712, 4
      %v3715 = vor.u32 %v3714, %v3710
      %v3716 = vrot.slane %v3715, 4
      %v3718 = vshll.u32 %v2938, 16
      %v3720 = vrot.slane %v3718, 5
      %v3721 = vsel %vm736, %v3716, %v3720
      %v3722 = vshrl.u32 %v2938, 16
      %v3724 = vrot.slane %v3722, 4
      %v3725 = vor.u32 %v3724, %v3720
      %v3726 = vrot.slane %v3725, 4
      %v3728 = vshll.u32 %v2939, 16
      %v3730 = vrot.slane %v3728, 5
      %v3731 = vsel %vm736, %v3726, %v3730
      %v3732 = vunpack.c.l.b16 %v2953
      %v3733 = vunpack.c.l.b16 %v2963
      %v3734 = vunpack.c.l.b16 %v2973
      %v3735 = vunpack.c.l.b16 %v2983
      %v3736 = vunpack.c.l.b16 %v2997
      %v3737 = vunpack.c.l.b16 %v3007
      %v3738 = vunpack.c.l.b16 %v3017
      %v3739 = vunpack.c.l.b16 %v3027
      %v3740 = vunpack.c.l.b16 %v3041
      %v3741 = vunpack.c.l.b16 %v3051
      %v3742 = vunpack.c.l.b16 %v3061
      %v3743 = vunpack.c.l.b16 %v3071
      %v3744 = vunpack.c.l.b16 %v3085
      %v3745 = vunpack.c.l.b16 %v3095
      %v3746 = vunpack.c.l.b16 %v3105
      %v3747 = vunpack.c.l.b16 %v3115
      %v3748 = vunpack.c.l.b16 %v3129
      %v3749 = vunpack.c.l.b16 %v3139
      %v3750 = vunpack.c.l.b16 %v3149
      %v3751 = vunpack.c.l.b16 %v3159
      %v3752 = vunpack.c.l.b16 %v3173
      %v3753 = vunpack.c.l.b16 %v3183
      %v3754 = vunpack.c.l.b16 %v3193
      %v3755 = vunpack.c.l.b16 %v3203
      %v3756 = vunpack.c.l.b16 %v3217
      %v3757 = vunpack.c.l.b16 %v3227
      %v3758 = vunpack.c.l.b16 %v3237
      %v3759 = vunpack.c.l.b16 %v3247
      %v3760 = vunpack.c.l.b16 %v3261
      %v3761 = vunpack.c.l.b16 %v3271
      %v3762 = vunpack.c.l.b16 %v3281
      %v3763 = vunpack.c.l.b16 %v3291
      %v3764 = vunpack.c.l.b16 %v3305
      %v3765 = vunpack.c.l.b16 %v3315
      %v3766 = vunpack.c.l.b16 %v3325
      %v3767 = vunpack.c.l.b16 %v3335
      %v3768 = vunpack.c.l.b16 %v3349
      %v3769 = vunpack.c.l.b16 %v3359
      %v3770 = vunpack.c.l.b16 %v3369
      %v3771 = vunpack.c.l.b16 %v3379
      %v3772 = vunpack.c.l.b16 %v3393
      %v3773 = vunpack.c.l.b16 %v3403
      %v3774 = vunpack.c.l.b16 %v3413
      %v3775 = vunpack.c.l.b16 %v3423
      %v3776 = vunpack.c.l.b16 %v3437
      %v3777 = vunpack.c.l.b16 %v3447
      %v3778 = vunpack.c.l.b16 %v3457
      %v3779 = vunpack.c.l.b16 %v3467
      %v3780 = vunpack.c.l.b16 %v3481
      %v3781 = vunpack.c.l.b16 %v3491
      %v3782 = vunpack.c.l.b16 %v3501
      %v3783 = vunpack.c.l.b16 %v3511
      %v3784 = vunpack.c.l.b16 %v3525
      %v3785 = vunpack.c.l.b16 %v3535
      %v3786 = vunpack.c.l.b16 %v3545
      %v3787 = vunpack.c.l.b16 %v3555
      %v3788 = vunpack.c.l.b16 %v3569
      %v3789 = vunpack.c.l.b16 %v3579
      %v3790 = vunpack.c.l.b16 %v3589
      %v3791 = vunpack.c.l.b16 %v3599
      %v3792 = vunpack.c.l.b16 %v3613
      %v3793 = vunpack.c.l.b16 %v3623
      %v3794 = vunpack.c.l.b16 %v3633
      %v3795 = vunpack.c.l.b16 %v3643
      %v3796 = vunpack.c.l.b16 %v3657
      %v3797 = vunpack.c.l.b16 %v3667
      %v3798 = vunpack.c.l.b16 %v3677
      %v3799 = vunpack.c.l.b16 %v3687
      %v3800 = vunpack.c.l.b16 %v3701
      %v3801 = vunpack.c.l.b16 %v3711
      %v3802 = vunpack.c.l.b16 %v3721
      %v3803 = vunpack.c.l.b16 %v3731
      %v3804 = vpack.c.b16 %v3733, %v3732
      %v3805 = vpack.c.b16 %v3735, %v3734
      %v3806 = vpack.c.b16 %v3737, %v3736
      %v3807 = vpack.c.b16 %v3739, %v3738
      %v3808 = vpack.c.b16 %v3741, %v3740
      %v3809 = vpack.c.b16 %v3743, %v3742
      %v3810 = vpack.c.b16 %v3745, %v3744
      %v3811 = vpack.c.b16 %v3747, %v3746
      %v3812 = vpack.c.b16 %v3749, %v3748
      %v3813 = vpack.c.b16 %v3751, %v3750
      %v3814 = vpack.c.b16 %v3753, %v3752
      %v3815 = vpack.c.b16 %v3755, %v3754
      %v3816 = vpack.c.b16 %v3757, %v3756
      %v3817 = vpack.c.b16 %v3759, %v3758
      %v3818 = vpack.c.b16 %v3761, %v3760
      %v3819 = vpack.c.b16 %v3763, %v3762
      %v3820 = vpack.c.b16 %v3765, %v3764
      %v3821 = vpack.c.b16 %v3767, %v3766
      %v3822 = vpack.c.b16 %v3769, %v3768
      %v3823 = vpack.c.b16 %v3771, %v3770
      %v3824 = vpack.c.b16 %v3773, %v3772
      %v3825 = vpack.c.b16 %v3775, %v3774
      %v3826 = vpack.c.b16 %v3777, %v3776
      %v3827 = vpack.c.b16 %v3779, %v3778
      %v3828 = vpack.c.b16 %v3781, %v3780
      %v3829 = vpack.c.b16 %v3783, %v3782
      %v3830 = vpack.c.b16 %v3785, %v3784
      %v3831 = vpack.c.b16 %v3787, %v3786
      %v3832 = vpack.c.b16 %v3789, %v3788
      %v3833 = vpack.c.b16 %v3791, %v3790
      %v3834 = vpack.c.b16 %v3793, %v3792
      %v3835 = vpack.c.b16 %v3795, %v3794
      %v3836 = vpack.c.b16 %v3797, %v3796
      %v3837 = vpack.c.b16 %v3799, %v3798
      %v3838 = vpack.c.b16 %v3801, %v3800
      %v3839 = vpack.c.b16 %v3803, %v3802
      %3840 = vrot.lane.b32.xlu0 %v3804, 16
      %v3841 = vpop.permute.xlu0 %3840
      %3842 = vrot.lane.b32.xlu0 %v3805, 16
      %v3843 = vpop.permute.xlu0 %3842
      %3844 = vrot.lane.b32.xlu0 %v3806, 16
      %v3845 = vpop.permute.xlu0 %3844
      %3846 = vrot.lane.b32.xlu0 %v3807, 16
      %v3847 = vpop.permute.xlu0 %3846
      %3848 = vrot.lane.b32.xlu0 %v3808, 16
      %v3849 = vpop.permute.xlu0 %3848
      %3850 = vrot.lane.b32.xlu0 %v3809, 16
      %v3851 = vpop.permute.xlu0 %3850
      %3852 = vrot.lane.b32.xlu0 %v3810, 16
      %v3853 = vpop.permute.xlu0 %3852
      %3854 = vrot.lane.b32.xlu0 %v3811, 16
      %v3855 = vpop.permute.xlu0 %3854
      %3856 = vrot.lane.b32.xlu0 %v3812, 16
      %v3857 = vpop.permute.xlu0 %3856
      %3858 = vrot.lane.b32.xlu0 %v3813, 16
      %v3859 = vpop.permute.xlu0 %3858
      %3860 = vrot.lane.b32.xlu0 %v3814, 16
      %v3861 = vpop.permute.xlu0 %3860
      %3862 = vrot.lane.b32.xlu0 %v3815, 16
      %v3863 = vpop.permute.xlu0 %3862
      %3864 = vrot.lane.b32.xlu0 %v3816, 16
      %v3865 = vpop.permute.xlu0 %3864
      %3866 = vrot.lane.b32.xlu0 %v3817, 16
      %v3867 = vpop.permute.xlu0 %3866
      %3868 = vrot.lane.b32.xlu0 %v3818, 16
      %v3869 = vpop.permute.xlu0 %3868
      %3870 = vrot.lane.b32.xlu0 %v3819, 16
      %v3871 = vpop.permute.xlu0 %3870
      %3872 = vrot.lane.b32.xlu0 %v3820, 16
      %v3873 = vpop.permute.xlu0 %3872
      %3874 = vrot.lane.b32.xlu0 %v3821, 16
      %v3875 = vpop.permute.xlu0 %3874
      %3876 = vrot.lane.b32.xlu0 %v3822, 16
      %v3877 = vpop.permute.xlu0 %3876
      %3878 = vrot.lane.b32.xlu0 %v3823, 16
      %v3879 = vpop.permute.xlu0 %3878
      %3880 = vrot.lane.b32.xlu0 %v3824, 16
      %v3881 = vpop.permute.xlu0 %3880
      %3882 = vrot.lane.b32.xlu0 %v3825, 16
      %v3883 = vpop.permute.xlu0 %3882
      %3884 = vrot.lane.b32.xlu0 %v3826, 16
      %v3885 = vpop.permute.xlu0 %3884
      %3886 = vrot.lane.b32.xlu0 %v3827, 16
      %v3887 = vpop.permute.xlu0 %3886
      %3888 = vrot.lane.b32.xlu0 %v3828, 16
      %v3889 = vpop.permute.xlu0 %3888
      %3890 = vrot.lane.b32.xlu0 %v3829, 16
      %v3891 = vpop.permute.xlu0 %3890
      %3892 = vrot.lane.b32.xlu0 %v3830, 16
      %v3893 = vpop.permute.xlu0 %3892
      %3894 = vrot.lane.b32.xlu0 %v3831, 16
      %v3895 = vpop.permute.xlu0 %3894
      %3896 = vrot.lane.b32.xlu0 %v3832, 16
      %v3897 = vpop.permute.xlu0 %3896
      %3898 = vrot.lane.b32.xlu0 %v3833, 16
      %v3899 = vpop.permute.xlu0 %3898
      %3900 = vrot.lane.b32.xlu0 %v3834, 16
      %v3901 = vpop.permute.xlu0 %3900
      %3902 = vrot.lane.b32.xlu0 %v3835, 16
      %v3903 = vpop.permute.xlu0 %3902
      %3904 = vrot.lane.b32.xlu0 %v3836, 16
      %v3905 = vpop.permute.xlu0 %3904
      %3906 = vrot.lane.b32.xlu0 %v3837, 16
      %v3907 = vpop.permute.xlu0 %3906
      %3908 = vrot.lane.b32.xlu0 %v3838, 16
      %v3909 = vpop.permute.xlu0 %3908
      %3910 = vrot.lane.b32.xlu0 %v3839, 16
      %v3911 = vpop.permute.xlu0 %3910
      %vm3948 = vcmask 162944
      %3949 = vst.msk [vmem:[#allocation2] sm:$0xff] %vm3948, %v3841
      %3950 = vst.msk [vmem:[#allocation2 + $0x8] sm:$0xff] %vm3948, %v3843
      %3951 = vst.msk [vmem:[#allocation2 + $0x10] sm:$0xff] %vm3948, %v3845
      %3952 = vst.msk [vmem:[#allocation2 + $0x18] sm:$0xff] %vm3948, %v3847
      %3953 = vst.msk [vmem:[#allocation2 + $0x20] sm:$0xff] %vm3948, %v3849
      %3954 = vst.msk [vmem:[#allocation2 + $0x28] sm:$0xff] %vm3948, %v3851
      %3955 = vst.msk [vmem:[#allocation2 + $0x30] sm:$0xff] %vm3948, %v3853
      %3956 = vst.msk [vmem:[#allocation2 + $0x38] sm:$0xff] %vm3948, %v3855
      %3957 = vst.msk [vmem:[#allocation2 + $0x40] sm:$0xff] %vm3948, %v3857
      %3958 = vst.msk [vmem:[#allocation2 + $0x48] sm:$0xff] %vm3948, %v3859
      %3959 = vst.msk [vmem:[#allocation2 + $0x50] sm:$0xff] %vm3948, %v3861
      %3960 = vst.msk [vmem:[#allocation2 + $0x58] sm:$0xff] %vm3948, %v3863
      %3961 = vst.msk [vmem:[#allocation2 + $0x60] sm:$0xff] %vm3948, %v3865
      %3962 = vst.msk [vmem:[#allocation2 + $0x68] sm:$0xff] %vm3948, %v3867
      %3963 = vst.msk [vmem:[#allocation2 + $0x70] sm:$0xff] %vm3948, %v3869
      %3964 = vst.msk [vmem:[#allocation2 + $0x78] sm:$0xff] %vm3948, %v3871
      %3965 = vst.msk [vmem:[#allocation2 + $0x80] sm:$0xff] %vm3948, %v3873
      %3966 = vst.msk [vmem:[#allocation2 + $0x88] sm:$0xff] %vm3948, %v3875
      %3967 = vst.msk [vmem:[#allocation2 + $0x90] sm:$0xff] %vm3948, %v3877
      %3968 = vst.msk [vmem:[#allocation2 + $0x98] sm:$0xff] %vm3948, %v3879
      %3969 = vst.msk [vmem:[#allocation2 + $0xa0] sm:$0xff] %vm3948, %v3881
      %3970 = vst.msk [vmem:[#allocation2 + $0xa8] sm:$0xff] %vm3948, %v3883
      %3971 = vst.msk [vmem:[#allocation2 + $0xb0] sm:$0xff] %vm3948, %v3885
      %3972 = vst.msk [vmem:[#allocation2 + $0xb8] sm:$0xff] %vm3948, %v3887
      %3973 = vst.msk [vmem:[#allocation2 + $0xc0] sm:$0xff] %vm3948, %v3889
      %3974 = vst.msk [vmem:[#allocation2 + $0xc8] sm:$0xff] %vm3948, %v3891
      %3975 = vst.msk [vmem:[#allocation2 + $0xd0] sm:$0xff] %vm3948, %v3893
      %3976 = vst.msk [vmem:[#allocation2 + $0xd8] sm:$0xff] %vm3948, %v3895
      %3977 = vst.msk [vmem:[#allocation2 + $0xe0] sm:$0xff] %vm3948, %v3897
      %3978 = vst.msk [vmem:[#allocation2 + $0xe8] sm:$0xff] %vm3948, %v3899
      %3979 = vst.msk [vmem:[#allocation2 + $0xf0] sm:$0xff] %vm3948, %v3901
      %3980 = vst.msk [vmem:[#allocation2 + $0xf8] sm:$0xff] %vm3948, %v3903
      %3981 = vst.msk [vmem:[#allocation2 + $0x100] sm:$0xff] %vm3948, %v3905
      %3982 = vst.msk [vmem:[#allocation2 + $0x108] sm:$0xff] %vm3948, %v3907
      %3983 = vst.msk [vmem:[#allocation2 + $0x110] sm:$0xff] %vm3948, %v3909
      %3984 = vst.msk [vmem:[#allocation2 + $0x118] sm:$0xff] %vm3948, %v3911
      %v3985 = vld [vmem:[%s2452] sm:$0xe]
      %v3986 = vld [vmem:[%s2452 + $0x4] sm:$0xf]
      %v3987 = vld [vmem:[%s2452 + $0x8] sm:$0xf]
      %v3988 = vld [vmem:[%s2452 + $0xc] sm:$0xf]
      %v3989 = vld [vmem:[%s2452 + $0x10] sm:$0x1]
      %v3990 = vld [vmem:[%s2452 + $0x14] sm:$0xe]
      %v3991 = vld [vmem:[%s2452 + $0x18] sm:$0xf]
      %v3992 = vld [vmem:[%s2452 + $0x1c] sm:$0xf]
      %v3993 = vld [vmem:[%s2452 + $0x20] sm:$0xf]
      %v3994 = vld [vmem:[%s2452 + $0x24] sm:$0x1]
      %v3995 = vld [vmem:[%s2452 + $0x28] sm:$0xe]
      %v3996 = vld [vmem:[%s2452 + $0x2c] sm:$0xf]
      %v3997 = vld [vmem:[%s2452 + $0x30] sm:$0xf]
      %v3998 = vld [vmem:[%s2452 + $0x34] sm:$0xf]
      %v3999 = vld [vmem:[%s2452 + $0x38] sm:$0x1]
      %v4000 = vld [vmem:[%s2452 + $0x3c] sm:$0xe]
      %v4001 = vld [vmem:[%s2452 + $0x40] sm:$0xf]
      %v4002 = vld [vmem:[%s2452 + $0x44] sm:$0xf]
      %v4003 = vld [vmem:[%s2452 + $0x48] sm:$0xf]
      %v4004 = vld [vmem:[%s2452 + $0x4c] sm:$0x1]
      %v4005 = vld [vmem:[%s2452 + $0x50] sm:$0xe]
      %v4006 = vld [vmem:[%s2452 + $0x54] sm:$0xf]
      %v4007 = vld [vmem:[%s2452 + $0x58] sm:$0xf]
      %v4008 = vld [vmem:[%s2452 + $0x5c] sm:$0xf]
      %v4009 = vld [vmem:[%s2452 + $0x60] sm:$0x1]
      %v4010 = vld [vmem:[%s2452 + $0x64] sm:$0xe]
      %v4011 = vld [vmem:[%s2452 + $0x68] sm:$0xf]
      %v4012 = vld [vmem:[%s2452 + $0x6c] sm:$0xf]
      %v4013 = vld [vmem:[%s2452 + $0x70] sm:$0xf]
      %v4014 = vld [vmem:[%s2452 + $0x74] sm:$0x1]
      %v4015 = vld [vmem:[%s2452 + $0x78] sm:$0xe]
      %v4016 = vld [vmem:[%s2452 + $0x7c] sm:$0xf]
      %v4017 = vld [vmem:[%s2452 + $0x80] sm:$0xf]
      %v4018 = vld [vmem:[%s2452 + $0x84] sm:$0xf]
      %v4019 = vld [vmem:[%s2452 + $0x88] sm:$0x1]
      %v4020 = vld [vmem:[%s2452 + $0x8c] sm:$0xe]
      %v4021 = vld [vmem:[%s2452 + $0x90] sm:$0xf]
      %v4022 = vld [vmem:[%s2452 + $0x94] sm:$0xf]
      %v4023 = vld [vmem:[%s2452 + $0x98] sm:$0xf]
      %v4024 = vld [vmem:[%s2452 + $0x9c] sm:$0x1]
      %v4025 = vld [vmem:[%s2452 + $0xa0] sm:$0xe]
      %v4026 = vld [vmem:[%s2452 + $0xa4] sm:$0xf]
      %v4027 = vld [vmem:[%s2452 + $0xa8] sm:$0xf]
      %v4028 = vld [vmem:[%s2452 + $0xac] sm:$0xf]
      %v4029 = vld [vmem:[%s2452 + $0xb0] sm:$0x1]
      %v4030 = vld [vmem:[%s2452 + $0xb4] sm:$0xe]
      %v4031 = vld [vmem:[%s2452 + $0xb8] sm:$0xf]
      %v4032 = vld [vmem:[%s2452 + $0xbc] sm:$0xf]
      %v4033 = vld [vmem:[%s2452 + $0xc0] sm:$0xf]
      %v4034 = vld [vmem:[%s2452 + $0xc4] sm:$0x1]
      %v4035 = vld [vmem:[%s2452 + $0xc8] sm:$0xe]
      %v4036 = vld [vmem:[%s2452 + $0xcc] sm:$0xf]
      %v4037 = vld [vmem:[%s2452 + $0xd0] sm:$0xf]
      %v4038 = vld [vmem:[%s2452 + $0xd4] sm:$0xf]
      %v4039 = vld [vmem:[%s2452 + $0xd8] sm:$0x1]
      %v4040 = vld [vmem:[%s2452 + $0xdc] sm:$0xe]
      %v4041 = vld [vmem:[%s2452 + $0xe0] sm:$0xf]
      %v4042 = vld [vmem:[%s2452 + $0xe4] sm:$0xf]
      %v4043 = vld [vmem:[%s2452 + $0xe8] sm:$0xf]
      %v4044 = vld [vmem:[%s2452 + $0xec] sm:$0x1]
      %v4045 = vld [vmem:[%s2452 + $0xf0] sm:$0xe]
      %v4046 = vld [vmem:[%s2452 + $0xf4] sm:$0xf]
      %v4047 = vld [vmem:[%s2452 + $0xf8] sm:$0xf]
      %v4048 = vld [vmem:[%s2452 + $0xfc] sm:$0xf]
      %v4049 = vld [vmem:[%s2452 + $0x100] sm:$0x1]
      %v4050 = vld [vmem:[%s2452 + $0x104] sm:$0xe]
      %v4051 = vld [vmem:[%s2452 + $0x108] sm:$0xf]
      %v4052 = vld [vmem:[%s2452 + $0x10c] sm:$0xf]
      %v4053 = vld [vmem:[%s2452 + $0x110] sm:$0xf]
      %v4054 = vld [vmem:[%s2452 + $0x114] sm:$0x1]
      %v4055 = vld [vmem:[%s2452 + $0x118] sm:$0xe]
      %v4056 = vld [vmem:[%s2452 + $0x11c] sm:$0xf]
      %v4057 = vld [vmem:[%s2452 + $0x120] sm:$0xf]
      %v4058 = vld [vmem:[%s2452 + $0x124] sm:$0xf]
      %v4059 = vld [vmem:[%s2452 + $0x128] sm:$0x1]
      %v4060 = vld [vmem:[%s2452 + $0x12c] sm:$0xe]
      %v4061 = vld [vmem:[%s2452 + $0x130] sm:$0xf]
      %v4062 = vld [vmem:[%s2452 + $0x134] sm:$0xf]
      %v4063 = vld [vmem:[%s2452 + $0x138] sm:$0xf]
      %v4064 = vld [vmem:[%s2452 + $0x13c] sm:$0x1]
      %v4065 = vld [vmem:[%s2452 + $0x140] sm:$0xe]
      %v4066 = vld [vmem:[%s2452 + $0x144] sm:$0xf]
      %v4067 = vld [vmem:[%s2452 + $0x148] sm:$0xf]
      %v4068 = vld [vmem:[%s2452 + $0x14c] sm:$0xf]
      %v4069 = vld [vmem:[%s2452 + $0x150] sm:$0x1]
      %v4070 = vld [vmem:[%s2452 + $0x154] sm:$0xe]
      %v4071 = vld [vmem:[%s2452 + $0x158] sm:$0xf]
      %v4072 = vld [vmem:[%s2452 + $0x15c] sm:$0xf]
      %v4073 = vld [vmem:[%s2452 + $0x160] sm:$0xf]
      %v4074 = vld [vmem:[%s2452 + $0x164] sm:$0x1]
      %v4165 = vrot.slane %v3985, 5
      %v4166 = vrot.slane %v4165, 4
      %v4167 = vrot.slane %v3986, 5
      %v4168 = vsel %vm1964, %v4166, %v4167
      %v4169 = vrot.slane %v4167, 4
      %v4170 = vrot.slane %v3987, 5
      %v4171 = vsel %vm1964, %v4169, %v4170
      %v4172 = vrot.slane %v4170, 4
      %v4173 = vrot.slane %v3988, 5
      %v4174 = vsel %vm1964, %v4172, %v4173
      %v4175 = vrot.slane %v4173, 4
      %v4176 = vrot.slane %v3989, 5
      %v4177 = vsel %vm1964, %v4175, %v4176
      %v4178 = vrot.slane %v3990, 5
      %v4179 = vrot.slane %v4178, 4
      %v4180 = vrot.slane %v3991, 5
      %v4181 = vsel %vm1964, %v4179, %v4180
      %v4182 = vrot.slane %v4180, 4
      %v4183 = vrot.slane %v3992, 5
      %v4184 = vsel %vm1964, %v4182, %v4183
      %v4185 = vrot.slane %v4183, 4
      %v4186 = vrot.slane %v3993, 5
      %v4187 = vsel %vm1964, %v4185, %v4186
      %v4188 = vrot.slane %v4186, 4
      %v4189 = vrot.slane %v3994, 5
      %v4190 = vsel %vm1964, %v4188, %v4189
      %v4191 = vrot.slane %v3995, 5
      %v4192 = vrot.slane %v4191, 4
      %v4193 = vrot.slane %v3996, 5
      %v4194 = vsel %vm1964, %v4192, %v4193
      %v4195 = vrot.slane %v4193, 4
      %v4196 = vrot.slane %v3997, 5
      %v4197 = vsel %vm1964, %v4195, %v4196
      %v4198 = vrot.slane %v4196, 4
      %v4199 = vrot.slane %v3998, 5
      %v4200 = vsel %vm1964, %v4198, %v4199
      %v4201 = vrot.slane %v4199, 4
      %v4202 = vrot.slane %v3999, 5
      %v4203 = vsel %vm1964, %v4201, %v4202
      %v4204 = vrot.slane %v4000, 5
      %v4205 = vrot.slane %v4204, 4
      %v4206 = vrot.slane %v4001, 5
      %v4207 = vsel %vm1964, %v4205, %v4206
      %v4208 = vrot.slane %v4206, 4
      %v4209 = vrot.slane %v4002, 5
      %v4210 = vsel %vm1964, %v4208, %v4209
      %v4211 = vrot.slane %v4209, 4
      %v4212 = vrot.slane %v4003, 5
      %v4213 = vsel %vm1964, %v4211, %v4212
      %v4214 = vrot.slane %v4212, 4
      %v4215 = vrot.slane %v4004, 5
      %v4216 = vsel %vm1964, %v4214, %v4215
      %v4217 = vrot.slane %v4005, 5
      %v4218 = vrot.slane %v4217, 4
      %v4219 = vrot.slane %v4006, 5
      %v4220 = vsel %vm1964, %v4218, %v4219
      %v4221 = vrot.slane %v4219, 4
      %v4222 = vrot.slane %v4007, 5
      %v4223 = vsel %vm1964, %v4221, %v4222
      %v4224 = vrot.slane %v4222, 4
      %v4225 = vrot.slane %v4008, 5
      %v4226 = vsel %vm1964, %v4224, %v4225
      %v4227 = vrot.slane %v4225, 4
      %v4228 = vrot.slane %v4009, 5
      %v4229 = vsel %vm1964, %v4227, %v4228
      %v4230 = vrot.slane %v4010, 5
      %v4231 = vrot.slane %v4230, 4
      %v4232 = vrot.slane %v4011, 5
      %v4233 = vsel %vm1964, %v4231, %v4232
      %v4234 = vrot.slane %v4232, 4
      %v4235 = vrot.slane %v4012, 5
      %v4236 = vsel %vm1964, %v4234, %v4235
      %v4237 = vrot.slane %v4235, 4
      %v4238 = vrot.slane %v4013, 5
      %v4239 = vsel %vm1964, %v4237, %v4238
      %v4240 = vrot.slane %v4238, 4
      %v4241 = vrot.slane %v4014, 5
      %v4242 = vsel %vm1964, %v4240, %v4241
      %v4243 = vrot.slane %v4015, 5
      %v4244 = vrot.slane %v4243, 4
      %v4245 = vrot.slane %v4016, 5
      %v4246 = vsel %vm1964, %v4244, %v4245
      %v4247 = vrot.slane %v4245, 4
      %v4248 = vrot.slane %v4017, 5
      %v4249 = vsel %vm1964, %v4247, %v4248
      %v4250 = vrot.slane %v4248, 4
      %v4251 = vrot.slane %v4018, 5
      %v4252 = vsel %vm1964, %v4250, %v4251
      %v4253 = vrot.slane %v4251, 4
      %v4254 = vrot.slane %v4019, 5
      %v4255 = vsel %vm1964, %v4253, %v4254
      %v4256 = vrot.slane %v4020, 5
      %v4257 = vrot.slane %v4256, 4
      %v4258 = vrot.slane %v4021, 5
      %v4259 = vsel %vm1964, %v4257, %v4258
      %v4260 = vrot.slane %v4258, 4
      %v4261 = vrot.slane %v4022, 5
      %v4262 = vsel %vm1964, %v4260, %v4261
      %v4263 = vrot.slane %v4261, 4
      %v4264 = vrot.slane %v4023, 5
      %v4265 = vsel %vm1964, %v4263, %v4264
      %v4266 = vrot.slane %v4264, 4
      %v4267 = vrot.slane %v4024, 5
      %v4268 = vsel %vm1964, %v4266, %v4267
      %v4269 = vrot.slane %v4025, 5
      %v4270 = vrot.slane %v4269, 4
      %v4271 = vrot.slane %v4026, 5
      %v4272 = vsel %vm1964, %v4270, %v4271
      %v4273 = vrot.slane %v4271, 4
      %v4274 = vrot.slane %v4027, 5
      %v4275 = vsel %vm1964, %v4273, %v4274
      %v4276 = vrot.slane %v4274, 4
      %v4277 = vrot.slane %v4028, 5
      %v4278 = vsel %vm1964, %v4276, %v4277
      %v4279 = vrot.slane %v4277, 4
      %v4280 = vrot.slane %v4029, 5
      %v4281 = vsel %vm1964, %v4279, %v4280
      %v4282 = vrot.slane %v4030, 5
      %v4283 = vrot.slane %v4282, 4
      %v4284 = vrot.slane %v4031, 5
      %v4285 = vsel %vm1964, %v4283, %v4284
      %v4286 = vrot.slane %v4284, 4
      %v4287 = vrot.slane %v4032, 5
      %v4288 = vsel %vm1964, %v4286, %v4287
      %v4289 = vrot.slane %v4287, 4
      %v4290 = vrot.slane %v4033, 5
      %v4291 = vsel %vm1964, %v4289, %v4290
      %v4292 = vrot.slane %v4290, 4
      %v4293 = vrot.slane %v4034, 5
      %v4294 = vsel %vm1964, %v4292, %v4293
      %v4295 = vrot.slane %v4035, 5
      %v4296 = vrot.slane %v4295, 4
      %v4297 = vrot.slane %v4036, 5
      %v4298 = vsel %vm1964, %v4296, %v4297
      %v4299 = vrot.slane %v4297, 4
      %v4300 = vrot.slane %v4037, 5
      %v4301 = vsel %vm1964, %v4299, %v4300
      %v4302 = vrot.slane %v4300, 4
      %v4303 = vrot.slane %v4038, 5
      %v4304 = vsel %vm1964, %v4302, %v4303
      %v4305 = vrot.slane %v4303, 4
      %v4306 = vrot.slane %v4039, 5
      %v4307 = vsel %vm1964, %v4305, %v4306
      %v4308 = vrot.slane %v4040, 5
      %v4309 = vrot.slane %v4308, 4
      %v4310 = vrot.slane %v4041, 5
      %v4311 = vsel %vm1964, %v4309, %v4310
      %v4312 = vrot.slane %v4310, 4
      %v4313 = vrot.slane %v4042, 5
      %v4314 = vsel %vm1964, %v4312, %v4313
      %v4315 = vrot.slane %v4313, 4
      %v4316 = vrot.slane %v4043, 5
      %v4317 = vsel %vm1964, %v4315, %v4316
      %v4318 = vrot.slane %v4316, 4
      %v4319 = vrot.slane %v4044, 5
      %v4320 = vsel %vm1964, %v4318, %v4319
      %v4321 = vrot.slane %v4045, 5
      %v4322 = vrot.slane %v4321, 4
      %v4323 = vrot.slane %v4046, 5
      %v4324 = vsel %vm1964, %v4322, %v4323
      %v4325 = vrot.slane %v4323, 4
      %v4326 = vrot.slane %v4047, 5
      %v4327 = vsel %vm1964, %v4325, %v4326
      %v4328 = vrot.slane %v4326, 4
      %v4329 = vrot.slane %v4048, 5
      %v4330 = vsel %vm1964, %v4328, %v4329
      %v4331 = vrot.slane %v4329, 4
      %v4332 = vrot.slane %v4049, 5
      %v4333 = vsel %vm1964, %v4331, %v4332
      %v4334 = vrot.slane %v4050, 5
      %v4335 = vrot.slane %v4334, 4
      %v4336 = vrot.slane %v4051, 5
      %v4337 = vsel %vm1964, %v4335, %v4336
      %v4338 = vrot.slane %v4336, 4
      %v4339 = vrot.slane %v4052, 5
      %v4340 = vsel %vm1964, %v4338, %v4339
      %v4341 = vrot.slane %v4339, 4
      %v4342 = vrot.slane %v4053, 5
      %v4343 = vsel %vm1964, %v4341, %v4342
      %v4344 = vrot.slane %v4342, 4
      %v4345 = vrot.slane %v4054, 5
      %v4346 = vsel %vm1964, %v4344, %v4345
      %v4347 = vrot.slane %v4055, 5
      %v4348 = vrot.slane %v4347, 4
      %v4349 = vrot.slane %v4056, 5
      %v4350 = vsel %vm1964, %v4348, %v4349
      %v4351 = vrot.slane %v4349, 4
      %v4352 = vrot.slane %v4057, 5
      %v4353 = vsel %vm1964, %v4351, %v4352
      %v4354 = vrot.slane %v4352, 4
      %v4355 = vrot.slane %v4058, 5
      %v4356 = vsel %vm1964, %v4354, %v4355
      %v4357 = vrot.slane %v4355, 4
      %v4358 = vrot.slane %v4059, 5
      %v4359 = vsel %vm1964, %v4357, %v4358
      %v4360 = vrot.slane %v4060, 5
      %v4361 = vrot.slane %v4360, 4
      %v4362 = vrot.slane %v4061, 5
      %v4363 = vsel %vm1964, %v4361, %v4362
      %v4364 = vrot.slane %v4362, 4
      %v4365 = vrot.slane %v4062, 5
      %v4366 = vsel %vm1964, %v4364, %v4365
      %v4367 = vrot.slane %v4365, 4
      %v4368 = vrot.slane %v4063, 5
      %v4369 = vsel %vm1964, %v4367, %v4368
      %v4370 = vrot.slane %v4368, 4
      %v4371 = vrot.slane %v4064, 5
      %v4372 = vsel %vm1964, %v4370, %v4371
      %v4373 = vrot.slane %v4065, 5
      %v4374 = vrot.slane %v4373, 4
      %v4375 = vrot.slane %v4066, 5
      %v4376 = vsel %vm1964, %v4374, %v4375
      %v4377 = vrot.slane %v4375, 4
      %v4378 = vrot.slane %v4067, 5
      %v4379 = vsel %vm1964, %v4377, %v4378
      %v4380 = vrot.slane %v4378, 4
      %v4381 = vrot.slane %v4068, 5
      %v4382 = vsel %vm1964, %v4380, %v4381
      %v4383 = vrot.slane %v4381, 4
      %v4384 = vrot.slane %v4069, 5
      %v4385 = vsel %vm1964, %v4383, %v4384
      %v4386 = vrot.slane %v4070, 5
      %v4387 = vrot.slane %v4386, 4
      %v4388 = vrot.slane %v4071, 5
      %v4389 = vsel %vm1964, %v4387, %v4388
      %v4390 = vrot.slane %v4388, 4
      %v4391 = vrot.slane %v4072, 5
      %v4392 = vsel %vm1964, %v4390, %v4391
      %v4393 = vrot.slane %v4391, 4
      %v4394 = vrot.slane %v4073, 5
      %v4395 = vsel %vm1964, %v4393, %v4394
      %v4396 = vrot.slane %v4394, 4
      %v4397 = vrot.slane %v4074, 5
      %v4398 = vsel %vm1964, %v4396, %v4397
      %v4399 = vunpack.c.l.b16 %v4168
      %v4400 = vunpack.c.l.b16 %v4171
      %v4401 = vunpack.c.l.b16 %v4174
      %v4402 = vunpack.c.l.b16 %v4177
      %v4403 = vunpack.c.l.b16 %v4181
      %v4404 = vunpack.c.l.b16 %v4184
      %v4405 = vunpack.c.l.b16 %v4187
      %v4406 = vunpack.c.l.b16 %v4190
      %v4407 = vunpack.c.l.b16 %v4194
      %v4408 = vunpack.c.l.b16 %v4197
      %v4409 = vunpack.c.l.b16 %v4200
      %v4410 = vunpack.c.l.b16 %v4203
      %v4411 = vunpack.c.l.b16 %v4207
      %v4412 = vunpack.c.l.b16 %v4210
      %v4413 = vunpack.c.l.b16 %v4213
      %v4414 = vunpack.c.l.b16 %v4216
      %v4415 = vunpack.c.l.b16 %v4220
      %v4416 = vunpack.c.l.b16 %v4223
      %v4417 = vunpack.c.l.b16 %v4226
      %v4418 = vunpack.c.l.b16 %v4229
      %v4419 = vunpack.c.l.b16 %v4233
      %v4420 = vunpack.c.l.b16 %v4236
      %v4421 = vunpack.c.l.b16 %v4239
      %v4422 = vunpack.c.l.b16 %v4242
      %v4423 = vunpack.c.l.b16 %v4246
      %v4424 = vunpack.c.l.b16 %v4249
      %v4425 = vunpack.c.l.b16 %v4252
      %v4426 = vunpack.c.l.b16 %v4255
      %v4427 = vunpack.c.l.b16 %v4259
      %v4428 = vunpack.c.l.b16 %v4262
      %v4429 = vunpack.c.l.b16 %v4265
      %v4430 = vunpack.c.l.b16 %v4268
      %v4431 = vunpack.c.l.b16 %v4272
      %v4432 = vunpack.c.l.b16 %v4275
      %v4433 = vunpack.c.l.b16 %v4278
      %v4434 = vunpack.c.l.b16 %v4281
      %v4435 = vunpack.c.l.b16 %v4285
      %v4436 = vunpack.c.l.b16 %v4288
      %v4437 = vunpack.c.l.b16 %v4291
      %v4438 = vunpack.c.l.b16 %v4294
      %v4439 = vunpack.c.l.b16 %v4298
      %v4440 = vunpack.c.l.b16 %v4301
      %v4441 = vunpack.c.l.b16 %v4304
      %v4442 = vunpack.c.l.b16 %v4307
      %v4443 = vunpack.c.l.b16 %v4311
      %v4444 = vunpack.c.l.b16 %v4314
      %v4445 = vunpack.c.l.b16 %v4317
      %v4446 = vunpack.c.l.b16 %v4320
      %v4447 = vunpack.c.l.b16 %v4324
      %v4448 = vunpack.c.l.b16 %v4327
      %v4449 = vunpack.c.l.b16 %v4330
      %v4450 = vunpack.c.l.b16 %v4333
      %v4451 = vunpack.c.l.b16 %v4337
      %v4452 = vunpack.c.l.b16 %v4340
      %v4453 = vunpack.c.l.b16 %v4343
      %v4454 = vunpack.c.l.b16 %v4346
      %v4455 = vunpack.c.l.b16 %v4350
      %v4456 = vunpack.c.l.b16 %v4353
      %v4457 = vunpack.c.l.b16 %v4356
      %v4458 = vunpack.c.l.b16 %v4359
      %v4459 = vunpack.c.l.b16 %v4363
      %v4460 = vunpack.c.l.b16 %v4366
      %v4461 = vunpack.c.l.b16 %v4369
      %v4462 = vunpack.c.l.b16 %v4372
      %v4463 = vunpack.c.l.b16 %v4376
      %v4464 = vunpack.c.l.b16 %v4379
      %v4465 = vunpack.c.l.b16 %v4382
      %v4466 = vunpack.c.l.b16 %v4385
      %v4467 = vunpack.c.l.b16 %v4389
      %v4468 = vunpack.c.l.b16 %v4392
      %v4469 = vunpack.c.l.b16 %v4395
      %v4470 = vunpack.c.l.b16 %v4398
      %v4471 = vpack.c.b16 %v4400, %v4399
      %v4472 = vpack.c.b16 %v4402, %v4401
      %v4473 = vpack.c.b16 %v4404, %v4403
      %v4474 = vpack.c.b16 %v4406, %v4405
      %v4475 = vpack.c.b16 %v4408, %v4407
      %v4476 = vpack.c.b16 %v4410, %v4409
      %v4477 = vpack.c.b16 %v4412, %v4411
      %v4478 = vpack.c.b16 %v4414, %v4413
      %v4479 = vpack.c.b16 %v4416, %v4415
      %v4480 = vpack.c.b16 %v4418, %v4417
      %v4481 = vpack.c.b16 %v4420, %v4419
      %v4482 = vpack.c.b16 %v4422, %v4421
      %v4483 = vpack.c.b16 %v4424, %v4423
      %v4484 = vpack.c.b16 %v4426, %v4425
      %v4485 = vpack.c.b16 %v4428, %v4427
      %v4486 = vpack.c.b16 %v4430, %v4429
      %v4487 = vpack.c.b16 %v4432, %v4431
      %v4488 = vpack.c.b16 %v4434, %v4433
      %v4489 = vpack.c.b16 %v4436, %v4435
      %v4490 = vpack.c.b16 %v4438, %v4437
      %v4491 = vpack.c.b16 %v4440, %v4439
      %v4492 = vpack.c.b16 %v4442, %v4441
      %v4493 = vpack.c.b16 %v4444, %v4443
      %v4494 = vpack.c.b16 %v4446, %v4445
      %v4495 = vpack.c.b16 %v4448, %v4447
      %v4496 = vpack.c.b16 %v4450, %v4449
      %v4497 = vpack.c.b16 %v4452, %v4451
      %v4498 = vpack.c.b16 %v4454, %v4453
      %v4499 = vpack.c.b16 %v4456, %v4455
      %v4500 = vpack.c.b16 %v4458, %v4457
      %v4501 = vpack.c.b16 %v4460, %v4459
      %v4502 = vpack.c.b16 %v4462, %v4461
      %v4503 = vpack.c.b16 %v4464, %v4463
      %v4504 = vpack.c.b16 %v4466, %v4465
      %v4505 = vpack.c.b16 %v4468, %v4467
      %v4506 = vpack.c.b16 %v4470, %v4469
      %4507 = vrot.lane.b32.xlu0 %v4471, 20
      %v4508 = vpop.permute.xlu0 %4507
      %4509 = vrot.lane.b32.xlu0 %v4472, 20
      %v4510 = vpop.permute.xlu0 %4509
      %4511 = vrot.lane.b32.xlu0 %v4473, 20
      %v4512 = vpop.permute.xlu0 %4511
      %4513 = vrot.lane.b32.xlu0 %v4474, 20
      %v4514 = vpop.permute.xlu0 %4513
      %4515 = vrot.lane.b32.xlu0 %v4475, 20
      %v4516 = vpop.permute.xlu0 %4515
      %4517 = vrot.lane.b32.xlu0 %v4476, 20
      %v4518 = vpop.permute.xlu0 %4517
      %4519 = vrot.lane.b32.xlu0 %v4477, 20
      %v4520 = vpop.permute.xlu0 %4519
      %4521 = vrot.lane.b32.xlu0 %v4478, 20
      %v4522 = vpop.permute.xlu0 %4521
      %4523 = vrot.lane.b32.xlu0 %v4479, 20
      %v4524 = vpop.permute.xlu0 %4523
      %4525 = vrot.lane.b32.xlu0 %v4480, 20
      %v4526 = vpop.permute.xlu0 %4525
      %4527 = vrot.lane.b32.xlu0 %v4481, 20
      %v4528 = vpop.permute.xlu0 %4527
      %4529 = vrot.lane.b32.xlu0 %v4482, 20
      %v4530 = vpop.permute.xlu0 %4529
      %4531 = vrot.lane.b32.xlu0 %v4483, 20
      %v4532 = vpop.permute.xlu0 %4531
      %4533 = vrot.lane.b32.xlu0 %v4484, 20
      %v4534 = vpop.permute.xlu0 %4533
      %4535 = vrot.lane.b32.xlu0 %v4485, 20
      %v4536 = vpop.permute.xlu0 %4535
      %4537 = vrot.lane.b32.xlu0 %v4486, 20
      %v4538 = vpop.permute.xlu0 %4537
      %4539 = vrot.lane.b32.xlu0 %v4487, 20
      %v4540 = vpop.permute.xlu0 %4539
      %4541 = vrot.lane.b32.xlu0 %v4488, 20
      %v4542 = vpop.permute.xlu0 %4541
      %4543 = vrot.lane.b32.xlu0 %v4489, 20
      %v4544 = vpop.permute.xlu0 %4543
      %4545 = vrot.lane.b32.xlu0 %v4490, 20
      %v4546 = vpop.permute.xlu0 %4545
      %4547 = vrot.lane.b32.xlu0 %v4491, 20
      %v4548 = vpop.permute.xlu0 %4547
      %4549 = vrot.lane.b32.xlu0 %v4492, 20
      %v4550 = vpop.permute.xlu0 %4549
      %4551 = vrot.lane.b32.xlu0 %v4493, 20
      %v4552 = vpop.permute.xlu0 %4551
      %4553 = vrot.lane.b32.xlu0 %v4494, 20
      %v4554 = vpop.permute.xlu0 %4553
      %4555 = vrot.lane.b32.xlu0 %v4495, 20
      %v4556 = vpop.permute.xlu0 %4555
      %4557 = vrot.lane.b32.xlu0 %v4496, 20
      %v4558 = vpop.permute.xlu0 %4557
      %4559 = vrot.lane.b32.xlu0 %v4497, 20
      %v4560 = vpop.permute.xlu0 %4559
      %4561 = vrot.lane.b32.xlu0 %v4498, 20
      %v4562 = vpop.permute.xlu0 %4561
      %4563 = vrot.lane.b32.xlu0 %v4499, 20
      %v4564 = vpop.permute.xlu0 %4563
      %4565 = vrot.lane.b32.xlu0 %v4500, 20
      %v4566 = vpop.permute.xlu0 %4565
      %4567 = vrot.lane.b32.xlu0 %v4501, 20
      %v4568 = vpop.permute.xlu0 %4567
      %4569 = vrot.lane.b32.xlu0 %v4502, 20
      %v4570 = vpop.permute.xlu0 %4569
      %4571 = vrot.lane.b32.xlu0 %v4503, 20
      %v4572 = vpop.permute.xlu0 %4571
      %4573 = vrot.lane.b32.xlu0 %v4504, 20
      %v4574 = vpop.permute.xlu0 %4573
      %4575 = vrot.lane.b32.xlu0 %v4505, 20
      %v4576 = vpop.permute.xlu0 %4575
      %4577 = vrot.lane.b32.xlu0 %v4506, 20
      %v4578 = vpop.permute.xlu0 %4577
      %vm4615 = vcmask 195744
      %4616 = vst.msk [vmem:[#allocation2] sm:$0xff] %vm4615, %v4508
      %4617 = vst.msk [vmem:[#allocation2 + $0x8] sm:$0xff] %vm4615, %v4510
      %4618 = vst.msk [vmem:[#allocation2 + $0x10] sm:$0xff] %vm4615, %v4512
      %4619 = vst.msk [vmem:[#allocation2 + $0x18] sm:$0xff] %vm4615, %v4514
      %4620 = vst.msk [vmem:[#allocation2 + $0x20] sm:$0xff] %vm4615, %v4516
      %4621 = vst.msk [vmem:[#allocation2 + $0x28] sm:$0xff] %vm4615, %v4518
      %4622 = vst.msk [vmem:[#allocation2 + $0x30] sm:$0xff] %vm4615, %v4520
      %4623 = vst.msk [vmem:[#allocation2 + $0x38] sm:$0xff] %vm4615, %v4522
      %4624 = vst.msk [vmem:[#allocation2 + $0x40] sm:$0xff] %vm4615, %v4524
      %4625 = vst.msk [vmem:[#allocation2 + $0x48] sm:$0xff] %vm4615, %v4526
      %4626 = vst.msk [vmem:[#allocation2 + $0x50] sm:$0xff] %vm4615, %v4528
      %4627 = vst.msk [vmem:[#allocation2 + $0x58] sm:$0xff] %vm4615, %v4530
      %4628 = vst.msk [vmem:[#allocation2 + $0x60] sm:$0xff] %vm4615, %v4532
      %4629 = vst.msk [vmem:[#allocation2 + $0x68] sm:$0xff] %vm4615, %v4534
      %4630 = vst.msk [vmem:[#allocation2 + $0x70] sm:$0xff] %vm4615, %v4536
      %4631 = vst.msk [vmem:[#allocation2 + $0x78] sm:$0xff] %vm4615, %v4538
      %4632 = vst.msk [vmem:[#allocation2 + $0x80] sm:$0xff] %vm4615, %v4540
      %4633 = vst.msk [vmem:[#allocation2 + $0x88] sm:$0xff] %vm4615, %v4542
      %4634 = vst.msk [vmem:[#allocation2 + $0x90] sm:$0xff] %vm4615, %v4544
      %4635 = vst.msk [vmem:[#allocation2 + $0x98] sm:$0xff] %vm4615, %v4546
      %4636 = vst.msk [vmem:[#allocation2 + $0xa0] sm:$0xff] %vm4615, %v4548
      %4637 = vst.msk [vmem:[#allocation2 + $0xa8] sm:$0xff] %vm4615, %v4550
      %4638 = vst.msk [vmem:[#allocation2 + $0xb0] sm:$0xff] %vm4615, %v4552
      %4639 = vst.msk [vmem:[#allocation2 + $0xb8] sm:$0xff] %vm4615, %v4554
      %4640 = vst.msk [vmem:[#allocation2 + $0xc0] sm:$0xff] %vm4615, %v4556
      %4641 = vst.msk [vmem:[#allocation2 + $0xc8] sm:$0xff] %vm4615, %v4558
      %4642 = vst.msk [vmem:[#allocation2 + $0xd0] sm:$0xff] %vm4615, %v4560
      %4643 = vst.msk [vmem:[#allocation2 + $0xd8] sm:$0xff] %vm4615, %v4562
      %4644 = vst.msk [vmem:[#allocation2 + $0xe0] sm:$0xff] %vm4615, %v4564
      %4645 = vst.msk [vmem:[#allocation2 + $0xe8] sm:$0xff] %vm4615, %v4566
      %4646 = vst.msk [vmem:[#allocation2 + $0xf0] sm:$0xff] %vm4615, %v4568
      %4647 = vst.msk [vmem:[#allocation2 + $0xf8] sm:$0xff] %vm4615, %v4570
      %4648 = vst.msk [vmem:[#allocation2 + $0x100] sm:$0xff] %vm4615, %v4572
      %4649 = vst.msk [vmem:[#allocation2 + $0x108] sm:$0xff] %vm4615, %v4574
      %4650 = vst.msk [vmem:[#allocation2 + $0x110] sm:$0xff] %vm4615, %v4576
      %4651 = vst.msk [vmem:[#allocation2 + $0x118] sm:$0xff] %vm4615, %v4578
      %s4652 = scalar_lea.vmem %s306, 40
      %v4653 = vld [vmem:[%s4652] sm:$0xf]
      %v4654 = vld [vmem:[%s4652 + $0x4] sm:$0xf]
      %v4655 = vld [vmem:[%s4652 + $0x8] sm:$0xf]
      %v4656 = vld [vmem:[%s4652 + $0xc] sm:$0xf]
      %v4657 = vld [vmem:[%s4652 + $0x14] sm:$0xf]
      %v4658 = vld [vmem:[%s4652 + $0x18] sm:$0xf]
      %v4659 = vld [vmem:[%s4652 + $0x1c] sm:$0xf]
      %v4660 = vld [vmem:[%s4652 + $0x20] sm:$0xf]
      %v4661 = vld [vmem:[%s4652 + $0x28] sm:$0xf]
      %v4662 = vld [vmem:[%s4652 + $0x2c] sm:$0xf]
      %v4663 = vld [vmem:[%s4652 + $0x30] sm:$0xf]
      %v4664 = vld [vmem:[%s4652 + $0x34] sm:$0xf]
      %v4665 = vld [vmem:[%s4652 + $0x3c] sm:$0xf]
      %v4666 = vld [vmem:[%s4652 + $0x40] sm:$0xf]
      %v4667 = vld [vmem:[%s4652 + $0x44] sm:$0xf]
      %v4668 = vld [vmem:[%s4652 + $0x48] sm:$0xf]
      %v4669 = vld [vmem:[%s4652 + $0x50] sm:$0xf]
      %v4670 = vld [vmem:[%s4652 + $0x54] sm:$0xf]
      %v4671 = vld [vmem:[%s4652 + $0x58] sm:$0xf]
      %v4672 = vld [vmem:[%s4652 + $0x5c] sm:$0xf]
      %v4673 = vld [vmem:[%s4652 + $0x64] sm:$0xf]
      %v4674 = vld [vmem:[%s4652 + $0x68] sm:$0xf]
      %v4675 = vld [vmem:[%s4652 + $0x6c] sm:$0xf]
      %v4676 = vld [vmem:[%s4652 + $0x70] sm:$0xf]
      %v4677 = vld [vmem:[%s4652 + $0x78] sm:$0xf]
      %v4678 = vld [vmem:[%s4652 + $0x7c] sm:$0xf]
      %v4679 = vld [vmem:[%s4652 + $0x80] sm:$0xf]
      %v4680 = vld [vmem:[%s4652 + $0x84] sm:$0xf]
      %v4681 = vld [vmem:[%s4652 + $0x8c] sm:$0xf]
      %v4682 = vld [vmem:[%s4652 + $0x90] sm:$0xf]
      %v4683 = vld [vmem:[%s4652 + $0x94] sm:$0xf]
      %v4684 = vld [vmem:[%s4652 + $0x98] sm:$0xf]
      %v4685 = vld [vmem:[%s4652 + $0xa0] sm:$0xf]
      %v4686 = vld [vmem:[%s4652 + $0xa4] sm:$0xf]
      %v4687 = vld [vmem:[%s4652 + $0xa8] sm:$0xf]
      %v4688 = vld [vmem:[%s4652 + $0xac] sm:$0xf]
      %v4689 = vld [vmem:[%s4652 + $0xb4] sm:$0xf]
      %v4690 = vld [vmem:[%s4652 + $0xb8] sm:$0xf]
      %v4691 = vld [vmem:[%s4652 + $0xbc] sm:$0xf]
      %v4692 = vld [vmem:[%s4652 + $0xc0] sm:$0xf]
      %v4693 = vld [vmem:[%s4652 + $0xc8] sm:$0xf]
      %v4694 = vld [vmem:[%s4652 + $0xcc] sm:$0xf]
      %v4695 = vld [vmem:[%s4652 + $0xd0] sm:$0xf]
      %v4696 = vld [vmem:[%s4652 + $0xd4] sm:$0xf]
      %v4697 = vld [vmem:[%s4652 + $0xdc] sm:$0xf]
      %v4698 = vld [vmem:[%s4652 + $0xe0] sm:$0xf]
      %v4699 = vld [vmem:[%s4652 + $0xe4] sm:$0xf]
      %v4700 = vld [vmem:[%s4652 + $0xe8] sm:$0xf]
      %v4701 = vld [vmem:[%s4652 + $0xf0] sm:$0xf]
      %v4702 = vld [vmem:[%s4652 + $0xf4] sm:$0xf]
      %v4703 = vld [vmem:[%s4652 + $0xf8] sm:$0xf]
      %v4704 = vld [vmem:[%s4652 + $0xfc] sm:$0xf]
      %v4705 = vld [vmem:[%s4652 + $0x104] sm:$0xf]
      %v4706 = vld [vmem:[%s4652 + $0x108] sm:$0xf]
      %v4707 = vld [vmem:[%s4652 + $0x10c] sm:$0xf]
      %v4708 = vld [vmem:[%s4652 + $0x110] sm:$0xf]
      %v4709 = vld [vmem:[%s4652 + $0x118] sm:$0xf]
      %v4710 = vld [vmem:[%s4652 + $0x11c] sm:$0xf]
      %v4711 = vld [vmem:[%s4652 + $0x120] sm:$0xf]
      %v4712 = vld [vmem:[%s4652 + $0x124] sm:$0xf]
      %v4713 = vld [vmem:[%s4652 + $0x12c] sm:$0xf]
      %v4714 = vld [vmem:[%s4652 + $0x130] sm:$0xf]
      %v4715 = vld [vmem:[%s4652 + $0x134] sm:$0xf]
      %v4716 = vld [vmem:[%s4652 + $0x138] sm:$0xf]
      %v4717 = vld [vmem:[%s4652 + $0x140] sm:$0xf]
      %v4718 = vld [vmem:[%s4652 + $0x144] sm:$0xf]
      %v4719 = vld [vmem:[%s4652 + $0x148] sm:$0xf]
      %v4720 = vld [vmem:[%s4652 + $0x14c] sm:$0xf]
      %v4721 = vld [vmem:[%s4652 + $0x154] sm:$0xf]
      %v4722 = vld [vmem:[%s4652 + $0x158] sm:$0xf]
      %v4723 = vld [vmem:[%s4652 + $0x15c] sm:$0xf]
      %v4724 = vld [vmem:[%s4652 + $0x160] sm:$0xf]
      %v4797 = vunpack.c.l.b16 %v4653
      %v4798 = vunpack.c.l.b16 %v4654
      %v4799 = vunpack.c.l.b16 %v4655
      %v4800 = vunpack.c.l.b16 %v4656
      %v4801 = vunpack.c.l.b16 %v4657
      %v4802 = vunpack.c.l.b16 %v4658
      %v4803 = vunpack.c.l.b16 %v4659
      %v4804 = vunpack.c.l.b16 %v4660
      %v4805 = vunpack.c.l.b16 %v4661
      %v4806 = vunpack.c.l.b16 %v4662
      %v4807 = vunpack.c.l.b16 %v4663
      %v4808 = vunpack.c.l.b16 %v4664
      %v4809 = vunpack.c.l.b16 %v4665
      %v4810 = vunpack.c.l.b16 %v4666
      %v4811 = vunpack.c.l.b16 %v4667
      %v4812 = vunpack.c.l.b16 %v4668
      %v4813 = vunpack.c.l.b16 %v4669
      %v4814 = vunpack.c.l.b16 %v4670
      %v4815 = vunpack.c.l.b16 %v4671
      %v4816 = vunpack.c.l.b16 %v4672
      %v4817 = vunpack.c.l.b16 %v4673
      %v4818 = vunpack.c.l.b16 %v4674
      %v4819 = vunpack.c.l.b16 %v4675
      %v4820 = vunpack.c.l.b16 %v4676
      %v4821 = vunpack.c.l.b16 %v4677
      %v4822 = vunpack.c.l.b16 %v4678
      %v4823 = vunpack.c.l.b16 %v4679
      %v4824 = vunpack.c.l.b16 %v4680
      %v4825 = vunpack.c.l.b16 %v4681
      %v4826 = vunpack.c.l.b16 %v4682
      %v4827 = vunpack.c.l.b16 %v4683
      %v4828 = vunpack.c.l.b16 %v4684
      %v4829 = vunpack.c.l.b16 %v4685
      %v4830 = vunpack.c.l.b16 %v4686
      %v4831 = vunpack.c.l.b16 %v4687
      %v4832 = vunpack.c.l.b16 %v4688
      %v4833 = vunpack.c.l.b16 %v4689
      %v4834 = vunpack.c.l.b16 %v4690
      %v4835 = vunpack.c.l.b16 %v4691
      %v4836 = vunpack.c.l.b16 %v4692
      %v4837 = vunpack.c.l.b16 %v4693
      %v4838 = vunpack.c.l.b16 %v4694
      %v4839 = vunpack.c.l.b16 %v4695
      %v4840 = vunpack.c.l.b16 %v4696
      %v4841 = vunpack.c.l.b16 %v4697
      %v4842 = vunpack.c.l.b16 %v4698
      %v4843 = vunpack.c.l.b16 %v4699
      %v4844 = vunpack.c.l.b16 %v4700
      %v4845 = vunpack.c.l.b16 %v4701
      %v4846 = vunpack.c.l.b16 %v4702
      %v4847 = vunpack.c.l.b16 %v4703
      %v4848 = vunpack.c.l.b16 %v4704
      %v4849 = vunpack.c.l.b16 %v4705
      %v4850 = vunpack.c.l.b16 %v4706
      %v4851 = vunpack.c.l.b16 %v4707
      %v4852 = vunpack.c.l.b16 %v4708
      %v4853 = vunpack.c.l.b16 %v4709
      %v4854 = vunpack.c.l.b16 %v4710
      %v4855 = vunpack.c.l.b16 %v4711
      %v4856 = vunpack.c.l.b16 %v4712
      %v4857 = vunpack.c.l.b16 %v4713
      %v4858 = vunpack.c.l.b16 %v4714
      %v4859 = vunpack.c.l.b16 %v4715
      %v4860 = vunpack.c.l.b16 %v4716
      %v4861 = vunpack.c.l.b16 %v4717
      %v4862 = vunpack.c.l.b16 %v4718
      %v4863 = vunpack.c.l.b16 %v4719
      %v4864 = vunpack.c.l.b16 %v4720
      %v4865 = vunpack.c.l.b16 %v4721
      %v4866 = vunpack.c.l.b16 %v4722
      %v4867 = vunpack.c.l.b16 %v4723
      %v4868 = vunpack.c.l.b16 %v4724
      %v4869 = vpack.c.b16 %v4798, %v4797
      %v4870 = vpack.c.b16 %v4800, %v4799
      %v4871 = vpack.c.b16 %v4802, %v4801
      %v4872 = vpack.c.b16 %v4804, %v4803
      %v4873 = vpack.c.b16 %v4806, %v4805
      %v4874 = vpack.c.b16 %v4808, %v4807
      %v4875 = vpack.c.b16 %v4810, %v4809
      %v4876 = vpack.c.b16 %v4812, %v4811
      %v4877 = vpack.c.b16 %v4814, %v4813
      %v4878 = vpack.c.b16 %v4816, %v4815
      %v4879 = vpack.c.b16 %v4818, %v4817
      %v4880 = vpack.c.b16 %v4820, %v4819
      %v4881 = vpack.c.b16 %v4822, %v4821
      %v4882 = vpack.c.b16 %v4824, %v4823
      %v4883 = vpack.c.b16 %v4826, %v4825
      %v4884 = vpack.c.b16 %v4828, %v4827
      %v4885 = vpack.c.b16 %v4830, %v4829
      %v4886 = vpack.c.b16 %v4832, %v4831
      %v4887 = vpack.c.b16 %v4834, %v4833
      %v4888 = vpack.c.b16 %v4836, %v4835
      %v4889 = vpack.c.b16 %v4838, %v4837
      %v4890 = vpack.c.b16 %v4840, %v4839
      %v4891 = vpack.c.b16 %v4842, %v4841
      %v4892 = vpack.c.b16 %v4844, %v4843
      %v4893 = vpack.c.b16 %v4846, %v4845
      %v4894 = vpack.c.b16 %v4848, %v4847
      %v4895 = vpack.c.b16 %v4850, %v4849
      %v4896 = vpack.c.b16 %v4852, %v4851
      %v4897 = vpack.c.b16 %v4854, %v4853
      %v4898 = vpack.c.b16 %v4856, %v4855
      %v4899 = vpack.c.b16 %v4858, %v4857
      %v4900 = vpack.c.b16 %v4860, %v4859
      %v4901 = vpack.c.b16 %v4862, %v4861
      %v4902 = vpack.c.b16 %v4864, %v4863
      %v4903 = vpack.c.b16 %v4866, %v4865
      %v4904 = vpack.c.b16 %v4868, %v4867
      %4905 = vrot.lane.b32.xlu0 %v4869, 24
      %v4906 = vpop.permute.xlu0 %4905
      %4907 = vrot.lane.b32.xlu0 %v4870, 24
      %v4908 = vpop.permute.xlu0 %4907
      %4909 = vrot.lane.b32.xlu0 %v4871, 24
      %v4910 = vpop.permute.xlu0 %4909
      %4911 = vrot.lane.b32.xlu0 %v4872, 24
      %v4912 = vpop.permute.xlu0 %4911
      %4913 = vrot.lane.b32.xlu0 %v4873, 24
      %v4914 = vpop.permute.xlu0 %4913
      %4915 = vrot.lane.b32.xlu0 %v4874, 24
      %v4916 = vpop.permute.xlu0 %4915
      %4917 = vrot.lane.b32.xlu0 %v4875, 24
      %v4918 = vpop.permute.xlu0 %4917
      %4919 = vrot.lane.b32.xlu0 %v4876, 24
      %v4920 = vpop.permute.xlu0 %4919
      %4921 = vrot.lane.b32.xlu0 %v4877, 24
      %v4922 = vpop.permute.xlu0 %4921
      %4923 = vrot.lane.b32.xlu0 %v4878, 24
      %v4924 = vpop.permute.xlu0 %4923
      %4925 = vrot.lane.b32.xlu0 %v4879, 24
      %v4926 = vpop.permute.xlu0 %4925
      %4927 = vrot.lane.b32.xlu0 %v4880, 24
      %v4928 = vpop.permute.xlu0 %4927
      %4929 = vrot.lane.b32.xlu0 %v4881, 24
      %v4930 = vpop.permute.xlu0 %4929
      %4931 = vrot.lane.b32.xlu0 %v4882, 24
      %v4932 = vpop.permute.xlu0 %4931
      %4933 = vrot.lane.b32.xlu0 %v4883, 24
      %v4934 = vpop.permute.xlu0 %4933
      %4935 = vrot.lane.b32.xlu0 %v4884, 24
      %v4936 = vpop.permute.xlu0 %4935
      %4937 = vrot.lane.b32.xlu0 %v4885, 24
      %v4938 = vpop.permute.xlu0 %4937
      %4939 = vrot.lane.b32.xlu0 %v4886, 24
      %v4940 = vpop.permute.xlu0 %4939
      %4941 = vrot.lane.b32.xlu0 %v4887, 24
      %v4942 = vpop.permute.xlu0 %4941
      %4943 = vrot.lane.b32.xlu0 %v4888, 24
      %v4944 = vpop.permute.xlu0 %4943
      %4945 = vrot.lane.b32.xlu0 %v4889, 24
      %v4946 = vpop.permute.xlu0 %4945
      %4947 = vrot.lane.b32.xlu0 %v4890, 24
      %v4948 = vpop.permute.xlu0 %4947
      %4949 = vrot.lane.b32.xlu0 %v4891, 24
      %v4950 = vpop.permute.xlu0 %4949
      %4951 = vrot.lane.b32.xlu0 %v4892, 24
      %v4952 = vpop.permute.xlu0 %4951
      %4953 = vrot.lane.b32.xlu0 %v4893, 24
      %v4954 = vpop.permute.xlu0 %4953
      %4955 = vrot.lane.b32.xlu0 %v4894, 24
      %v4956 = vpop.permute.xlu0 %4955
      %4957 = vrot.lane.b32.xlu0 %v4895, 24
      %v4958 = vpop.permute.xlu0 %4957
      %4959 = vrot.lane.b32.xlu0 %v4896, 24
      %v4960 = vpop.permute.xlu0 %4959
      %4961 = vrot.lane.b32.xlu0 %v4897, 24
      %v4962 = vpop.permute.xlu0 %4961
      %4963 = vrot.lane.b32.xlu0 %v4898, 24
      %v4964 = vpop.permute.xlu0 %4963
      %4965 = vrot.lane.b32.xlu0 %v4899, 24
      %v4966 = vpop.permute.xlu0 %4965
      %4967 = vrot.lane.b32.xlu0 %v4900, 24
      %v4968 = vpop.permute.xlu0 %4967
      %4969 = vrot.lane.b32.xlu0 %v4901, 24
      %v4970 = vpop.permute.xlu0 %4969
      %4971 = vrot.lane.b32.xlu0 %v4902, 24
      %v4972 = vpop.permute.xlu0 %4971
      %4973 = vrot.lane.b32.xlu0 %v4903, 24
      %v4974 = vpop.permute.xlu0 %4973
      %4975 = vrot.lane.b32.xlu0 %v4904, 24
      %v4976 = vpop.permute.xlu0 %4975
      %vm5013 = vcmask 228544
      %5014 = vst.msk [vmem:[#allocation2] sm:$0xff] %vm5013, %v4906
      %5015 = vst.msk [vmem:[#allocation2 + $0x8] sm:$0xff] %vm5013, %v4908
      %5016 = vst.msk [vmem:[#allocation2 + $0x10] sm:$0xff] %vm5013, %v4910
      %5017 = vst.msk [vmem:[#allocation2 + $0x18] sm:$0xff] %vm5013, %v4912
      %5018 = vst.msk [vmem:[#allocation2 + $0x20] sm:$0xff] %vm5013, %v4914
      %5019 = vst.msk [vmem:[#allocation2 + $0x28] sm:$0xff] %vm5013, %v4916
      %5020 = vst.msk [vmem:[#allocation2 + $0x30] sm:$0xff] %vm5013, %v4918
      %5021 = vst.msk [vmem:[#allocation2 + $0x38] sm:$0xff] %vm5013, %v4920
      %5022 = vst.msk [vmem:[#allocation2 + $0x40] sm:$0xff] %vm5013, %v4922
      %5023 = vst.msk [vmem:[#allocation2 + $0x48] sm:$0xff] %vm5013, %v4924
      %5024 = vst.msk [vmem:[#allocation2 + $0x50] sm:$0xff] %vm5013, %v4926
      %5025 = vst.msk [vmem:[#allocation2 + $0x58] sm:$0xff] %vm5013, %v4928
      %5026 = vst.msk [vmem:[#allocation2 + $0x60] sm:$0xff] %vm5013, %v4930
      %5027 = vst.msk [vmem:[#allocation2 + $0x68] sm:$0xff] %vm5013, %v4932
      %5028 = vst.msk [vmem:[#allocation2 + $0x70] sm:$0xff] %vm5013, %v4934
      %5029 = vst.msk [vmem:[#allocation2 + $0x78] sm:$0xff] %vm5013, %v4936
      %5030 = vst.msk [vmem:[#allocation2 + $0x80] sm:$0xff] %vm5013, %v4938
      %5031 = vst.msk [vmem:[#allocation2 + $0x88] sm:$0xff] %vm5013, %v4940
      %5032 = vst.msk [vmem:[#allocation2 + $0x90] sm:$0xff] %vm5013, %v4942
      %5033 = vst.msk [vmem:[#allocation2 + $0x98] sm:$0xff] %vm5013, %v4944
      %5034 = vst.msk [vmem:[#allocation2 + $0xa0] sm:$0xff] %vm5013, %v4946
      %5035 = vst.msk [vmem:[#allocation2 + $0xa8] sm:$0xff] %vm5013, %v4948
      %5036 = vst.msk [vmem:[#allocation2 + $0xb0] sm:$0xff] %vm5013, %v4950
      %5037 = vst.msk [vmem:[#allocation2 + $0xb8] sm:$0xff] %vm5013, %v4952
      %5038 = vst.msk [vmem:[#allocation2 + $0xc0] sm:$0xff] %vm5013, %v4954
      %5039 = vst.msk [vmem:[#allocation2 + $0xc8] sm:$0xff] %vm5013, %v4956
      %5040 = vst.msk [vmem:[#allocation2 + $0xd0] sm:$0xff] %vm5013, %v4958
      %5041 = vst.msk [vmem:[#allocation2 + $0xd8] sm:$0xff] %vm5013, %v4960
      %5042 = vst.msk [vmem:[#allocation2 + $0xe0] sm:$0xff] %vm5013, %v4962
      %5043 = vst.msk [vmem:[#allocation2 + $0xe8] sm:$0xff] %vm5013, %v4964
      %5044 = vst.msk [vmem:[#allocation2 + $0xf0] sm:$0xff] %vm5013, %v4966
      %5045 = vst.msk [vmem:[#allocation2 + $0xf8] sm:$0xff] %vm5013, %v4968
      %5046 = vst.msk [vmem:[#allocation2 + $0x100] sm:$0xff] %vm5013, %v4970
      %5047 = vst.msk [vmem:[#allocation2 + $0x108] sm:$0xff] %vm5013, %v4972
      %5048 = vst.msk [vmem:[#allocation2 + $0x110] sm:$0xff] %vm5013, %v4974
      %5049 = vst.msk [vmem:[#allocation2 + $0x118] sm:$0xff] %vm5013, %v4976
      %v5050 = vld [vmem:[%s4652] sm:$0xf]
      %v5051 = vld [vmem:[%s4652 + $0x4] sm:$0xf]
      %v5052 = vld [vmem:[%s4652 + $0x8] sm:$0xf]
      %v5053 = vld [vmem:[%s4652 + $0xc] sm:$0xf]
      %v5054 = vld [vmem:[%s4652 + $0x10] sm:$0x1]
      %v5055 = vld [vmem:[%s4652 + $0x14] sm:$0xf]
      %v5056 = vld [vmem:[%s4652 + $0x18] sm:$0xf]
      %v5057 = vld [vmem:[%s4652 + $0x1c] sm:$0xf]
      %v5058 = vld [vmem:[%s4652 + $0x20] sm:$0xf]
      %v5059 = vld [vmem:[%s4652 + $0x24] sm:$0x1]
      %v5060 = vld [vmem:[%s4652 + $0x28] sm:$0xf]
      %v5061 = vld [vmem:[%s4652 + $0x2c] sm:$0xf]
      %v5062 = vld [vmem:[%s4652 + $0x30] sm:$0xf]
      %v5063 = vld [vmem:[%s4652 + $0x34] sm:$0xf]
      %v5064 = vld [vmem:[%s4652 + $0x38] sm:$0x1]
      %v5065 = vld [vmem:[%s4652 + $0x3c] sm:$0xf]
      %v5066 = vld [vmem:[%s4652 + $0x40] sm:$0xf]
      %v5067 = vld [vmem:[%s4652 + $0x44] sm:$0xf]
      %v5068 = vld [vmem:[%s4652 + $0x48] sm:$0xf]
      %v5069 = vld [vmem:[%s4652 + $0x4c] sm:$0x1]
      %v5070 = vld [vmem:[%s4652 + $0x50] sm:$0xf]
      %v5071 = vld [vmem:[%s4652 + $0x54] sm:$0xf]
      %v5072 = vld [vmem:[%s4652 + $0x58] sm:$0xf]
      %v5073 = vld [vmem:[%s4652 + $0x5c] sm:$0xf]
      %v5074 = vld [vmem:[%s4652 + $0x60] sm:$0x1]
      %v5075 = vld [vmem:[%s4652 + $0x64] sm:$0xf]
      %v5076 = vld [vmem:[%s4652 + $0x68] sm:$0xf]
      %v5077 = vld [vmem:[%s4652 + $0x6c] sm:$0xf]
      %v5078 = vld [vmem:[%s4652 + $0x70] sm:$0xf]
      %v5079 = vld [vmem:[%s4652 + $0x74] sm:$0x1]
      %v5080 = vld [vmem:[%s4652 + $0x78] sm:$0xf]
      %v5081 = vld [vmem:[%s4652 + $0x7c] sm:$0xf]
      %v5082 = vld [vmem:[%s4652 + $0x80] sm:$0xf]
      %v5083 = vld [vmem:[%s4652 + $0x84] sm:$0xf]
      %v5084 = vld [vmem:[%s4652 + $0x88] sm:$0x1]
      %v5085 = vld [vmem:[%s4652 + $0x8c] sm:$0xf]
      %v5086 = vld [vmem:[%s4652 + $0x90] sm:$0xf]
      %v5087 = vld [vmem:[%s4652 + $0x94] sm:$0xf]
      %v5088 = vld [vmem:[%s4652 + $0x98] sm:$0xf]
      %v5089 = vld [vmem:[%s4652 + $0x9c] sm:$0x1]
      %v5090 = vld [vmem:[%s4652 + $0xa0] sm:$0xf]
      %v5091 = vld [vmem:[%s4652 + $0xa4] sm:$0xf]
      %v5092 = vld [vmem:[%s4652 + $0xa8] sm:$0xf]
      %v5093 = vld [vmem:[%s4652 + $0xac] sm:$0xf]
      %v5094 = vld [vmem:[%s4652 + $0xb0] sm:$0x1]
      %v5095 = vld [vmem:[%s4652 + $0xb4] sm:$0xf]
      %v5096 = vld [vmem:[%s4652 + $0xb8] sm:$0xf]
      %v5097 = vld [vmem:[%s4652 + $0xbc] sm:$0xf]
      %v5098 = vld [vmem:[%s4652 + $0xc0] sm:$0xf]
      %v5099 = vld [vmem:[%s4652 + $0xc4] sm:$0x1]
      %v5100 = vld [vmem:[%s4652 + $0xc8] sm:$0xf]
      %v5101 = vld [vmem:[%s4652 + $0xcc] sm:$0xf]
      %v5102 = vld [vmem:[%s4652 + $0xd0] sm:$0xf]
      %v5103 = vld [vmem:[%s4652 + $0xd4] sm:$0xf]
      %v5104 = vld [vmem:[%s4652 + $0xd8] sm:$0x1]
      %v5105 = vld [vmem:[%s4652 + $0xdc] sm:$0xf]
      %v5106 = vld [vmem:[%s4652 + $0xe0] sm:$0xf]
      %v5107 = vld [vmem:[%s4652 + $0xe4] sm:$0xf]
      %v5108 = vld [vmem:[%s4652 + $0xe8] sm:$0xf]
      %v5109 = vld [vmem:[%s4652 + $0xec] sm:$0x1]
      %v5110 = vld [vmem:[%s4652 + $0xf0] sm:$0xf]
      %v5111 = vld [vmem:[%s4652 + $0xf4] sm:$0xf]
      %v5112 = vld [vmem:[%s4652 + $0xf8] sm:$0xf]
      %v5113 = vld [vmem:[%s4652 + $0xfc] sm:$0xf]
      %v5114 = vld [vmem:[%s4652 + $0x100] sm:$0x1]
      %v5115 = vld [vmem:[%s4652 + $0x104] sm:$0xf]
      %v5116 = vld [vmem:[%s4652 + $0x108] sm:$0xf]
      %v5117 = vld [vmem:[%s4652 + $0x10c] sm:$0xf]
      %v5118 = vld [vmem:[%s4652 + $0x110] sm:$0xf]
      %v5119 = vld [vmem:[%s4652 + $0x114] sm:$0x1]
      %v5120 = vld [vmem:[%s4652 + $0x118] sm:$0xf]
      %v5121 = vld [vmem:[%s4652 + $0x11c] sm:$0xf]
      %v5122 = vld [vmem:[%s4652 + $0x120] sm:$0xf]
      %v5123 = vld [vmem:[%s4652 + $0x124] sm:$0xf]
      %v5124 = vld [vmem:[%s4652 + $0x128] sm:$0x1]
      %v5125 = vld [vmem:[%s4652 + $0x12c] sm:$0xf]
      %v5126 = vld [vmem:[%s4652 + $0x130] sm:$0xf]
      %v5127 = vld [vmem:[%s4652 + $0x134] sm:$0xf]
      %v5128 = vld [vmem:[%s4652 + $0x138] sm:$0xf]
      %v5129 = vld [vmem:[%s4652 + $0x13c] sm:$0x1]
      %v5130 = vld [vmem:[%s4652 + $0x140] sm:$0xf]
      %v5131 = vld [vmem:[%s4652 + $0x144] sm:$0xf]
      %v5132 = vld [vmem:[%s4652 + $0x148] sm:$0xf]
      %v5133 = vld [vmem:[%s4652 + $0x14c] sm:$0xf]
      %v5134 = vld [vmem:[%s4652 + $0x150] sm:$0x1]
      %v5135 = vld [vmem:[%s4652 + $0x154] sm:$0xf]
      %v5136 = vld [vmem:[%s4652 + $0x158] sm:$0xf]
      %v5137 = vld [vmem:[%s4652 + $0x15c] sm:$0xf]
      %v5138 = vld [vmem:[%s4652 + $0x160] sm:$0xf]
      %v5139 = vld [vmem:[%s4652 + $0x164] sm:$0x1]
      %v5141 = vshrl.u32 %v5050, 16
      %v5143 = vrot.slane %v5141, 4
      %v5144 = vshll.u32 %v5050, 16
      %v5146 = vrot.slane %v5144, 5
      %v5147 = vor.u32 %v5143, %v5146
      %v5148 = vrot.slane %v5147, 4
      %v5150 = vshll.u32 %v5051, 16
      %v5152 = vrot.slane %v5150, 5
      %v5153 = vsel %vm736, %v5148, %v5152
      %v5154 = vshrl.u32 %v5051, 16
      %v5156 = vrot.slane %v5154, 4
      %v5157 = vor.u32 %v5156, %v5152
      %v5158 = vrot.slane %v5157, 4
      %v5160 = vshll.u32 %v5052, 16
      %v5162 = vrot.slane %v5160, 5
      %v5163 = vsel %vm736, %v5158, %v5162
      %v5164 = vshrl.u32 %v5052, 16
      %v5166 = vrot.slane %v5164, 4
      %v5167 = vor.u32 %v5166, %v5162
      %v5168 = vrot.slane %v5167, 4
      %v5170 = vshll.u32 %v5053, 16
      %v5172 = vrot.slane %v5170, 5
      %v5173 = vsel %vm736, %v5168, %v5172
      %v5174 = vshrl.u32 %v5053, 16
      %v5176 = vrot.slane %v5174, 4
      %v5177 = vor.u32 %v5176, %v5172
      %v5178 = vrot.slane %v5177, 4
      %v5180 = vshll.u32 %v5054, 16
      %v5182 = vrot.slane %v5180, 5
      %v5183 = vsel %vm736, %v5178, %v5182
      %v5185 = vshrl.u32 %v5055, 16
      %v5187 = vrot.slane %v5185, 4
      %v5188 = vshll.u32 %v5055, 16
      %v5190 = vrot.slane %v5188, 5
      %v5191 = vor.u32 %v5187, %v5190
      %v5192 = vrot.slane %v5191, 4
      %v5194 = vshll.u32 %v5056, 16
      %v5196 = vrot.slane %v5194, 5
      %v5197 = vsel %vm736, %v5192, %v5196
      %v5198 = vshrl.u32 %v5056, 16
      %v5200 = vrot.slane %v5198, 4
      %v5201 = vor.u32 %v5200, %v5196
      %v5202 = vrot.slane %v5201, 4
      %v5204 = vshll.u32 %v5057, 16
      %v5206 = vrot.slane %v5204, 5
      %v5207 = vsel %vm736, %v5202, %v5206
      %v5208 = vshrl.u32 %v5057, 16
      %v5210 = vrot.slane %v5208, 4
      %v5211 = vor.u32 %v5210, %v5206
      %v5212 = vrot.slane %v5211, 4
      %v5214 = vshll.u32 %v5058, 16
      %v5216 = vrot.slane %v5214, 5
      %v5217 = vsel %vm736, %v5212, %v5216
      %v5218 = vshrl.u32 %v5058, 16
      %v5220 = vrot.slane %v5218, 4
      %v5221 = vor.u32 %v5220, %v5216
      %v5222 = vrot.slane %v5221, 4
      %v5224 = vshll.u32 %v5059, 16
      %v5226 = vrot.slane %v5224, 5
      %v5227 = vsel %vm736, %v5222, %v5226
      %v5229 = vshrl.u32 %v5060, 16
      %v5231 = vrot.slane %v5229, 4
      %v5232 = vshll.u32 %v5060, 16
      %v5234 = vrot.slane %v5232, 5
      %v5235 = vor.u32 %v5231, %v5234
      %v5236 = vrot.slane %v5235, 4
      %v5238 = vshll.u32 %v5061, 16
      %v5240 = vrot.slane %v5238, 5
      %v5241 = vsel %vm736, %v5236, %v5240
      %v5242 = vshrl.u32 %v5061, 16
      %v5244 = vrot.slane %v5242, 4
      %v5245 = vor.u32 %v5244, %v5240
      %v5246 = vrot.slane %v5245, 4
      %v5248 = vshll.u32 %v5062, 16
      %v5250 = vrot.slane %v5248, 5
      %v5251 = vsel %vm736, %v5246, %v5250
      %v5252 = vshrl.u32 %v5062, 16
      %v5254 = vrot.slane %v5252, 4
      %v5255 = vor.u32 %v5254, %v5250
      %v5256 = vrot.slane %v5255, 4
      %v5258 = vshll.u32 %v5063, 16
      %v5260 = vrot.slane %v5258, 5
      %v5261 = vsel %vm736, %v5256, %v5260
      %v5262 = vshrl.u32 %v5063, 16
      %v5264 = vrot.slane %v5262, 4
      %v5265 = vor.u32 %v5264, %v5260
      %v5266 = vrot.slane %v5265, 4
      %v5268 = vshll.u32 %v5064, 16
      %v5270 = vrot.slane %v5268, 5
      %v5271 = vsel %vm736, %v5266, %v5270
      %v5273 = vshrl.u32 %v5065, 16
      %v5275 = vrot.slane %v5273, 4
      %v5276 = vshll.u32 %v5065, 16
      %v5278 = vrot.slane %v5276, 5
      %v5279 = vor.u32 %v5275, %v5278
      %v5280 = vrot.slane %v5279, 4
      %v5282 = vshll.u32 %v5066, 16
      %v5284 = vrot.slane %v5282, 5
      %v5285 = vsel %vm736, %v5280, %v5284
      %v5286 = vshrl.u32 %v5066, 16
      %v5288 = vrot.slane %v5286, 4
      %v5289 = vor.u32 %v5288, %v5284
      %v5290 = vrot.slane %v5289, 4
      %v5292 = vshll.u32 %v5067, 16
      %v5294 = vrot.slane %v5292, 5
      %v5295 = vsel %vm736, %v5290, %v5294
      %v5296 = vshrl.u32 %v5067, 16
      %v5298 = vrot.slane %v5296, 4
      %v5299 = vor.u32 %v5298, %v5294
      %v5300 = vrot.slane %v5299, 4
      %v5302 = vshll.u32 %v5068, 16
      %v5304 = vrot.slane %v5302, 5
      %v5305 = vsel %vm736, %v5300, %v5304
      %v5306 = vshrl.u32 %v5068, 16
      %v5308 = vrot.slane %v5306, 4
      %v5309 = vor.u32 %v5308, %v5304
      %v5310 = vrot.slane %v5309, 4
      %v5312 = vshll.u32 %v5069, 16
      %v5314 = vrot.slane %v5312, 5
      %v5315 = vsel %vm736, %v5310, %v5314
      %v5317 = vshrl.u32 %v5070, 16
      %v5319 = vrot.slane %v5317, 4
      %v5320 = vshll.u32 %v5070, 16
      %v5322 = vrot.slane %v5320, 5
      %v5323 = vor.u32 %v5319, %v5322
      %v5324 = vrot.slane %v5323, 4
      %v5326 = vshll.u32 %v5071, 16
      %v5328 = vrot.slane %v5326, 5
      %v5329 = vsel %vm736, %v5324, %v5328
      %v5330 = vshrl.u32 %v5071, 16
      %v5332 = vrot.slane %v5330, 4
      %v5333 = vor.u32 %v5332, %v5328
      %v5334 = vrot.slane %v5333, 4
      %v5336 = vshll.u32 %v5072, 16
      %v5338 = vrot.slane %v5336, 5
      %v5339 = vsel %vm736, %v5334, %v5338
      %v5340 = vshrl.u32 %v5072, 16
      %v5342 = vrot.slane %v5340, 4
      %v5343 = vor.u32 %v5342, %v5338
      %v5344 = vrot.slane %v5343, 4
      %v5346 = vshll.u32 %v5073, 16
      %v5348 = vrot.slane %v5346, 5
      %v5349 = vsel %vm736, %v5344, %v5348
      %v5350 = vshrl.u32 %v5073, 16
      %v5352 = vrot.slane %v5350, 4
      %v5353 = vor.u32 %v5352, %v5348
      %v5354 = vrot.slane %v5353, 4
      %v5356 = vshll.u32 %v5074, 16
      %v5358 = vrot.slane %v5356, 5
      %v5359 = vsel %vm736, %v5354, %v5358
      %v5361 = vshrl.u32 %v5075, 16
      %v5363 = vrot.slane %v5361, 4
      %v5364 = vshll.u32 %v5075, 16
      %v5366 = vrot.slane %v5364, 5
      %v5367 = vor.u32 %v5363, %v5366
      %v5368 = vrot.slane %v5367, 4
      %v5370 = vshll.u32 %v5076, 16
      %v5372 = vrot.slane %v5370, 5
      %v5373 = vsel %vm736, %v5368, %v5372
      %v5374 = vshrl.u32 %v5076, 16
      %v5376 = vrot.slane %v5374, 4
      %v5377 = vor.u32 %v5376, %v5372
      %v5378 = vrot.slane %v5377, 4
      %v5380 = vshll.u32 %v5077, 16
      %v5382 = vrot.slane %v5380, 5
      %v5383 = vsel %vm736, %v5378, %v5382
      %v5384 = vshrl.u32 %v5077, 16
      %v5386 = vrot.slane %v5384, 4
      %v5387 = vor.u32 %v5386, %v5382
      %v5388 = vrot.slane %v5387, 4
      %v5390 = vshll.u32 %v5078, 16
      %v5392 = vrot.slane %v5390, 5
      %v5393 = vsel %vm736, %v5388, %v5392
      %v5394 = vshrl.u32 %v5078, 16
      %v5396 = vrot.slane %v5394, 4
      %v5397 = vor.u32 %v5396, %v5392
      %v5398 = vrot.slane %v5397, 4
      %v5400 = vshll.u32 %v5079, 16
      %v5402 = vrot.slane %v5400, 5
      %v5403 = vsel %vm736, %v5398, %v5402
      %v5405 = vshrl.u32 %v5080, 16
      %v5407 = vrot.slane %v5405, 4
      %v5408 = vshll.u32 %v5080, 16
      %v5410 = vrot.slane %v5408, 5
      %v5411 = vor.u32 %v5407, %v5410
      %v5412 = vrot.slane %v5411, 4
      %v5414 = vshll.u32 %v5081, 16
      %v5416 = vrot.slane %v5414, 5
      %v5417 = vsel %vm736, %v5412, %v5416
      %v5418 = vshrl.u32 %v5081, 16
      %v5420 = vrot.slane %v5418, 4
      %v5421 = vor.u32 %v5420, %v5416
      %v5422 = vrot.slane %v5421, 4
      %v5424 = vshll.u32 %v5082, 16
      %v5426 = vrot.slane %v5424, 5
      %v5427 = vsel %vm736, %v5422, %v5426
      %v5428 = vshrl.u32 %v5082, 16
      %v5430 = vrot.slane %v5428, 4
      %v5431 = vor.u32 %v5430, %v5426
      %v5432 = vrot.slane %v5431, 4
      %v5434 = vshll.u32 %v5083, 16
      %v5436 = vrot.slane %v5434, 5
      %v5437 = vsel %vm736, %v5432, %v5436
      %v5438 = vshrl.u32 %v5083, 16
      %v5440 = vrot.slane %v5438, 4
      %v5441 = vor.u32 %v5440, %v5436
      %v5442 = vrot.slane %v5441, 4
      %v5444 = vshll.u32 %v5084, 16
      %v5446 = vrot.slane %v5444, 5
      %v5447 = vsel %vm736, %v5442, %v5446
      %v5449 = vshrl.u32 %v5085, 16
      %v5451 = vrot.slane %v5449, 4
      %v5452 = vshll.u32 %v5085, 16
      %v5454 = vrot.slane %v5452, 5
      %v5455 = vor.u32 %v5451, %v5454
      %v5456 = vrot.slane %v5455, 4
      %v5458 = vshll.u32 %v5086, 16
      %v5460 = vrot.slane %v5458, 5
      %v5461 = vsel %vm736, %v5456, %v5460
      %v5462 = vshrl.u32 %v5086, 16
      %v5464 = vrot.slane %v5462, 4
      %v5465 = vor.u32 %v5464, %v5460
      %v5466 = vrot.slane %v5465, 4
      %v5468 = vshll.u32 %v5087, 16
      %v5470 = vrot.slane %v5468, 5
      %v5471 = vsel %vm736, %v5466, %v5470
      %v5472 = vshrl.u32 %v5087, 16
      %v5474 = vrot.slane %v5472, 4
      %v5475 = vor.u32 %v5474, %v5470
      %v5476 = vrot.slane %v5475, 4
      %v5478 = vshll.u32 %v5088, 16
      %v5480 = vrot.slane %v5478, 5
      %v5481 = vsel %vm736, %v5476, %v5480
      %v5482 = vshrl.u32 %v5088, 16
      %v5484 = vrot.slane %v5482, 4
      %v5485 = vor.u32 %v5484, %v5480
      %v5486 = vrot.slane %v5485, 4
      %v5488 = vshll.u32 %v5089, 16
      %v5490 = vrot.slane %v5488, 5
      %v5491 = vsel %vm736, %v5486, %v5490
      %v5493 = vshrl.u32 %v5090, 16
      %v5495 = vrot.slane %v5493, 4
      %v5496 = vshll.u32 %v5090, 16
      %v5498 = vrot.slane %v5496, 5
      %v5499 = vor.u32 %v5495, %v5498
      %v5500 = vrot.slane %v5499, 4
      %v5502 = vshll.u32 %v5091, 16
      %v5504 = vrot.slane %v5502, 5
      %v5505 = vsel %vm736, %v5500, %v5504
      %v5506 = vshrl.u32 %v5091, 16
      %v5508 = vrot.slane %v5506, 4
      %v5509 = vor.u32 %v5508, %v5504
      %v5510 = vrot.slane %v5509, 4
      %v5512 = vshll.u32 %v5092, 16
      %v5514 = vrot.slane %v5512, 5
      %v5515 = vsel %vm736, %v5510, %v5514
      %v5516 = vshrl.u32 %v5092, 16
      %v5518 = vrot.slane %v5516, 4
      %v5519 = vor.u32 %v5518, %v5514
      %v5520 = vrot.slane %v5519, 4
      %v5522 = vshll.u32 %v5093, 16
      %v5524 = vrot.slane %v5522, 5
      %v5525 = vsel %vm736, %v5520, %v5524
      %v5526 = vshrl.u32 %v5093, 16
      %v5528 = vrot.slane %v5526, 4
      %v5529 = vor.u32 %v5528, %v5524
      %v5530 = vrot.slane %v5529, 4
      %v5532 = vshll.u32 %v5094, 16
      %v5534 = vrot.slane %v5532, 5
      %v5535 = vsel %vm736, %v5530, %v5534
      %v5537 = vshrl.u32 %v5095, 16
      %v5539 = vrot.slane %v5537, 4
      %v5540 = vshll.u32 %v5095, 16
      %v5542 = vrot.slane %v5540, 5
      %v5543 = vor.u32 %v5539, %v5542
      %v5544 = vrot.slane %v5543, 4
      %v5546 = vshll.u32 %v5096, 16
      %v5548 = vrot.slane %v5546, 5
      %v5549 = vsel %vm736, %v5544, %v5548
      %v5550 = vshrl.u32 %v5096, 16
      %v5552 = vrot.slane %v5550, 4
      %v5553 = vor.u32 %v5552, %v5548
      %v5554 = vrot.slane %v5553, 4
      %v5556 = vshll.u32 %v5097, 16
      %v5558 = vrot.slane %v5556, 5
      %v5559 = vsel %vm736, %v5554, %v5558
      %v5560 = vshrl.u32 %v5097, 16
      %v5562 = vrot.slane %v5560, 4
      %v5563 = vor.u32 %v5562, %v5558
      %v5564 = vrot.slane %v5563, 4
      %v5566 = vshll.u32 %v5098, 16
      %v5568 = vrot.slane %v5566, 5
      %v5569 = vsel %vm736, %v5564, %v5568
      %v5570 = vshrl.u32 %v5098, 16
      %v5572 = vrot.slane %v5570, 4
      %v5573 = vor.u32 %v5572, %v5568
      %v5574 = vrot.slane %v5573, 4
      %v5576 = vshll.u32 %v5099, 16
      %v5578 = vrot.slane %v5576, 5
      %v5579 = vsel %vm736, %v5574, %v5578
      %v5581 = vshrl.u32 %v5100, 16
      %v5583 = vrot.slane %v5581, 4
      %v5584 = vshll.u32 %v5100, 16
      %v5586 = vrot.slane %v5584, 5
      %v5587 = vor.u32 %v5583, %v5586
      %v5588 = vrot.slane %v5587, 4
      %v5590 = vshll.u32 %v5101, 16
      %v5592 = vrot.slane %v5590, 5
      %v5593 = vsel %vm736, %v5588, %v5592
      %v5594 = vshrl.u32 %v5101, 16
      %v5596 = vrot.slane %v5594, 4
      %v5597 = vor.u32 %v5596, %v5592
      %v5598 = vrot.slane %v5597, 4
      %v5600 = vshll.u32 %v5102, 16
      %v5602 = vrot.slane %v5600, 5
      %v5603 = vsel %vm736, %v5598, %v5602
      %v5604 = vshrl.u32 %v5102, 16
      %v5606 = vrot.slane %v5604, 4
      %v5607 = vor.u32 %v5606, %v5602
      %v5608 = vrot.slane %v5607, 4
      %v5610 = vshll.u32 %v5103, 16
      %v5612 = vrot.slane %v5610, 5
      %v5613 = vsel %vm736, %v5608, %v5612
      %v5614 = vshrl.u32 %v5103, 16
      %v5616 = vrot.slane %v5614, 4
      %v5617 = vor.u32 %v5616, %v5612
      %v5618 = vrot.slane %v5617, 4
      %v5620 = vshll.u32 %v5104, 16
      %v5622 = vrot.slane %v5620, 5
      %v5623 = vsel %vm736, %v5618, %v5622
      %v5625 = vshrl.u32 %v5105, 16
      %v5627 = vrot.slane %v5625, 4
      %v5628 = vshll.u32 %v5105, 16
      %v5630 = vrot.slane %v5628, 5
      %v5631 = vor.u32 %v5627, %v5630
      %v5632 = vrot.slane %v5631, 4
      %v5634 = vshll.u32 %v5106, 16
      %v5636 = vrot.slane %v5634, 5
      %v5637 = vsel %vm736, %v5632, %v5636
      %v5638 = vshrl.u32 %v5106, 16
      %v5640 = vrot.slane %v5638, 4
      %v5641 = vor.u32 %v5640, %v5636
      %v5642 = vrot.slane %v5641, 4
      %v5644 = vshll.u32 %v5107, 16
      %v5646 = vrot.slane %v5644, 5
      %v5647 = vsel %vm736, %v5642, %v5646
      %v5648 = vshrl.u32 %v5107, 16
      %v5650 = vrot.slane %v5648, 4
      %v5651 = vor.u32 %v5650, %v5646
      %v5652 = vrot.slane %v5651, 4
      %v5654 = vshll.u32 %v5108, 16
      %v5656 = vrot.slane %v5654, 5
      %v5657 = vsel %vm736, %v5652, %v5656
      %v5658 = vshrl.u32 %v5108, 16
      %v5660 = vrot.slane %v5658, 4
      %v5661 = vor.u32 %v5660, %v5656
      %v5662 = vrot.slane %v5661, 4
      %v5664 = vshll.u32 %v5109, 16
      %v5666 = vrot.slane %v5664, 5
      %v5667 = vsel %vm736, %v5662, %v5666
      %v5669 = vshrl.u32 %v5110, 16
      %v5671 = vrot.slane %v5669, 4
      %v5672 = vshll.u32 %v5110, 16
      %v5674 = vrot.slane %v5672, 5
      %v5675 = vor.u32 %v5671, %v5674
      %v5676 = vrot.slane %v5675, 4
      %v5678 = vshll.u32 %v5111, 16
      %v5680 = vrot.slane %v5678, 5
      %v5681 = vsel %vm736, %v5676, %v5680
      %v5682 = vshrl.u32 %v5111, 16
      %v5684 = vrot.slane %v5682, 4
      %v5685 = vor.u32 %v5684, %v5680
      %v5686 = vrot.slane %v5685, 4
      %v5688 = vshll.u32 %v5112, 16
      %v5690 = vrot.slane %v5688, 5
      %v5691 = vsel %vm736, %v5686, %v5690
      %v5692 = vshrl.u32 %v5112, 16
      %v5694 = vrot.slane %v5692, 4
      %v5695 = vor.u32 %v5694, %v5690
      %v5696 = vrot.slane %v5695, 4
      %v5698 = vshll.u32 %v5113, 16
      %v5700 = vrot.slane %v5698, 5
      %v5701 = vsel %vm736, %v5696, %v5700
      %v5702 = vshrl.u32 %v5113, 16
      %v5704 = vrot.slane %v5702, 4
      %v5705 = vor.u32 %v5704, %v5700
      %v5706 = vrot.slane %v5705, 4
      %v5708 = vshll.u32 %v5114, 16
      %v5710 = vrot.slane %v5708, 5
      %v5711 = vsel %vm736, %v5706, %v5710
      %v5713 = vshrl.u32 %v5115, 16
      %v5715 = vrot.slane %v5713, 4
      %v5716 = vshll.u32 %v5115, 16
      %v5718 = vrot.slane %v5716, 5
      %v5719 = vor.u32 %v5715, %v5718
      %v5720 = vrot.slane %v5719, 4
      %v5722 = vshll.u32 %v5116, 16
      %v5724 = vrot.slane %v5722, 5
      %v5725 = vsel %vm736, %v5720, %v5724
      %v5726 = vshrl.u32 %v5116, 16
      %v5728 = vrot.slane %v5726, 4
      %v5729 = vor.u32 %v5728, %v5724
      %v5730 = vrot.slane %v5729, 4
      %v5732 = vshll.u32 %v5117, 16
      %v5734 = vrot.slane %v5732, 5
      %v5735 = vsel %vm736, %v5730, %v5734
      %v5736 = vshrl.u32 %v5117, 16
      %v5738 = vrot.slane %v5736, 4
      %v5739 = vor.u32 %v5738, %v5734
      %v5740 = vrot.slane %v5739, 4
      %v5742 = vshll.u32 %v5118, 16
      %v5744 = vrot.slane %v5742, 5
      %v5745 = vsel %vm736, %v5740, %v5744
      %v5746 = vshrl.u32 %v5118, 16
      %v5748 = vrot.slane %v5746, 4
      %v5749 = vor.u32 %v5748, %v5744
      %v5750 = vrot.slane %v5749, 4
      %v5752 = vshll.u32 %v5119, 16
      %v5754 = vrot.slane %v5752, 5
      %v5755 = vsel %vm736, %v5750, %v5754
      %v5757 = vshrl.u32 %v5120, 16
      %v5759 = vrot.slane %v5757, 4
      %v5760 = vshll.u32 %v5120, 16
      %v5762 = vrot.slane %v5760, 5
      %v5763 = vor.u32 %v5759, %v5762
      %v5764 = vrot.slane %v5763, 4
      %v5766 = vshll.u32 %v5121, 16
      %v5768 = vrot.slane %v5766, 5
      %v5769 = vsel %vm736, %v5764, %v5768
      %v5770 = vshrl.u32 %v5121, 16
      %v5772 = vrot.slane %v5770, 4
      %v5773 = vor.u32 %v5772, %v5768
      %v5774 = vrot.slane %v5773, 4
      %v5776 = vshll.u32 %v5122, 16
      %v5778 = vrot.slane %v5776, 5
      %v5779 = vsel %vm736, %v5774, %v5778
      %v5780 = vshrl.u32 %v5122, 16
      %v5782 = vrot.slane %v5780, 4
      %v5783 = vor.u32 %v5782, %v5778
      %v5784 = vrot.slane %v5783, 4
      %v5786 = vshll.u32 %v5123, 16
      %v5788 = vrot.slane %v5786, 5
      %v5789 = vsel %vm736, %v5784, %v5788
      %v5790 = vshrl.u32 %v5123, 16
      %v5792 = vrot.slane %v5790, 4
      %v5793 = vor.u32 %v5792, %v5788
      %v5794 = vrot.slane %v5793, 4
      %v5796 = vshll.u32 %v5124, 16
      %v5798 = vrot.slane %v5796, 5
      %v5799 = vsel %vm736, %v5794, %v5798
      %v5801 = vshrl.u32 %v5125, 16
      %v5803 = vrot.slane %v5801, 4
      %v5804 = vshll.u32 %v5125, 16
      %v5806 = vrot.slane %v5804, 5
      %v5807 = vor.u32 %v5803, %v5806
      %v5808 = vrot.slane %v5807, 4
      %v5810 = vshll.u32 %v5126, 16
      %v5812 = vrot.slane %v5810, 5
      %v5813 = vsel %vm736, %v5808, %v5812
      %v5814 = vshrl.u32 %v5126, 16
      %v5816 = vrot.slane %v5814, 4
      %v5817 = vor.u32 %v5816, %v5812
      %v5818 = vrot.slane %v5817, 4
      %v5820 = vshll.u32 %v5127, 16
      %v5822 = vrot.slane %v5820, 5
      %v5823 = vsel %vm736, %v5818, %v5822
      %v5824 = vshrl.u32 %v5127, 16
      %v5826 = vrot.slane %v5824, 4
      %v5827 = vor.u32 %v5826, %v5822
      %v5828 = vrot.slane %v5827, 4
      %v5830 = vshll.u32 %v5128, 16
      %v5832 = vrot.slane %v5830, 5
      %v5833 = vsel %vm736, %v5828, %v5832
      %v5834 = vshrl.u32 %v5128, 16
      %v5836 = vrot.slane %v5834, 4
      %v5837 = vor.u32 %v5836, %v5832
      %v5838 = vrot.slane %v5837, 4
      %v5840 = vshll.u32 %v5129, 16
      %v5842 = vrot.slane %v5840, 5
      %v5843 = vsel %vm736, %v5838, %v5842
      %v5845 = vshrl.u32 %v5130, 16
      %v5847 = vrot.slane %v5845, 4
      %v5848 = vshll.u32 %v5130, 16
      %v5850 = vrot.slane %v5848, 5
      %v5851 = vor.u32 %v5847, %v5850
      %v5852 = vrot.slane %v5851, 4
      %v5854 = vshll.u32 %v5131, 16
      %v5856 = vrot.slane %v5854, 5
      %v5857 = vsel %vm736, %v5852, %v5856
      %v5858 = vshrl.u32 %v5131, 16
      %v5860 = vrot.slane %v5858, 4
      %v5861 = vor.u32 %v5860, %v5856
      %v5862 = vrot.slane %v5861, 4
      %v5864 = vshll.u32 %v5132, 16
      %v5866 = vrot.slane %v5864, 5
      %v5867 = vsel %vm736, %v5862, %v5866
      %v5868 = vshrl.u32 %v5132, 16
      %v5870 = vrot.slane %v5868, 4
      %v5871 = vor.u32 %v5870, %v5866
      %v5872 = vrot.slane %v5871, 4
      %v5874 = vshll.u32 %v5133, 16
      %v5876 = vrot.slane %v5874, 5
      %v5877 = vsel %vm736, %v5872, %v5876
      %v5878 = vshrl.u32 %v5133, 16
      %v5880 = vrot.slane %v5878, 4
      %v5881 = vor.u32 %v5880, %v5876
      %v5882 = vrot.slane %v5881, 4
      %v5884 = vshll.u32 %v5134, 16
      %v5886 = vrot.slane %v5884, 5
      %v5887 = vsel %vm736, %v5882, %v5886
      %v5889 = vshrl.u32 %v5135, 16
      %v5891 = vrot.slane %v5889, 4
      %v5892 = vshll.u32 %v5135, 16
      %v5894 = vrot.slane %v5892, 5
      %v5895 = vor.u32 %v5891, %v5894
      %v5896 = vrot.slane %v5895, 4
      %v5898 = vshll.u32 %v5136, 16
      %v5900 = vrot.slane %v5898, 5
      %v5901 = vsel %vm736, %v5896, %v5900
      %v5902 = vshrl.u32 %v5136, 16
      %v5904 = vrot.slane %v5902, 4
      %v5905 = vor.u32 %v5904, %v5900
      %v5906 = vrot.slane %v5905, 4
      %v5908 = vshll.u32 %v5137, 16
      %v5910 = vrot.slane %v5908, 5
      %v5911 = vsel %vm736, %v5906, %v5910
      %v5912 = vshrl.u32 %v5137, 16
      %v5914 = vrot.slane %v5912, 4
      %v5915 = vor.u32 %v5914, %v5910
      %v5916 = vrot.slane %v5915, 4
      %v5918 = vshll.u32 %v5138, 16
      %v5920 = vrot.slane %v5918, 5
      %v5921 = vsel %vm736, %v5916, %v5920
      %v5922 = vshrl.u32 %v5138, 16
      %v5924 = vrot.slane %v5922, 4
      %v5925 = vor.u32 %v5924, %v5920
      %v5926 = vrot.slane %v5925, 4
      %v5928 = vshll.u32 %v5139, 16
      %v5930 = vrot.slane %v5928, 5
      %v5931 = vsel %vm736, %v5926, %v5930
      %v5932 = vunpack.c.l.b16 %v5153
      %v5933 = vunpack.c.l.b16 %v5163
      %v5934 = vunpack.c.l.b16 %v5173
      %v5935 = vunpack.c.l.b16 %v5183
      %v5936 = vunpack.c.l.b16 %v5197
      %v5937 = vunpack.c.l.b16 %v5207
      %v5938 = vunpack.c.l.b16 %v5217
      %v5939 = vunpack.c.l.b16 %v5227
      %v5940 = vunpack.c.l.b16 %v5241
      %v5941 = vunpack.c.l.b16 %v5251
      %v5942 = vunpack.c.l.b16 %v5261
      %v5943 = vunpack.c.l.b16 %v5271
      %v5944 = vunpack.c.l.b16 %v5285
      %v5945 = vunpack.c.l.b16 %v5295
      %v5946 = vunpack.c.l.b16 %v5305
      %v5947 = vunpack.c.l.b16 %v5315
      %v5948 = vunpack.c.l.b16 %v5329
      %v5949 = vunpack.c.l.b16 %v5339
      %v5950 = vunpack.c.l.b16 %v5349
      %v5951 = vunpack.c.l.b16 %v5359
      %v5952 = vunpack.c.l.b16 %v5373
      %v5953 = vunpack.c.l.b16 %v5383
      %v5954 = vunpack.c.l.b16 %v5393
      %v5955 = vunpack.c.l.b16 %v5403
      %v5956 = vunpack.c.l.b16 %v5417
      %v5957 = vunpack.c.l.b16 %v5427
      %v5958 = vunpack.c.l.b16 %v5437
      %v5959 = vunpack.c.l.b16 %v5447
      %v5960 = vunpack.c.l.b16 %v5461
      %v5961 = vunpack.c.l.b16 %v5471
      %v5962 = vunpack.c.l.b16 %v5481
      %v5963 = vunpack.c.l.b16 %v5491
      %v5964 = vunpack.c.l.b16 %v5505
      %v5965 = vunpack.c.l.b16 %v5515
      %v5966 = vunpack.c.l.b16 %v5525
      %v5967 = vunpack.c.l.b16 %v5535
      %v5968 = vunpack.c.l.b16 %v5549
      %v5969 = vunpack.c.l.b16 %v5559
      %v5970 = vunpack.c.l.b16 %v5569
      %v5971 = vunpack.c.l.b16 %v5579
      %v5972 = vunpack.c.l.b16 %v5593
      %v5973 = vunpack.c.l.b16 %v5603
      %v5974 = vunpack.c.l.b16 %v5613
      %v5975 = vunpack.c.l.b16 %v5623
      %v5976 = vunpack.c.l.b16 %v5637
      %v5977 = vunpack.c.l.b16 %v5647
      %v5978 = vunpack.c.l.b16 %v5657
      %v5979 = vunpack.c.l.b16 %v5667
      %v5980 = vunpack.c.l.b16 %v5681
      %v5981 = vunpack.c.l.b16 %v5691
      %v5982 = vunpack.c.l.b16 %v5701
      %v5983 = vunpack.c.l.b16 %v5711
      %v5984 = vunpack.c.l.b16 %v5725
      %v5985 = vunpack.c.l.b16 %v5735
      %v5986 = vunpack.c.l.b16 %v5745
      %v5987 = vunpack.c.l.b16 %v5755
      %v5988 = vunpack.c.l.b16 %v5769
      %v5989 = vunpack.c.l.b16 %v5779
      %v5990 = vunpack.c.l.b16 %v5789
      %v5991 = vunpack.c.l.b16 %v5799
      %v5992 = vunpack.c.l.b16 %v5813
      %v5993 = vunpack.c.l.b16 %v5823
      %v5994 = vunpack.c.l.b16 %v5833
      %v5995 = vunpack.c.l.b16 %v5843
      %v5996 = vunpack.c.l.b16 %v5857
      %v5997 = vunpack.c.l.b16 %v5867
      %v5998 = vunpack.c.l.b16 %v5877
      %v5999 = vunpack.c.l.b16 %v5887
      %v6000 = vunpack.c.l.b16 %v5901
      %v6001 = vunpack.c.l.b16 %v5911
      %v6002 = vunpack.c.l.b16 %v5921
      %v6003 = vunpack.c.l.b16 %v5931
      %v6004 = vpack.c.b16 %v5933, %v5932
      %v6005 = vpack.c.b16 %v5935, %v5934
      %v6006 = vpack.c.b16 %v5937, %v5936
      %v6007 = vpack.c.b16 %v5939, %v5938
      %v6008 = vpack.c.b16 %v5941, %v5940
      %v6009 = vpack.c.b16 %v5943, %v5942
      %v6010 = vpack.c.b16 %v5945, %v5944
      %v6011 = vpack.c.b16 %v5947, %v5946
      %v6012 = vpack.c.b16 %v5949, %v5948
      %v6013 = vpack.c.b16 %v5951, %v5950
      %v6014 = vpack.c.b16 %v5953, %v5952
      %v6015 = vpack.c.b16 %v5955, %v5954
      %v6016 = vpack.c.b16 %v5957, %v5956
      %v6017 = vpack.c.b16 %v5959, %v5958
      %v6018 = vpack.c.b16 %v5961, %v5960
      %v6019 = vpack.c.b16 %v5963, %v5962
      %v6020 = vpack.c.b16 %v5965, %v5964
      %v6021 = vpack.c.b16 %v5967, %v5966
      %v6022 = vpack.c.b16 %v5969, %v5968
      %v6023 = vpack.c.b16 %v5971, %v5970
      %v6024 = vpack.c.b16 %v5973, %v5972
      %v6025 = vpack.c.b16 %v5975, %v5974
      %v6026 = vpack.c.b16 %v5977, %v5976
      %v6027 = vpack.c.b16 %v5979, %v5978
      %v6028 = vpack.c.b16 %v5981, %v5980
      %v6029 = vpack.c.b16 %v5983, %v5982
      %v6030 = vpack.c.b16 %v5985, %v5984
      %v6031 = vpack.c.b16 %v5987, %v5986
      %v6032 = vpack.c.b16 %v5989, %v5988
      %v6033 = vpack.c.b16 %v5991, %v5990
      %v6034 = vpack.c.b16 %v5993, %v5992
      %v6035 = vpack.c.b16 %v5995, %v5994
      %v6036 = vpack.c.b16 %v5997, %v5996
      %v6037 = vpack.c.b16 %v5999, %v5998
      %v6038 = vpack.c.b16 %v6001, %v6000
      %v6039 = vpack.c.b16 %v6003, %v6002
      %6040 = vrot.lane.b32.xlu0 %v6004, 28
      %v6041 = vpop.permute.xlu0 %6040
      %6042 = vrot.lane.b32.xlu0 %v6005, 28
      %v6043 = vpop.permute.xlu0 %6042
      %6044 = vrot.lane.b32.xlu0 %v6006, 28
      %v6045 = vpop.permute.xlu0 %6044
      %6046 = vrot.lane.b32.xlu0 %v6007, 28
      %v6047 = vpop.permute.xlu0 %6046
      %6048 = vrot.lane.b32.xlu0 %v6008, 28
      %v6049 = vpop.permute.xlu0 %6048
      %6050 = vrot.lane.b32.xlu0 %v6009, 28
      %v6051 = vpop.permute.xlu0 %6050
      %6052 = vrot.lane.b32.xlu0 %v6010, 28
      %v6053 = vpop.permute.xlu0 %6052
      %6054 = vrot.lane.b32.xlu0 %v6011, 28
      %v6055 = vpop.permute.xlu0 %6054
      %6056 = vrot.lane.b32.xlu0 %v6012, 28
      %v6057 = vpop.permute.xlu0 %6056
      %6058 = vrot.lane.b32.xlu0 %v6013, 28
      %v6059 = vpop.permute.xlu0 %6058
      %6060 = vrot.lane.b32.xlu0 %v6014, 28
      %v6061 = vpop.permute.xlu0 %6060
      %6062 = vrot.lane.b32.xlu0 %v6015, 28
      %v6063 = vpop.permute.xlu0 %6062
      %6064 = vrot.lane.b32.xlu0 %v6016, 28
      %v6065 = vpop.permute.xlu0 %6064
      %6066 = vrot.lane.b32.xlu0 %v6017, 28
      %v6067 = vpop.permute.xlu0 %6066
      %6068 = vrot.lane.b32.xlu0 %v6018, 28
      %v6069 = vpop.permute.xlu0 %6068
      %6070 = vrot.lane.b32.xlu0 %v6019, 28
      %v6071 = vpop.permute.xlu0 %6070
      %6072 = vrot.lane.b32.xlu0 %v6020, 28
      %v6073 = vpop.permute.xlu0 %6072
      %6074 = vrot.lane.b32.xlu0 %v6021, 28
      %v6075 = vpop.permute.xlu0 %6074
      %6076 = vrot.lane.b32.xlu0 %v6022, 28
      %v6077 = vpop.permute.xlu0 %6076
      %6078 = vrot.lane.b32.xlu0 %v6023, 28
      %v6079 = vpop.permute.xlu0 %6078
      %6080 = vrot.lane.b32.xlu0 %v6024, 28
      %v6081 = vpop.permute.xlu0 %6080
      %6082 = vrot.lane.b32.xlu0 %v6025, 28
      %v6083 = vpop.permute.xlu0 %6082
      %6084 = vrot.lane.b32.xlu0 %v6026, 28
      %v6085 = vpop.permute.xlu0 %6084
      %6086 = vrot.lane.b32.xlu0 %v6027, 28
      %v6087 = vpop.permute.xlu0 %6086
      %6088 = vrot.lane.b32.xlu0 %v6028, 28
      %v6089 = vpop.permute.xlu0 %6088
      %6090 = vrot.lane.b32.xlu0 %v6029, 28
      %v6091 = vpop.permute.xlu0 %6090
      %6092 = vrot.lane.b32.xlu0 %v6030, 28
      %v6093 = vpop.permute.xlu0 %6092
      %6094 = vrot.lane.b32.xlu0 %v6031, 28
      %v6095 = vpop.permute.xlu0 %6094
      %6096 = vrot.lane.b32.xlu0 %v6032, 28
      %v6097 = vpop.permute.xlu0 %6096
      %6098 = vrot.lane.b32.xlu0 %v6033, 28
      %v6099 = vpop.permute.xlu0 %6098
      %6100 = vrot.lane.b32.xlu0 %v6034, 28
      %v6101 = vpop.permute.xlu0 %6100
      %6102 = vrot.lane.b32.xlu0 %v6035, 28
      %v6103 = vpop.permute.xlu0 %6102
      %6104 = vrot.lane.b32.xlu0 %v6036, 28
      %v6105 = vpop.permute.xlu0 %6104
      %6106 = vrot.lane.b32.xlu0 %v6037, 28
      %v6107 = vpop.permute.xlu0 %6106
      %6108 = vrot.lane.b32.xlu0 %v6038, 28
      %v6109 = vpop.permute.xlu0 %6108
      %6110 = vrot.lane.b32.xlu0 %v6039, 28
      %v6111 = vpop.permute.xlu0 %6110
      %vm6148 = vcmask 261344
      %6149 = vst.msk [vmem:[#allocation2] sm:$0xff] %vm6148, %v6041
      %6150 = vst.msk [vmem:[#allocation2 + $0x8] sm:$0xff] %vm6148, %v6043
      %6151 = vst.msk [vmem:[#allocation2 + $0x10] sm:$0xff] %vm6148, %v6045
      %6152 = vst.msk [vmem:[#allocation2 + $0x18] sm:$0xff] %vm6148, %v6047
      %6153 = vst.msk [vmem:[#allocation2 + $0x20] sm:$0xff] %vm6148, %v6049
      %6154 = vst.msk [vmem:[#allocation2 + $0x28] sm:$0xff] %vm6148, %v6051
      %6155 = vst.msk [vmem:[#allocation2 + $0x30] sm:$0xff] %vm6148, %v6053
      %6156 = vst.msk [vmem:[#allocation2 + $0x38] sm:$0xff] %vm6148, %v6055
      %6157 = vst.msk [vmem:[#allocation2 + $0x40] sm:$0xff] %vm6148, %v6057
      %6158 = vst.msk [vmem:[#allocation2 + $0x48] sm:$0xff] %vm6148, %v6059
      %6159 = vst.msk [vmem:[#allocation2 + $0x50] sm:$0xff] %vm6148, %v6061
      %6160 = vst.msk [vmem:[#allocation2 + $0x58] sm:$0xff] %vm6148, %v6063
      %6161 = vst.msk [vmem:[#allocation2 + $0x60] sm:$0xff] %vm6148, %v6065
      %6162 = vst.msk [vmem:[#allocation2 + $0x68] sm:$0xff] %vm6148, %v6067
      %6163 = vst.msk [vmem:[#allocation2 + $0x70] sm:$0xff] %vm6148, %v6069
      %6164 = vst.msk [vmem:[#allocation2 + $0x78] sm:$0xff] %vm6148, %v6071
      %6165 = vst.msk [vmem:[#allocation2 + $0x80] sm:$0xff] %vm6148, %v6073
      %6166 = vst.msk [vmem:[#allocation2 + $0x88] sm:$0xff] %vm6148, %v6075
      %6167 = vst.msk [vmem:[#allocation2 + $0x90] sm:$0xff] %vm6148, %v6077
      %6168 = vst.msk [vmem:[#allocation2 + $0x98] sm:$0xff] %vm6148, %v6079
      %6169 = vst.msk [vmem:[#allocation2 + $0xa0] sm:$0xff] %vm6148, %v6081
      %6170 = vst.msk [vmem:[#allocation2 + $0xa8] sm:$0xff] %vm6148, %v6083
      %6171 = vst.msk [vmem:[#allocation2 + $0xb0] sm:$0xff] %vm6148, %v6085
      %6172 = vst.msk [vmem:[#allocation2 + $0xb8] sm:$0xff] %vm6148, %v6087
      %6173 = vst.msk [vmem:[#allocation2 + $0xc0] sm:$0xff] %vm6148, %v6089
      %6174 = vst.msk [vmem:[#allocation2 + $0xc8] sm:$0xff] %vm6148, %v6091
      %6175 = vst.msk [vmem:[#allocation2 + $0xd0] sm:$0xff] %vm6148, %v6093
      %6176 = vst.msk [vmem:[#allocation2 + $0xd8] sm:$0xff] %vm6148, %v6095
      %6177 = vst.msk [vmem:[#allocation2 + $0xe0] sm:$0xff] %vm6148, %v6097
      %6178 = vst.msk [vmem:[#allocation2 + $0xe8] sm:$0xff] %vm6148, %v6099
      %6179 = vst.msk [vmem:[#allocation2 + $0xf0] sm:$0xff] %vm6148, %v6101
      %6180 = vst.msk [vmem:[#allocation2 + $0xf8] sm:$0xff] %vm6148, %v6103
      %6181 = vst.msk [vmem:[#allocation2 + $0x100] sm:$0xff] %vm6148, %v6105
      %6182 = vst.msk [vmem:[#allocation2 + $0x108] sm:$0xff] %vm6148, %v6107
      %6183 = vst.msk [vmem:[#allocation2 + $0x110] sm:$0xff] %vm6148, %v6109
      %6184 = vst.msk [vmem:[#allocation2 + $0x118] sm:$0xff] %vm6148, %v6111
      %v6185 = vld [vmem:[%s4652] sm:$0xe]
      %v6186 = vld [vmem:[%s4652 + $0x4] sm:$0xf]
      %v6187 = vld [vmem:[%s4652 + $0x8] sm:$0xf]
      %v6188 = vld [vmem:[%s4652 + $0xc] sm:$0xf]
      %v6189 = vld [vmem:[%s4652 + $0x10] sm:$0x1]
      %v6190 = vld [vmem:[%s4652 + $0x14] sm:$0xe]
      %v6191 = vld [vmem:[%s4652 + $0x18] sm:$0xf]
      %v6192 = vld [vmem:[%s4652 + $0x1c] sm:$0xf]
      %v6193 = vld [vmem:[%s4652 + $0x20] sm:$0xf]
      %v6194 = vld [vmem:[%s4652 + $0x24] sm:$0x1]
      %v6195 = vld [vmem:[%s4652 + $0x28] sm:$0xe]
      %v6196 = vld [vmem:[%s4652 + $0x2c] sm:$0xf]
      %v6197 = vld [vmem:[%s4652 + $0x30] sm:$0xf]
      %v6198 = vld [vmem:[%s4652 + $0x34] sm:$0xf]
      %v6199 = vld [vmem:[%s4652 + $0x38] sm:$0x1]
      %v6200 = vld [vmem:[%s4652 + $0x3c] sm:$0xe]
      %v6201 = vld [vmem:[%s4652 + $0x40] sm:$0xf]
      %v6202 = vld [vmem:[%s4652 + $0x44] sm:$0xf]
      %v6203 = vld [vmem:[%s4652 + $0x48] sm:$0xf]
      %v6204 = vld [vmem:[%s4652 + $0x4c] sm:$0x1]
      %v6205 = vld [vmem:[%s4652 + $0x50] sm:$0xe]
      %v6206 = vld [vmem:[%s4652 + $0x54] sm:$0xf]
      %v6207 = vld [vmem:[%s4652 + $0x58] sm:$0xf]
      %v6208 = vld [vmem:[%s4652 + $0x5c] sm:$0xf]
      %v6209 = vld [vmem:[%s4652 + $0x60] sm:$0x1]
      %v6210 = vld [vmem:[%s4652 + $0x64] sm:$0xe]
      %v6211 = vld [vmem:[%s4652 + $0x68] sm:$0xf]
      %v6212 = vld [vmem:[%s4652 + $0x6c] sm:$0xf]
      %v6213 = vld [vmem:[%s4652 + $0x70] sm:$0xf]
      %v6214 = vld [vmem:[%s4652 + $0x74] sm:$0x1]
      %v6215 = vld [vmem:[%s4652 + $0x78] sm:$0xe]
      %v6216 = vld [vmem:[%s4652 + $0x7c] sm:$0xf]
      %v6217 = vld [vmem:[%s4652 + $0x80] sm:$0xf]
      %v6218 = vld [vmem:[%s4652 + $0x84] sm:$0xf]
      %v6219 = vld [vmem:[%s4652 + $0x88] sm:$0x1]
      %v6220 = vld [vmem:[%s4652 + $0x8c] sm:$0xe]
      %v6221 = vld [vmem:[%s4652 + $0x90] sm:$0xf]
      %v6222 = vld [vmem:[%s4652 + $0x94] sm:$0xf]
      %v6223 = vld [vmem:[%s4652 + $0x98] sm:$0xf]
      %v6224 = vld [vmem:[%s4652 + $0x9c] sm:$0x1]
      %v6225 = vld [vmem:[%s4652 + $0xa0] sm:$0xe]
      %v6226 = vld [vmem:[%s4652 + $0xa4] sm:$0xf]
      %v6227 = vld [vmem:[%s4652 + $0xa8] sm:$0xf]
      %v6228 = vld [vmem:[%s4652 + $0xac] sm:$0xf]
      %v6229 = vld [vmem:[%s4652 + $0xb0] sm:$0x1]
      %v6230 = vld [vmem:[%s4652 + $0xb4] sm:$0xe]
      %v6231 = vld [vmem:[%s4652 + $0xb8] sm:$0xf]
      %v6232 = vld [vmem:[%s4652 + $0xbc] sm:$0xf]
      %v6233 = vld [vmem:[%s4652 + $0xc0] sm:$0xf]
      %v6234 = vld [vmem:[%s4652 + $0xc4] sm:$0x1]
      %v6235 = vld [vmem:[%s4652 + $0xc8] sm:$0xe]
      %v6236 = vld [vmem:[%s4652 + $0xcc] sm:$0xf]
      %v6237 = vld [vmem:[%s4652 + $0xd0] sm:$0xf]
      %v6238 = vld [vmem:[%s4652 + $0xd4] sm:$0xf]
      %v6239 = vld [vmem:[%s4652 + $0xd8] sm:$0x1]
      %v6240 = vld [vmem:[%s4652 + $0xdc] sm:$0xe]
      %v6241 = vld [vmem:[%s4652 + $0xe0] sm:$0xf]
      %v6242 = vld [vmem:[%s4652 + $0xe4] sm:$0xf]
      %v6243 = vld [vmem:[%s4652 + $0xe8] sm:$0xf]
      %v6244 = vld [vmem:[%s4652 + $0xec] sm:$0x1]
      %v6245 = vld [vmem:[%s4652 + $0xf0] sm:$0xe]
      %v6246 = vld [vmem:[%s4652 + $0xf4] sm:$0xf]
      %v6247 = vld [vmem:[%s4652 + $0xf8] sm:$0xf]
      %v6248 = vld [vmem:[%s4652 + $0xfc] sm:$0xf]
      %v6249 = vld [vmem:[%s4652 + $0x100] sm:$0x1]
      %v6250 = vld [vmem:[%s4652 + $0x104] sm:$0xe]
      %v6251 = vld [vmem:[%s4652 + $0x108] sm:$0xf]
      %v6252 = vld [vmem:[%s4652 + $0x10c] sm:$0xf]
      %v6253 = vld [vmem:[%s4652 + $0x110] sm:$0xf]
      %v6254 = vld [vmem:[%s4652 + $0x114] sm:$0x1]
      %v6255 = vld [vmem:[%s4652 + $0x118] sm:$0xe]
      %v6256 = vld [vmem:[%s4652 + $0x11c] sm:$0xf]
      %v6257 = vld [vmem:[%s4652 + $0x120] sm:$0xf]
      %v6258 = vld [vmem:[%s4652 + $0x124] sm:$0xf]
      %v6259 = vld [vmem:[%s4652 + $0x128] sm:$0x1]
      %v6260 = vld [vmem:[%s4652 + $0x12c] sm:$0xe]
      %v6261 = vld [vmem:[%s4652 + $0x130] sm:$0xf]
      %v6262 = vld [vmem:[%s4652 + $0x134] sm:$0xf]
      %v6263 = vld [vmem:[%s4652 + $0x138] sm:$0xf]
      %v6264 = vld [vmem:[%s4652 + $0x13c] sm:$0x1]
      %v6265 = vld [vmem:[%s4652 + $0x140] sm:$0xe]
      %v6266 = vld [vmem:[%s4652 + $0x144] sm:$0xf]
      %v6267 = vld [vmem:[%s4652 + $0x148] sm:$0xf]
      %v6268 = vld [vmem:[%s4652 + $0x14c] sm:$0xf]
      %v6269 = vld [vmem:[%s4652 + $0x150] sm:$0x1]
      %v6270 = vld [vmem:[%s4652 + $0x154] sm:$0xe]
      %v6271 = vld [vmem:[%s4652 + $0x158] sm:$0xf]
      %v6272 = vld [vmem:[%s4652 + $0x15c] sm:$0xf]
      %v6273 = vld [vmem:[%s4652 + $0x160] sm:$0xf]
      %v6274 = vld [vmem:[%s4652 + $0x164] sm:$0x1]
      %v6365 = vrot.slane %v6185, 5
      %v6366 = vrot.slane %v6365, 4
      %v6367 = vrot.slane %v6186, 5
      %v6368 = vsel %vm1964, %v6366, %v6367
      %v6369 = vrot.slane %v6367, 4
      %v6370 = vrot.slane %v6187, 5
      %v6371 = vsel %vm1964, %v6369, %v6370
      %v6372 = vrot.slane %v6370, 4
      %v6373 = vrot.slane %v6188, 5
      %v6374 = vsel %vm1964, %v6372, %v6373
      %v6375 = vrot.slane %v6373, 4
      %v6376 = vrot.slane %v6189, 5
      %v6377 = vsel %vm1964, %v6375, %v6376
      %v6378 = vrot.slane %v6190, 5
      %v6379 = vrot.slane %v6378, 4
      %v6380 = vrot.slane %v6191, 5
      %v6381 = vsel %vm1964, %v6379, %v6380
      %v6382 = vrot.slane %v6380, 4
      %v6383 = vrot.slane %v6192, 5
      %v6384 = vsel %vm1964, %v6382, %v6383
      %v6385 = vrot.slane %v6383, 4
      %v6386 = vrot.slane %v6193, 5
      %v6387 = vsel %vm1964, %v6385, %v6386
      %v6388 = vrot.slane %v6386, 4
      %v6389 = vrot.slane %v6194, 5
      %v6390 = vsel %vm1964, %v6388, %v6389
      %v6391 = vrot.slane %v6195, 5
      %v6392 = vrot.slane %v6391, 4
      %v6393 = vrot.slane %v6196, 5
      %v6394 = vsel %vm1964, %v6392, %v6393
      %v6395 = vrot.slane %v6393, 4
      %v6396 = vrot.slane %v6197, 5
      %v6397 = vsel %vm1964, %v6395, %v6396
      %v6398 = vrot.slane %v6396, 4
      %v6399 = vrot.slane %v6198, 5
      %v6400 = vsel %vm1964, %v6398, %v6399
      %v6401 = vrot.slane %v6399, 4
      %v6402 = vrot.slane %v6199, 5
      %v6403 = vsel %vm1964, %v6401, %v6402
      %v6404 = vrot.slane %v6200, 5
      %v6405 = vrot.slane %v6404, 4
      %v6406 = vrot.slane %v6201, 5
      %v6407 = vsel %vm1964, %v6405, %v6406
      %v6408 = vrot.slane %v6406, 4
      %v6409 = vrot.slane %v6202, 5
      %v6410 = vsel %vm1964, %v6408, %v6409
      %v6411 = vrot.slane %v6409, 4
      %v6412 = vrot.slane %v6203, 5
      %v6413 = vsel %vm1964, %v6411, %v6412
      %v6414 = vrot.slane %v6412, 4
      %v6415 = vrot.slane %v6204, 5
      %v6416 = vsel %vm1964, %v6414, %v6415
      %v6417 = vrot.slane %v6205, 5
      %v6418 = vrot.slane %v6417, 4
      %v6419 = vrot.slane %v6206, 5
      %v6420 = vsel %vm1964, %v6418, %v6419
      %v6421 = vrot.slane %v6419, 4
      %v6422 = vrot.slane %v6207, 5
      %v6423 = vsel %vm1964, %v6421, %v6422
      %v6424 = vrot.slane %v6422, 4
      %v6425 = vrot.slane %v6208, 5
      %v6426 = vsel %vm1964, %v6424, %v6425
      %v6427 = vrot.slane %v6425, 4
      %v6428 = vrot.slane %v6209, 5
      %v6429 = vsel %vm1964, %v6427, %v6428
      %v6430 = vrot.slane %v6210, 5
      %v6431 = vrot.slane %v6430, 4
      %v6432 = vrot.slane %v6211, 5
      %v6433 = vsel %vm1964, %v6431, %v6432
      %v6434 = vrot.slane %v6432, 4
      %v6435 = vrot.slane %v6212, 5
      %v6436 = vsel %vm1964, %v6434, %v6435
      %v6437 = vrot.slane %v6435, 4
      %v6438 = vrot.slane %v6213, 5
      %v6439 = vsel %vm1964, %v6437, %v6438
      %v6440 = vrot.slane %v6438, 4
      %v6441 = vrot.slane %v6214, 5
      %v6442 = vsel %vm1964, %v6440, %v6441
      %v6443 = vrot.slane %v6215, 5
      %v6444 = vrot.slane %v6443, 4
      %v6445 = vrot.slane %v6216, 5
      %v6446 = vsel %vm1964, %v6444, %v6445
      %v6447 = vrot.slane %v6445, 4
      %v6448 = vrot.slane %v6217, 5
      %v6449 = vsel %vm1964, %v6447, %v6448
      %v6450 = vrot.slane %v6448, 4
      %v6451 = vrot.slane %v6218, 5
      %v6452 = vsel %vm1964, %v6450, %v6451
      %v6453 = vrot.slane %v6451, 4
      %v6454 = vrot.slane %v6219, 5
      %v6455 = vsel %vm1964, %v6453, %v6454
      %v6456 = vrot.slane %v6220, 5
      %v6457 = vrot.slane %v6456, 4
      %v6458 = vrot.slane %v6221, 5
      %v6459 = vsel %vm1964, %v6457, %v6458
      %v6460 = vrot.slane %v6458, 4
      %v6461 = vrot.slane %v6222, 5
      %v6462 = vsel %vm1964, %v6460, %v6461
      %v6463 = vrot.slane %v6461, 4
      %v6464 = vrot.slane %v6223, 5
      %v6465 = vsel %vm1964, %v6463, %v6464
      %v6466 = vrot.slane %v6464, 4
      %v6467 = vrot.slane %v6224, 5
      %v6468 = vsel %vm1964, %v6466, %v6467
      %v6469 = vrot.slane %v6225, 5
      %v6470 = vrot.slane %v6469, 4
      %v6471 = vrot.slane %v6226, 5
      %v6472 = vsel %vm1964, %v6470, %v6471
      %v6473 = vrot.slane %v6471, 4
      %v6474 = vrot.slane %v6227, 5
      %v6475 = vsel %vm1964, %v6473, %v6474
      %v6476 = vrot.slane %v6474, 4
      %v6477 = vrot.slane %v6228, 5
      %v6478 = vsel %vm1964, %v6476, %v6477
      %v6479 = vrot.slane %v6477, 4
      %v6480 = vrot.slane %v6229, 5
      %v6481 = vsel %vm1964, %v6479, %v6480
      %v6482 = vrot.slane %v6230, 5
      %v6483 = vrot.slane %v6482, 4
      %v6484 = vrot.slane %v6231, 5
      %v6485 = vsel %vm1964, %v6483, %v6484
      %v6486 = vrot.slane %v6484, 4
      %v6487 = vrot.slane %v6232, 5
      %v6488 = vsel %vm1964, %v6486, %v6487
      %v6489 = vrot.slane %v6487, 4
      %v6490 = vrot.slane %v6233, 5
      %v6491 = vsel %vm1964, %v6489, %v6490
      %v6492 = vrot.slane %v6490, 4
      %v6493 = vrot.slane %v6234, 5
      %v6494 = vsel %vm1964, %v6492, %v6493
      %v6495 = vrot.slane %v6235, 5
      %v6496 = vrot.slane %v6495, 4
      %v6497 = vrot.slane %v6236, 5
      %v6498 = vsel %vm1964, %v6496, %v6497
      %v6499 = vrot.slane %v6497, 4
      %v6500 = vrot.slane %v6237, 5
      %v6501 = vsel %vm1964, %v6499, %v6500
      %v6502 = vrot.slane %v6500, 4
      %v6503 = vrot.slane %v6238, 5
      %v6504 = vsel %vm1964, %v6502, %v6503
      %v6505 = vrot.slane %v6503, 4
      %v6506 = vrot.slane %v6239, 5
      %v6507 = vsel %vm1964, %v6505, %v6506
      %v6508 = vrot.slane %v6240, 5
      %v6509 = vrot.slane %v6508, 4
      %v6510 = vrot.slane %v6241, 5
      %v6511 = vsel %vm1964, %v6509, %v6510
      %v6512 = vrot.slane %v6510, 4
      %v6513 = vrot.slane %v6242, 5
      %v6514 = vsel %vm1964, %v6512, %v6513
      %v6515 = vrot.slane %v6513, 4
      %v6516 = vrot.slane %v6243, 5
      %v6517 = vsel %vm1964, %v6515, %v6516
      %v6518 = vrot.slane %v6516, 4
      %v6519 = vrot.slane %v6244, 5
      %v6520 = vsel %vm1964, %v6518, %v6519
      %v6521 = vrot.slane %v6245, 5
      %v6522 = vrot.slane %v6521, 4
      %v6523 = vrot.slane %v6246, 5
      %v6524 = vsel %vm1964, %v6522, %v6523
      %v6525 = vrot.slane %v6523, 4
      %v6526 = vrot.slane %v6247, 5
      %v6527 = vsel %vm1964, %v6525, %v6526
      %v6528 = vrot.slane %v6526, 4
      %v6529 = vrot.slane %v6248, 5
      %v6530 = vsel %vm1964, %v6528, %v6529
      %v6531 = vrot.slane %v6529, 4
      %v6532 = vrot.slane %v6249, 5
      %v6533 = vsel %vm1964, %v6531, %v6532
      %v6534 = vrot.slane %v6250, 5
      %v6535 = vrot.slane %v6534, 4
      %v6536 = vrot.slane %v6251, 5
      %v6537 = vsel %vm1964, %v6535, %v6536
      %v6538 = vrot.slane %v6536, 4
      %v6539 = vrot.slane %v6252, 5
      %v6540 = vsel %vm1964, %v6538, %v6539
      %v6541 = vrot.slane %v6539, 4
      %v6542 = vrot.slane %v6253, 5
      %v6543 = vsel %vm1964, %v6541, %v6542
      %v6544 = vrot.slane %v6542, 4
      %v6545 = vrot.slane %v6254, 5
      %v6546 = vsel %vm1964, %v6544, %v6545
      %v6547 = vrot.slane %v6255, 5
      %v6548 = vrot.slane %v6547, 4
      %v6549 = vrot.slane %v6256, 5
      %v6550 = vsel %vm1964, %v6548, %v6549
      %v6551 = vrot.slane %v6549, 4
      %v6552 = vrot.slane %v6257, 5
      %v6553 = vsel %vm1964, %v6551, %v6552
      %v6554 = vrot.slane %v6552, 4
      %v6555 = vrot.slane %v6258, 5
      %v6556 = vsel %vm1964, %v6554, %v6555
      %v6557 = vrot.slane %v6555, 4
      %v6558 = vrot.slane %v6259, 5
      %v6559 = vsel %vm1964, %v6557, %v6558
      %v6560 = vrot.slane %v6260, 5
      %v6561 = vrot.slane %v6560, 4
      %v6562 = vrot.slane %v6261, 5
      %v6563 = vsel %vm1964, %v6561, %v6562
      %v6564 = vrot.slane %v6562, 4
      %v6565 = vrot.slane %v6262, 5
      %v6566 = vsel %vm1964, %v6564, %v6565
      %v6567 = vrot.slane %v6565, 4
      %v6568 = vrot.slane %v6263, 5
      %v6569 = vsel %vm1964, %v6567, %v6568
      %v6570 = vrot.slane %v6568, 4
      %v6571 = vrot.slane %v6264, 5
      %v6572 = vsel %vm1964, %v6570, %v6571
      %v6573 = vrot.slane %v6265, 5
      %v6574 = vrot.slane %v6573, 4
      %v6575 = vrot.slane %v6266, 5
      %v6576 = vsel %vm1964, %v6574, %v6575
      %v6577 = vrot.slane %v6575, 4
      %v6578 = vrot.slane %v6267, 5
      %v6579 = vsel %vm1964, %v6577, %v6578
      %v6580 = vrot.slane %v6578, 4
      %v6581 = vrot.slane %v6268, 5
      %v6582 = vsel %vm1964, %v6580, %v6581
      %v6583 = vrot.slane %v6581, 4
      %v6584 = vrot.slane %v6269, 5
      %v6585 = vsel %vm1964, %v6583, %v6584
      %v6586 = vrot.slane %v6270, 5
      %v6587 = vrot.slane %v6586, 4
      %v6588 = vrot.slane %v6271, 5
      %v6589 = vsel %vm1964, %v6587, %v6588
      %v6590 = vrot.slane %v6588, 4
      %v6591 = vrot.slane %v6272, 5
      %v6592 = vsel %vm1964, %v6590, %v6591
      %v6593 = vrot.slane %v6591, 4
      %v6594 = vrot.slane %v6273, 5
      %v6595 = vsel %vm1964, %v6593, %v6594
      %v6596 = vrot.slane %v6594, 4
      %v6597 = vrot.slane %v6274, 5
      %v6598 = vsel %vm1964, %v6596, %v6597
      %v6599 = vunpack.c.l.b16 %v6368
      %v6600 = vunpack.c.l.b16 %v6371
      %v6601 = vunpack.c.l.b16 %v6374
      %v6602 = vunpack.c.l.b16 %v6377
      %v6603 = vunpack.c.l.b16 %v6381
      %v6604 = vunpack.c.l.b16 %v6384
      %v6605 = vunpack.c.l.b16 %v6387
      %v6606 = vunpack.c.l.b16 %v6390
      %v6607 = vunpack.c.l.b16 %v6394
      %v6608 = vunpack.c.l.b16 %v6397
      %v6609 = vunpack.c.l.b16 %v6400
      %v6610 = vunpack.c.l.b16 %v6403
      %v6611 = vunpack.c.l.b16 %v6407
      %v6612 = vunpack.c.l.b16 %v6410
      %v6613 = vunpack.c.l.b16 %v6413
      %v6614 = vunpack.c.l.b16 %v6416
      %v6615 = vunpack.c.l.b16 %v6420
      %v6616 = vunpack.c.l.b16 %v6423
      %v6617 = vunpack.c.l.b16 %v6426
      %v6618 = vunpack.c.l.b16 %v6429
      %v6619 = vunpack.c.l.b16 %v6433
      %v6620 = vunpack.c.l.b16 %v6436
      %v6621 = vunpack.c.l.b16 %v6439
      %v6622 = vunpack.c.l.b16 %v6442
      %v6623 = vunpack.c.l.b16 %v6446
      %v6624 = vunpack.c.l.b16 %v6449
      %v6625 = vunpack.c.l.b16 %v6452
      %v6626 = vunpack.c.l.b16 %v6455
      %v6627 = vunpack.c.l.b16 %v6459
      %v6628 = vunpack.c.l.b16 %v6462
      %v6629 = vunpack.c.l.b16 %v6465
      %v6630 = vunpack.c.l.b16 %v6468
      %v6631 = vunpack.c.l.b16 %v6472
      %v6632 = vunpack.c.l.b16 %v6475
      %v6633 = vunpack.c.l.b16 %v6478
      %v6634 = vunpack.c.l.b16 %v6481
      %v6635 = vunpack.c.l.b16 %v6485
      %v6636 = vunpack.c.l.b16 %v6488
      %v6637 = vunpack.c.l.b16 %v6491
      %v6638 = vunpack.c.l.b16 %v6494
      %v6639 = vunpack.c.l.b16 %v6498
      %v6640 = vunpack.c.l.b16 %v6501
      %v6641 = vunpack.c.l.b16 %v6504
      %v6642 = vunpack.c.l.b16 %v6507
      %v6643 = vunpack.c.l.b16 %v6511
      %v6644 = vunpack.c.l.b16 %v6514
      %v6645 = vunpack.c.l.b16 %v6517
      %v6646 = vunpack.c.l.b16 %v6520
      %v6647 = vunpack.c.l.b16 %v6524
      %v6648 = vunpack.c.l.b16 %v6527
      %v6649 = vunpack.c.l.b16 %v6530
      %v6650 = vunpack.c.l.b16 %v6533
      %v6651 = vunpack.c.l.b16 %v6537
      %v6652 = vunpack.c.l.b16 %v6540
      %v6653 = vunpack.c.l.b16 %v6543
      %v6654 = vunpack.c.l.b16 %v6546
      %v6655 = vunpack.c.l.b16 %v6550
      %v6656 = vunpack.c.l.b16 %v6553
      %v6657 = vunpack.c.l.b16 %v6556
      %v6658 = vunpack.c.l.b16 %v6559
      %v6659 = vunpack.c.l.b16 %v6563
      %v6660 = vunpack.c.l.b16 %v6566
      %v6661 = vunpack.c.l.b16 %v6569
      %v6662 = vunpack.c.l.b16 %v6572
      %v6663 = vunpack.c.l.b16 %v6576
      %v6664 = vunpack.c.l.b16 %v6579
      %v6665 = vunpack.c.l.b16 %v6582
      %v6666 = vunpack.c.l.b16 %v6585
      %v6667 = vunpack.c.l.b16 %v6589
      %v6668 = vunpack.c.l.b16 %v6592
      %v6669 = vunpack.c.l.b16 %v6595
      %v6670 = vunpack.c.l.b16 %v6598
      %v6671 = vpack.c.b16 %v6600, %v6599
      %v6672 = vpack.c.b16 %v6602, %v6601
      %v6673 = vpack.c.b16 %v6604, %v6603
      %v6674 = vpack.c.b16 %v6606, %v6605
      %v6675 = vpack.c.b16 %v6608, %v6607
      %v6676 = vpack.c.b16 %v6610, %v6609
      %v6677 = vpack.c.b16 %v6612, %v6611
      %v6678 = vpack.c.b16 %v6614, %v6613
      %v6679 = vpack.c.b16 %v6616, %v6615
      %v6680 = vpack.c.b16 %v6618, %v6617
      %v6681 = vpack.c.b16 %v6620, %v6619
      %v6682 = vpack.c.b16 %v6622, %v6621
      %v6683 = vpack.c.b16 %v6624, %v6623
      %v6684 = vpack.c.b16 %v6626, %v6625
      %v6685 = vpack.c.b16 %v6628, %v6627
      %v6686 = vpack.c.b16 %v6630, %v6629
      %v6687 = vpack.c.b16 %v6632, %v6631
      %v6688 = vpack.c.b16 %v6634, %v6633
      %v6689 = vpack.c.b16 %v6636, %v6635
      %v6690 = vpack.c.b16 %v6638, %v6637
      %v6691 = vpack.c.b16 %v6640, %v6639
      %v6692 = vpack.c.b16 %v6642, %v6641
      %v6693 = vpack.c.b16 %v6644, %v6643
      %v6694 = vpack.c.b16 %v6646, %v6645
      %v6695 = vpack.c.b16 %v6648, %v6647
      %v6696 = vpack.c.b16 %v6650, %v6649
      %v6697 = vpack.c.b16 %v6652, %v6651
      %v6698 = vpack.c.b16 %v6654, %v6653
      %v6699 = vpack.c.b16 %v6656, %v6655
      %v6700 = vpack.c.b16 %v6658, %v6657
      %v6701 = vpack.c.b16 %v6660, %v6659
      %v6702 = vpack.c.b16 %v6662, %v6661
      %v6703 = vpack.c.b16 %v6664, %v6663
      %v6704 = vpack.c.b16 %v6666, %v6665
      %v6705 = vpack.c.b16 %v6668, %v6667
      %v6706 = vpack.c.b16 %v6670, %v6669
      %6707 = vrot.lane.b32.xlu0 %v6671, 32
      %v6708 = vpop.permute.xlu0 %6707
      %6709 = vrot.lane.b32.xlu0 %v6672, 32
      %v6710 = vpop.permute.xlu0 %6709
      %6711 = vrot.lane.b32.xlu0 %v6673, 32
      %v6712 = vpop.permute.xlu0 %6711
      %6713 = vrot.lane.b32.xlu0 %v6674, 32
      %v6714 = vpop.permute.xlu0 %6713
      %6715 = vrot.lane.b32.xlu0 %v6675, 32
      %v6716 = vpop.permute.xlu0 %6715
      %6717 = vrot.lane.b32.xlu0 %v6676, 32
      %v6718 = vpop.permute.xlu0 %6717
      %6719 = vrot.lane.b32.xlu0 %v6677, 32
      %v6720 = vpop.permute.xlu0 %6719
      %6721 = vrot.lane.b32.xlu0 %v6678, 32
      %v6722 = vpop.permute.xlu0 %6721
      %6723 = vrot.lane.b32.xlu0 %v6679, 32
      %v6724 = vpop.permute.xlu0 %6723
      %6725 = vrot.lane.b32.xlu0 %v6680, 32
      %v6726 = vpop.permute.xlu0 %6725
      %6727 = vrot.lane.b32.xlu0 %v6681, 32
      %v6728 = vpop.permute.xlu0 %6727
      %6729 = vrot.lane.b32.xlu0 %v6682, 32
      %v6730 = vpop.permute.xlu0 %6729
      %6731 = vrot.lane.b32.xlu0 %v6683, 32
      %v6732 = vpop.permute.xlu0 %6731
      %6733 = vrot.lane.b32.xlu0 %v6684, 32
      %v6734 = vpop.permute.xlu0 %6733
      %6735 = vrot.lane.b32.xlu0 %v6685, 32
      %v6736 = vpop.permute.xlu0 %6735
      %6737 = vrot.lane.b32.xlu0 %v6686, 32
      %v6738 = vpop.permute.xlu0 %6737
      %6739 = vrot.lane.b32.xlu0 %v6687, 32
      %v6740 = vpop.permute.xlu0 %6739
      %6741 = vrot.lane.b32.xlu0 %v6688, 32
      %v6742 = vpop.permute.xlu0 %6741
      %6743 = vrot.lane.b32.xlu0 %v6689, 32
      %v6744 = vpop.permute.xlu0 %6743
      %6745 = vrot.lane.b32.xlu0 %v6690, 32
      %v6746 = vpop.permute.xlu0 %6745
      %6747 = vrot.lane.b32.xlu0 %v6691, 32
      %v6748 = vpop.permute.xlu0 %6747
      %6749 = vrot.lane.b32.xlu0 %v6692, 32
      %v6750 = vpop.permute.xlu0 %6749
      %6751 = vrot.lane.b32.xlu0 %v6693, 32
      %v6752 = vpop.permute.xlu0 %6751
      %6753 = vrot.lane.b32.xlu0 %v6694, 32
      %v6754 = vpop.permute.xlu0 %6753
      %6755 = vrot.lane.b32.xlu0 %v6695, 32
      %v6756 = vpop.permute.xlu0 %6755
      %6757 = vrot.lane.b32.xlu0 %v6696, 32
      %v6758 = vpop.permute.xlu0 %6757
      %6759 = vrot.lane.b32.xlu0 %v6697, 32
      %v6760 = vpop.permute.xlu0 %6759
      %6761 = vrot.lane.b32.xlu0 %v6698, 32
      %v6762 = vpop.permute.xlu0 %6761
      %6763 = vrot.lane.b32.xlu0 %v6699, 32
      %v6764 = vpop.permute.xlu0 %6763
      %6765 = vrot.lane.b32.xlu0 %v6700, 32
      %v6766 = vpop.permute.xlu0 %6765
      %6767 = vrot.lane.b32.xlu0 %v6701, 32
      %v6768 = vpop.permute.xlu0 %6767
      %6769 = vrot.lane.b32.xlu0 %v6702, 32
      %v6770 = vpop.permute.xlu0 %6769
      %6771 = vrot.lane.b32.xlu0 %v6703, 32
      %v6772 = vpop.permute.xlu0 %6771
      %6773 = vrot.lane.b32.xlu0 %v6704, 32
      %v6774 = vpop.permute.xlu0 %6773
      %6775 = vrot.lane.b32.xlu0 %v6705, 32
      %v6776 = vpop.permute.xlu0 %6775
      %6777 = vrot.lane.b32.xlu0 %v6706, 32
      %v6778 = vpop.permute.xlu0 %6777
      %vm6815 = vcmask 294144
      %6816 = vst.msk [vmem:[#allocation2] sm:$0xff] %vm6815, %v6708
      %6817 = vst.msk [vmem:[#allocation2 + $0x8] sm:$0xff] %vm6815, %v6710
      %6818 = vst.msk [vmem:[#allocation2 + $0x10] sm:$0xff] %vm6815, %v6712
      %6819 = vst.msk [vmem:[#allocation2 + $0x18] sm:$0xff] %vm6815, %v6714
      %6820 = vst.msk [vmem:[#allocation2 + $0x20] sm:$0xff] %vm6815, %v6716
      %6821 = vst.msk [vmem:[#allocation2 + $0x28] sm:$0xff] %vm6815, %v6718
      %6822 = vst.msk [vmem:[#allocation2 + $0x30] sm:$0xff] %vm6815, %v6720
      %6823 = vst.msk [vmem:[#allocation2 + $0x38] sm:$0xff] %vm6815, %v6722
      %6824 = vst.msk [vmem:[#allocation2 + $0x40] sm:$0xff] %vm6815, %v6724
      %6825 = vst.msk [vmem:[#allocation2 + $0x48] sm:$0xff] %vm6815, %v6726
      %6826 = vst.msk [vmem:[#allocation2 + $0x50] sm:$0xff] %vm6815, %v6728
      %6827 = vst.msk [vmem:[#allocation2 + $0x58] sm:$0xff] %vm6815, %v6730
      %6828 = vst.msk [vmem:[#allocation2 + $0x60] sm:$0xff] %vm6815, %v6732
      %6829 = vst.msk [vmem:[#allocation2 + $0x68] sm:$0xff] %vm6815, %v6734
      %6830 = vst.msk [vmem:[#allocation2 + $0x70] sm:$0xff] %vm6815, %v6736
      %6831 = vst.msk [vmem:[#allocation2 + $0x78] sm:$0xff] %vm6815, %v6738
      %6832 = vst.msk [vmem:[#allocation2 + $0x80] sm:$0xff] %vm6815, %v6740
      %6833 = vst.msk [vmem:[#allocation2 + $0x88] sm:$0xff] %vm6815, %v6742
      %6834 = vst.msk [vmem:[#allocation2 + $0x90] sm:$0xff] %vm6815, %v6744
      %6835 = vst.msk [vmem:[#allocation2 + $0x98] sm:$0xff] %vm6815, %v6746
      %6836 = vst.msk [vmem:[#allocation2 + $0xa0] sm:$0xff] %vm6815, %v6748
      %6837 = vst.msk [vmem:[#allocation2 + $0xa8] sm:$0xff] %vm6815, %v6750
      %6838 = vst.msk [vmem:[#allocation2 + $0xb0] sm:$0xff] %vm6815, %v6752
      %6839 = vst.msk [vmem:[#allocation2 + $0xb8] sm:$0xff] %vm6815, %v6754
      %6840 = vst.msk [vmem:[#allocation2 + $0xc0] sm:$0xff] %vm6815, %v6756
      %6841 = vst.msk [vmem:[#allocation2 + $0xc8] sm:$0xff] %vm6815, %v6758
      %6842 = vst.msk [vmem:[#allocation2 + $0xd0] sm:$0xff] %vm6815, %v6760
      %6843 = vst.msk [vmem:[#allocation2 + $0xd8] sm:$0xff] %vm6815, %v6762
      %6844 = vst.msk [vmem:[#allocation2 + $0xe0] sm:$0xff] %vm6815, %v6764
      %6845 = vst.msk [vmem:[#allocation2 + $0xe8] sm:$0xff] %vm6815, %v6766
      %6846 = vst.msk [vmem:[#allocation2 + $0xf0] sm:$0xff] %vm6815, %v6768
      %6847 = vst.msk [vmem:[#allocation2 + $0xf8] sm:$0xff] %vm6815, %v6770
      %6848 = vst.msk [vmem:[#allocation2 + $0x100] sm:$0xff] %vm6815, %v6772
      %6849 = vst.msk [vmem:[#allocation2 + $0x108] sm:$0xff] %vm6815, %v6774
      %6850 = vst.msk [vmem:[#allocation2 + $0x110] sm:$0xff] %vm6815, %v6776
      %6851 = vst.msk [vmem:[#allocation2 + $0x118] sm:$0xff] %vm6815, %v6778
      %v6852 = vld [vmem:[#allocation2] sm:$0xff]
      %v6853 = vld [vmem:[#allocation2 + $0x8] sm:$0xff]
      %v6854 = vld [vmem:[#allocation2 + $0x10] sm:$0xff]
      %v6855 = vld [vmem:[#allocation2 + $0x18] sm:$0xff]
      %v6856 = vld [vmem:[#allocation2 + $0x20] sm:$0xff]
      %v6857 = vld [vmem:[#allocation2 + $0x28] sm:$0xff]
      %v6858 = vld [vmem:[#allocation2 + $0x30] sm:$0xff]
      %v6859 = vld [vmem:[#allocation2 + $0x38] sm:$0xff]
      %v6860 = vld [vmem:[#allocation2 + $0x40] sm:$0xff]
      %v6861 = vld [vmem:[#allocation2 + $0x48] sm:$0xff]
      %v6862 = vld [vmem:[#allocation2 + $0x50] sm:$0xff]
      %v6863 = vld [vmem:[#allocation2 + $0x58] sm:$0xff]
      %v6864 = vld [vmem:[#allocation2 + $0x60] sm:$0xff]
      %v6865 = vld [vmem:[#allocation2 + $0x68] sm:$0xff]
      %v6866 = vld [vmem:[#allocation2 + $0x70] sm:$0xff]
      %v6867 = vld [vmem:[#allocation2 + $0x78] sm:$0xff]
      %v6868 = vld [vmem:[#allocation2 + $0x80] sm:$0xff]
      %v6869 = vld [vmem:[#allocation2 + $0x88] sm:$0xff]
      %v6870 = vld [vmem:[#allocation2 + $0x90] sm:$0xff]
      %v6871 = vld [vmem:[#allocation2 + $0x98] sm:$0xff]
      %v6872 = vld [vmem:[#allocation2 + $0xa0] sm:$0xff]
      %v6873 = vld [vmem:[#allocation2 + $0xa8] sm:$0xff]
      %v6874 = vld [vmem:[#allocation2 + $0xb0] sm:$0xff]
      %v6875 = vld [vmem:[#allocation2 + $0xb8] sm:$0xff]
      %v6876 = vld [vmem:[#allocation2 + $0xc0] sm:$0xff]
      %v6877 = vld [vmem:[#allocation2 + $0xc8] sm:$0xff]
      %v6878 = vld [vmem:[#allocation2 + $0xd0] sm:$0xff]
      %v6879 = vld [vmem:[#allocation2 + $0xd8] sm:$0xff]
      %v6880 = vld [vmem:[#allocation2 + $0xe0] sm:$0xff]
      %v6881 = vld [vmem:[#allocation2 + $0xe8] sm:$0xff]
      %v6882 = vld [vmem:[#allocation2 + $0xf0] sm:$0xff]
      %v6883 = vld [vmem:[#allocation2 + $0xf8] sm:$0xff]
      %v6884 = vld [vmem:[#allocation2 + $0x100] sm:$0xff]
      %v6885 = vld [vmem:[#allocation2 + $0x108] sm:$0xff]
      %v6886 = vld [vmem:[#allocation2 + $0x110] sm:$0xff]
      %v6887 = vld [vmem:[#allocation2 + $0x118] sm:$0xff]
      %v6888 = vld [vmem:[%s1] sm:$0xf]
      %v6889 = vld [vmem:[%s1 + $0x4] sm:$0xf]
      %v6890 = vld [vmem:[%s1 + $0x8] sm:$0xf]
      %v6891 = vld [vmem:[%s1 + $0xc] sm:$0xf]
      %v6892 = vld [vmem:[%s1 + $0x10] sm:$0x3]
      %v6898 = vunpack.c.l.b16 %v6888
      %v6899 = vunpack.c.l.b16 %v6889
      %v6900 = vunpack.c.l.b16 %v6890
      %v6901 = vunpack.c.l.b16 %v6891
      %v6902 = vunpack.c.l.b16 %v6892
      %v6903 = vpack.c.b16 %v6899, %v6898
      %v6904 = vpack.c.b16 %v6901, %v6900
      %v6905 = vpack.c.b16 %v6902, %v6902
      %vm6908 = vcmask 293888
      %v6910 = vsel %vm6908, %v6852, 0
      %v6913 = vsel %vm6908, %v6853, 0
      %v6916 = vsel %vm6908, %v6854, 0
      %v6919 = vsel %vm6908, %v6855, 0
      %v6922 = vsel %vm6908, %v6856, 0
      %v6925 = vsel %vm6908, %v6857, 0
      %v6928 = vsel %vm6908, %v6858, 0
      %v6931 = vsel %vm6908, %v6859, 0
      %v6934 = vsel %vm6908, %v6860, 0
      %v6937 = vsel %vm6908, %v6861, 0
      %v6940 = vsel %vm6908, %v6862, 0
      %v6943 = vsel %vm6908, %v6863, 0
      %v6946 = vsel %vm6908, %v6864, 0
      %v6949 = vsel %vm6908, %v6865, 0
      %v6952 = vsel %vm6908, %v6866, 0
      %v6955 = vsel %vm6908, %v6867, 0
      %v6958 = vsel %vm6908, %v6868, 0
      %v6961 = vsel %vm6908, %v6869, 0
      %v6964 = vsel %vm6908, %v6870, 0
      %v6967 = vsel %vm6908, %v6871, 0
      %v6970 = vsel %vm6908, %v6872, 0
      %v6973 = vsel %vm6908, %v6873, 0
      %v6976 = vsel %vm6908, %v6874, 0
      %v6979 = vsel %vm6908, %v6875, 0
      %v6982 = vsel %vm6908, %v6876, 0
      %v6985 = vsel %vm6908, %v6877, 0
      %v6988 = vsel %vm6908, %v6878, 0
      %v6991 = vsel %vm6908, %v6879, 0
      %v6994 = vsel %vm6908, %v6880, 0
      %v6997 = vsel %vm6908, %v6881, 0
      %v7000 = vsel %vm6908, %v6882, 0
      %v7003 = vsel %vm6908, %v6883, 0
      %v7006 = vsel %vm6908, %v6884, 0
      %v7009 = vsel %vm6908, %v6885, 0
      %v7012 = vsel %vm6908, %v6886, 0
      %v7015 = vsel %vm6908, %v6887, 0
      %vm7017 = vcmask 1041408
      %v7019 = vsel %vm7017, %v6905, 0
      %7021 = vmatprep.subr.bf16.mxu0 0
      %7022 = vmatpush1.bf16.msra.mxu0 %v6903
      %7023 = vmatprep.subr.bf16.mxu0 0
      %7024 = vmatpush1.bf16.msra.mxu0 %v6904
      %7025 = vmatprep.subr.bf16.mxu0 0
      %7026 = vmatpush1.bf16.msra.mxu0 %v7019
      %7027 = vmatprep.subr.bf16.mxu0 0
      %7028 = vmatpush1.bf16.msra.mxu0 0
      %7029 = vmatprep.subr.bf16.mxu0 0
      %7030 = vmatpush1.bf16.msra.mxu0 0
      %7031 = vmatprep.subr.bf16.mxu0 0
      %7032 = vmatpush1.bf16.msra.mxu0 0
      %7033 = vmatprep.subr.bf16.mxu0 0
      %7034 = vmatpush1.bf16.msra.mxu0 0
      %7035 = vmatprep.subr.bf16.mxu0 0
      %7036 = vmatpush1.bf16.msra.mxu0 0
      %7037 = vmatprep.subr.bf16.mxu0 0
      %7038 = vmatpush1.bf16.msra.mxu0 0
      %7039 = vmatprep.subr.bf16.mxu0 0
      %7040 = vmatpush1.bf16.msra.mxu0 0
      %7041 = vmatprep.subr.bf16.mxu0 0
      %7042 = vmatpush1.bf16.msra.mxu0 0
      %7043 = vmatprep.subr.bf16.mxu0 0
      %7044 = vmatpush1.bf16.msra.mxu0 0
      %7045 = vmatprep.subr.bf16.mxu0 0
      %7046 = vmatpush1.bf16.msra.mxu0 0
      %7047 = vmatprep.subr.bf16.mxu0 0
      %7048 = vmatpush1.bf16.msra.mxu0 0
      %7049 = vmatprep.subr.bf16.mxu0 0
      %7050 = vmatpush1.bf16.msra.mxu0 0
      %7051 = vmatprep.subr.bf16.mxu0 0
      %7052 = vmatpush1.bf16.msra.mxu0 0
      %7053 = vmatprep.mubr.bf16.mxu0 0
      %7054 = vmatmul.mubr.bf16.gmra.mrb[0].mxu0 %v6910
      %v7055 = vpop.f32.mrb[0].mxu0
      %v7056 = vadd.f32 0.0, %v7055
      %v7057 = vpop.f32.mrb[0].mxu0
      %v7058 = vpop.f32.mrb[0].mxu0
      %v7059 = vadd.f32 0.0, %v7058
      %v7060 = vpop.f32.mrb[0].mxu0
      %7061 = vmatprep.mubr.bf16.mxu0 0
      %7062 = vmatmul.mubr.bf16.gmra.mrb[0].mxu0 %v6913
      %v7063 = vpop.f32.mrb[0].mxu0
      %v7064 = vadd.f32 0.0, %v7063
      %v7065 = vpop.f32.mrb[0].mxu0
      %v7066 = vpop.f32.mrb[0].mxu0
      %v7067 = vadd.f32 0.0, %v7066
      %v7068 = vpop.f32.mrb[0].mxu0
      %7069 = vmatprep.mubr.bf16.mxu0 0
      %7070 = vmatmul.mubr.bf16.gmra.mrb[0].mxu0 %v6916
      %v7071 = vpop.f32.mrb[0].mxu0
      %v7072 = vadd.f32 0.0, %v7071
      %v7073 = vpop.f32.mrb[0].mxu0
      %v7074 = vpop.f32.mrb[0].mxu0
      %v7075 = vadd.f32 0.0, %v7074
      %v7076 = vpop.f32.mrb[0].mxu0
      %7077 = vmatprep.mubr.bf16.mxu0 0
      %7078 = vmatmul.mubr.bf16.gmra.mrb[0].mxu0 %v6919
      %v7079 = vpop.f32.mrb[0].mxu0
      %v7080 = vadd.f32 0.0, %v7079
      %v7081 = vpop.f32.mrb[0].mxu0
      %v7082 = vpop.f32.mrb[0].mxu0
      %v7083 = vadd.f32 0.0, %v7082
      %v7084 = vpop.f32.mrb[0].mxu0
      %7085 = vmatprep.mubr.bf16.mxu0 0
      %7086 = vmatmul.mubr.bf16.gmra.mrb[0].mxu0 %v6922
      %v7087 = vpop.f32.mrb[0].mxu0
      %v7088 = vadd.f32 0.0, %v7087
      %v7089 = vpop.f32.mrb[0].mxu0
      %v7090 = vpop.f32.mrb[0].mxu0
      %v7091 = vadd.f32 0.0, %v7090
      %v7092 = vpop.f32.mrb[0].mxu0
      %7093 = vmatprep.mubr.bf16.mxu0 0
      %7094 = vmatmul.mubr.bf16.gmra.mrb[0].mxu0 %v6925
      %v7095 = vpop.f32.mrb[0].mxu0
      %v7096 = vadd.f32 0.0, %v7095
      %v7097 = vpop.f32.mrb[0].mxu0
      %v7098 = vpop.f32.mrb[0].mxu0
      %v7099 = vadd.f32 0.0, %v7098
      %v7100 = vpop.f32.mrb[0].mxu0
      %7101 = vmatprep.mubr.bf16.mxu0 0
      %7102 = vmatmul.mubr.bf16.gmra.mrb[0].mxu0 %v6928
      %v7103 = vpop.f32.mrb[0].mxu0
      %v7104 = vadd.f32 0.0, %v7103
      %v7105 = vpop.f32.mrb[0].mxu0
      %v7106 = vpop.f32.mrb[0].mxu0
      %v7107 = vadd.f32 0.0, %v7106
      %v7108 = vpop.f32.mrb[0].mxu0
      %7109 = vmatprep.mubr.bf16.mxu0 0
      %7110 = vmatmul.mubr.bf16.gmra.mrb[0].mxu0 %v6931
      %v7111 = vpop.f32.mrb[0].mxu0
      %v7112 = vadd.f32 0.0, %v7111
      %v7113 = vpop.f32.mrb[0].mxu0
      %v7114 = vpop.f32.mrb[0].mxu0
      %v7115 = vadd.f32 0.0, %v7114
      %v7116 = vpop.f32.mrb[0].mxu0
      %7117 = vmatprep.mubr.bf16.mxu0 0
      %7118 = vmatmul.mubr.bf16.gmra.mrb[0].mxu0 %v6934
      %v7119 = vpop.f32.mrb[0].mxu0
      %v7120 = vadd.f32 0.0, %v7119
      %v7121 = vpop.f32.mrb[0].mxu0
      %v7122 = vpop.f32.mrb[0].mxu0
      %v7123 = vadd.f32 0.0, %v7122
      %v7124 = vpop.f32.mrb[0].mxu0
      %7125 = vmatprep.mubr.bf16.mxu0 0
      %7126 = vmatmul.mubr.bf16.gmra.mrb[0].mxu0 %v6937
      %v7127 = vpop.f32.mrb[0].mxu0
      %v7128 = vadd.f32 0.0, %v7127
      %v7129 = vpop.f32.mrb[0].mxu0
      %v7130 = vpop.f32.mrb[0].mxu0
      %v7131 = vadd.f32 0.0, %v7130
      %v7132 = vpop.f32.mrb[0].mxu0
      %7133 = vmatprep.mubr.bf16.mxu0 0
      %7134 = vmatmul.mubr.bf16.gmra.mrb[0].mxu0 %v6940
      %v7135 = vpop.f32.mrb[0].mxu0
      %v7136 = vadd.f32 0.0, %v7135
      %v7137 = vpop.f32.mrb[0].mxu0
      %v7138 = vpop.f32.mrb[0].mxu0
      %v7139 = vadd.f32 0.0, %v7138
      %v7140 = vpop.f32.mrb[0].mxu0
      %7141 = vmatprep.mubr.bf16.mxu0 0
      %7142 = vmatmul.mubr.bf16.gmra.mrb[0].mxu0 %v6943
      %v7143 = vpop.f32.mrb[0].mxu0
      %v7144 = vadd.f32 0.0, %v7143
      %v7145 = vpop.f32.mrb[0].mxu0
      %v7146 = vpop.f32.mrb[0].mxu0
      %v7147 = vadd.f32 0.0, %v7146
      %v7148 = vpop.f32.mrb[0].mxu0
      %7149 = vmatprep.mubr.bf16.mxu0 0
      %7150 = vmatmul.mubr.bf16.gmra.mrb[0].mxu0 %v6946
      %v7151 = vpop.f32.mrb[0].mxu0
      %v7152 = vadd.f32 0.0, %v7151
      %v7153 = vpop.f32.mrb[0].mxu0
      %v7154 = vpop.f32.mrb[0].mxu0
      %v7155 = vadd.f32 0.0, %v7154
      %v7156 = vpop.f32.mrb[0].mxu0
      %7157 = vmatprep.mubr.bf16.mxu0 0
      %7158 = vmatmul.mubr.bf16.gmra.mrb[0].mxu0 %v6949
      %v7159 = vpop.f32.mrb[0].mxu0
      %v7160 = vadd.f32 0.0, %v7159
      %v7161 = vpop.f32.mrb[0].mxu0
      %v7162 = vpop.f32.mrb[0].mxu0
      %v7163 = vadd.f32 0.0, %v7162
      %v7164 = vpop.f32.mrb[0].mxu0
      %7165 = vmatprep.mubr.bf16.mxu0 0
      %7166 = vmatmul.mubr.bf16.gmra.mrb[0].mxu0 %v6952
      %v7167 = vpop.f32.mrb[0].mxu0
      %v7168 = vadd.f32 0.0, %v7167
      %v7169 = vpop.f32.mrb[0].mxu0
      %v7170 = vpop.f32.mrb[0].mxu0
      %v7171 = vadd.f32 0.0, %v7170
      %v7172 = vpop.f32.mrb[0].mxu0
      %7173 = vmatprep.mubr.bf16.mxu0 0
      %7174 = vmatmul.mubr.bf16.gmra.mrb[0].mxu0 %v6955
      %v7175 = vpop.f32.mrb[0].mxu0
      %v7176 = vadd.f32 0.0, %v7175
      %v7177 = vpop.f32.mrb[0].mxu0
      %v7178 = vpop.f32.mrb[0].mxu0
      %v7179 = vadd.f32 0.0, %v7178
      %v7180 = vpop.f32.mrb[0].mxu0
      %7181 = vmatprep.mubr.bf16.mxu0 0
      %7182 = vmatmul.mubr.bf16.gmra.mrb[0].mxu0 %v6958
      %v7183 = vpop.f32.mrb[0].mxu0
      %v7184 = vadd.f32 0.0, %v7183
      %v7185 = vpop.f32.mrb[0].mxu0
      %v7186 = vpop.f32.mrb[0].mxu0
      %v7187 = vadd.f32 0.0, %v7186
      %v7188 = vpop.f32.mrb[0].mxu0
      %7189 = vmatprep.mubr.bf16.mxu0 0
      %7190 = vmatmul.mubr.bf16.gmra.mrb[0].mxu0 %v6961
      %v7191 = vpop.f32.mrb[0].mxu0
      %v7192 = vadd.f32 0.0, %v7191
      %v7193 = vpop.f32.mrb[0].mxu0
      %v7194 = vpop.f32.mrb[0].mxu0
      %v7195 = vadd.f32 0.0, %v7194
      %v7196 = vpop.f32.mrb[0].mxu0
      %7197 = vmatprep.mubr.bf16.mxu0 0
      %7198 = vmatmul.mubr.bf16.gmra.mrb[0].mxu0 %v6964
      %v7199 = vpop.f32.mrb[0].mxu0
      %v7200 = vadd.f32 0.0, %v7199
      %v7201 = vpop.f32.mrb[0].mxu0
      %v7202 = vpop.f32.mrb[0].mxu0
      %v7203 = vadd.f32 0.0, %v7202
      %v7204 = vpop.f32.mrb[0].mxu0
      %7205 = vmatprep.mubr.bf16.mxu0 0
      %7206 = vmatmul.mubr.bf16.gmra.mrb[0].mxu0 %v6967
      %v7207 = vpop.f32.mrb[0].mxu0
      %v7208 = vadd.f32 0.0, %v7207
      %v7209 = vpop.f32.mrb[0].mxu0
      %v7210 = vpop.f32.mrb[0].mxu0
      %v7211 = vadd.f32 0.0, %v7210
      %v7212 = vpop.f32.mrb[0].mxu0
      %7213 = vmatprep.mubr.bf16.mxu0 0
      %7214 = vmatmul.mubr.bf16.gmra.mrb[0].mxu0 %v6970
      %v7215 = vpop.f32.mrb[0].mxu0
      %v7216 = vadd.f32 0.0, %v7215
      %v7217 = vpop.f32.mrb[0].mxu0
      %v7218 = vpop.f32.mrb[0].mxu0
      %v7219 = vadd.f32 0.0, %v7218
      %v7220 = vpop.f32.mrb[0].mxu0
      %7221 = vmatprep.mubr.bf16.mxu0 0
      %7222 = vmatmul.mubr.bf16.gmra.mrb[0].mxu0 %v6973
      %v7223 = vpop.f32.mrb[0].mxu0
      %v7224 = vadd.f32 0.0, %v7223
      %v7225 = vpop.f32.mrb[0].mxu0
      %v7226 = vpop.f32.mrb[0].mxu0
      %v7227 = vadd.f32 0.0, %v7226
      %v7228 = vpop.f32.mrb[0].mxu0
      %7229 = vmatprep.mubr.bf16.mxu0 0
      %7230 = vmatmul.mubr.bf16.gmra.mrb[0].mxu0 %v6976
      %v7231 = vpop.f32.mrb[0].mxu0
      %v7232 = vadd.f32 0.0, %v7231
      %v7233 = vpop.f32.mrb[0].mxu0
      %v7234 = vpop.f32.mrb[0].mxu0
      %v7235 = vadd.f32 0.0, %v7234
      %v7236 = vpop.f32.mrb[0].mxu0
      %7237 = vmatprep.mubr.bf16.mxu0 0
      %7238 = vmatmul.mubr.bf16.gmra.mrb[0].mxu0 %v6979
      %v7239 = vpop.f32.mrb[0].mxu0
      %v7240 = vadd.f32 0.0, %v7239
      %v7241 = vpop.f32.mrb[0].mxu0
      %v7242 = vpop.f32.mrb[0].mxu0
      %v7243 = vadd.f32 0.0, %v7242
      %v7244 = vpop.f32.mrb[0].mxu0
      %7245 = vmatprep.mubr.bf16.mxu0 0
      %7246 = vmatmul.mubr.bf16.gmra.mrb[0].mxu0 %v6982
      %v7247 = vpop.f32.mrb[0].mxu0
      %v7248 = vadd.f32 0.0, %v7247
      %v7249 = vpop.f32.mrb[0].mxu0
      %v7250 = vpop.f32.mrb[0].mxu0
      %v7251 = vadd.f32 0.0, %v7250
      %v7252 = vpop.f32.mrb[0].mxu0
      %7253 = vmatprep.mubr.bf16.mxu0 0
      %7254 = vmatmul.mubr.bf16.gmra.mrb[0].mxu0 %v6985
      %v7255 = vpop.f32.mrb[0].mxu0
      %v7256 = vadd.f32 0.0, %v7255
      %v7257 = vpop.f32.mrb[0].mxu0
      %v7258 = vpop.f32.mrb[0].mxu0
      %v7259 = vadd.f32 0.0, %v7258
      %v7260 = vpop.f32.mrb[0].mxu0
      %7261 = vmatprep.mubr.bf16.mxu0 0
      %7262 = vmatmul.mubr.bf16.gmra.mrb[0].mxu0 %v6988
      %v7263 = vpop.f32.mrb[0].mxu0
      %v7264 = vadd.f32 0.0, %v7263
      %v7265 = vpop.f32.mrb[0].mxu0
      %v7266 = vpop.f32.mrb[0].mxu0
      %v7267 = vadd.f32 0.0, %v7266
      %v7268 = vpop.f32.mrb[0].mxu0
      %7269 = vmatprep.mubr.bf16.mxu0 0
      %7270 = vmatmul.mubr.bf16.gmra.mrb[0].mxu0 %v6991
      %v7271 = vpop.f32.mrb[0].mxu0
      %v7272 = vadd.f32 0.0, %v7271
      %v7273 = vpop.f32.mrb[0].mxu0
      %v7274 = vpop.f32.mrb[0].mxu0
      %v7275 = vadd.f32 0.0, %v7274
      %v7276 = vpop.f32.mrb[0].mxu0
      %7277 = vmatprep.mubr.bf16.mxu0 0
      %7278 = vmatmul.mubr.bf16.gmra.mrb[0].mxu0 %v6994
      %v7279 = vpop.f32.mrb[0].mxu0
      %v7280 = vadd.f32 0.0, %v7279
      %v7281 = vpop.f32.mrb[0].mxu0
      %v7282 = vpop.f32.mrb[0].mxu0
      %v7283 = vadd.f32 0.0, %v7282
      %v7284 = vpop.f32.mrb[0].mxu0
      %7285 = vmatprep.mubr.bf16.mxu0 0
      %7286 = vmatmul.mubr.bf16.gmra.mrb[0].mxu0 %v6997
      %v7287 = vpop.f32.mrb[0].mxu0
      %v7288 = vadd.f32 0.0, %v7287
      %v7289 = vpop.f32.mrb[0].mxu0
      %v7290 = vpop.f32.mrb[0].mxu0
      %v7291 = vadd.f32 0.0, %v7290
      %v7292 = vpop.f32.mrb[0].mxu0
      %7293 = vmatprep.mubr.bf16.mxu0 0
      %7294 = vmatmul.mubr.bf16.gmra.mrb[0].mxu0 %v7000
      %v7295 = vpop.f32.mrb[0].mxu0
      %v7296 = vadd.f32 0.0, %v7295
      %v7297 = vpop.f32.mrb[0].mxu0
      %v7298 = vpop.f32.mrb[0].mxu0
      %v7299 = vadd.f32 0.0, %v7298
      %v7300 = vpop.f32.mrb[0].mxu0
      %7301 = vmatprep.mubr.bf16.mxu0 0
      %7302 = vmatmul.mubr.bf16.gmra.mrb[0].mxu0 %v7003
      %v7303 = vpop.f32.mrb[0].mxu0
      %v7304 = vadd.f32 0.0, %v7303
      %v7305 = vpop.f32.mrb[0].mxu0
      %v7306 = vpop.f32.mrb[0].mxu0
      %v7307 = vadd.f32 0.0, %v7306
      %v7308 = vpop.f32.mrb[0].mxu0
      %7309 = vmatprep.mubr.bf16.mxu0 0
      %7310 = vmatmul.mubr.bf16.gmra.mrb[0].mxu0 %v7006
      %v7311 = vpop.f32.mrb[0].mxu0
      %v7312 = vadd.f32 0.0, %v7311
      %v7313 = vpop.f32.mrb[0].mxu0
      %v7314 = vpop.f32.mrb[0].mxu0
      %v7315 = vadd.f32 0.0, %v7314
      %v7316 = vpop.f32.mrb[0].mxu0
      %7317 = vmatprep.mubr.bf16.mxu0 0
      %7318 = vmatmul.mubr.bf16.gmra.mrb[0].mxu0 %v7009
      %v7319 = vpop.f32.mrb[0].mxu0
      %v7320 = vadd.f32 0.0, %v7319
      %v7321 = vpop.f32.mrb[0].mxu0
      %v7322 = vpop.f32.mrb[0].mxu0
      %v7323 = vadd.f32 0.0, %v7322
      %v7324 = vpop.f32.mrb[0].mxu0
      %7325 = vmatprep.mubr.bf16.mxu0 0
      %7326 = vmatmul.mubr.bf16.gmra.mrb[0].mxu0 %v7012
      %v7327 = vpop.f32.mrb[0].mxu0
      %v7328 = vadd.f32 0.0, %v7327
      %v7329 = vpop.f32.mrb[0].mxu0
      %v7330 = vpop.f32.mrb[0].mxu0
      %v7331 = vadd.f32 0.0, %v7330
      %v7332 = vpop.f32.mrb[0].mxu0
      %7333 = vmatprep.mubr.bf16.mxu0 0
      %7334 = vmatmul.mubr.bf16.gmra.mrb[0].mxu0 %v7015
      %v7335 = vpop.f32.mrb[0].mxu0
      %v7336 = vadd.f32 0.0, %v7335
      %v7337 = vpop.f32.mrb[0].mxu0
      %v7338 = vpop.f32.mrb[0].mxu0
      %v7339 = vadd.f32 0.0, %v7338
      %v7340 = vpop.f32.mrb[0].mxu0
      %7341 = vdwg.mxu0
      %v7342 = vld [vmem:[%s2] sm:$0x1]
      %v7344 = vlaneseq
      %v7345 = vshrl.u32 %v7344, 7
      %v7346 = vsub.s32 0, %v7345
      %v7347 = vrot.slane %v7342, %v7346
      %v7349 = vmul.f32 %v7056, %v7347
      %v7350 = vmul.f32 %v7059, %v7347
      %v7351 = vmul.f32 %v7064, %v7347
      %v7352 = vmul.f32 %v7067, %v7347
      %v7353 = vmul.f32 %v7072, %v7347
      %v7354 = vmul.f32 %v7075, %v7347
      %v7355 = vmul.f32 %v7080, %v7347
      %v7356 = vmul.f32 %v7083, %v7347
      %v7357 = vmul.f32 %v7088, %v7347
      %v7358 = vmul.f32 %v7091, %v7347
      %v7359 = vmul.f32 %v7096, %v7347
      %v7360 = vmul.f32 %v7099, %v7347
      %v7361 = vmul.f32 %v7104, %v7347
      %v7362 = vmul.f32 %v7107, %v7347
      %v7363 = vmul.f32 %v7112, %v7347
      %v7364 = vmul.f32 %v7115, %v7347
      %v7365 = vmul.f32 %v7120, %v7347
      %v7366 = vmul.f32 %v7123, %v7347
      %v7367 = vmul.f32 %v7128, %v7347
      %v7368 = vmul.f32 %v7131, %v7347
      %v7369 = vmul.f32 %v7136, %v7347
      %v7370 = vmul.f32 %v7139, %v7347
      %v7371 = vmul.f32 %v7144, %v7347
      %v7372 = vmul.f32 %v7147, %v7347
      %v7373 = vmul.f32 %v7152, %v7347
      %v7374 = vmul.f32 %v7155, %v7347
      %v7375 = vmul.f32 %v7160, %v7347
      %v7376 = vmul.f32 %v7163, %v7347
      %v7377 = vmul.f32 %v7168, %v7347
      %v7378 = vmul.f32 %v7171, %v7347
      %v7379 = vmul.f32 %v7176, %v7347
      %v7380 = vmul.f32 %v7179, %v7347
      %v7381 = vmul.f32 %v7184, %v7347
      %v7382 = vmul.f32 %v7187, %v7347
      %v7383 = vmul.f32 %v7192, %v7347
      %v7384 = vmul.f32 %v7195, %v7347
      %v7385 = vmul.f32 %v7200, %v7347
      %v7386 = vmul.f32 %v7203, %v7347
      %v7387 = vmul.f32 %v7208, %v7347
      %v7388 = vmul.f32 %v7211, %v7347
      %v7389 = vmul.f32 %v7216, %v7347
      %v7390 = vmul.f32 %v7219, %v7347
      %v7391 = vmul.f32 %v7224, %v7347
      %v7392 = vmul.f32 %v7227, %v7347
      %v7393 = vmul.f32 %v7232, %v7347
      %v7394 = vmul.f32 %v7235, %v7347
      %v7395 = vmul.f32 %v7240, %v7347
      %v7396 = vmul.f32 %v7243, %v7347
      %v7397 = vmul.f32 %v7248, %v7347
      %v7398 = vmul.f32 %v7251, %v7347
      %v7399 = vmul.f32 %v7256, %v7347
      %v7400 = vmul.f32 %v7259, %v7347
      %v7401 = vmul.f32 %v7264, %v7347
      %v7402 = vmul.f32 %v7267, %v7347
      %v7403 = vmul.f32 %v7272, %v7347
      %v7404 = vmul.f32 %v7275, %v7347
      %v7405 = vmul.f32 %v7280, %v7347
      %v7406 = vmul.f32 %v7283, %v7347
      %v7407 = vmul.f32 %v7288, %v7347
      %v7408 = vmul.f32 %v7291, %v7347
      %v7409 = vmul.f32 %v7296, %v7347
      %v7410 = vmul.f32 %v7299, %v7347
      %v7411 = vmul.f32 %v7304, %v7347
      %v7412 = vmul.f32 %v7307, %v7347
      %v7413 = vmul.f32 %v7312, %v7347
      %v7414 = vmul.f32 %v7315, %v7347
      %v7415 = vmul.f32 %v7320, %v7347
      %v7416 = vmul.f32 %v7323, %v7347
      %v7417 = vmul.f32 %v7328, %v7347
      %v7418 = vmul.f32 %v7331, %v7347
      %v7419 = vmul.f32 %v7336, %v7347
      %v7420 = vmul.f32 %v7339, %v7347
      %v7421 = vld [vmem:[%s3] sm:$0x1]
      %v7423 = vlaneseq
      %v7424 = vshrl.u32 %v7423, 7
      %v7425 = vsub.s32 0, %v7424
      %v7426 = vrot.slane %v7421, %v7425
      %v7428 = vadd.f32 %v7349, %v7426
      %v7429 = vadd.f32 %v7350, %v7426
      %v7430 = vadd.f32 %v7351, %v7426
      %v7431 = vadd.f32 %v7352, %v7426
      %v7432 = vadd.f32 %v7353, %v7426
      %v7433 = vadd.f32 %v7354, %v7426
      %v7434 = vadd.f32 %v7355, %v7426
      %v7435 = vadd.f32 %v7356, %v7426
      %v7436 = vadd.f32 %v7357, %v7426
      %v7437 = vadd.f32 %v7358, %v7426
      %v7438 = vadd.f32 %v7359, %v7426
      %v7439 = vadd.f32 %v7360, %v7426
      %v7440 = vadd.f32 %v7361, %v7426
      %v7441 = vadd.f32 %v7362, %v7426
      %v7442 = vadd.f32 %v7363, %v7426
      %v7443 = vadd.f32 %v7364, %v7426
      %v7444 = vadd.f32 %v7365, %v7426
      %v7445 = vadd.f32 %v7366, %v7426
      %v7446 = vadd.f32 %v7367, %v7426
      %v7447 = vadd.f32 %v7368, %v7426
      %v7448 = vadd.f32 %v7369, %v7426
      %v7449 = vadd.f32 %v7370, %v7426
      %v7450 = vadd.f32 %v7371, %v7426
      %v7451 = vadd.f32 %v7372, %v7426
      %v7452 = vadd.f32 %v7373, %v7426
      %v7453 = vadd.f32 %v7374, %v7426
      %v7454 = vadd.f32 %v7375, %v7426
      %v7455 = vadd.f32 %v7376, %v7426
      %v7456 = vadd.f32 %v7377, %v7426
      %v7457 = vadd.f32 %v7378, %v7426
      %v7458 = vadd.f32 %v7379, %v7426
      %v7459 = vadd.f32 %v7380, %v7426
      %v7460 = vadd.f32 %v7381, %v7426
      %v7461 = vadd.f32 %v7382, %v7426
      %v7462 = vadd.f32 %v7383, %v7426
      %v7463 = vadd.f32 %v7384, %v7426
      %v7464 = vadd.f32 %v7385, %v7426
      %v7465 = vadd.f32 %v7386, %v7426
      %v7466 = vadd.f32 %v7387, %v7426
      %v7467 = vadd.f32 %v7388, %v7426
      %v7468 = vadd.f32 %v7389, %v7426
      %v7469 = vadd.f32 %v7390, %v7426
      %v7470 = vadd.f32 %v7391, %v7426
      %v7471 = vadd.f32 %v7392, %v7426
      %v7472 = vadd.f32 %v7393, %v7426
      %v7473 = vadd.f32 %v7394, %v7426
      %v7474 = vadd.f32 %v7395, %v7426
      %v7475 = vadd.f32 %v7396, %v7426
      %v7476 = vadd.f32 %v7397, %v7426
      %v7477 = vadd.f32 %v7398, %v7426
      %v7478 = vadd.f32 %v7399, %v7426
      %v7479 = vadd.f32 %v7400, %v7426
      %v7480 = vadd.f32 %v7401, %v7426
      %v7481 = vadd.f32 %v7402, %v7426
      %v7482 = vadd.f32 %v7403, %v7426
      %v7483 = vadd.f32 %v7404, %v7426
      %v7484 = vadd.f32 %v7405, %v7426
      %v7485 = vadd.f32 %v7406, %v7426
      %v7486 = vadd.f32 %v7407, %v7426
      %v7487 = vadd.f32 %v7408, %v7426
      %v7488 = vadd.f32 %v7409, %v7426
      %v7489 = vadd.f32 %v7410, %v7426
      %v7490 = vadd.f32 %v7411, %v7426
      %v7491 = vadd.f32 %v7412, %v7426
      %v7492 = vadd.f32 %v7413, %v7426
      %v7493 = vadd.f32 %v7414, %v7426
      %v7494 = vadd.f32 %v7415, %v7426
      %v7495 = vadd.f32 %v7416, %v7426
      %v7496 = vadd.f32 %v7417, %v7426
      %v7497 = vadd.f32 %v7418, %v7426
      %v7498 = vadd.f32 %v7419, %v7426
      %v7499 = vadd.f32 %v7420, %v7426
      %v7500 = vmax.f32 %v7428, 0.0
      %v7501 = vmax.f32 %v7429, 0.0
      %v7502 = vmax.f32 %v7430, 0.0
      %v7503 = vmax.f32 %v7431, 0.0
      %v7504 = vmax.f32 %v7432, 0.0
      %v7505 = vmax.f32 %v7433, 0.0
      %v7506 = vmax.f32 %v7434, 0.0
      %v7507 = vmax.f32 %v7435, 0.0
      %v7508 = vmax.f32 %v7436, 0.0
      %v7509 = vmax.f32 %v7437, 0.0
      %v7510 = vmax.f32 %v7438, 0.0
      %v7511 = vmax.f32 %v7439, 0.0
      %v7512 = vmax.f32 %v7440, 0.0
      %v7513 = vmax.f32 %v7441, 0.0
      %v7514 = vmax.f32 %v7442, 0.0
      %v7515 = vmax.f32 %v7443, 0.0
      %v7516 = vmax.f32 %v7444, 0.0
      %v7517 = vmax.f32 %v7445, 0.0
      %v7518 = vmax.f32 %v7446, 0.0
      %v7519 = vmax.f32 %v7447, 0.0
      %v7520 = vmax.f32 %v7448, 0.0
      %v7521 = vmax.f32 %v7449, 0.0
      %v7522 = vmax.f32 %v7450, 0.0
      %v7523 = vmax.f32 %v7451, 0.0
      %v7524 = vmax.f32 %v7452, 0.0
      %v7525 = vmax.f32 %v7453, 0.0
      %v7526 = vmax.f32 %v7454, 0.0
      %v7527 = vmax.f32 %v7455, 0.0
      %v7528 = vmax.f32 %v7456, 0.0
      %v7529 = vmax.f32 %v7457, 0.0
      %v7530 = vmax.f32 %v7458, 0.0
      %v7531 = vmax.f32 %v7459, 0.0
      %v7532 = vmax.f32 %v7460, 0.0
      %v7533 = vmax.f32 %v7461, 0.0
      %v7534 = vmax.f32 %v7462, 0.0
      %v7535 = vmax.f32 %v7463, 0.0
      %v7536 = vmax.f32 %v7464, 0.0
      %v7537 = vmax.f32 %v7465, 0.0
      %v7538 = vmax.f32 %v7466, 0.0
      %v7539 = vmax.f32 %v7467, 0.0
      %v7540 = vmax.f32 %v7468, 0.0
      %v7541 = vmax.f32 %v7469, 0.0
      %v7542 = vmax.f32 %v7470, 0.0
      %v7543 = vmax.f32 %v7471, 0.0
      %v7544 = vmax.f32 %v7472, 0.0
      %v7545 = vmax.f32 %v7473, 0.0
      %v7546 = vmax.f32 %v7474, 0.0
      %v7547 = vmax.f32 %v7475, 0.0
      %v7548 = vmax.f32 %v7476, 0.0
      %v7549 = vmax.f32 %v7477, 0.0
      %v7550 = vmax.f32 %v7478, 0.0
      %v7551 = vmax.f32 %v7479, 0.0
      %v7552 = vmax.f32 %v7480, 0.0
      %v7553 = vmax.f32 %v7481, 0.0
      %v7554 = vmax.f32 %v7482, 0.0
      %v7555 = vmax.f32 %v7483, 0.0
      %v7556 = vmax.f32 %v7484, 0.0
      %v7557 = vmax.f32 %v7485, 0.0
      %v7558 = vmax.f32 %v7486, 0.0
      %v7559 = vmax.f32 %v7487, 0.0
      %v7560 = vmax.f32 %v7488, 0.0
      %v7561 = vmax.f32 %v7489, 0.0
      %v7562 = vmax.f32 %v7490, 0.0
      %v7563 = vmax.f32 %v7491, 0.0
      %v7564 = vmax.f32 %v7492, 0.0
      %v7565 = vmax.f32 %v7493, 0.0
      %v7566 = vmax.f32 %v7494, 0.0
      %v7567 = vmax.f32 %v7495, 0.0
      %v7568 = vmax.f32 %v7496, 0.0
      %v7569 = vmax.f32 %v7497, 0.0
      %v7570 = vmax.f32 %v7498, 0.0
      %v7571 = vmax.f32 %v7499, 0.0
      %v7572 = vpack.c.bf16 %v7501, %v7500
      %v7573 = vpack.c.bf16 %v7503, %v7502
      %v7574 = vpack.c.bf16 %v7505, %v7504
      %v7575 = vpack.c.bf16 %v7507, %v7506
      %v7576 = vpack.c.bf16 %v7509, %v7508
      %v7577 = vpack.c.bf16 %v7511, %v7510
      %v7578 = vpack.c.bf16 %v7513, %v7512
      %v7579 = vpack.c.bf16 %v7515, %v7514
      %v7580 = vpack.c.bf16 %v7517, %v7516
      %v7581 = vpack.c.bf16 %v7519, %v7518
      %v7582 = vpack.c.bf16 %v7521, %v7520
      %v7583 = vpack.c.bf16 %v7523, %v7522
      %v7584 = vpack.c.bf16 %v7525, %v7524
      %v7585 = vpack.c.bf16 %v7527, %v7526
      %v7586 = vpack.c.bf16 %v7529, %v7528
      %v7587 = vpack.c.bf16 %v7531, %v7530
      %v7588 = vpack.c.bf16 %v7533, %v7532
      %v7589 = vpack.c.bf16 %v7535, %v7534
      %v7590 = vpack.c.bf16 %v7537, %v7536
      %v7591 = vpack.c.bf16 %v7539, %v7538
      %v7592 = vpack.c.bf16 %v7541, %v7540
      %v7593 = vpack.c.bf16 %v7543, %v7542
      %v7594 = vpack.c.bf16 %v7545, %v7544
      %v7595 = vpack.c.bf16 %v7547, %v7546
      %v7596 = vpack.c.bf16 %v7549, %v7548
      %v7597 = vpack.c.bf16 %v7551, %v7550
      %v7598 = vpack.c.bf16 %v7553, %v7552
      %v7599 = vpack.c.bf16 %v7555, %v7554
      %v7600 = vpack.c.bf16 %v7557, %v7556
      %v7601 = vpack.c.bf16 %v7559, %v7558
      %v7602 = vpack.c.bf16 %v7561, %v7560
      %v7603 = vpack.c.bf16 %v7563, %v7562
      %v7604 = vpack.c.bf16 %v7565, %v7564
      %v7605 = vpack.c.bf16 %v7567, %v7566
      %v7606 = vpack.c.bf16 %v7569, %v7568
      %v7607 = vpack.c.bf16 %v7571, %v7570
      %7608 = vst.msk [vmem:[#allocation3] sm:$0xff] %vm607, %v7572
      %7609 = vst.msk [vmem:[#allocation3 + $0x8] sm:$0xff] %vm607, %v7573
      %7610 = vst.msk [vmem:[#allocation3 + $0x10] sm:$0xff] %vm607, %v7574
      %7611 = vst.msk [vmem:[#allocation3 + $0x18] sm:$0xff] %vm607, %v7575
      %7612 = vst.msk [vmem:[#allocation3 + $0x20] sm:$0xff] %vm607, %v7576
      %7613 = vst.msk [vmem:[#allocation3 + $0x28] sm:$0xff] %vm607, %v7577
      %7614 = vst.msk [vmem:[#allocation3 + $0x30] sm:$0xff] %vm607, %v7578
      %7615 = vst.msk [vmem:[#allocation3 + $0x38] sm:$0xff] %vm607, %v7579
      %7616 = vst.msk [vmem:[#allocation3 + $0x40] sm:$0xff] %vm607, %v7580
      %7617 = vst.msk [vmem:[#allocation3 + $0x48] sm:$0xff] %vm607, %v7581
      %7618 = vst.msk [vmem:[#allocation3 + $0x50] sm:$0xff] %vm607, %v7582
      %7619 = vst.msk [vmem:[#allocation3 + $0x58] sm:$0xff] %vm607, %v7583
      %7620 = vst.msk [vmem:[#allocation3 + $0x60] sm:$0xff] %vm607, %v7584
      %7621 = vst.msk [vmem:[#allocation3 + $0x68] sm:$0xff] %vm607, %v7585
      %7622 = vst.msk [vmem:[#allocation3 + $0x70] sm:$0xff] %vm607, %v7586
      %7623 = vst.msk [vmem:[#allocation3 + $0x78] sm:$0xff] %vm607, %v7587
      %7624 = vst.msk [vmem:[#allocation3 + $0x80] sm:$0xff] %vm607, %v7588
      %7625 = vst.msk [vmem:[#allocation3 + $0x88] sm:$0xff] %vm607, %v7589
      %7626 = vst.msk [vmem:[#allocation3 + $0x90] sm:$0xff] %vm607, %v7590
      %7627 = vst.msk [vmem:[#allocation3 + $0x98] sm:$0xff] %vm607, %v7591
      %7628 = vst.msk [vmem:[#allocation3 + $0xa0] sm:$0xff] %vm607, %v7592
      %7629 = vst.msk [vmem:[#allocation3 + $0xa8] sm:$0xff] %vm607, %v7593
      %7630 = vst.msk [vmem:[#allocation3 + $0xb0] sm:$0xff] %vm607, %v7594
      %7631 = vst.msk [vmem:[#allocation3 + $0xb8] sm:$0xff] %vm607, %v7595
      %7632 = vst.msk [vmem:[#allocation3 + $0xc0] sm:$0xff] %vm607, %v7596
      %7633 = vst.msk [vmem:[#allocation3 + $0xc8] sm:$0xff] %vm607, %v7597
      %7634 = vst.msk [vmem:[#allocation3 + $0xd0] sm:$0xff] %vm607, %v7598
      %7635 = vst.msk [vmem:[#allocation3 + $0xd8] sm:$0xff] %vm607, %v7599
      %7636 = vst.msk [vmem:[#allocation3 + $0xe0] sm:$0xff] %vm607, %v7600
      %7637 = vst.msk [vmem:[#allocation3 + $0xe8] sm:$0xff] %vm607, %v7601
      %7638 = vst.msk [vmem:[#allocation3 + $0xf0] sm:$0xff] %vm607, %v7602
      %7639 = vst.msk [vmem:[#allocation3 + $0xf8] sm:$0xff] %vm607, %v7603
      %7640 = vst.msk [vmem:[#allocation3 + $0x100] sm:$0xff] %vm607, %v7604
      %7641 = vst.msk [vmem:[#allocation3 + $0x108] sm:$0xff] %vm607, %v7605
      %7642 = vst.msk [vmem:[#allocation3 + $0x110] sm:$0xff] %vm607, %v7606
      %7643 = vst.msk [vmem:[#allocation3 + $0x118] sm:$0xff] %vm607, %v7607
      %vm7644 = vcmask 24576
      %vm7645 = vsmask.f32 256
      %vm7646 = vmand %vm7644, %vm7645
      %v7647 = vld [vmem:[#allocation3] sm:$0x1]
      %v7648 = vsel %vm7646, 0, %v7647
      %7649 = vst [vmem:[#allocation3] sm:$0x1] %v7648
      %v7650 = vld [vmem:[#allocation3 + $0x10] sm:$0x1]
      %v7651 = vsel %vm7646, 0, %v7650
      %7652 = vst [vmem:[#allocation3 + $0x10] sm:$0x1] %v7651
      %v7653 = vld [vmem:[#allocation3 + $0x20] sm:$0x1]
      %v7654 = vsel %vm7646, 0, %v7653
      %7655 = vst [vmem:[#allocation3 + $0x20] sm:$0x1] %v7654
      %v7656 = vld [vmem:[#allocation3 + $0x30] sm:$0x1]
      %v7657 = vsel %vm7646, 0, %v7656
      %7658 = vst [vmem:[#allocation3 + $0x30] sm:$0x1] %v7657
      %v7659 = vld [vmem:[#allocation3 + $0x40] sm:$0x1]
      %v7660 = vsel %vm7646, 0, %v7659
      %7661 = vst [vmem:[#allocation3 + $0x40] sm:$0x1] %v7660
      %v7662 = vld [vmem:[#allocation3 + $0x50] sm:$0x1]
      %v7663 = vsel %vm7646, 0, %v7662
      %7664 = vst [vmem:[#allocation3 + $0x50] sm:$0x1] %v7663
      %v7665 = vld [vmem:[#allocation3 + $0x60] sm:$0x1]
      %v7666 = vsel %vm7646, 0, %v7665
      %7667 = vst [vmem:[#allocation3 + $0x60] sm:$0x1] %v7666
      %v7668 = vld [vmem:[#allocation3 + $0x70] sm:$0x1]
      %v7669 = vsel %vm7646, 0, %v7668
      %7670 = vst [vmem:[#allocation3 + $0x70] sm:$0x1] %v7669
      %v7671 = vld [vmem:[#allocation3 + $0x80] sm:$0x1]
      %v7672 = vsel %vm7646, 0, %v7671
      %7673 = vst [vmem:[#allocation3 + $0x80] sm:$0x1] %v7672
      %v7674 = vld [vmem:[#allocation3 + $0x90] sm:$0x1]
      %v7675 = vsel %vm7646, 0, %v7674
      %7676 = vst [vmem:[#allocation3 + $0x90] sm:$0x1] %v7675
      %v7677 = vld [vmem:[#allocation3 + $0xa0] sm:$0x1]
      %v7678 = vsel %vm7646, 0, %v7677
      %7679 = vst [vmem:[#allocation3 + $0xa0] sm:$0x1] %v7678
      %v7680 = vld [vmem:[#allocation3 + $0xb0] sm:$0x1]
      %v7681 = vsel %vm7646, 0, %v7680
      %7682 = vst [vmem:[#allocation3 + $0xb0] sm:$0x1] %v7681
      %v7683 = vld [vmem:[#allocation3 + $0xc0] sm:$0x1]
      %v7684 = vsel %vm7646, 0, %v7683
      %7685 = vst [vmem:[#allocation3 + $0xc0] sm:$0x1] %v7684
      %v7686 = vld [vmem:[#allocation3 + $0xd0] sm:$0x1]
      %v7687 = vsel %vm7646, 0, %v7686
      %7688 = vst [vmem:[#allocation3 + $0xd0] sm:$0x1] %v7687
      %v7689 = vld [vmem:[#allocation3 + $0xe0] sm:$0x1]
      %v7690 = vsel %vm7646, 0, %v7689
      %7691 = vst [vmem:[#allocation3 + $0xe0] sm:$0x1] %v7690
      %v7692 = vld [vmem:[#allocation3 + $0xf0] sm:$0x1]
      %v7693 = vsel %vm7646, 0, %v7692
      %7694 = vst [vmem:[#allocation3 + $0xf0] sm:$0x1] %v7693
      %v7695 = vld [vmem:[#allocation3 + $0x100] sm:$0x1]
      %v7696 = vsel %vm7646, 0, %v7695
      %7697 = vst [vmem:[#allocation3 + $0x100] sm:$0x1] %v7696
      %v7698 = vld [vmem:[#allocation3 + $0x110] sm:$0x1]
      %v7699 = vsel %vm7646, 0, %v7698
      %7700 = vst [vmem:[#allocation3 + $0x110] sm:$0x1] %v7699
      %vm7701 = vsmask.f32 7938
      %vm7702 = vmand %vm7644, %vm7701
      %v7703 = vld [vmem:[#allocation3 + $0x8] sm:$0x1]
      %v7704 = vsel %vm7702, 0, %v7703
      %7705 = vst [vmem:[#allocation3 + $0x8] sm:$0x1] %v7704
      %v7706 = vld [vmem:[#allocation3 + $0x18] sm:$0x1]
      %v7707 = vsel %vm7702, 0, %v7706
      %7708 = vst [vmem:[#allocation3 + $0x18] sm:$0x1] %v7707
      %v7709 = vld [vmem:[#allocation3 + $0x28] sm:$0x1]
      %v7710 = vsel %vm7702, 0, %v7709
      %7711 = vst [vmem:[#allocation3 + $0x28] sm:$0x1] %v7710
      %v7712 = vld [vmem:[#allocation3 + $0x38] sm:$0x1]
      %v7713 = vsel %vm7702, 0, %v7712
      %7714 = vst [vmem:[#allocation3 + $0x38] sm:$0x1] %v7713
      %v7715 = vld [vmem:[#allocation3 + $0x48] sm:$0x1]
      %v7716 = vsel %vm7702, 0, %v7715
      %7717 = vst [vmem:[#allocation3 + $0x48] sm:$0x1] %v7716
      %v7718 = vld [vmem:[#allocation3 + $0x58] sm:$0x1]
      %v7719 = vsel %vm7702, 0, %v7718
      %7720 = vst [vmem:[#allocation3 + $0x58] sm:$0x1] %v7719
      %v7721 = vld [vmem:[#allocation3 + $0x68] sm:$0x1]
      %v7722 = vsel %vm7702, 0, %v7721
      %7723 = vst [vmem:[#allocation3 + $0x68] sm:$0x1] %v7722
      %v7724 = vld [vmem:[#allocation3 + $0x78] sm:$0x1]
      %v7725 = vsel %vm7702, 0, %v7724
      %7726 = vst [vmem:[#allocation3 + $0x78] sm:$0x1] %v7725
      %v7727 = vld [vmem:[#allocation3 + $0x88] sm:$0x1]
      %v7728 = vsel %vm7702, 0, %v7727
      %7729 = vst [vmem:[#allocation3 + $0x88] sm:$0x1] %v7728
      %v7730 = vld [vmem:[#allocation3 + $0x98] sm:$0x1]
      %v7731 = vsel %vm7702, 0, %v7730
      %7732 = vst [vmem:[#allocation3 + $0x98] sm:$0x1] %v7731
      %v7733 = vld [vmem:[#allocation3 + $0xa8] sm:$0x1]
      %v7734 = vsel %vm7702, 0, %v7733
      %7735 = vst [vmem:[#allocation3 + $0xa8] sm:$0x1] %v7734
      %v7736 = vld [vmem:[#allocation3 + $0xb8] sm:$0x1]
      %v7737 = vsel %vm7702, 0, %v7736
      %7738 = vst [vmem:[#allocation3 + $0xb8] sm:$0x1] %v7737
      %v7739 = vld [vmem:[#allocation3 + $0xc8] sm:$0x1]
      %v7740 = vsel %vm7702, 0, %v7739
      %7741 = vst [vmem:[#allocation3 + $0xc8] sm:$0x1] %v7740
      %v7742 = vld [vmem:[#allocation3 + $0xd8] sm:$0x1]
      %v7743 = vsel %vm7702, 0, %v7742
      %7744 = vst [vmem:[#allocation3 + $0xd8] sm:$0x1] %v7743
      %v7745 = vld [vmem:[#allocation3 + $0xe8] sm:$0x1]
      %v7746 = vsel %vm7702, 0, %v7745
      %7747 = vst [vmem:[#allocation3 + $0xe8] sm:$0x1] %v7746
      %v7748 = vld [vmem:[#allocation3 + $0xf8] sm:$0x1]
      %v7749 = vsel %vm7702, 0, %v7748
      %7750 = vst [vmem:[#allocation3 + $0xf8] sm:$0x1] %v7749
      %v7751 = vld [vmem:[#allocation3 + $0x108] sm:$0x1]
      %v7752 = vsel %vm7702, 0, %v7751
      %7753 = vst [vmem:[#allocation3 + $0x108] sm:$0x1] %v7752
      %v7754 = vld [vmem:[#allocation3 + $0x118] sm:$0x1]
      %v7755 = vsel %vm7702, 0, %v7754
      %7756 = vst [vmem:[#allocation3 + $0x118] sm:$0x1] %v7755
      %p7757 = scmp.eq.s32.totalorder %s23, 0
      // Predicated region
      $region49: #{basic_block_forward.1} parent=47 // pred_check
        %p7758 = pneg %p7757
      $region50: #{basic_block_forward.1} parent=47 // pred_check_branch
        %7760 = sbr.rel (%p7758) target = $region52
      $region51: #{basic_block_forward.1} parent=47 // pred_region
        %7761 = vst.msk [vmem:[#allocation3] sm:$0xff] %vm607, 0
        %7762 = vst.msk [vmem:[#allocation3 + $0x8] sm:$0xff] %vm607, 0
        %s7763 = scalar_lea.vmem [#allocation3], 272
        %7764 = vst.msk [vmem:[%s7763] sm:$0xff] %vm607, 0
        %7765 = vst.msk [vmem:[%s7763 + $0x8] sm:$0xff] %vm607, 0
      $region52: #{basic_block_forward.1} parent=47 // pred_fallthru
        _
      %v7766 = vld [vmem:[#allocation3] sm:$0xff]
      %v7767 = vld [vmem:[#allocation3 + $0x10] sm:$0xff]
      %v7768 = vld [vmem:[#allocation3 + $0x20] sm:$0xff]
      %v7769 = vld [vmem:[#allocation3 + $0x30] sm:$0xff]
      %v7770 = vld [vmem:[#allocation3 + $0x40] sm:$0xff]
      %v7771 = vld [vmem:[#allocation3 + $0x50] sm:$0xff]
      %v7772 = vld [vmem:[#allocation3 + $0x60] sm:$0xff]
      %v7773 = vld [vmem:[#allocation3 + $0x70] sm:$0xff]
      %v7774 = vld [vmem:[#allocation3 + $0x80] sm:$0xff]
      %v7775 = vld [vmem:[#allocation3 + $0x90] sm:$0xff]
      %v7776 = vld [vmem:[#allocation3 + $0xa0] sm:$0xff]
      %v7777 = vld [vmem:[#allocation3 + $0xb0] sm:$0xff]
      %v7778 = vld [vmem:[#allocation3 + $0xc0] sm:$0xff]
      %v7779 = vld [vmem:[#allocation3 + $0xd0] sm:$0xff]
      %v7780 = vld [vmem:[#allocation3 + $0xe0] sm:$0xff]
      %v7781 = vld [vmem:[#allocation3 + $0xf0] sm:$0xff]
      %7782 = vst.msk [vmem:[#allocation2] sm:$0xff] %vm607, %v7766
      %7783 = vst.msk [vmem:[#allocation2 + $0x8] sm:$0xff] %vm607, %v7767
      %7784 = vst.msk [vmem:[#allocation2 + $0x10] sm:$0xff] %vm607, %v7768
      %7785 = vst.msk [vmem:[#allocation2 + $0x18] sm:$0xff] %vm607, %v7769
      %7786 = vst.msk [vmem:[#allocation2 + $0x20] sm:$0xff] %vm607, %v7770
      %7787 = vst.msk [vmem:[#allocation2 + $0x28] sm:$0xff] %vm607, %v7771
      %7788 = vst.msk [vmem:[#allocation2 + $0x30] sm:$0xff] %vm607, %v7772
      %7789 = vst.msk [vmem:[#allocation2 + $0x38] sm:$0xff] %vm607, %v7773
      %7790 = vst.msk [vmem:[#allocation2 + $0x40] sm:$0xff] %vm607, %v7774
      %7791 = vst.msk [vmem:[#allocation2 + $0x48] sm:$0xff] %vm607, %v7775
      %7792 = vst.msk [vmem:[#allocation2 + $0x50] sm:$0xff] %vm607, %v7776
      %7793 = vst.msk [vmem:[#allocation2 + $0x58] sm:$0xff] %vm607, %v7777
      %7794 = vst.msk [vmem:[#allocation2 + $0x60] sm:$0xff] %vm607, %v7778
      %7795 = vst.msk [vmem:[#allocation2 + $0x68] sm:$0xff] %vm607, %v7779
      %7796 = vst.msk [vmem:[#allocation2 + $0x70] sm:$0xff] %vm607, %v7780
      %7797 = vst.msk [vmem:[#allocation2 + $0x78] sm:$0xff] %vm607, %v7781
      %v7798 = vld [vmem:[#allocation3] sm:$0xff]
      %v7799 = vld [vmem:[#allocation3 + $0x8] sm:$0x1]
      %v7800 = vld [vmem:[#allocation3 + $0x10] sm:$0xff]
      %v7801 = vld [vmem:[#allocation3 + $0x18] sm:$0x1]
      %v7802 = vld [vmem:[#allocation3 + $0x20] sm:$0xff]
      %v7803 = vld [vmem:[#allocation3 + $0x28] sm:$0x1]
      %v7804 = vld [vmem:[#allocation3 + $0x30] sm:$0xff]
      %v7805 = vld [vmem:[#allocation3 + $0x38] sm:$0x1]
      %v7806 = vld [vmem:[#allocation3 + $0x40] sm:$0xff]
      %v7807 = vld [vmem:[#allocation3 + $0x48] sm:$0x1]
      %v7808 = vld [vmem:[#allocation3 + $0x50] sm:$0xff]
      %v7809 = vld [vmem:[#allocation3 + $0x58] sm:$0x1]
      %v7810 = vld [vmem:[#allocation3 + $0x60] sm:$0xff]
      %v7811 = vld [vmem:[#allocation3 + $0x68] sm:$0x1]
      %v7812 = vld [vmem:[#allocation3 + $0x70] sm:$0xff]
      %v7813 = vld [vmem:[#allocation3 + $0x78] sm:$0x1]
      %v7814 = vld [vmem:[#allocation3 + $0x80] sm:$0xff]
      %v7815 = vld [vmem:[#allocation3 + $0x88] sm:$0x1]
      %v7816 = vld [vmem:[#allocation3 + $0x90] sm:$0xff]
      %v7817 = vld [vmem:[#allocation3 + $0x98] sm:$0x1]
      %v7818 = vld [vmem:[#allocation3 + $0xa0] sm:$0xff]
      %v7819 = vld [vmem:[#allocation3 + $0xa8] sm:$0x1]
      %v7820 = vld [vmem:[#allocation3 + $0xb0] sm:$0xff]
      %v7821 = vld [vmem:[#allocation3 + $0xb8] sm:$0x1]
      %v7822 = vld [vmem:[#allocation3 + $0xc0] sm:$0xff]
      %v7823 = vld [vmem:[#allocation3 + $0xc8] sm:$0x1]
      %v7824 = vld [vmem:[#allocation3 + $0xd0] sm:$0xff]
      %v7825 = vld [vmem:[#allocation3 + $0xd8] sm:$0x1]
      %v7826 = vld [vmem:[#allocation3 + $0xe0] sm:$0xff]
      %v7827 = vld [vmem:[#allocation3 + $0xe8] sm:$0x1]
      %v7828 = vld [vmem:[#allocation3 + $0xf0] sm:$0xff]
      %v7829 = vld [vmem:[#allocation3 + $0xf8] sm:$0x1]
      %vm7830 = vsmask.f32 7424
      %v7832 = vshrl.u32 %v7798, 16
      %v7834 = vshll.u32 %v7798, 16
      %v7836 = vrot.slane %v7834, 1
      %v7837 = vor.u32 %v7832, %v7836
      %v7839 = vshll.u32 %v7799, 16
      %v7841 = vrot.slane %v7839, 1
      %v7842 = vsel %vm7830, %v7837, %v7841
      %v7844 = vshrl.u32 %v7800, 16
      %v7846 = vshll.u32 %v7800, 16
      %v7848 = vrot.slane %v7846, 1
      %v7849 = vor.u32 %v7844, %v7848
      %v7851 = vshll.u32 %v7801, 16
      %v7853 = vrot.slane %v7851, 1
      %v7854 = vsel %vm7830, %v7849, %v7853
      %v7856 = vshrl.u32 %v7802, 16
      %v7858 = vshll.u32 %v7802, 16
      %v7860 = vrot.slane %v7858, 1
      %v7861 = vor.u32 %v7856, %v7860
      %v7863 = vshll.u32 %v7803, 16
      %v7865 = vrot.slane %v7863, 1
      %v7866 = vsel %vm7830, %v7861, %v7865
      %v7868 = vshrl.u32 %v7804, 16
      %v7870 = vshll.u32 %v7804, 16
      %v7872 = vrot.slane %v7870, 1
      %v7873 = vor.u32 %v7868, %v7872
      %v7875 = vshll.u32 %v7805, 16
      %v7877 = vrot.slane %v7875, 1
      %v7878 = vsel %vm7830, %v7873, %v7877
      %v7880 = vshrl.u32 %v7806, 16
      %v7882 = vshll.u32 %v7806, 16
      %v7884 = vrot.slane %v7882, 1
      %v7885 = vor.u32 %v7880, %v7884
      %v7887 = vshll.u32 %v7807, 16
      %v7889 = vrot.slane %v7887, 1
      %v7890 = vsel %vm7830, %v7885, %v7889
      %v7892 = vshrl.u32 %v7808, 16
      %v7894 = vshll.u32 %v7808, 16
      %v7896 = vrot.slane %v7894, 1
      %v7897 = vor.u32 %v7892, %v7896
      %v7899 = vshll.u32 %v7809, 16
      %v7901 = vrot.slane %v7899, 1
      %v7902 = vsel %vm7830, %v7897, %v7901
      %v7904 = vshrl.u32 %v7810, 16
      %v7906 = vshll.u32 %v7810, 16
      %v7908 = vrot.slane %v7906, 1
      %v7909 = vor.u32 %v7904, %v7908
      %v7911 = vshll.u32 %v7811, 16
      %v7913 = vrot.slane %v7911, 1
      %v7914 = vsel %vm7830, %v7909, %v7913
      %v7916 = vshrl.u32 %v7812, 16
      %v7918 = vshll.u32 %v7812, 16
      %v7920 = vrot.slane %v7918, 1
      %v7921 = vor.u32 %v7916, %v7920
      %v7923 = vshll.u32 %v7813, 16
      %v7925 = vrot.slane %v7923, 1
      %v7926 = vsel %vm7830, %v7921, %v7925
      %v7928 = vshrl.u32 %v7814, 16
      %v7930 = vshll.u32 %v7814, 16
      %v7932 = vrot.slane %v7930, 1
      %v7933 = vor.u32 %v7928, %v7932
      %v7935 = vshll.u32 %v7815, 16
      %v7937 = vrot.slane %v7935, 1
      %v7938 = vsel %vm7830, %v7933, %v7937
      %v7940 = vshrl.u32 %v7816, 16
      %v7942 = vshll.u32 %v7816, 16
      %v7944 = vrot.slane %v7942, 1
      %v7945 = vor.u32 %v7940, %v7944
      %v7947 = vshll.u32 %v7817, 16
      %v7949 = vrot.slane %v7947, 1
      %v7950 = vsel %vm7830, %v7945, %v7949
      %v7952 = vshrl.u32 %v7818, 16
      %v7954 = vshll.u32 %v7818, 16
      %v7956 = vrot.slane %v7954, 1
      %v7957 = vor.u32 %v7952, %v7956
      %v7959 = vshll.u32 %v7819, 16
      %v7961 = vrot.slane %v7959, 1
      %v7962 = vsel %vm7830, %v7957, %v7961
      %v7964 = vshrl.u32 %v7820, 16
      %v7966 = vshll.u32 %v7820, 16
      %v7968 = vrot.slane %v7966, 1
      %v7969 = vor.u32 %v7964, %v7968
      %v7971 = vshll.u32 %v7821, 16
      %v7973 = vrot.slane %v7971, 1
      %v7974 = vsel %vm7830, %v7969, %v7973
      %v7976 = vshrl.u32 %v7822, 16
      %v7978 = vshll.u32 %v7822, 16
      %v7980 = vrot.slane %v7978, 1
      %v7981 = vor.u32 %v7976, %v7980
      %v7983 = vshll.u32 %v7823, 16
      %v7985 = vrot.slane %v7983, 1
      %v7986 = vsel %vm7830, %v7981, %v7985
      %v7988 = vshrl.u32 %v7824, 16
      %v7990 = vshll.u32 %v7824, 16
      %v7992 = vrot.slane %v7990, 1
      %v7993 = vor.u32 %v7988, %v7992
      %v7995 = vshll.u32 %v7825, 16
      %v7997 = vrot.slane %v7995, 1
      %v7998 = vsel %vm7830, %v7993, %v7997
      %v8000 = vshrl.u32 %v7826, 16
      %v8002 = vshll.u32 %v7826, 16
      %v8004 = vrot.slane %v8002, 1
      %v8005 = vor.u32 %v8000, %v8004
      %v8007 = vshll.u32 %v7827, 16
      %v8009 = vrot.slane %v8007, 1
      %v8010 = vsel %vm7830, %v8005, %v8009
      %v8012 = vshrl.u32 %v7828, 16
      %v8014 = vshll.u32 %v7828, 16
      %v8016 = vrot.slane %v8014, 1
      %v8017 = vor.u32 %v8012, %v8016
      %v8019 = vshll.u32 %v7829, 16
      %v8021 = vrot.slane %v8019, 1
      %v8022 = vsel %vm7830, %v8017, %v8021
      %8023 = vrot.lane.b32.xlu0 %v7842, 4
      %v8024 = vpop.permute.xlu0 %8023
      %8025 = vrot.lane.b32.xlu0 %v7854, 4
      %v8026 = vpop.permute.xlu0 %8025
      %8027 = vrot.lane.b32.xlu0 %v7866, 4
      %v8028 = vpop.permute.xlu0 %8027
      %8029 = vrot.lane.b32.xlu0 %v7878, 4
      %v8030 = vpop.permute.xlu0 %8029
      %8031 = vrot.lane.b32.xlu0 %v7890, 4
      %v8032 = vpop.permute.xlu0 %8031
      %8033 = vrot.lane.b32.xlu0 %v7902, 4
      %v8034 = vpop.permute.xlu0 %8033
      %8035 = vrot.lane.b32.xlu0 %v7914, 4
      %v8036 = vpop.permute.xlu0 %8035
      %8037 = vrot.lane.b32.xlu0 %v7926, 4
      %v8038 = vpop.permute.xlu0 %8037
      %8039 = vrot.lane.b32.xlu0 %v7938, 4
      %v8040 = vpop.permute.xlu0 %8039
      %8041 = vrot.lane.b32.xlu0 %v7950, 4
      %v8042 = vpop.permute.xlu0 %8041
      %8043 = vrot.lane.b32.xlu0 %v7962, 4
      %v8044 = vpop.permute.xlu0 %8043
      %8045 = vrot.lane.b32.xlu0 %v7974, 4
      %v8046 = vpop.permute.xlu0 %8045
      %8047 = vrot.lane.b32.xlu0 %v7986, 4
      %v8048 = vpop.permute.xlu0 %8047
      %8049 = vrot.lane.b32.xlu0 %v7998, 4
      %v8050 = vpop.permute.xlu0 %8049
      %8051 = vrot.lane.b32.xlu0 %v8010, 4
      %v8052 = vpop.permute.xlu0 %8051
      %8053 = vrot.lane.b32.xlu0 %v8022, 4
      %v8054 = vpop.permute.xlu0 %8053
      %8071 = vst.msk [vmem:[#allocation2] sm:$0xff] %vm1745, %v8024
      %8072 = vst.msk [vmem:[#allocation2 + $0x8] sm:$0xff] %vm1745, %v8026
      %8073 = vst.msk [vmem:[#allocation2 + $0x10] sm:$0xff] %vm1745, %v8028
      %8074 = vst.msk [vmem:[#allocation2 + $0x18] sm:$0xff] %vm1745, %v8030
      %8075 = vst.msk [vmem:[#allocation2 + $0x20] sm:$0xff] %vm1745, %v8032
      %8076 = vst.msk [vmem:[#allocation2 + $0x28] sm:$0xff] %vm1745, %v8034
      %8077 = vst.msk [vmem:[#allocation2 + $0x30] sm:$0xff] %vm1745, %v8036
      %8078 = vst.msk [vmem:[#allocation2 + $0x38] sm:$0xff] %vm1745, %v8038
      %8079 = vst.msk [vmem:[#allocation2 + $0x40] sm:$0xff] %vm1745, %v8040
      %8080 = vst.msk [vmem:[#allocation2 + $0x48] sm:$0xff] %vm1745, %v8042
      %8081 = vst.msk [vmem:[#allocation2 + $0x50] sm:$0xff] %vm1745, %v8044
      %8082 = vst.msk [vmem:[#allocation2 + $0x58] sm:$0xff] %vm1745, %v8046
      %8083 = vst.msk [vmem:[#allocation2 + $0x60] sm:$0xff] %vm1745, %v8048
      %8084 = vst.msk [vmem:[#allocation2 + $0x68] sm:$0xff] %vm1745, %v8050
      %8085 = vst.msk [vmem:[#allocation2 + $0x70] sm:$0xff] %vm1745, %v8052
      %8086 = vst.msk [vmem:[#allocation2 + $0x78] sm:$0xff] %vm1745, %v8054
      %v8087 = vld [vmem:[#allocation3] sm:$0xfe]
      %v8088 = vld [vmem:[#allocation3 + $0x8] sm:$0x1]
      %v8089 = vld [vmem:[#allocation3 + $0x10] sm:$0xfe]
      %v8090 = vld [vmem:[#allocation3 + $0x18] sm:$0x1]
      %v8091 = vld [vmem:[#allocation3 + $0x20] sm:$0xfe]
      %v8092 = vld [vmem:[#allocation3 + $0x28] sm:$0x1]
      %v8093 = vld [vmem:[#allocation3 + $0x30] sm:$0xfe]
      %v8094 = vld [vmem:[#allocation3 + $0x38] sm:$0x1]
      %v8095 = vld [vmem:[#allocation3 + $0x40] sm:$0xfe]
      %v8096 = vld [vmem:[#allocation3 + $0x48] sm:$0x1]
      %v8097 = vld [vmem:[#allocation3 + $0x50] sm:$0xfe]
      %v8098 = vld [vmem:[#allocation3 + $0x58] sm:$0x1]
      %v8099 = vld [vmem:[#allocation3 + $0x60] sm:$0xfe]
      %v8100 = vld [vmem:[#allocation3 + $0x68] sm:$0x1]
      %v8101 = vld [vmem:[#allocation3 + $0x70] sm:$0xfe]
      %v8102 = vld [vmem:[#allocation3 + $0x78] sm:$0x1]
      %v8103 = vld [vmem:[#allocation3 + $0x80] sm:$0xfe]
      %v8104 = vld [vmem:[#allocation3 + $0x88] sm:$0x1]
      %v8105 = vld [vmem:[#allocation3 + $0x90] sm:$0xfe]
      %v8106 = vld [vmem:[#allocation3 + $0x98] sm:$0x1]
      %v8107 = vld [vmem:[#allocation3 + $0xa0] sm:$0xfe]
      %v8108 = vld [vmem:[#allocation3 + $0xa8] sm:$0x1]
      %v8109 = vld [vmem:[#allocation3 + $0xb0] sm:$0xfe]
      %v8110 = vld [vmem:[#allocation3 + $0xb8] sm:$0x1]
      %v8111 = vld [vmem:[#allocation3 + $0xc0] sm:$0xfe]
      %v8112 = vld [vmem:[#allocation3 + $0xc8] sm:$0x1]
      %v8113 = vld [vmem:[#allocation3 + $0xd0] sm:$0xfe]
      %v8114 = vld [vmem:[#allocation3 + $0xd8] sm:$0x1]
      %v8115 = vld [vmem:[#allocation3 + $0xe0] sm:$0xfe]
      %v8116 = vld [vmem:[#allocation3 + $0xe8] sm:$0x1]
      %v8117 = vld [vmem:[#allocation3 + $0xf0] sm:$0xfe]
      %v8118 = vld [vmem:[#allocation3 + $0xf8] sm:$0x1]
      %vm8151 = vcmask 1046528
      %v8152 = vrot.slane %v8087, 1
      %v8153 = vrot.slane %v8088, 1
      %v8154 = vsel %vm8151, %v8152, %v8153
      %v8155 = vrot.slane %v8089, 1
      %v8156 = vrot.slane %v8090, 1
      %v8157 = vsel %vm8151, %v8155, %v8156
      %v8158 = vrot.slane %v8091, 1
      %v8159 = vrot.slane %v8092, 1
      %v8160 = vsel %vm8151, %v8158, %v8159
      %v8161 = vrot.slane %v8093, 1
      %v8162 = vrot.slane %v8094, 1
      %v8163 = vsel %vm8151, %v8161, %v8162
      %v8164 = vrot.slane %v8095, 1
      %v8165 = vrot.slane %v8096, 1
      %v8166 = vsel %vm8151, %v8164, %v8165
      %v8167 = vrot.slane %v8097, 1
      %v8168 = vrot.slane %v8098, 1
      %v8169 = vsel %vm8151, %v8167, %v8168
      %v8170 = vrot.slane %v8099, 1
      %v8171 = vrot.slane %v8100, 1
      %v8172 = vsel %vm8151, %v8170, %v8171
      %v8173 = vrot.slane %v8101, 1
      %v8174 = vrot.slane %v8102, 1
      %v8175 = vsel %vm8151, %v8173, %v8174
      %v8176 = vrot.slane %v8103, 1
      %v8177 = vrot.slane %v8104, 1
      %v8178 = vsel %vm8151, %v8176, %v8177
      %v8179 = vrot.slane %v8105, 1
      %v8180 = vrot.slane %v8106, 1
      %v8181 = vsel %vm8151, %v8179, %v8180
      %v8182 = vrot.slane %v8107, 1
      %v8183 = vrot.slane %v8108, 1
      %v8184 = vsel %vm8151, %v8182, %v8183
      %v8185 = vrot.slane %v8109, 1
      %v8186 = vrot.slane %v8110, 1
      %v8187 = vsel %vm8151, %v8185, %v8186
      %v8188 = vrot.slane %v8111, 1
      %v8189 = vrot.slane %v8112, 1
      %v8190 = vsel %vm8151, %v8188, %v8189
      %v8191 = vrot.slane %v8113, 1
      %v8192 = vrot.slane %v8114, 1
      %v8193 = vsel %vm8151, %v8191, %v8192
      %v8194 = vrot.slane %v8115, 1
      %v8195 = vrot.slane %v8116, 1
      %v8196 = vsel %vm8151, %v8194, %v8195
      %v8197 = vrot.slane %v8117, 1
      %v8198 = vrot.slane %v8118, 1
      %v8199 = vsel %vm8151, %v8197, %v8198
      %8200 = vrot.lane.b32.xlu0 %v8154, 8
      %v8201 = vpop.permute.xlu0 %8200
      %8202 = vrot.lane.b32.xlu0 %v8157, 8
      %v8203 = vpop.permute.xlu0 %8202
      %8204 = vrot.lane.b32.xlu0 %v8160, 8
      %v8205 = vpop.permute.xlu0 %8204
      %8206 = vrot.lane.b32.xlu0 %v8163, 8
      %v8207 = vpop.permute.xlu0 %8206
      %8208 = vrot.lane.b32.xlu0 %v8166, 8
      %v8209 = vpop.permute.xlu0 %8208
      %8210 = vrot.lane.b32.xlu0 %v8169, 8
      %v8211 = vpop.permute.xlu0 %8210
      %8212 = vrot.lane.b32.xlu0 %v8172, 8
      %v8213 = vpop.permute.xlu0 %8212
      %8214 = vrot.lane.b32.xlu0 %v8175, 8
      %v8215 = vpop.permute.xlu0 %8214
      %8216 = vrot.lane.b32.xlu0 %v8178, 8
      %v8217 = vpop.permute.xlu0 %8216
      %8218 = vrot.lane.b32.xlu0 %v8181, 8
      %v8219 = vpop.permute.xlu0 %8218
      %8220 = vrot.lane.b32.xlu0 %v8184, 8
      %v8221 = vpop.permute.xlu0 %8220
      %8222 = vrot.lane.b32.xlu0 %v8187, 8
      %v8223 = vpop.permute.xlu0 %8222
      %8224 = vrot.lane.b32.xlu0 %v8190, 8
      %v8225 = vpop.permute.xlu0 %8224
      %8226 = vrot.lane.b32.xlu0 %v8193, 8
      %v8227 = vpop.permute.xlu0 %8226
      %8228 = vrot.lane.b32.xlu0 %v8196, 8
      %v8229 = vpop.permute.xlu0 %8228
      %8230 = vrot.lane.b32.xlu0 %v8199, 8
      %v8231 = vpop.permute.xlu0 %8230
      %8248 = vst.msk [vmem:[#allocation2] sm:$0xff] %vm2415, %v8201
      %8249 = vst.msk [vmem:[#allocation2 + $0x8] sm:$0xff] %vm2415, %v8203
      %8250 = vst.msk [vmem:[#allocation2 + $0x10] sm:$0xff] %vm2415, %v8205
      %8251 = vst.msk [vmem:[#allocation2 + $0x18] sm:$0xff] %vm2415, %v8207
      %8252 = vst.msk [vmem:[#allocation2 + $0x20] sm:$0xff] %vm2415, %v8209
      %8253 = vst.msk [vmem:[#allocation2 + $0x28] sm:$0xff] %vm2415, %v8211
      %8254 = vst.msk [vmem:[#allocation2 + $0x30] sm:$0xff] %vm2415, %v8213
      %8255 = vst.msk [vmem:[#allocation2 + $0x38] sm:$0xff] %vm2415, %v8215
      %8256 = vst.msk [vmem:[#allocation2 + $0x40] sm:$0xff] %vm2415, %v8217
      %8257 = vst.msk [vmem:[#allocation2 + $0x48] sm:$0xff] %vm2415, %v8219
      %8258 = vst.msk [vmem:[#allocation2 + $0x50] sm:$0xff] %vm2415, %v8221
      %8259 = vst.msk [vmem:[#allocation2 + $0x58] sm:$0xff] %vm2415, %v8223
      %8260 = vst.msk [vmem:[#allocation2 + $0x60] sm:$0xff] %vm2415, %v8225
      %8261 = vst.msk [vmem:[#allocation2 + $0x68] sm:$0xff] %vm2415, %v8227
      %8262 = vst.msk [vmem:[#allocation2 + $0x70] sm:$0xff] %vm2415, %v8229
      %8263 = vst.msk [vmem:[#allocation2 + $0x78] sm:$0xff] %vm2415, %v8231
      %s8264 = scalar_lea.vmem [#allocation3], 16
      %v8265 = vld [vmem:[%s8264] sm:$0xff]
      %v8266 = vld [vmem:[%s8264 + $0x10] sm:$0xff]
      %v8267 = vld [vmem:[%s8264 + $0x20] sm:$0xff]
      %v8268 = vld [vmem:[%s8264 + $0x30] sm:$0xff]
      %v8269 = vld [vmem:[%s8264 + $0x40] sm:$0xff]
      %v8270 = vld [vmem:[%s8264 + $0x50] sm:$0xff]
      %v8271 = vld [vmem:[%s8264 + $0x60] sm:$0xff]
      %v8272 = vld [vmem:[%s8264 + $0x70] sm:$0xff]
      %v8273 = vld [vmem:[%s8264 + $0x80] sm:$0xff]
      %v8274 = vld [vmem:[%s8264 + $0x90] sm:$0xff]
      %v8275 = vld [vmem:[%s8264 + $0xa0] sm:$0xff]
      %v8276 = vld [vmem:[%s8264 + $0xb0] sm:$0xff]
      %v8277 = vld [vmem:[%s8264 + $0xc0] sm:$0xff]
      %v8278 = vld [vmem:[%s8264 + $0xd0] sm:$0xff]
      %v8279 = vld [vmem:[%s8264 + $0xe0] sm:$0xff]
      %v8280 = vld [vmem:[%s8264 + $0xf0] sm:$0xff]
      %8297 = vrot.lane.b32.xlu0 %v8265, 12
      %v8298 = vpop.permute.xlu0 %8297
      %8299 = vrot.lane.b32.xlu0 %v8266, 12
      %v8300 = vpop.permute.xlu0 %8299
      %8301 = vrot.lane.b32.xlu0 %v8267, 12
      %v8302 = vpop.permute.xlu0 %8301
      %8303 = vrot.lane.b32.xlu0 %v8268, 12
      %v8304 = vpop.permute.xlu0 %8303
      %8305 = vrot.lane.b32.xlu0 %v8269, 12
      %v8306 = vpop.permute.xlu0 %8305
      %8307 = vrot.lane.b32.xlu0 %v8270, 12
      %v8308 = vpop.permute.xlu0 %8307
      %8309 = vrot.lane.b32.xlu0 %v8271, 12
      %v8310 = vpop.permute.xlu0 %8309
      %8311 = vrot.lane.b32.xlu0 %v8272, 12
      %v8312 = vpop.permute.xlu0 %8311
      %8313 = vrot.lane.b32.xlu0 %v8273, 12
      %v8314 = vpop.permute.xlu0 %8313
      %8315 = vrot.lane.b32.xlu0 %v8274, 12
      %v8316 = vpop.permute.xlu0 %8315
      %8317 = vrot.lane.b32.xlu0 %v8275, 12
      %v8318 = vpop.permute.xlu0 %8317
      %8319 = vrot.lane.b32.xlu0 %v8276, 12
      %v8320 = vpop.permute.xlu0 %8319
      %8321 = vrot.lane.b32.xlu0 %v8277, 12
      %v8322 = vpop.permute.xlu0 %8321
      %8323 = vrot.lane.b32.xlu0 %v8278, 12
      %v8324 = vpop.permute.xlu0 %8323
      %8325 = vrot.lane.b32.xlu0 %v8279, 12
      %v8326 = vpop.permute.xlu0 %8325
      %8327 = vrot.lane.b32.xlu0 %v8280, 12
      %v8328 = vpop.permute.xlu0 %8327
      %8345 = vst.msk [vmem:[#allocation2] sm:$0xff] %vm2813, %v8298
      %8346 = vst.msk [vmem:[#allocation2 + $0x8] sm:$0xff] %vm2813, %v8300
      %8347 = vst.msk [vmem:[#allocation2 + $0x10] sm:$0xff] %vm2813, %v8302
      %8348 = vst.msk [vmem:[#allocation2 + $0x18] sm:$0xff] %vm2813, %v8304
      %8349 = vst.msk [vmem:[#allocation2 + $0x20] sm:$0xff] %vm2813, %v8306
      %8350 = vst.msk [vmem:[#allocation2 + $0x28] sm:$0xff] %vm2813, %v8308
      %8351 = vst.msk [vmem:[#allocation2 + $0x30] sm:$0xff] %vm2813, %v8310
      %8352 = vst.msk [vmem:[#allocation2 + $0x38] sm:$0xff] %vm2813, %v8312
      %8353 = vst.msk [vmem:[#allocation2 + $0x40] sm:$0xff] %vm2813, %v8314
      %8354 = vst.msk [vmem:[#allocation2 + $0x48] sm:$0xff] %vm2813, %v8316
      %8355 = vst.msk [vmem:[#allocation2 + $0x50] sm:$0xff] %vm2813, %v8318
      %8356 = vst.msk [vmem:[#allocation2 + $0x58] sm:$0xff] %vm2813, %v8320
      %8357 = vst.msk [vmem:[#allocation2 + $0x60] sm:$0xff] %vm2813, %v8322
      %8358 = vst.msk [vmem:[#allocation2 + $0x68] sm:$0xff] %vm2813, %v8324
      %8359 = vst.msk [vmem:[#allocation2 + $0x70] sm:$0xff] %vm2813, %v8326
      %8360 = vst.msk [vmem:[#allocation2 + $0x78] sm:$0xff] %vm2813, %v8328
      %v8361 = vld [vmem:[%s8264] sm:$0xff]
      %v8362 = vld [vmem:[%s8264 + $0x8] sm:$0x1]
      %v8363 = vld [vmem:[%s8264 + $0x10] sm:$0xff]
      %v8364 = vld [vmem:[%s8264 + $0x18] sm:$0x1]
      %v8365 = vld [vmem:[%s8264 + $0x20] sm:$0xff]
      %v8366 = vld [vmem:[%s8264 + $0x28] sm:$0x1]
      %v8367 = vld [vmem:[%s8264 + $0x30] sm:$0xff]
      %v8368 = vld [vmem:[%s8264 + $0x38] sm:$0x1]
      %v8369 = vld [vmem:[%s8264 + $0x40] sm:$0xff]
      %v8370 = vld [vmem:[%s8264 + $0x48] sm:$0x1]
      %v8371 = vld [vmem:[%s8264 + $0x50] sm:$0xff]
      %v8372 = vld [vmem:[%s8264 + $0x58] sm:$0x1]
      %v8373 = vld [vmem:[%s8264 + $0x60] sm:$0xff]
      %v8374 = vld [vmem:[%s8264 + $0x68] sm:$0x1]
      %v8375 = vld [vmem:[%s8264 + $0x70] sm:$0xff]
      %v8376 = vld [vmem:[%s8264 + $0x78] sm:$0x1]
      %v8377 = vld [vmem:[%s8264 + $0x80] sm:$0xff]
      %v8378 = vld [vmem:[%s8264 + $0x88] sm:$0x1]
      %v8379 = vld [vmem:[%s8264 + $0x90] sm:$0xff]
      %v8380 = vld [vmem:[%s8264 + $0x98] sm:$0x1]
      %v8381 = vld [vmem:[%s8264 + $0xa0] sm:$0xff]
      %v8382 = vld [vmem:[%s8264 + $0xa8] sm:$0x1]
      %v8383 = vld [vmem:[%s8264 + $0xb0] sm:$0xff]
      %v8384 = vld [vmem:[%s8264 + $0xb8] sm:$0x1]
      %v8385 = vld [vmem:[%s8264 + $0xc0] sm:$0xff]
      %v8386 = vld [vmem:[%s8264 + $0xc8] sm:$0x1]
      %v8387 = vld [vmem:[%s8264 + $0xd0] sm:$0xff]
      %v8388 = vld [vmem:[%s8264 + $0xd8] sm:$0x1]
      %v8389 = vld [vmem:[%s8264 + $0xe0] sm:$0xff]
      %v8390 = vld [vmem:[%s8264 + $0xe8] sm:$0x1]
      %v8391 = vld [vmem:[%s8264 + $0xf0] sm:$0xff]
      %v8392 = vld [vmem:[%s8264 + $0xf8] sm:$0x1]
      %v8394 = vshrl.u32 %v8361, 16
      %v8396 = vshll.u32 %v8361, 16
      %v8398 = vrot.slane %v8396, 1
      %v8399 = vor.u32 %v8394, %v8398
      %v8401 = vshll.u32 %v8362, 16
      %v8403 = vrot.slane %v8401, 1
      %v8404 = vsel %vm7830, %v8399, %v8403
      %v8406 = vshrl.u32 %v8363, 16
      %v8408 = vshll.u32 %v8363, 16
      %v8410 = vrot.slane %v8408, 1
      %v8411 = vor.u32 %v8406, %v8410
      %v8413 = vshll.u32 %v8364, 16
      %v8415 = vrot.slane %v8413, 1
      %v8416 = vsel %vm7830, %v8411, %v8415
      %v8418 = vshrl.u32 %v8365, 16
      %v8420 = vshll.u32 %v8365, 16
      %v8422 = vrot.slane %v8420, 1
      %v8423 = vor.u32 %v8418, %v8422
      %v8425 = vshll.u32 %v8366, 16
      %v8427 = vrot.slane %v8425, 1
      %v8428 = vsel %vm7830, %v8423, %v8427
      %v8430 = vshrl.u32 %v8367, 16
      %v8432 = vshll.u32 %v8367, 16
      %v8434 = vrot.slane %v8432, 1
      %v8435 = vor.u32 %v8430, %v8434
      %v8437 = vshll.u32 %v8368, 16
      %v8439 = vrot.slane %v8437, 1
      %v8440 = vsel %vm7830, %v8435, %v8439
      %v8442 = vshrl.u32 %v8369, 16
      %v8444 = vshll.u32 %v8369, 16
      %v8446 = vrot.slane %v8444, 1
      %v8447 = vor.u32 %v8442, %v8446
      %v8449 = vshll.u32 %v8370, 16
      %v8451 = vrot.slane %v8449, 1
      %v8452 = vsel %vm7830, %v8447, %v8451
      %v8454 = vshrl.u32 %v8371, 16
      %v8456 = vshll.u32 %v8371, 16
      %v8458 = vrot.slane %v8456, 1
      %v8459 = vor.u32 %v8454, %v8458
      %v8461 = vshll.u32 %v8372, 16
      %v8463 = vrot.slane %v8461, 1
      %v8464 = vsel %vm7830, %v8459, %v8463
      %v8466 = vshrl.u32 %v8373, 16
      %v8468 = vshll.u32 %v8373, 16
      %v8470 = vrot.slane %v8468, 1
      %v8471 = vor.u32 %v8466, %v8470
      %v8473 = vshll.u32 %v8374, 16
      %v8475 = vrot.slane %v8473, 1
      %v8476 = vsel %vm7830, %v8471, %v8475
      %v8478 = vshrl.u32 %v8375, 16
      %v8480 = vshll.u32 %v8375, 16
      %v8482 = vrot.slane %v8480, 1
      %v8483 = vor.u32 %v8478, %v8482
      %v8485 = vshll.u32 %v8376, 16
      %v8487 = vrot.slane %v8485, 1
      %v8488 = vsel %vm7830, %v8483, %v8487
      %v8490 = vshrl.u32 %v8377, 16
      %v8492 = vshll.u32 %v8377, 16
      %v8494 = vrot.slane %v8492, 1
      %v8495 = vor.u32 %v8490, %v8494
      %v8497 = vshll.u32 %v8378, 16
      %v8499 = vrot.slane %v8497, 1
      %v8500 = vsel %vm7830, %v8495, %v8499
      %v8502 = vshrl.u32 %v8379, 16
      %v8504 = vshll.u32 %v8379, 16
      %v8506 = vrot.slane %v8504, 1
      %v8507 = vor.u32 %v8502, %v8506
      %v8509 = vshll.u32 %v8380, 16
      %v8511 = vrot.slane %v8509, 1
      %v8512 = vsel %vm7830, %v8507, %v8511
      %v8514 = vshrl.u32 %v8381, 16
      %v8516 = vshll.u32 %v8381, 16
      %v8518 = vrot.slane %v8516, 1
      %v8519 = vor.u32 %v8514, %v8518
      %v8521 = vshll.u32 %v8382, 16
      %v8523 = vrot.slane %v8521, 1
      %v8524 = vsel %vm7830, %v8519, %v8523
      %v8526 = vshrl.u32 %v8383, 16
      %v8528 = vshll.u32 %v8383, 16
      %v8530 = vrot.slane %v8528, 1
      %v8531 = vor.u32 %v8526, %v8530
      %v8533 = vshll.u32 %v8384, 16
      %v8535 = vrot.slane %v8533, 1
      %v8536 = vsel %vm7830, %v8531, %v8535
      %v8538 = vshrl.u32 %v8385, 16
      %v8540 = vshll.u32 %v8385, 16
      %v8542 = vrot.slane %v8540, 1
      %v8543 = vor.u32 %v8538, %v8542
      %v8545 = vshll.u32 %v8386, 16
      %v8547 = vrot.slane %v8545, 1
      %v8548 = vsel %vm7830, %v8543, %v8547
      %v8550 = vshrl.u32 %v8387, 16
      %v8552 = vshll.u32 %v8387, 16
      %v8554 = vrot.slane %v8552, 1
      %v8555 = vor.u32 %v8550, %v8554
      %v8557 = vshll.u32 %v8388, 16
      %v8559 = vrot.slane %v8557, 1
      %v8560 = vsel %vm7830, %v8555, %v8559
      %v8562 = vshrl.u32 %v8389, 16
      %v8564 = vshll.u32 %v8389, 16
      %v8566 = vrot.slane %v8564, 1
      %v8567 = vor.u32 %v8562, %v8566
      %v8569 = vshll.u32 %v8390, 16
      %v8571 = vrot.slane %v8569, 1
      %v8572 = vsel %vm7830, %v8567, %v8571
      %v8574 = vshrl.u32 %v8391, 16
      %v8576 = vshll.u32 %v8391, 16
      %v8578 = vrot.slane %v8576, 1
      %v8579 = vor.u32 %v8574, %v8578
      %v8581 = vshll.u32 %v8392, 16
      %v8583 = vrot.slane %v8581, 1
      %v8584 = vsel %vm7830, %v8579, %v8583
      %8585 = vrot.lane.b32.xlu0 %v8404, 16
      %v8586 = vpop.permute.xlu0 %8585
      %8587 = vrot.lane.b32.xlu0 %v8416, 16
      %v8588 = vpop.permute.xlu0 %8587
      %8589 = vrot.lane.b32.xlu0 %v8428, 16
      %v8590 = vpop.permute.xlu0 %8589
      %8591 = vrot.lane.b32.xlu0 %v8440, 16
      %v8592 = vpop.permute.xlu0 %8591
      %8593 = vrot.lane.b32.xlu0 %v8452, 16
      %v8594 = vpop.permute.xlu0 %8593
      %8595 = vrot.lane.b32.xlu0 %v8464, 16
      %v8596 = vpop.permute.xlu0 %8595
      %8597 = vrot.lane.b32.xlu0 %v8476, 16
      %v8598 = vpop.permute.xlu0 %8597
      %8599 = vrot.lane.b32.xlu0 %v8488, 16
      %v8600 = vpop.permute.xlu0 %8599
      %8601 = vrot.lane.b32.xlu0 %v8500, 16
      %v8602 = vpop.permute.xlu0 %8601
      %8603 = vrot.lane.b32.xlu0 %v8512, 16
      %v8604 = vpop.permute.xlu0 %8603
      %8605 = vrot.lane.b32.xlu0 %v8524, 16
      %v8606 = vpop.permute.xlu0 %8605
      %8607 = vrot.lane.b32.xlu0 %v8536, 16
      %v8608 = vpop.permute.xlu0 %8607
      %8609 = vrot.lane.b32.xlu0 %v8548, 16
      %v8610 = vpop.permute.xlu0 %8609
      %8611 = vrot.lane.b32.xlu0 %v8560, 16
      %v8612 = vpop.permute.xlu0 %8611
      %8613 = vrot.lane.b32.xlu0 %v8572, 16
      %v8614 = vpop.permute.xlu0 %8613
      %8615 = vrot.lane.b32.xlu0 %v8584, 16
      %v8616 = vpop.permute.xlu0 %8615
      %8633 = vst.msk [vmem:[#allocation2] sm:$0xff] %vm3948, %v8586
      %8634 = vst.msk [vmem:[#allocation2 + $0x8] sm:$0xff] %vm3948, %v8588
      %8635 = vst.msk [vmem:[#allocation2 + $0x10] sm:$0xff] %vm3948, %v8590
      %8636 = vst.msk [vmem:[#allocation2 + $0x18] sm:$0xff] %vm3948, %v8592
      %8637 = vst.msk [vmem:[#allocation2 + $0x20] sm:$0xff] %vm3948, %v8594
      %8638 = vst.msk [vmem:[#allocation2 + $0x28] sm:$0xff] %vm3948, %v8596
      %8639 = vst.msk [vmem:[#allocation2 + $0x30] sm:$0xff] %vm3948, %v8598
      %8640 = vst.msk [vmem:[#allocation2 + $0x38] sm:$0xff] %vm3948, %v8600
      %8641 = vst.msk [vmem:[#allocation2 + $0x40] sm:$0xff] %vm3948, %v8602
      %8642 = vst.msk [vmem:[#allocation2 + $0x48] sm:$0xff] %vm3948, %v8604
      %8643 = vst.msk [vmem:[#allocation2 + $0x50] sm:$0xff] %vm3948, %v8606
      %8644 = vst.msk [vmem:[#allocation2 + $0x58] sm:$0xff] %vm3948, %v8608
      %8645 = vst.msk [vmem:[#allocation2 + $0x60] sm:$0xff] %vm3948, %v8610
      %8646 = vst.msk [vmem:[#allocation2 + $0x68] sm:$0xff] %vm3948, %v8612
      %8647 = vst.msk [vmem:[#allocation2 + $0x70] sm:$0xff] %vm3948, %v8614
      %8648 = vst.msk [vmem:[#allocation2 + $0x78] sm:$0xff] %vm3948, %v8616
      %v8649 = vld [vmem:[%s8264] sm:$0xfe]
      %v8650 = vld [vmem:[%s8264 + $0x8] sm:$0x1]
      %v8651 = vld [vmem:[%s8264 + $0x10] sm:$0xfe]
      %v8652 = vld [vmem:[%s8264 + $0x18] sm:$0x1]
      %v8653 = vld [vmem:[%s8264 + $0x20] sm:$0xfe]
      %v8654 = vld [vmem:[%s8264 + $0x28] sm:$0x1]
      %v8655 = vld [vmem:[%s8264 + $0x30] sm:$0xfe]
      %v8656 = vld [vmem:[%s8264 + $0x38] sm:$0x1]
      %v8657 = vld [vmem:[%s8264 + $0x40] sm:$0xfe]
      %v8658 = vld [vmem:[%s8264 + $0x48] sm:$0x1]
      %v8659 = vld [vmem:[%s8264 + $0x50] sm:$0xfe]
      %v8660 = vld [vmem:[%s8264 + $0x58] sm:$0x1]
      %v8661 = vld [vmem:[%s8264 + $0x60] sm:$0xfe]
      %v8662 = vld [vmem:[%s8264 + $0x68] sm:$0x1]
      %v8663 = vld [vmem:[%s8264 + $0x70] sm:$0xfe]
      %v8664 = vld [vmem:[%s8264 + $0x78] sm:$0x1]
      %v8665 = vld [vmem:[%s8264 + $0x80] sm:$0xfe]
      %v8666 = vld [vmem:[%s8264 + $0x88] sm:$0x1]
      %v8667 = vld [vmem:[%s8264 + $0x90] sm:$0xfe]
      %v8668 = vld [vmem:[%s8264 + $0x98] sm:$0x1]
      %v8669 = vld [vmem:[%s8264 + $0xa0] sm:$0xfe]
      %v8670 = vld [vmem:[%s8264 + $0xa8] sm:$0x1]
      %v8671 = vld [vmem:[%s8264 + $0xb0] sm:$0xfe]
      %v8672 = vld [vmem:[%s8264 + $0xb8] sm:$0x1]
      %v8673 = vld [vmem:[%s8264 + $0xc0] sm:$0xfe]
      %v8674 = vld [vmem:[%s8264 + $0xc8] sm:$0x1]
      %v8675 = vld [vmem:[%s8264 + $0xd0] sm:$0xfe]
      %v8676 = vld [vmem:[%s8264 + $0xd8] sm:$0x1]
      %v8677 = vld [vmem:[%s8264 + $0xe0] sm:$0xfe]
      %v8678 = vld [vmem:[%s8264 + $0xe8] sm:$0x1]
      %v8679 = vld [vmem:[%s8264 + $0xf0] sm:$0xfe]
      %v8680 = vld [vmem:[%s8264 + $0xf8] sm:$0x1]
      %v8713 = vrot.slane %v8649, 1
      %v8714 = vrot.slane %v8650, 1
      %v8715 = vsel %vm8151, %v8713, %v8714
      %v8716 = vrot.slane %v8651, 1
      %v8717 = vrot.slane %v8652, 1
      %v8718 = vsel %vm8151, %v8716, %v8717
      %v8719 = vrot.slane %v8653, 1
      %v8720 = vrot.slane %v8654, 1
      %v8721 = vsel %vm8151, %v8719, %v8720
      %v8722 = vrot.slane %v8655, 1
      %v8723 = vrot.slane %v8656, 1
      %v8724 = vsel %vm8151, %v8722, %v8723
      %v8725 = vrot.slane %v8657, 1
      %v8726 = vrot.slane %v8658, 1
      %v8727 = vsel %vm8151, %v8725, %v8726
      %v8728 = vrot.slane %v8659, 1
      %v8729 = vrot.slane %v8660, 1
      %v8730 = vsel %vm8151, %v8728, %v8729
      %v8731 = vrot.slane %v8661, 1
      %v8732 = vrot.slane %v8662, 1
      %v8733 = vsel %vm8151, %v8731, %v8732
      %v8734 = vrot.slane %v8663, 1
      %v8735 = vrot.slane %v8664, 1
      %v8736 = vsel %vm8151, %v8734, %v8735
      %v8737 = vrot.slane %v8665, 1
      %v8738 = vrot.slane %v8666, 1
      %v8739 = vsel %vm8151, %v8737, %v8738
      %v8740 = vrot.slane %v8667, 1
      %v8741 = vrot.slane %v8668, 1
      %v8742 = vsel %vm8151, %v8740, %v8741
      %v8743 = vrot.slane %v8669, 1
      %v8744 = vrot.slane %v8670, 1
      %v8745 = vsel %vm8151, %v8743, %v8744
      %v8746 = vrot.slane %v8671, 1
      %v8747 = vrot.slane %v8672, 1
      %v8748 = vsel %vm8151, %v8746, %v8747
      %v8749 = vrot.slane %v8673, 1
      %v8750 = vrot.slane %v8674, 1
      %v8751 = vsel %vm8151, %v8749, %v8750
      %v8752 = vrot.slane %v8675, 1
      %v8753 = vrot.slane %v8676, 1
      %v8754 = vsel %vm8151, %v8752, %v8753
      %v8755 = vrot.slane %v8677, 1
      %v8756 = vrot.slane %v8678, 1
      %v8757 = vsel %vm8151, %v8755, %v8756
      %v8758 = vrot.slane %v8679, 1
      %v8759 = vrot.slane %v8680, 1
      %v8760 = vsel %vm8151, %v8758, %v8759
      %8761 = vrot.lane.b32.xlu0 %v8715, 20
      %v8762 = vpop.permute.xlu0 %8761
      %8763 = vrot.lane.b32.xlu0 %v8718, 20
      %v8764 = vpop.permute.xlu0 %8763
      %8765 = vrot.lane.b32.xlu0 %v8721, 20
      %v8766 = vpop.permute.xlu0 %8765
      %8767 = vrot.lane.b32.xlu0 %v8724, 20
      %v8768 = vpop.permute.xlu0 %8767
      %8769 = vrot.lane.b32.xlu0 %v8727, 20
      %v8770 = vpop.permute.xlu0 %8769
      %8771 = vrot.lane.b32.xlu0 %v8730, 20
      %v8772 = vpop.permute.xlu0 %8771
      %8773 = vrot.lane.b32.xlu0 %v8733, 20
      %v8774 = vpop.permute.xlu0 %8773
      %8775 = vrot.lane.b32.xlu0 %v8736, 20
      %v8776 = vpop.permute.xlu0 %8775
      %8777 = vrot.lane.b32.xlu0 %v8739, 20
      %v8778 = vpop.permute.xlu0 %8777
      %8779 = vrot.lane.b32.xlu0 %v8742, 20
      %v8780 = vpop.permute.xlu0 %8779
      %8781 = vrot.lane.b32.xlu0 %v8745, 20
      %v8782 = vpop.permute.xlu0 %8781
      %8783 = vrot.lane.b32.xlu0 %v8748, 20
      %v8784 = vpop.permute.xlu0 %8783
      %8785 = vrot.lane.b32.xlu0 %v8751, 20
      %v8786 = vpop.permute.xlu0 %8785
      %8787 = vrot.lane.b32.xlu0 %v8754, 20
      %v8788 = vpop.permute.xlu0 %8787
      %8789 = vrot.lane.b32.xlu0 %v8757, 20
      %v8790 = vpop.permute.xlu0 %8789
      %8791 = vrot.lane.b32.xlu0 %v8760, 20
      %v8792 = vpop.permute.xlu0 %8791
      %8809 = vst.msk [vmem:[#allocation2] sm:$0xff] %vm4615, %v8762
      %8810 = vst.msk [vmem:[#allocation2 + $0x8] sm:$0xff] %vm4615, %v8764
      %8811 = vst.msk [vmem:[#allocation2 + $0x10] sm:$0xff] %vm4615, %v8766
      %8812 = vst.msk [vmem:[#allocation2 + $0x18] sm:$0xff] %vm4615, %v8768
      %8813 = vst.msk [vmem:[#allocation2 + $0x20] sm:$0xff] %vm4615, %v8770
      %8814 = vst.msk [vmem:[#allocation2 + $0x28] sm:$0xff] %vm4615, %v8772
      %8815 = vst.msk [vmem:[#allocation2 + $0x30] sm:$0xff] %vm4615, %v8774
      %8816 = vst.msk [vmem:[#allocation2 + $0x38] sm:$0xff] %vm4615, %v8776
      %8817 = vst.msk [vmem:[#allocation2 + $0x40] sm:$0xff] %vm4615, %v8778
      %8818 = vst.msk [vmem:[#allocation2 + $0x48] sm:$0xff] %vm4615, %v8780
      %8819 = vst.msk [vmem:[#allocation2 + $0x50] sm:$0xff] %vm4615, %v8782
      %8820 = vst.msk [vmem:[#allocation2 + $0x58] sm:$0xff] %vm4615, %v8784
      %8821 = vst.msk [vmem:[#allocation2 + $0x60] sm:$0xff] %vm4615, %v8786
      %8822 = vst.msk [vmem:[#allocation2 + $0x68] sm:$0xff] %vm4615, %v8788
      %8823 = vst.msk [vmem:[#allocation2 + $0x70] sm:$0xff] %vm4615, %v8790
      %8824 = vst.msk [vmem:[#allocation2 + $0x78] sm:$0xff] %vm4615, %v8792
      %s8825 = scalar_lea.vmem [#allocation3], 32
      %v8826 = vld [vmem:[%s8825] sm:$0xff]
      %v8827 = vld [vmem:[%s8825 + $0x10] sm:$0xff]
      %v8828 = vld [vmem:[%s8825 + $0x20] sm:$0xff]
      %v8829 = vld [vmem:[%s8825 + $0x30] sm:$0xff]
      %v8830 = vld [vmem:[%s8825 + $0x40] sm:$0xff]
      %v8831 = vld [vmem:[%s8825 + $0x50] sm:$0xff]
      %v8832 = vld [vmem:[%s8825 + $0x60] sm:$0xff]
      %v8833 = vld [vmem:[%s8825 + $0x70] sm:$0xff]
      %v8834 = vld [vmem:[%s8825 + $0x80] sm:$0xff]
      %v8835 = vld [vmem:[%s8825 + $0x90] sm:$0xff]
      %v8836 = vld [vmem:[%s8825 + $0xa0] sm:$0xff]
      %v8837 = vld [vmem:[%s8825 + $0xb0] sm:$0xff]
      %v8838 = vld [vmem:[%s8825 + $0xc0] sm:$0xff]
      %v8839 = vld [vmem:[%s8825 + $0xd0] sm:$0xff]
      %v8840 = vld [vmem:[%s8825 + $0xe0] sm:$0xff]
      %v8841 = vld [vmem:[%s8825 + $0xf0] sm:$0xff]
      %8858 = vrot.lane.b32.xlu0 %v8826, 24
      %v8859 = vpop.permute.xlu0 %8858
      %8860 = vrot.lane.b32.xlu0 %v8827, 24
      %v8861 = vpop.permute.xlu0 %8860
      %8862 = vrot.lane.b32.xlu0 %v8828, 24
      %v8863 = vpop.permute.xlu0 %8862
      %8864 = vrot.lane.b32.xlu0 %v8829, 24
      %v8865 = vpop.permute.xlu0 %8864
      %8866 = vrot.lane.b32.xlu0 %v8830, 24
      %v8867 = vpop.permute.xlu0 %8866
      %8868 = vrot.lane.b32.xlu0 %v8831, 24
      %v8869 = vpop.permute.xlu0 %8868
      %8870 = vrot.lane.b32.xlu0 %v8832, 24
      %v8871 = vpop.permute.xlu0 %8870
      %8872 = vrot.lane.b32.xlu0 %v8833, 24
      %v8873 = vpop.permute.xlu0 %8872
      %8874 = vrot.lane.b32.xlu0 %v8834, 24
      %v8875 = vpop.permute.xlu0 %8874
      %8876 = vrot.lane.b32.xlu0 %v8835, 24
      %v8877 = vpop.permute.xlu0 %8876
      %8878 = vrot.lane.b32.xlu0 %v8836, 24
      %v8879 = vpop.permute.xlu0 %8878
      %8880 = vrot.lane.b32.xlu0 %v8837, 24
      %v8881 = vpop.permute.xlu0 %8880
      %8882 = vrot.lane.b32.xlu0 %v8838, 24
      %v8883 = vpop.permute.xlu0 %8882
      %8884 = vrot.lane.b32.xlu0 %v8839, 24
      %v8885 = vpop.permute.xlu0 %8884
      %8886 = vrot.lane.b32.xlu0 %v8840, 24
      %v8887 = vpop.permute.xlu0 %8886
      %8888 = vrot.lane.b32.xlu0 %v8841, 24
      %v8889 = vpop.permute.xlu0 %8888
      %8906 = vst.msk [vmem:[#allocation2] sm:$0xff] %vm5013, %v8859
      %8907 = vst.msk [vmem:[#allocation2 + $0x8] sm:$0xff] %vm5013, %v8861
      %8908 = vst.msk [vmem:[#allocation2 + $0x10] sm:$0xff] %vm5013, %v8863
      %8909 = vst.msk [vmem:[#allocation2 + $0x18] sm:$0xff] %vm5013, %v8865
      %8910 = vst.msk [vmem:[#allocation2 + $0x20] sm:$0xff] %vm5013, %v8867
      %8911 = vst.msk [vmem:[#allocation2 + $0x28] sm:$0xff] %vm5013, %v8869
      %8912 = vst.msk [vmem:[#allocation2 + $0x30] sm:$0xff] %vm5013, %v8871
      %8913 = vst.msk [vmem:[#allocation2 + $0x38] sm:$0xff] %vm5013, %v8873
      %8914 = vst.msk [vmem:[#allocation2 + $0x40] sm:$0xff] %vm5013, %v8875
      %8915 = vst.msk [vmem:[#allocation2 + $0x48] sm:$0xff] %vm5013, %v8877
      %8916 = vst.msk [vmem:[#allocation2 + $0x50] sm:$0xff] %vm5013, %v8879
      %8917 = vst.msk [vmem:[#allocation2 + $0x58] sm:$0xff] %vm5013, %v8881
      %8918 = vst.msk [vmem:[#allocation2 + $0x60] sm:$0xff] %vm5013, %v8883
      %8919 = vst.msk [vmem:[#allocation2 + $0x68] sm:$0xff] %vm5013, %v8885
      %8920 = vst.msk [vmem:[#allocation2 + $0x70] sm:$0xff] %vm5013, %v8887
      %8921 = vst.msk [vmem:[#allocation2 + $0x78] sm:$0xff] %vm5013, %v8889
      %v8922 = vld [vmem:[%s8825] sm:$0xff]
      %v8923 = vld [vmem:[%s8825 + $0x8] sm:$0x1]
      %v8924 = vld [vmem:[%s8825 + $0x10] sm:$0xff]
      %v8925 = vld [vmem:[%s8825 + $0x18] sm:$0x1]
      %v8926 = vld [vmem:[%s8825 + $0x20] sm:$0xff]
      %v8927 = vld [vmem:[%s8825 + $0x28] sm:$0x1]
      %v8928 = vld [vmem:[%s8825 + $0x30] sm:$0xff]
      %v8929 = vld [vmem:[%s8825 + $0x38] sm:$0x1]
      %v8930 = vld [vmem:[%s8825 + $0x40] sm:$0xff]
      %v8931 = vld [vmem:[%s8825 + $0x48] sm:$0x1]
      %v8932 = vld [vmem:[%s8825 + $0x50] sm:$0xff]
      %v8933 = vld [vmem:[%s8825 + $0x58] sm:$0x1]
      %v8934 = vld [vmem:[%s8825 + $0x60] sm:$0xff]
      %v8935 = vld [vmem:[%s8825 + $0x68] sm:$0x1]
      %v8936 = vld [vmem:[%s8825 + $0x70] sm:$0xff]
      %v8937 = vld [vmem:[%s8825 + $0x78] sm:$0x1]
      %v8938 = vld [vmem:[%s8825 + $0x80] sm:$0xff]
      %v8939 = vld [vmem:[%s8825 + $0x88] sm:$0x1]
      %v8940 = vld [vmem:[%s8825 + $0x90] sm:$0xff]
      %v8941 = vld [vmem:[%s8825 + $0x98] sm:$0x1]
      %v8942 = vld [vmem:[%s8825 + $0xa0] sm:$0xff]
      %v8943 = vld [vmem:[%s8825 + $0xa8] sm:$0x1]
      %v8944 = vld [vmem:[%s8825 + $0xb0] sm:$0xff]
      %v8945 = vld [vmem:[%s8825 + $0xb8] sm:$0x1]
      %v8946 = vld [vmem:[%s8825 + $0xc0] sm:$0xff]
      %v8947 = vld [vmem:[%s8825 + $0xc8] sm:$0x1]
      %v8948 = vld [vmem:[%s8825 + $0xd0] sm:$0xff]
      %v8949 = vld [vmem:[%s8825 + $0xd8] sm:$0x1]
      %v8950 = vld [vmem:[%s8825 + $0xe0] sm:$0xff]
      %v8951 = vld [vmem:[%s8825 + $0xe8] sm:$0x1]
      %v8952 = vld [vmem:[%s8825 + $0xf0] sm:$0xff]
      %v8953 = vld [vmem:[%s8825 + $0xf8] sm:$0x1]
      %v8955 = vshrl.u32 %v8922, 16
      %v8957 = vshll.u32 %v8922, 16
      %v8959 = vrot.slane %v8957, 1
      %v8960 = vor.u32 %v8955, %v8959
      %v8962 = vshll.u32 %v8923, 16
      %v8964 = vrot.slane %v8962, 1
      %v8965 = vsel %vm7830, %v8960, %v8964
      %v8967 = vshrl.u32 %v8924, 16
      %v8969 = vshll.u32 %v8924, 16
      %v8971 = vrot.slane %v8969, 1
      %v8972 = vor.u32 %v8967, %v8971
      %v8974 = vshll.u32 %v8925, 16
      %v8976 = vrot.slane %v8974, 1
      %v8977 = vsel %vm7830, %v8972, %v8976
      %v8979 = vshrl.u32 %v8926, 16
      %v8981 = vshll.u32 %v8926, 16
      %v8983 = vrot.slane %v8981, 1
      %v8984 = vor.u32 %v8979, %v8983
      %v8986 = vshll.u32 %v8927, 16
      %v8988 = vrot.slane %v8986, 1
      %v8989 = vsel %vm7830, %v8984, %v8988
      %v8991 = vshrl.u32 %v8928, 16
      %v8993 = vshll.u32 %v8928, 16
      %v8995 = vrot.slane %v8993, 1
      %v8996 = vor.u32 %v8991, %v8995
      %v8998 = vshll.u32 %v8929, 16
      %v9000 = vrot.slane %v8998, 1
      %v9001 = vsel %vm7830, %v8996, %v9000
      %v9003 = vshrl.u32 %v8930, 16
      %v9005 = vshll.u32 %v8930, 16
      %v9007 = vrot.slane %v9005, 1
      %v9008 = vor.u32 %v9003, %v9007
      %v9010 = vshll.u32 %v8931, 16
      %v9012 = vrot.slane %v9010, 1
      %v9013 = vsel %vm7830, %v9008, %v9012
      %v9015 = vshrl.u32 %v8932, 16
      %v9017 = vshll.u32 %v8932, 16
      %v9019 = vrot.slane %v9017, 1
      %v9020 = vor.u32 %v9015, %v9019
      %v9022 = vshll.u32 %v8933, 16
      %v9024 = vrot.slane %v9022, 1
      %v9025 = vsel %vm7830, %v9020, %v9024
      %v9027 = vshrl.u32 %v8934, 16
      %v9029 = vshll.u32 %v8934, 16
      %v9031 = vrot.slane %v9029, 1
      %v9032 = vor.u32 %v9027, %v9031
      %v9034 = vshll.u32 %v8935, 16
      %v9036 = vrot.slane %v9034, 1
      %v9037 = vsel %vm7830, %v9032, %v9036
      %v9039 = vshrl.u32 %v8936, 16
      %v9041 = vshll.u32 %v8936, 16
      %v9043 = vrot.slane %v9041, 1
      %v9044 = vor.u32 %v9039, %v9043
      %v9046 = vshll.u32 %v8937, 16
      %v9048 = vrot.slane %v9046, 1
      %v9049 = vsel %vm7830, %v9044, %v9048
      %v9051 = vshrl.u32 %v8938, 16
      %v9053 = vshll.u32 %v8938, 16
      %v9055 = vrot.slane %v9053, 1
      %v9056 = vor.u32 %v9051, %v9055
      %v9058 = vshll.u32 %v8939, 16
      %v9060 = vrot.slane %v9058, 1
      %v9061 = vsel %vm7830, %v9056, %v9060
      %v9063 = vshrl.u32 %v8940, 16
      %v9065 = vshll.u32 %v8940, 16
      %v9067 = vrot.slane %v9065, 1
      %v9068 = vor.u32 %v9063, %v9067
      %v9070 = vshll.u32 %v8941, 16
      %v9072 = vrot.slane %v9070, 1
      %v9073 = vsel %vm7830, %v9068, %v9072
      %v9075 = vshrl.u32 %v8942, 16
      %v9077 = vshll.u32 %v8942, 16
      %v9079 = vrot.slane %v9077, 1
      %v9080 = vor.u32 %v9075, %v9079
      %v9082 = vshll.u32 %v8943, 16
      %v9084 = vrot.slane %v9082, 1
      %v9085 = vsel %vm7830, %v9080, %v9084
      %v9087 = vshrl.u32 %v8944, 16
      %v9089 = vshll.u32 %v8944, 16
      %v9091 = vrot.slane %v9089, 1
      %v9092 = vor.u32 %v9087, %v9091
      %v9094 = vshll.u32 %v8945, 16
      %v9096 = vrot.slane %v9094, 1
      %v9097 = vsel %vm7830, %v9092, %v9096
      %v9099 = vshrl.u32 %v8946, 16
      %v9101 = vshll.u32 %v8946, 16
      %v9103 = vrot.slane %v9101, 1
      %v9104 = vor.u32 %v9099, %v9103
      %v9106 = vshll.u32 %v8947, 16
      %v9108 = vrot.slane %v9106, 1
      %v9109 = vsel %vm7830, %v9104, %v9108
      %v9111 = vshrl.u32 %v8948, 16
      %v9113 = vshll.u32 %v8948, 16
      %v9115 = vrot.slane %v9113, 1
      %v9116 = vor.u32 %v9111, %v9115
      %v9118 = vshll.u32 %v8949, 16
      %v9120 = vrot.slane %v9118, 1
      %v9121 = vsel %vm7830, %v9116, %v9120
      %v9123 = vshrl.u32 %v8950, 16
      %v9125 = vshll.u32 %v8950, 16
      %v9127 = vrot.slane %v9125, 1
      %v9128 = vor.u32 %v9123, %v9127
      %v9130 = vshll.u32 %v8951, 16
      %v9132 = vrot.slane %v9130, 1
      %v9133 = vsel %vm7830, %v9128, %v9132
      %v9135 = vshrl.u32 %v8952, 16
      %v9137 = vshll.u32 %v8952, 16
      %v9139 = vrot.slane %v9137, 1
      %v9140 = vor.u32 %v9135, %v9139
      %v9142 = vshll.u32 %v8953, 16
      %v9144 = vrot.slane %v9142, 1
      %v9145 = vsel %vm7830, %v9140, %v9144
      %9146 = vrot.lane.b32.xlu0 %v8965, 28
      %v9147 = vpop.permute.xlu0 %9146
      %9148 = vrot.lane.b32.xlu0 %v8977, 28
      %v9149 = vpop.permute.xlu0 %9148
      %9150 = vrot.lane.b32.xlu0 %v8989, 28
      %v9151 = vpop.permute.xlu0 %9150
      %9152 = vrot.lane.b32.xlu0 %v9001, 28
      %v9153 = vpop.permute.xlu0 %9152
      %9154 = vrot.lane.b32.xlu0 %v9013, 28
      %v9155 = vpop.permute.xlu0 %9154
      %9156 = vrot.lane.b32.xlu0 %v9025, 28
      %v9157 = vpop.permute.xlu0 %9156
      %9158 = vrot.lane.b32.xlu0 %v9037, 28
      %v9159 = vpop.permute.xlu0 %9158
      %9160 = vrot.lane.b32.xlu0 %v9049, 28
      %v9161 = vpop.permute.xlu0 %9160
      %9162 = vrot.lane.b32.xlu0 %v9061, 28
      %v9163 = vpop.permute.xlu0 %9162
      %9164 = vrot.lane.b32.xlu0 %v9073, 28
      %v9165 = vpop.permute.xlu0 %9164
      %9166 = vrot.lane.b32.xlu0 %v9085, 28
      %v9167 = vpop.permute.xlu0 %9166
      %9168 = vrot.lane.b32.xlu0 %v9097, 28
      %v9169 = vpop.permute.xlu0 %9168
      %9170 = vrot.lane.b32.xlu0 %v9109, 28
      %v9171 = vpop.permute.xlu0 %9170
      %9172 = vrot.lane.b32.xlu0 %v9121, 28
      %v9173 = vpop.permute.xlu0 %9172
      %9174 = vrot.lane.b32.xlu0 %v9133, 28
      %v9175 = vpop.permute.xlu0 %9174
      %9176 = vrot.lane.b32.xlu0 %v9145, 28
      %v9177 = vpop.permute.xlu0 %9176
      %9194 = vst.msk [vmem:[#allocation2] sm:$0xff] %vm6148, %v9147
      %9195 = vst.msk [vmem:[#allocation2 + $0x8] sm:$0xff] %vm6148, %v9149
      %9196 = vst.msk [vmem:[#allocation2 + $0x10] sm:$0xff] %vm6148, %v9151
      %9197 = vst.msk [vmem:[#allocation2 + $0x18] sm:$0xff] %vm6148, %v9153
      %9198 = vst.msk [vmem:[#allocation2 + $0x20] sm:$0xff] %vm6148, %v9155
      %9199 = vst.msk [vmem:[#allocation2 + $0x28] sm:$0xff] %vm6148, %v9157
      %9200 = vst.msk [vmem:[#allocation2 + $0x30] sm:$0xff] %vm6148, %v9159
      %9201 = vst.msk [vmem:[#allocation2 + $0x38] sm:$0xff] %vm6148, %v9161
      %9202 = vst.msk [vmem:[#allocation2 + $0x40] sm:$0xff] %vm6148, %v9163
      %9203 = vst.msk [vmem:[#allocation2 + $0x48] sm:$0xff] %vm6148, %v9165
      %9204 = vst.msk [vmem:[#allocation2 + $0x50] sm:$0xff] %vm6148, %v9167
      %9205 = vst.msk [vmem:[#allocation2 + $0x58] sm:$0xff] %vm6148, %v9169
      %9206 = vst.msk [vmem:[#allocation2 + $0x60] sm:$0xff] %vm6148, %v9171
      %9207 = vst.msk [vmem:[#allocation2 + $0x68] sm:$0xff] %vm6148, %v9173
      %9208 = vst.msk [vmem:[#allocation2 + $0x70] sm:$0xff] %vm6148, %v9175
      %9209 = vst.msk [vmem:[#allocation2 + $0x78] sm:$0xff] %vm6148, %v9177
      %v9210 = vld [vmem:[%s8825] sm:$0xfe]
      %v9211 = vld [vmem:[%s8825 + $0x8] sm:$0x1]
      %v9212 = vld [vmem:[%s8825 + $0x10] sm:$0xfe]
      %v9213 = vld [vmem:[%s8825 + $0x18] sm:$0x1]
      %v9214 = vld [vmem:[%s8825 + $0x20] sm:$0xfe]
      %v9215 = vld [vmem:[%s8825 + $0x28] sm:$0x1]
      %v9216 = vld [vmem:[%s8825 + $0x30] sm:$0xfe]
      %v9217 = vld [vmem:[%s8825 + $0x38] sm:$0x1]
      %v9218 = vld [vmem:[%s8825 + $0x40] sm:$0xfe]
      %v9219 = vld [vmem:[%s8825 + $0x48] sm:$0x1]
      %v9220 = vld [vmem:[%s8825 + $0x50] sm:$0xfe]
      %v9221 = vld [vmem:[%s8825 + $0x58] sm:$0x1]
      %v9222 = vld [vmem:[%s8825 + $0x60] sm:$0xfe]
      %v9223 = vld [vmem:[%s8825 + $0x68] sm:$0x1]
      %v9224 = vld [vmem:[%s8825 + $0x70] sm:$0xfe]
      %v9225 = vld [vmem:[%s8825 + $0x78] sm:$0x1]
      %v9226 = vld [vmem:[%s8825 + $0x80] sm:$0xfe]
      %v9227 = vld [vmem:[%s8825 + $0x88] sm:$0x1]
      %v9228 = vld [vmem:[%s8825 + $0x90] sm:$0xfe]
      %v9229 = vld [vmem:[%s8825 + $0x98] sm:$0x1]
      %v9230 = vld [vmem:[%s8825 + $0xa0] sm:$0xfe]
      %v9231 = vld [vmem:[%s8825 + $0xa8] sm:$0x1]
      %v9232 = vld [vmem:[%s8825 + $0xb0] sm:$0xfe]
      %v9233 = vld [vmem:[%s8825 + $0xb8] sm:$0x1]
      %v9234 = vld [vmem:[%s8825 + $0xc0] sm:$0xfe]
      %v9235 = vld [vmem:[%s8825 + $0xc8] sm:$0x1]
      %v9236 = vld [vmem:[%s8825 + $0xd0] sm:$0xfe]
      %v9237 = vld [vmem:[%s8825 + $0xd8] sm:$0x1]
      %v9238 = vld [vmem:[%s8825 + $0xe0] sm:$0xfe]
      %v9239 = vld [vmem:[%s8825 + $0xe8] sm:$0x1]
      %v9240 = vld [vmem:[%s8825 + $0xf0] sm:$0xfe]
      %v9241 = vld [vmem:[%s8825 + $0xf8] sm:$0x1]
      %v9274 = vrot.slane %v9210, 1
      %v9275 = vrot.slane %v9211, 1
      %v9276 = vsel %vm8151, %v9274, %v9275
      %v9277 = vrot.slane %v9212, 1
      %v9278 = vrot.slane %v9213, 1
      %v9279 = vsel %vm8151, %v9277, %v9278
      %v9280 = vrot.slane %v9214, 1
      %v9281 = vrot.slane %v9215, 1
      %v9282 = vsel %vm8151, %v9280, %v9281
      %v9283 = vrot.slane %v9216, 1
      %v9284 = vrot.slane %v9217, 1
      %v9285 = vsel %vm8151, %v9283, %v9284
      %v9286 = vrot.slane %v9218, 1
      %v9287 = vrot.slane %v9219, 1
      %v9288 = vsel %vm8151, %v9286, %v9287
      %v9289 = vrot.slane %v9220, 1
      %v9290 = vrot.slane %v9221, 1
      %v9291 = vsel %vm8151, %v9289, %v9290
      %v9292 = vrot.slane %v9222, 1
      %v9293 = vrot.slane %v9223, 1
      %v9294 = vsel %vm8151, %v9292, %v9293
      %v9295 = vrot.slane %v9224, 1
      %v9296 = vrot.slane %v9225, 1
      %v9297 = vsel %vm8151, %v9295, %v9296
      %v9298 = vrot.slane %v9226, 1
      %v9299 = vrot.slane %v9227, 1
      %v9300 = vsel %vm8151, %v9298, %v9299
      %v9301 = vrot.slane %v9228, 1
      %v9302 = vrot.slane %v9229, 1
      %v9303 = vsel %vm8151, %v9301, %v9302
      %v9304 = vrot.slane %v9230, 1
      %v9305 = vrot.slane %v9231, 1
      %v9306 = vsel %vm8151, %v9304, %v9305
      %v9307 = vrot.slane %v9232, 1
      %v9308 = vrot.slane %v9233, 1
      %v9309 = vsel %vm8151, %v9307, %v9308
      %v9310 = vrot.slane %v9234, 1
      %v9311 = vrot.slane %v9235, 1
      %v9312 = vsel %vm8151, %v9310, %v9311
      %v9313 = vrot.slane %v9236, 1
      %v9314 = vrot.slane %v9237, 1
      %v9315 = vsel %vm8151, %v9313, %v9314
      %v9316 = vrot.slane %v9238, 1
      %v9317 = vrot.slane %v9239, 1
      %v9318 = vsel %vm8151, %v9316, %v9317
      %v9319 = vrot.slane %v9240, 1
      %v9320 = vrot.slane %v9241, 1
      %v9321 = vsel %vm8151, %v9319, %v9320
      %9322 = vrot.lane.b32.xlu0 %v9276, 32
      %v9323 = vpop.permute.xlu0 %9322
      %9324 = vrot.lane.b32.xlu0 %v9279, 32
      %v9325 = vpop.permute.xlu0 %9324
      %9326 = vrot.lane.b32.xlu0 %v9282, 32
      %v9327 = vpop.permute.xlu0 %9326
      %9328 = vrot.lane.b32.xlu0 %v9285, 32
      %v9329 = vpop.permute.xlu0 %9328
      %9330 = vrot.lane.b32.xlu0 %v9288, 32
      %v9331 = vpop.permute.xlu0 %9330
      %9332 = vrot.lane.b32.xlu0 %v9291, 32
      %v9333 = vpop.permute.xlu0 %9332
      %9334 = vrot.lane.b32.xlu0 %v9294, 32
      %v9335 = vpop.permute.xlu0 %9334
      %9336 = vrot.lane.b32.xlu0 %v9297, 32
      %v9337 = vpop.permute.xlu0 %9336
      %9338 = vrot.lane.b32.xlu0 %v9300, 32
      %v9339 = vpop.permute.xlu0 %9338
      %9340 = vrot.lane.b32.xlu0 %v9303, 32
      %v9341 = vpop.permute.xlu0 %9340
      %9342 = vrot.lane.b32.xlu0 %v9306, 32
      %v9343 = vpop.permute.xlu0 %9342
      %9344 = vrot.lane.b32.xlu0 %v9309, 32
      %v9345 = vpop.permute.xlu0 %9344
      %9346 = vrot.lane.b32.xlu0 %v9312, 32
      %v9347 = vpop.permute.xlu0 %9346
      %9348 = vrot.lane.b32.xlu0 %v9315, 32
      %v9349 = vpop.permute.xlu0 %9348
      %9350 = vrot.lane.b32.xlu0 %v9318, 32
      %v9351 = vpop.permute.xlu0 %9350
      %9352 = vrot.lane.b32.xlu0 %v9321, 32
      %v9353 = vpop.permute.xlu0 %9352
      %9370 = vst.msk [vmem:[#allocation2] sm:$0xff] %vm6815, %v9323
      %9371 = vst.msk [vmem:[#allocation2 + $0x8] sm:$0xff] %vm6815, %v9325
      %9372 = vst.msk [vmem:[#allocation2 + $0x10] sm:$0xff] %vm6815, %v9327
      %9373 = vst.msk [vmem:[#allocation2 + $0x18] sm:$0xff] %vm6815, %v9329
      %9374 = vst.msk [vmem:[#allocation2 + $0x20] sm:$0xff] %vm6815, %v9331
      %9375 = vst.msk [vmem:[#allocation2 + $0x28] sm:$0xff] %vm6815, %v9333
      %9376 = vst.msk [vmem:[#allocation2 + $0x30] sm:$0xff] %vm6815, %v9335
      %9377 = vst.msk [vmem:[#allocation2 + $0x38] sm:$0xff] %vm6815, %v9337
      %9378 = vst.msk [vmem:[#allocation2 + $0x40] sm:$0xff] %vm6815, %v9339
      %9379 = vst.msk [vmem:[#allocation2 + $0x48] sm:$0xff] %vm6815, %v9341
      %9380 = vst.msk [vmem:[#allocation2 + $0x50] sm:$0xff] %vm6815, %v9343
      %9381 = vst.msk [vmem:[#allocation2 + $0x58] sm:$0xff] %vm6815, %v9345
      %9382 = vst.msk [vmem:[#allocation2 + $0x60] sm:$0xff] %vm6815, %v9347
      %9383 = vst.msk [vmem:[#allocation2 + $0x68] sm:$0xff] %vm6815, %v9349
      %9384 = vst.msk [vmem:[#allocation2 + $0x70] sm:$0xff] %vm6815, %v9351
      %9385 = vst.msk [vmem:[#allocation2 + $0x78] sm:$0xff] %vm6815, %v9353
      %v9386 = vld [vmem:[#allocation2] sm:$0xff]
      %v9387 = vld [vmem:[#allocation2 + $0x8] sm:$0xff]
      %v9388 = vld [vmem:[#allocation2 + $0x10] sm:$0xff]
      %v9389 = vld [vmem:[#allocation2 + $0x18] sm:$0xff]
      %v9390 = vld [vmem:[#allocation2 + $0x20] sm:$0xff]
      %v9391 = vld [vmem:[#allocation2 + $0x28] sm:$0xff]
      %v9392 = vld [vmem:[#allocation2 + $0x30] sm:$0xff]
      %v9393 = vld [vmem:[#allocation2 + $0x38] sm:$0xff]
      %v9394 = vld [vmem:[#allocation2 + $0x40] sm:$0xff]
      %v9395 = vld [vmem:[#allocation2 + $0x48] sm:$0xff]
      %v9396 = vld [vmem:[#allocation2 + $0x50] sm:$0xff]
      %v9397 = vld [vmem:[#allocation2 + $0x58] sm:$0xff]
      %v9398 = vld [vmem:[#allocation2 + $0x60] sm:$0xff]
      %v9399 = vld [vmem:[#allocation2 + $0x68] sm:$0xff]
      %v9400 = vld [vmem:[#allocation2 + $0x70] sm:$0xff]
      %v9401 = vld [vmem:[#allocation2 + $0x78] sm:$0xff]
      %v9402 = vld [vmem:[%s4] sm:$0xf]
      %v9403 = vld [vmem:[%s4 + $0x4] sm:$0xf]
      %v9404 = vld [vmem:[%s4 + $0x8] sm:$0xf]
      %v9405 = vld [vmem:[%s4 + $0xc] sm:$0xf]
      %v9406 = vld [vmem:[%s4 + $0x10] sm:$0x3]
      %v9412 = vunpack.c.l.b16 %v9402
      %v9413 = vunpack.c.l.b16 %v9403
      %v9414 = vunpack.c.l.b16 %v9404
      %v9415 = vunpack.c.l.b16 %v9405
      %v9416 = vunpack.c.l.b16 %v9406
      %v9417 = vpack.c.b16 %v9413, %v9412
      %v9418 = vpack.c.b16 %v9415, %v9414
      %v9419 = vpack.c.b16 %v9416, %v9416
      %v9423 = vsel %vm6908, %v9386, 0
      %v9426 = vsel %vm6908, %v9387, 0
      %v9429 = vsel %vm6908, %v9388, 0
      %v9432 = vsel %vm6908, %v9389, 0
      %v9435 = vsel %vm6908, %v9390, 0
      %v9438 = vsel %vm6908, %v9391, 0
      %v9441 = vsel %vm6908, %v9392, 0
      %v9444 = vsel %vm6908, %v9393, 0
      %v9447 = vsel %vm6908, %v9394, 0
      %v9450 = vsel %vm6908, %v9395, 0
      %v9453 = vsel %vm6908, %v9396, 0
      %v9456 = vsel %vm6908, %v9397, 0
      %v9459 = vsel %vm6908, %v9398, 0
      %v9462 = vsel %vm6908, %v9399, 0
      %v9465 = vsel %vm6908, %v9400, 0
      %v9468 = vsel %vm6908, %v9401, 0
      %v9471 = vsel %vm7017, %v9419, 0
      %9473 = vmatprep.subr.bf16.mxu0 0
      %9474 = vmatpush1.bf16.msra.mxu0 %v9417
      %9475 = vmatprep.subr.bf16.mxu0 0
      %9476 = vmatpush1.bf16.msra.mxu0 %v9418
      %9477 = vmatprep.subr.bf16.mxu0 0
      %9478 = vmatpush1.bf16.msra.mxu0 %v9471
      %9479 = vmatprep.subr.bf16.mxu0 0
      %9480 = vmatpush1.bf16.msra.mxu0 0
      %9481 = vmatprep.subr.bf16.mxu0 0
      %9482 = vmatpush1.bf16.msra.mxu0 0
      %9483 = vmatprep.subr.bf16.mxu0 0
      %9484 = vmatpush1.bf16.msra.mxu0 0
      %9485 = vmatprep.subr.bf16.mxu0 0
      %9486 = vmatpush1.bf16.msra.mxu0 0
      %9487 = vmatprep.subr.bf16.mxu0 0
      %9488 = vmatpush1.bf16.msra.mxu0 0
      %9489 = vmatprep.subr.bf16.mxu0 0
      %9490 = vmatpush1.bf16.msra.mxu0 0
      %9491 = vmatprep.subr.bf16.mxu0 0
      %9492 = vmatpush1.bf16.msra.mxu0 0
      %9493 = vmatprep.subr.bf16.mxu0 0
      %9494 = vmatpush1.bf16.msra.mxu0 0
      %9495 = vmatprep.subr.bf16.mxu0 0
      %9496 = vmatpush1.bf16.msra.mxu0 0
      %9497 = vmatprep.subr.bf16.mxu0 0
      %9498 = vmatpush1.bf16.msra.mxu0 0
      %9499 = vmatprep.subr.bf16.mxu0 0
      %9500 = vmatpush1.bf16.msra.mxu0 0
      %9501 = vmatprep.subr.bf16.mxu0 0
      %9502 = vmatpush1.bf16.msra.mxu0 0
      %9503 = vmatprep.subr.bf16.mxu0 0
      %9504 = vmatpush1.bf16.msra.mxu0 0
      %9505 = vmatprep.mubr.bf16.mxu0 0
      %9506 = vmatmul.mubr.bf16.gmra.mrb[0].mxu0 %v9423
      %v9507 = vpop.f32.mrb[0].mxu0
      %v9508 = vadd.f32 0.0, %v9507
      %v9509 = vpop.f32.mrb[0].mxu0
      %v9510 = vpop.f32.mrb[0].mxu0
      %v9511 = vadd.f32 0.0, %v9510
      %v9512 = vpop.f32.mrb[0].mxu0
      %9513 = vmatprep.mubr.bf16.mxu0 0
      %9514 = vmatmul.mubr.bf16.gmra.mrb[0].mxu0 %v9426
      %v9515 = vpop.f32.mrb[0].mxu0
      %v9516 = vadd.f32 0.0, %v9515
      %v9517 = vpop.f32.mrb[0].mxu0
      %v9518 = vpop.f32.mrb[0].mxu0
      %v9519 = vadd.f32 0.0, %v9518
      %v9520 = vpop.f32.mrb[0].mxu0
      %9521 = vmatprep.mubr.bf16.mxu0 0
      %9522 = vmatmul.mubr.bf16.gmra.mrb[0].mxu0 %v9429
      %v9523 = vpop.f32.mrb[0].mxu0
      %v9524 = vadd.f32 0.0, %v9523
      %v9525 = vpop.f32.mrb[0].mxu0
      %v9526 = vpop.f32.mrb[0].mxu0
      %v9527 = vadd.f32 0.0, %v9526
      %v9528 = vpop.f32.mrb[0].mxu0
      %9529 = vmatprep.mubr.bf16.mxu0 0
      %9530 = vmatmul.mubr.bf16.gmra.mrb[0].mxu0 %v9432
      %v9531 = vpop.f32.mrb[0].mxu0
      %v9532 = vadd.f32 0.0, %v9531
      %v9533 = vpop.f32.mrb[0].mxu0
      %v9534 = vpop.f32.mrb[0].mxu0
      %v9535 = vadd.f32 0.0, %v9534
      %v9536 = vpop.f32.mrb[0].mxu0
      %9537 = vmatprep.mubr.bf16.mxu0 0
      %9538 = vmatmul.mubr.bf16.gmra.mrb[0].mxu0 %v9435
      %v9539 = vpop.f32.mrb[0].mxu0
      %v9540 = vadd.f32 0.0, %v9539
      %v9541 = vpop.f32.mrb[0].mxu0
      %v9542 = vpop.f32.mrb[0].mxu0
      %v9543 = vadd.f32 0.0, %v9542
      %v9544 = vpop.f32.mrb[0].mxu0
      %9545 = vmatprep.mubr.bf16.mxu0 0
      %9546 = vmatmul.mubr.bf16.gmra.mrb[0].mxu0 %v9438
      %v9547 = vpop.f32.mrb[0].mxu0
      %v9548 = vadd.f32 0.0, %v9547
      %v9549 = vpop.f32.mrb[0].mxu0
      %v9550 = vpop.f32.mrb[0].mxu0
      %v9551 = vadd.f32 0.0, %v9550
      %v9552 = vpop.f32.mrb[0].mxu0
      %9553 = vmatprep.mubr.bf16.mxu0 0
      %9554 = vmatmul.mubr.bf16.gmra.mrb[0].mxu0 %v9441
      %v9555 = vpop.f32.mrb[0].mxu0
      %v9556 = vadd.f32 0.0, %v9555
      %v9557 = vpop.f32.mrb[0].mxu0
      %v9558 = vpop.f32.mrb[0].mxu0
      %v9559 = vadd.f32 0.0, %v9558
      %v9560 = vpop.f32.mrb[0].mxu0
      %9561 = vmatprep.mubr.bf16.mxu0 0
      %9562 = vmatmul.mubr.bf16.gmra.mrb[0].mxu0 %v9444
      %v9563 = vpop.f32.mrb[0].mxu0
      %v9564 = vadd.f32 0.0, %v9563
      %v9565 = vpop.f32.mrb[0].mxu0
      %v9566 = vpop.f32.mrb[0].mxu0
      %v9567 = vadd.f32 0.0, %v9566
      %v9568 = vpop.f32.mrb[0].mxu0
      %9569 = vmatprep.mubr.bf16.mxu0 0
      %9570 = vmatmul.mubr.bf16.gmra.mrb[0].mxu0 %v9447
      %v9571 = vpop.f32.mrb[0].mxu0
      %v9572 = vadd.f32 0.0, %v9571
      %v9573 = vpop.f32.mrb[0].mxu0
      %v9574 = vpop.f32.mrb[0].mxu0
      %v9575 = vadd.f32 0.0, %v9574
      %v9576 = vpop.f32.mrb[0].mxu0
      %9577 = vmatprep.mubr.bf16.mxu0 0
      %9578 = vmatmul.mubr.bf16.gmra.mrb[0].mxu0 %v9450
      %v9579 = vpop.f32.mrb[0].mxu0
      %v9580 = vadd.f32 0.0, %v9579
      %v9581 = vpop.f32.mrb[0].mxu0
      %v9582 = vpop.f32.mrb[0].mxu0
      %v9583 = vadd.f32 0.0, %v9582
      %v9584 = vpop.f32.mrb[0].mxu0
      %9585 = vmatprep.mubr.bf16.mxu0 0
      %9586 = vmatmul.mubr.bf16.gmra.mrb[0].mxu0 %v9453
      %v9587 = vpop.f32.mrb[0].mxu0
      %v9588 = vadd.f32 0.0, %v9587
      %v9589 = vpop.f32.mrb[0].mxu0
      %v9590 = vpop.f32.mrb[0].mxu0
      %v9591 = vadd.f32 0.0, %v9590
      %v9592 = vpop.f32.mrb[0].mxu0
      %9593 = vmatprep.mubr.bf16.mxu0 0
      %9594 = vmatmul.mubr.bf16.gmra.mrb[0].mxu0 %v9456
      %v9595 = vpop.f32.mrb[0].mxu0
      %v9596 = vadd.f32 0.0, %v9595
      %v9597 = vpop.f32.mrb[0].mxu0
      %v9598 = vpop.f32.mrb[0].mxu0
      %v9599 = vadd.f32 0.0, %v9598
      %v9600 = vpop.f32.mrb[0].mxu0
      %9601 = vmatprep.mubr.bf16.mxu0 0
      %9602 = vmatmul.mubr.bf16.gmra.mrb[0].mxu0 %v9459
      %v9603 = vpop.f32.mrb[0].mxu0
      %v9604 = vadd.f32 0.0, %v9603
      %v9605 = vpop.f32.mrb[0].mxu0
      %v9606 = vpop.f32.mrb[0].mxu0
      %v9607 = vadd.f32 0.0, %v9606
      %v9608 = vpop.f32.mrb[0].mxu0
      %9609 = vmatprep.mubr.bf16.mxu0 0
      %9610 = vmatmul.mubr.bf16.gmra.mrb[0].mxu0 %v9462
      %v9611 = vpop.f32.mrb[0].mxu0
      %v9612 = vadd.f32 0.0, %v9611
      %v9613 = vpop.f32.mrb[0].mxu0
      %v9614 = vpop.f32.mrb[0].mxu0
      %v9615 = vadd.f32 0.0, %v9614
      %v9616 = vpop.f32.mrb[0].mxu0
      %9617 = vmatprep.mubr.bf16.mxu0 0
      %9618 = vmatmul.mubr.bf16.gmra.mrb[0].mxu0 %v9465
      %v9619 = vpop.f32.mrb[0].mxu0
      %v9620 = vadd.f32 0.0, %v9619
      %v9621 = vpop.f32.mrb[0].mxu0
      %v9622 = vpop.f32.mrb[0].mxu0
      %v9623 = vadd.f32 0.0, %v9622
      %v9624 = vpop.f32.mrb[0].mxu0
      %9625 = vmatprep.mubr.bf16.mxu0 0
      %9626 = vmatmul.mubr.bf16.gmra.mrb[0].mxu0 %v9468
      %v9627 = vpop.f32.mrb[0].mxu0
      %v9628 = vadd.f32 0.0, %v9627
      %v9629 = vpop.f32.mrb[0].mxu0
      %v9630 = vpop.f32.mrb[0].mxu0
      %v9631 = vadd.f32 0.0, %v9630
      %v9632 = vpop.f32.mrb[0].mxu0
      %9633 = vdwg.mxu0
      %v9634 = vld [vmem:[%s4652] sm:$0xe]
      %v9635 = vld [vmem:[%s4652 + $0x4] sm:$0xf]
      %v9636 = vld [vmem:[%s4652 + $0x8] sm:$0x1]
      %v9637 = vld [vmem:[%s4652 + $0x14] sm:$0xe]
      %v9638 = vld [vmem:[%s4652 + $0x18] sm:$0xf]
      %v9639 = vld [vmem:[%s4652 + $0x1c] sm:$0x1]
      %v9640 = vld [vmem:[%s4652 + $0x28] sm:$0xe]
      %v9641 = vld [vmem:[%s4652 + $0x2c] sm:$0xf]
      %v9642 = vld [vmem:[%s4652 + $0x30] sm:$0x1]
      %v9643 = vld [vmem:[%s4652 + $0x3c] sm:$0xe]
      %v9644 = vld [vmem:[%s4652 + $0x40] sm:$0xf]
      %v9645 = vld [vmem:[%s4652 + $0x44] sm:$0x1]
      %v9646 = vld [vmem:[%s4652 + $0x50] sm:$0xe]
      %v9647 = vld [vmem:[%s4652 + $0x54] sm:$0xf]
      %v9648 = vld [vmem:[%s4652 + $0x58] sm:$0x1]
      %v9649 = vld [vmem:[%s4652 + $0x64] sm:$0xe]
      %v9650 = vld [vmem:[%s4652 + $0x68] sm:$0xf]
      %v9651 = vld [vmem:[%s4652 + $0x6c] sm:$0x1]
      %v9652 = vld [vmem:[%s4652 + $0x78] sm:$0xe]
      %v9653 = vld [vmem:[%s4652 + $0x7c] sm:$0xf]
      %v9654 = vld [vmem:[%s4652 + $0x80] sm:$0x1]
      %v9655 = vld [vmem:[%s4652 + $0x8c] sm:$0xe]
      %v9656 = vld [vmem:[%s4652 + $0x90] sm:$0xf]
      %v9657 = vld [vmem:[%s4652 + $0x94] sm:$0x1]
      %v9658 = vld [vmem:[%s4652 + $0xa0] sm:$0xe]
      %v9659 = vld [vmem:[%s4652 + $0xa4] sm:$0xf]
      %v9660 = vld [vmem:[%s4652 + $0xa8] sm:$0x1]
      %v9661 = vld [vmem:[%s4652 + $0xb4] sm:$0xe]
      %v9662 = vld [vmem:[%s4652 + $0xb8] sm:$0xf]
      %v9663 = vld [vmem:[%s4652 + $0xbc] sm:$0x1]
      %v9664 = vld [vmem:[%s4652 + $0xc8] sm:$0xe]
      %v9665 = vld [vmem:[%s4652 + $0xcc] sm:$0xf]
      %v9666 = vld [vmem:[%s4652 + $0xd0] sm:$0x1]
      %v9667 = vld [vmem:[%s4652 + $0xdc] sm:$0xe]
      %v9668 = vld [vmem:[%s4652 + $0xe0] sm:$0xf]
      %v9669 = vld [vmem:[%s4652 + $0xe4] sm:$0x1]
      %v9670 = vld [vmem:[%s4652 + $0xf0] sm:$0xe]
      %v9671 = vld [vmem:[%s4652 + $0xf4] sm:$0xf]
      %v9672 = vld [vmem:[%s4652 + $0xf8] sm:$0x1]
      %v9673 = vld [vmem:[%s4652 + $0x104] sm:$0xe]
      %v9674 = vld [vmem:[%s4652 + $0x108] sm:$0xf]
      %v9675 = vld [vmem:[%s4652 + $0x10c] sm:$0x1]
      %v9676 = vld [vmem:[%s4652 + $0x118] sm:$0xe]
      %v9677 = vld [vmem:[%s4652 + $0x11c] sm:$0xf]
      %v9678 = vld [vmem:[%s4652 + $0x120] sm:$0x1]
      %v9679 = vld [vmem:[%s4652 + $0x12c] sm:$0xe]
      %v9680 = vld [vmem:[%s4652 + $0x130] sm:$0xf]
      %v9681 = vld [vmem:[%s4652 + $0x134] sm:$0x1]
      %v9730 = vrot.slane %v9634, 5
      %v9731 = vrot.slane %v9730, 4
      %v9732 = vrot.slane %v9635, 5
      %v9733 = vsel %vm1964, %v9731, %v9732
      %v9734 = vrot.slane %v9732, 4
      %v9735 = vrot.slane %v9636, 5
      %v9736 = vsel %vm1964, %v9734, %v9735
      %v9737 = vrot.slane %v9637, 5
      %v9738 = vrot.slane %v9737, 4
      %v9739 = vrot.slane %v9638, 5
      %v9740 = vsel %vm1964, %v9738, %v9739
      %v9741 = vrot.slane %v9739, 4
      %v9742 = vrot.slane %v9639, 5
      %v9743 = vsel %vm1964, %v9741, %v9742
      %v9744 = vrot.slane %v9640, 5
      %v9745 = vrot.slane %v9744, 4
      %v9746 = vrot.slane %v9641, 5
      %v9747 = vsel %vm1964, %v9745, %v9746
      %v9748 = vrot.slane %v9746, 4
      %v9749 = vrot.slane %v9642, 5
      %v9750 = vsel %vm1964, %v9748, %v9749
      %v9751 = vrot.slane %v9643, 5
      %v9752 = vrot.slane %v9751, 4
      %v9753 = vrot.slane %v9644, 5
      %v9754 = vsel %vm1964, %v9752, %v9753
      %v9755 = vrot.slane %v9753, 4
      %v9756 = vrot.slane %v9645, 5
      %v9757 = vsel %vm1964, %v9755, %v9756
      %v9758 = vrot.slane %v9646, 5
      %v9759 = vrot.slane %v9758, 4
      %v9760 = vrot.slane %v9647, 5
      %v9761 = vsel %vm1964, %v9759, %v9760
      %v9762 = vrot.slane %v9760, 4
      %v9763 = vrot.slane %v9648, 5
      %v9764 = vsel %vm1964, %v9762, %v9763
      %v9765 = vrot.slane %v9649, 5
      %v9766 = vrot.slane %v9765, 4
      %v9767 = vrot.slane %v9650, 5
      %v9768 = vsel %vm1964, %v9766, %v9767
      %v9769 = vrot.slane %v9767, 4
      %v9770 = vrot.slane %v9651, 5
      %v9771 = vsel %vm1964, %v9769, %v9770
      %v9772 = vrot.slane %v9652, 5
      %v9773 = vrot.slane %v9772, 4
      %v9774 = vrot.slane %v9653, 5
      %v9775 = vsel %vm1964, %v9773, %v9774
      %v9776 = vrot.slane %v9774, 4
      %v9777 = vrot.slane %v9654, 5
      %v9778 = vsel %vm1964, %v9776, %v9777
      %v9779 = vrot.slane %v9655, 5
      %v9780 = vrot.slane %v9779, 4
      %v9781 = vrot.slane %v9656, 5
      %v9782 = vsel %vm1964, %v9780, %v9781
      %v9783 = vrot.slane %v9781, 4
      %v9784 = vrot.slane %v9657, 5
      %v9785 = vsel %vm1964, %v9783, %v9784
      %v9786 = vrot.slane %v9658, 5
      %v9787 = vrot.slane %v9786, 4
      %v9788 = vrot.slane %v9659, 5
      %v9789 = vsel %vm1964, %v9787, %v9788
      %v9790 = vrot.slane %v9788, 4
      %v9791 = vrot.slane %v9660, 5
      %v9792 = vsel %vm1964, %v9790, %v9791
      %v9793 = vrot.slane %v9661, 5
      %v9794 = vrot.slane %v9793, 4
      %v9795 = vrot.slane %v9662, 5
      %v9796 = vsel %vm1964, %v9794, %v9795
      %v9797 = vrot.slane %v9795, 4
      %v9798 = vrot.slane %v9663, 5
      %v9799 = vsel %vm1964, %v9797, %v9798
      %v9800 = vrot.slane %v9664, 5
      %v9801 = vrot.slane %v9800, 4
      %v9802 = vrot.slane %v9665, 5
      %v9803 = vsel %vm1964, %v9801, %v9802
      %v9804 = vrot.slane %v9802, 4
      %v9805 = vrot.slane %v9666, 5
      %v9806 = vsel %vm1964, %v9804, %v9805
      %v9807 = vrot.slane %v9667, 5
      %v9808 = vrot.slane %v9807, 4
      %v9809 = vrot.slane %v9668, 5
      %v9810 = vsel %vm1964, %v9808, %v9809
      %v9811 = vrot.slane %v9809, 4
      %v9812 = vrot.slane %v9669, 5
      %v9813 = vsel %vm1964, %v9811, %v9812
      %v9814 = vrot.slane %v9670, 5
      %v9815 = vrot.slane %v9814, 4
      %v9816 = vrot.slane %v9671, 5
      %v9817 = vsel %vm1964, %v9815, %v9816
      %v9818 = vrot.slane %v9816, 4
      %v9819 = vrot.slane %v9672, 5
      %v9820 = vsel %vm1964, %v9818, %v9819
      %v9821 = vrot.slane %v9673, 5
      %v9822 = vrot.slane %v9821, 4
      %v9823 = vrot.slane %v9674, 5
      %v9824 = vsel %vm1964, %v9822, %v9823
      %v9825 = vrot.slane %v9823, 4
      %v9826 = vrot.slane %v9675, 5
      %v9827 = vsel %vm1964, %v9825, %v9826
      %v9828 = vrot.slane %v9676, 5
      %v9829 = vrot.slane %v9828, 4
      %v9830 = vrot.slane %v9677, 5
      %v9831 = vsel %vm1964, %v9829, %v9830
      %v9832 = vrot.slane %v9830, 4
      %v9833 = vrot.slane %v9678, 5
      %v9834 = vsel %vm1964, %v9832, %v9833
      %v9835 = vrot.slane %v9679, 5
      %v9836 = vrot.slane %v9835, 4
      %v9837 = vrot.slane %v9680, 5
      %v9838 = vsel %vm1964, %v9836, %v9837
      %v9839 = vrot.slane %v9837, 4
      %v9840 = vrot.slane %v9681, 5
      %v9841 = vsel %vm1964, %v9839, %v9840
      %v9874 = vunpack.c.l.bf16 %v9733
      %v9875 = vunpack.c.l.bf16 %v9736
      %v9876 = vunpack.c.l.bf16 %v9740
      %v9877 = vunpack.c.l.bf16 %v9743
      %v9878 = vunpack.c.l.bf16 %v9747
      %v9879 = vunpack.c.l.bf16 %v9750
      %v9880 = vunpack.c.l.bf16 %v9754
      %v9881 = vunpack.c.l.bf16 %v9757
      %v9882 = vunpack.c.l.bf16 %v9761
      %v9883 = vunpack.c.l.bf16 %v9764
      %v9884 = vunpack.c.l.bf16 %v9768
      %v9885 = vunpack.c.l.bf16 %v9771
      %v9886 = vunpack.c.l.bf16 %v9775
      %v9887 = vunpack.c.l.bf16 %v9778
      %v9888 = vunpack.c.l.bf16 %v9782
      %v9889 = vunpack.c.l.bf16 %v9785
      %v9890 = vunpack.c.l.bf16 %v9789
      %v9891 = vunpack.c.l.bf16 %v9792
      %v9892 = vunpack.c.l.bf16 %v9796
      %v9893 = vunpack.c.l.bf16 %v9799
      %v9894 = vunpack.c.l.bf16 %v9803
      %v9895 = vunpack.c.l.bf16 %v9806
      %v9896 = vunpack.c.l.bf16 %v9810
      %v9897 = vunpack.c.l.bf16 %v9813
      %v9898 = vunpack.c.l.bf16 %v9817
      %v9899 = vunpack.c.l.bf16 %v9820
      %v9900 = vunpack.c.l.bf16 %v9824
      %v9901 = vunpack.c.l.bf16 %v9827
      %v9902 = vunpack.c.l.bf16 %v9831
      %v9903 = vunpack.c.l.bf16 %v9834
      %v9904 = vunpack.c.l.bf16 %v9838
      %v9905 = vunpack.c.l.bf16 %v9841
      %v9906 = vld [vmem:[%s5] sm:$0x1]
      %v9908 = vlaneseq
      %v9909 = vshrl.u32 %v9908, 7
      %v9910 = vsub.s32 0, %v9909
      %v9911 = vrot.slane %v9906, %v9910
      %v9913 = vmul.f32 %v9508, %v9911
      %v9914 = vmul.f32 %v9511, %v9911
      %v9915 = vmul.f32 %v9516, %v9911
      %v9916 = vmul.f32 %v9519, %v9911
      %v9917 = vmul.f32 %v9524, %v9911
      %v9918 = vmul.f32 %v9527, %v9911
      %v9919 = vmul.f32 %v9532, %v9911
      %v9920 = vmul.f32 %v9535, %v9911
      %v9921 = vmul.f32 %v9540, %v9911
      %v9922 = vmul.f32 %v9543, %v9911
      %v9923 = vmul.f32 %v9548, %v9911
      %v9924 = vmul.f32 %v9551, %v9911
      %v9925 = vmul.f32 %v9556, %v9911
      %v9926 = vmul.f32 %v9559, %v9911
      %v9927 = vmul.f32 %v9564, %v9911
      %v9928 = vmul.f32 %v9567, %v9911
      %v9929 = vmul.f32 %v9572, %v9911
      %v9930 = vmul.f32 %v9575, %v9911
      %v9931 = vmul.f32 %v9580, %v9911
      %v9932 = vmul.f32 %v9583, %v9911
      %v9933 = vmul.f32 %v9588, %v9911
      %v9934 = vmul.f32 %v9591, %v9911
      %v9935 = vmul.f32 %v9596, %v9911
      %v9936 = vmul.f32 %v9599, %v9911
      %v9937 = vmul.f32 %v9604, %v9911
      %v9938 = vmul.f32 %v9607, %v9911
      %v9939 = vmul.f32 %v9612, %v9911
      %v9940 = vmul.f32 %v9615, %v9911
      %v9941 = vmul.f32 %v9620, %v9911
      %v9942 = vmul.f32 %v9623, %v9911
      %v9943 = vmul.f32 %v9628, %v9911
      %v9944 = vmul.f32 %v9631, %v9911
      %v9945 = vld [vmem:[%s6] sm:$0x1]
      %v9947 = vlaneseq
      %v9948 = vshrl.u32 %v9947, 7
      %v9949 = vsub.s32 0, %v9948
      %v9950 = vrot.slane %v9945, %v9949
      %v9952 = vadd.f32 %v9913, %v9950
      %v9953 = vadd.f32 %v9914, %v9950
      %v9954 = vadd.f32 %v9915, %v9950
      %v9955 = vadd.f32 %v9916, %v9950
      %v9956 = vadd.f32 %v9917, %v9950
      %v9957 = vadd.f32 %v9918, %v9950
      %v9958 = vadd.f32 %v9919, %v9950
      %v9959 = vadd.f32 %v9920, %v9950
      %v9960 = vadd.f32 %v9921, %v9950
      %v9961 = vadd.f32 %v9922, %v9950
      %v9962 = vadd.f32 %v9923, %v9950
      %v9963 = vadd.f32 %v9924, %v9950
      %v9964 = vadd.f32 %v9925, %v9950
      %v9965 = vadd.f32 %v9926, %v9950
      %v9966 = vadd.f32 %v9927, %v9950
      %v9967 = vadd.f32 %v9928, %v9950
      %v9968 = vadd.f32 %v9929, %v9950
      %v9969 = vadd.f32 %v9930, %v9950
      %v9970 = vadd.f32 %v9931, %v9950
      %v9971 = vadd.f32 %v9932, %v9950
      %v9972 = vadd.f32 %v9933, %v9950
      %v9973 = vadd.f32 %v9934, %v9950
      %v9974 = vadd.f32 %v9935, %v9950
      %v9975 = vadd.f32 %v9936, %v9950
      %v9976 = vadd.f32 %v9937, %v9950
      %v9977 = vadd.f32 %v9938, %v9950
      %v9978 = vadd.f32 %v9939, %v9950
      %v9979 = vadd.f32 %v9940, %v9950
      %v9980 = vadd.f32 %v9941, %v9950
      %v9981 = vadd.f32 %v9942, %v9950
      %v9982 = vadd.f32 %v9943, %v9950
      %v9983 = vadd.f32 %v9944, %v9950
      %v9984 = vadd.f32 %v9952, %v9874
      %v9985 = vadd.f32 %v9953, %v9875
      %v9986 = vadd.f32 %v9954, %v9876
      %v9987 = vadd.f32 %v9955, %v9877
      %v9988 = vadd.f32 %v9956, %v9878
      %v9989 = vadd.f32 %v9957, %v9879
      %v9990 = vadd.f32 %v9958, %v9880
      %v9991 = vadd.f32 %v9959, %v9881
      %v9992 = vadd.f32 %v9960, %v9882
      %v9993 = vadd.f32 %v9961, %v9883
      %v9994 = vadd.f32 %v9962, %v9884
      %v9995 = vadd.f32 %v9963, %v9885
      %v9996 = vadd.f32 %v9964, %v9886
      %v9997 = vadd.f32 %v9965, %v9887
      %v9998 = vadd.f32 %v9966, %v9888
      %v9999 = vadd.f32 %v9967, %v9889
      %v10000 = vadd.f32 %v9968, %v9890
      %v10001 = vadd.f32 %v9969, %v9891
      %v10002 = vadd.f32 %v9970, %v9892
      %v10003 = vadd.f32 %v9971, %v9893
      %v10004 = vadd.f32 %v9972, %v9894
      %v10005 = vadd.f32 %v9973, %v9895
      %v10006 = vadd.f32 %v9974, %v9896
      %v10007 = vadd.f32 %v9975, %v9897
      %v10008 = vadd.f32 %v9976, %v9898
      %v10009 = vadd.f32 %v9977, %v9899
      %v10010 = vadd.f32 %v9978, %v9900
      %v10011 = vadd.f32 %v9979, %v9901
      %v10012 = vadd.f32 %v9980, %v9902
      %v10013 = vadd.f32 %v9981, %v9903
      %v10014 = vadd.f32 %v9982, %v9904
      %v10015 = vadd.f32 %v9983, %v9905
      %v10016 = vmax.f32 %v9984, 0.0
      %v10017 = vmax.f32 %v9985, 0.0
      %v10018 = vmax.f32 %v9986, 0.0
      %v10019 = vmax.f32 %v9987, 0.0
      %v10020 = vmax.f32 %v9988, 0.0
      %v10021 = vmax.f32 %v9989, 0.0
      %v10022 = vmax.f32 %v9990, 0.0
      %v10023 = vmax.f32 %v9991, 0.0
      %v10024 = vmax.f32 %v9992, 0.0
      %v10025 = vmax.f32 %v9993, 0.0
      %v10026 = vmax.f32 %v9994, 0.0
      %v10027 = vmax.f32 %v9995, 0.0
      %v10028 = vmax.f32 %v9996, 0.0
      %v10029 = vmax.f32 %v9997, 0.0
      %v10030 = vmax.f32 %v9998, 0.0
      %v10031 = vmax.f32 %v9999, 0.0
      %v10032 = vmax.f32 %v10000, 0.0
      %v10033 = vmax.f32 %v10001, 0.0
      %v10034 = vmax.f32 %v10002, 0.0
      %v10035 = vmax.f32 %v10003, 0.0
      %v10036 = vmax.f32 %v10004, 0.0
      %v10037 = vmax.f32 %v10005, 0.0
      %v10038 = vmax.f32 %v10006, 0.0
      %v10039 = vmax.f32 %v10007, 0.0
      %v10040 = vmax.f32 %v10008, 0.0
      %v10041 = vmax.f32 %v10009, 0.0
      %v10042 = vmax.f32 %v10010, 0.0
      %v10043 = vmax.f32 %v10011, 0.0
      %v10044 = vmax.f32 %v10012, 0.0
      %v10045 = vmax.f32 %v10013, 0.0
      %v10046 = vmax.f32 %v10014, 0.0
      %v10047 = vmax.f32 %v10015, 0.0
      %v10048 = vpack.c.bf16 %v10017, %v10016
      %v10049 = vpack.c.bf16 %v10019, %v10018
      %v10050 = vpack.c.bf16 %v10021, %v10020
      %v10051 = vpack.c.bf16 %v10023, %v10022
      %v10052 = vpack.c.bf16 %v10025, %v10024
      %v10053 = vpack.c.bf16 %v10027, %v10026
      %v10054 = vpack.c.bf16 %v10029, %v10028
      %v10055 = vpack.c.bf16 %v10031, %v10030
      %v10056 = vpack.c.bf16 %v10033, %v10032
      %v10057 = vpack.c.bf16 %v10035, %v10034
      %v10058 = vpack.c.bf16 %v10037, %v10036
      %v10059 = vpack.c.bf16 %v10039, %v10038
      %v10060 = vpack.c.bf16 %v10041, %v10040
      %v10061 = vpack.c.bf16 %v10043, %v10042
      %v10062 = vpack.c.bf16 %v10045, %v10044
      %v10063 = vpack.c.bf16 %v10047, %v10046
      %v10080 = vunpack.c.l.b16 %v10048
      %v10081 = vunpack.c.h.b16 %v10048
      %v10082 = vunpack.c.l.b16 %v10049
      %v10083 = vunpack.c.h.b16 %v10049
      %v10084 = vunpack.c.l.b16 %v10050
      %v10085 = vunpack.c.h.b16 %v10050
      %v10086 = vunpack.c.l.b16 %v10051
      %v10087 = vunpack.c.h.b16 %v10051
      %v10088 = vunpack.c.l.b16 %v10052
      %v10089 = vunpack.c.h.b16 %v10052
      %v10090 = vunpack.c.l.b16 %v10053
      %v10091 = vunpack.c.h.b16 %v10053
      %v10092 = vunpack.c.l.b16 %v10054
      %v10093 = vunpack.c.h.b16 %v10054
      %v10094 = vunpack.c.l.b16 %v10055
      %v10095 = vunpack.c.h.b16 %v10055
      %v10096 = vunpack.c.l.b16 %v10056
      %v10097 = vunpack.c.h.b16 %v10056
      %v10098 = vunpack.c.l.b16 %v10057
      %v10099 = vunpack.c.h.b16 %v10057
      %v10100 = vunpack.c.l.b16 %v10058
      %v10101 = vunpack.c.h.b16 %v10058
      %v10102 = vunpack.c.l.b16 %v10059
      %v10103 = vunpack.c.h.b16 %v10059
      %v10104 = vunpack.c.l.b16 %v10060
      %v10105 = vunpack.c.h.b16 %v10060
      %v10106 = vunpack.c.l.b16 %v10061
      %v10107 = vunpack.c.h.b16 %v10061
      %v10108 = vunpack.c.l.b16 %v10062
      %v10109 = vunpack.c.h.b16 %v10062
      %v10110 = vunpack.c.l.b16 %v10063
      %v10111 = vunpack.c.h.b16 %v10063
      %v10112 = vpack.c.b16 %v10080, %v10080
      %v10113 = vpack.c.b16 %v10081, %v10081
      %v10114 = vpack.c.b16 %v10082, %v10082
      %v10115 = vpack.c.b16 %v10083, %v10083
      %v10116 = vpack.c.b16 %v10084, %v10084
      %v10117 = vpack.c.b16 %v10085, %v10085
      %v10118 = vpack.c.b16 %v10086, %v10086
      %v10119 = vpack.c.b16 %v10087, %v10087
      %v10120 = vpack.c.b16 %v10088, %v10088
      %v10121 = vpack.c.b16 %v10089, %v10089
      %v10122 = vpack.c.b16 %v10090, %v10090
      %v10123 = vpack.c.b16 %v10091, %v10091
      %v10124 = vpack.c.b16 %v10092, %v10092
      %v10125 = vpack.c.b16 %v10093, %v10093
      %v10126 = vpack.c.b16 %v10094, %v10094
      %v10127 = vpack.c.b16 %v10095, %v10095
      %v10128 = vpack.c.b16 %v10096, %v10096
      %v10129 = vpack.c.b16 %v10097, %v10097
      %v10130 = vpack.c.b16 %v10098, %v10098
      %v10131 = vpack.c.b16 %v10099, %v10099
      %v10132 = vpack.c.b16 %v10100, %v10100
      %v10133 = vpack.c.b16 %v10101, %v10101
      %v10134 = vpack.c.b16 %v10102, %v10102
      %v10135 = vpack.c.b16 %v10103, %v10103
      %v10136 = vpack.c.b16 %v10104, %v10104
      %v10137 = vpack.c.b16 %v10105, %v10105
      %v10138 = vpack.c.b16 %v10106, %v10106
      %v10139 = vpack.c.b16 %v10107, %v10107
      %v10140 = vpack.c.b16 %v10108, %v10108
      %v10141 = vpack.c.b16 %v10109, %v10109
      %v10142 = vpack.c.b16 %v10110, %v10110
      %v10143 = vpack.c.b16 %v10111, %v10111
      %vm10176 = vcmask 27648
      %10177 = vst.msk [vmem:[%s316] sm:$0xf] %vm10176, %v10112
      %10178 = vst.msk [vmem:[%s316 + $0x4] sm:$0xf] %vm10176, %v10113
      %10179 = vst.msk [vmem:[%s316 + $0x8] sm:$0xf] %vm10176, %v10114
      %10180 = vst.msk [vmem:[%s316 + $0xc] sm:$0xf] %vm10176, %v10115
      %10181 = vst.msk [vmem:[%s316 + $0x10] sm:$0xf] %vm10176, %v10116
      %10182 = vst.msk [vmem:[%s316 + $0x14] sm:$0xf] %vm10176, %v10117
      %10183 = vst.msk [vmem:[%s316 + $0x18] sm:$0xf] %vm10176, %v10118
      %10184 = vst.msk [vmem:[%s316 + $0x1c] sm:$0xf] %vm10176, %v10119
      %10185 = vst.msk [vmem:[%s316 + $0x20] sm:$0xf] %vm10176, %v10120
      %10186 = vst.msk [vmem:[%s316 + $0x24] sm:$0xf] %vm10176, %v10121
      %10187 = vst.msk [vmem:[%s316 + $0x28] sm:$0xf] %vm10176, %v10122
      %10188 = vst.msk [vmem:[%s316 + $0x2c] sm:$0xf] %vm10176, %v10123
      %10189 = vst.msk [vmem:[%s316 + $0x30] sm:$0xf] %vm10176, %v10124
      %10190 = vst.msk [vmem:[%s316 + $0x34] sm:$0xf] %vm10176, %v10125
      %10191 = vst.msk [vmem:[%s316 + $0x38] sm:$0xf] %vm10176, %v10126
      %10192 = vst.msk [vmem:[%s316 + $0x3c] sm:$0xf] %vm10176, %v10127
      %10193 = vst.msk [vmem:[%s316 + $0x40] sm:$0xf] %vm10176, %v10128
      %10194 = vst.msk [vmem:[%s316 + $0x44] sm:$0xf] %vm10176, %v10129
      %10195 = vst.msk [vmem:[%s316 + $0x48] sm:$0xf] %vm10176, %v10130
      %10196 = vst.msk [vmem:[%s316 + $0x4c] sm:$0xf] %vm10176, %v10131
      %10197 = vst.msk [vmem:[%s316 + $0x50] sm:$0xf] %vm10176, %v10132
      %10198 = vst.msk [vmem:[%s316 + $0x54] sm:$0xf] %vm10176, %v10133
      %10199 = vst.msk [vmem:[%s316 + $0x58] sm:$0xf] %vm10176, %v10134
      %10200 = vst.msk [vmem:[%s316 + $0x5c] sm:$0xf] %vm10176, %v10135
      %10201 = vst.msk [vmem:[%s316 + $0x60] sm:$0xf] %vm10176, %v10136
      %10202 = vst.msk [vmem:[%s316 + $0x64] sm:$0xf] %vm10176, %v10137
      %10203 = vst.msk [vmem:[%s316 + $0x68] sm:$0xf] %vm10176, %v10138
      %10204 = vst.msk [vmem:[%s316 + $0x6c] sm:$0xf] %vm10176, %v10139
      %10205 = vst.msk [vmem:[%s316 + $0x70] sm:$0xf] %vm10176, %v10140
      %10206 = vst.msk [vmem:[%s316 + $0x74] sm:$0xf] %vm10176, %v10141
      %10207 = vst.msk [vmem:[%s316 + $0x78] sm:$0xf] %vm10176, %v10142
      %10208 = vst.msk [vmem:[%s316 + $0x7c] sm:$0xf] %vm10176, %v10143
      %s10209 = smul.u32 16, %s23
      %p10210 = scmp.lt.s32.totalorder %s22, 1
      %s10211 = scalar_select %p10210, %s22, 1
      %p10212 = scmp.lt.s32.totalorder %s10209, 15
      %s10213 = scalar_select %p10212, %s10209, 15
      %s10214 = smul.addr %s10213, 2
      %s10215 = smul.addr %s10211, 32
      %s10216 = sadd.s32 %s10214, %s10215
      %s10217 = smul.addr %s10216, 4
      %s10218 = scalar_lea.vmem %s7, %s10217
      // Predicated region
      $region53: #{basic_block_forward.1} parent=47 // pred_check
        %p10219 = pneg %p204
      $region54: #{basic_block_forward.1} parent=47 // pred_check_branch
        %10221 = sbr.rel (%p10219) target = $region56
      $region55: #{basic_block_forward.1} parent=47 // pred_region
        %s10222 = smul.u32 16, %s23
      $region56: #{basic_block_forward.1} parent=47 // pred_fallthru
        _
    $region48: #{basic_block_forward.1} parent=5 // pred_fallthru
      _
    %p10223 = scmp.le.s32.totalorder 2, %s13
    // Predicated region
    $region57: #{basic_block_forward.1} parent=5 // pred_check
      %p10224 = pneg %p10223
    $region58: #{basic_block_forward.1} parent=5 // pred_check_branch
      %10226 = sbr.rel (%p10224) target = $region60
    $region59: #{basic_block_forward.1} parent=5 // pred_region
      %s10227 = ssub.s32 %s13, 2
      // Predicated region
      $region61: #{basic_block_forward.1} parent=59 // pred_check
        %p10228 = pneg %p210
      $region62: #{basic_block_forward.1} parent=59 // pred_check_branch
        %10230 = sbr.rel (%p10228) target = $region64
      $region63: #{basic_block_forward.1} parent=59 // pred_region
        %s10231 = smul.u32 16, %s25
        %p10232 = scmp.lt.s32.totalorder %s24, 1
        %s10233 = scalar_select %p10232, %s24, 1
        %p10234 = scmp.lt.s32.totalorder %s10231, 15
        %s10235 = scalar_select %p10234, %s10231, 15
        %s10236 = smul.addr %s10235, 2
        %s10237 = smul.addr %s10233, 32
        %s10238 = sadd.s32 %s10236, %s10237
        %s10239 = smul.addr %s10238, 4
        %s10240 = scalar_lea.vmem %s7, %s10239
      $region64: #{basic_block_forward.1} parent=59 // pred_fallthru
        _
    $region60: #{basic_block_forward.1} parent=5 // pred_fallthru
      _
  $region6: #{basic_block_forward.1} parent=0 // loop_footer
    %s17 = sadd.s32 1, %s13
  $region7: #{basic_block_forward.1} parent=0 // loop_footer_branch
    %12 = sbr.rel target = $region3
  $region8: #{basic_block_forward.1} parent=0 // loop_exit
    _

</llo_original>
